<compile_context>
chip_gen: v6e
topology: v6e:2x2x1
jax: 0.10.0
libtpu: 0.0.40
codegen_flags: <defaults>
</compile_context>

<pallas_src>
import jax
import jax.numpy as jnp
import numpy as np
from jax import lax
from jax.experimental import pallas as pl
from jax.experimental.pallas import tpu as pltpu

KSIZE = 3  # 3x3 "same"-padded convolutions


def _round_up(x, m):
    return (x + m - 1) // m * m


def _make_fused_kernel(H, W, Cp, n_blocks, base, S_mid):
    """n_blocks x (conv3x3 + folded-BN + relu); residual add is in the wrapper."""
    Wp = W + 2
    M = H * Wp                    # rows of the (H, W+2)-row output layout
    org = base - (Wp + 1)         # padded-image origin inside the mid slab
    n_slabs = min(n_blocks - 1, 2)

    def kernel(*refs):
        x_ref = refs[0]                              # (S_in, Cp) bf16, padded + flat
        mask_ref = refs[1]                           # (M, 1)  f32 column validity
        wb_refs = refs[2:2 + 2 * n_blocks]           # (w, b) per block
        out_ref = refs[2 + 2 * n_blocks]             # (M, Cp) bf16
        slabs = refs[3 + 2 * n_blocks:]              # bf16 ping-pong VMEM slabs

        # Re-zero only the slab halo rows each grid step.  The interior
        # [base, base+M) is fully overwritten; scratch is persistent and
        # uninitialized, and the batch axis may be megacore-sharded, so a
        # program_id==0 guard would be wrong -- zeroing the (tiny) halos every
        # step is both correct and cheap.
        for s in slabs:
            s[pl.ds(0, base), :] = jnp.zeros((base, Cp), s.dtype)
            s[pl.ds(base + M, S_mid - base - M), :] = jnp.zeros(
                (S_mid - base - M, Cp), s.dtype)

        def conv3x3(src_ref, src_org, w_ref):
            # Each tap is one contiguous sublane slice feeding one MXU matmul;
            # the accumulate chain has no interleaved VPU ops.
            acc = jnp.dot(src_ref[pl.ds(src_org, M), :], w_ref[0],
                          preferred_element_type=jnp.float32)
            for t in range(1, KSIZE * KSIZE):
                kh, kw = divmod(t, KSIZE)
                acc += jnp.dot(src_ref[pl.ds(src_org + kh * Wp + kw, M), :],
                               w_ref[t], preferred_element_type=jnp.float32)
            return acc

        mask = mask_ref[...]      # 1.0 on real columns, 0.0 on the 2 pads/row

        src_ref, src_org = x_ref, 0
        for i in range(n_blocks):
            w_ref, b_ref = wb_refs[2 * i], wb_refs[2 * i + 1]
            # conv -> (eval-mode BN folded into w/b) -> relu; f32 epilogue.
            y = jnp.maximum(conv3x3(src_ref, src_org, w_ref) + b_ref[...], 0.0)
            if i < n_blocks - 1:
                dst = slabs[i % n_slabs]
                # One aligned, lane/sublane-dense bf16 store.  The 2 masked
                # columns per (H, W+2)-row land exactly on the right/left halo
                # pixels of the next block's padded image.
                dst[pl.ds(base, M), :] = (y * mask).astype(jnp.bfloat16)
                src_ref, src_org = dst, org
            else:
                out_ref[...] = y.astype(out_ref.dtype)

    return kernel


def simple_fuse_block_2d(x_nchw, params, eps=1e-5):
    """Forward of _SimpleFuseBlockNd (connect_before=None, fuse = add)."""
    N, C, H, W = x_nchw.shape
    n_blocks = len(params)
    Cp = _round_up(C, 128)              # lane-dense channel count
    # TODO(synk): for real channel counts in (128, 256] round Cp to 256 on
    #             v6e/v7x (2x256^2 MXU) instead of the next multiple of 128.
    Wp = W + 2
    M = H * Wp
    base = _round_up(Wp + 1, 16)                    # aligned interior start (bf16)
    S_mid = _round_up(base + M + Wp + 1, 16)        # slab rows incl. guards
    S_in = _round_up((H + 2) * Wp + 2, 16)          # flattened padded-input rows
    n_slabs = min(n_blocks - 1, 2)

    # --- wrapper-side layout prep (one fused XLA copy) -----------------------
    # NCHW -> NHWC, 1-px spatial halo, channel pad to Cp, flatten rows, pad
    # guard rows, cast to bf16 for the MXU.
    x = jnp.transpose(x_nchw, (0, 2, 3, 1))
    x = jnp.pad(x, ((0, 0), (1, 1), (1, 1), (0, Cp - C)))
    x = x.reshape(N, (H + 2) * Wp, Cp)
    x = jnp.pad(x, ((0, 0), (0, S_in - (H + 2) * Wp), (0, 0)))
    x = x.astype(jnp.bfloat16)

    # Column-validity mask for the (H, W+2)-row layout, precomputed (constant).
    mask = jnp.asarray((np.arange(M) % Wp < W).astype(np.float32).reshape(M, 1))

    # Fold conv bias + eval-mode BatchNorm into the weights/bias at trace time:
    #   w'[..., o] = w[..., o] * scale[o],   b' = (b - mean) * scale + beta
    weight_args = []
    for p in params:
        w_hwio = jnp.transpose(p["w"].astype(jnp.float32), (2, 3, 1, 0))  # OIHW->HWIO
        scale = p["gamma"] * lax.rsqrt(p["var"] + eps)
        w_f = w_hwio * scale[None, None, None, :]
        b_f = (p["b"] - p["mean"]) * scale + p["beta"]
        w_pad = jnp.zeros((KSIZE, KSIZE, Cp, Cp), jnp.float32)
        w_pad = w_pad.at[:, :, :C, :C].set(w_f)
        b_pad = jnp.zeros((1, Cp), jnp.float32).at[0, :C].set(b_f)
        weight_args += [
            w_pad.reshape(KSIZE * KSIZE, Cp, Cp).astype(jnp.bfloat16),
            b_pad,                                   # bias stays f32
        ]

    kernel = _make_fused_kernel(H, W, Cp, n_blocks, base, S_mid)

    in_specs = [
        pl.BlockSpec((None, S_in, Cp), lambda n: (n, 0, 0)),   # x, per batch elem
        pl.BlockSpec((M, 1), lambda n: (0, 0)),                # mask, resident
    ]
    for _ in range(n_blocks):
        in_specs += [
            pl.BlockSpec((KSIZE * KSIZE, Cp, Cp), lambda n: (0, 0, 0)),
            pl.BlockSpec((1, Cp), lambda n: (0, 0)),
        ]

    out = pl.pallas_call(
        kernel,
        out_shape=jax.ShapeDtypeStruct((N, M, Cp), jnp.bfloat16),
        grid_spec=pltpu.PrefetchScalarGridSpec(
            num_scalar_prefetch=0,
            grid=(N,),                               # one batch element per step
            in_specs=in_specs,
            out_specs=pl.BlockSpec((None, M, Cp), lambda n: (n, 0, 0)),
            scratch_shapes=[pltpu.VMEM((S_mid, Cp), jnp.bfloat16)
                            for _ in range(n_slabs)],
        ),
        compiler_params=pltpu.CompilerParams(
            dimension_semantics=("parallel",),       # batch items independent
            # Stay under v7x's 64 MiB physical VMEM; on v5e/v6e this could be
            # raised toward ~100 MiB for larger row tiles.
            vmem_limit_bytes=48 * 1024 * 1024,
        ),
    )(x, mask, *weight_args)

    # Crop padded columns/channels and apply fuse(x, out) = x + out in f32 so
    # the skip connection keeps full input precision (fuses with the crop).
    y = out.reshape(N, H, Wp, Cp)[:, :, :W, :C].astype(jnp.float32)
    y = jnp.transpose(y, (0, 3, 1, 2))               # NHWC -> NCHW
    return x_nchw + y


def init_params(key, C, n_blocks):
    params = []
    for _ in range(n_blocks):
        key, k1, k2, k3, k4, k5, k6 = jax.random.split(key, 7)
        params.append(dict(
            w=0.1 * jax.random.normal(k1, (C, C, KSIZE, KSIZE), jnp.float32),  # OIHW
            b=0.1 * jax.random.normal(k2, (C,), jnp.float32),
            gamma=1.0 + 0.1 * jax.random.normal(k3, (C,), jnp.float32),
            beta=0.1 * jax.random.normal(k4, (C,), jnp.float32),
            mean=0.1 * jax.random.normal(k5, (C,), jnp.float32),
            var=0.5 + jax.random.uniform(k6, (C,), jnp.float32),
        ))
    return params


def ref_forward(x, params, eps=1e-5):
    """Pure-JAX f32 reference (mirrors PyTorch eval-mode semantics)."""
    def block(h, p):
        y = lax.conv_general_dilated(
            h, p["w"], (1, 1), "SAME",
            dimension_numbers=("NCHW", "OIHW", "NCHW"))
        y = y + p["b"][None, :, None, None]
        y = (y - p["mean"][None, :, None, None]) / jnp.sqrt(
            p["var"] + eps)[None, :, None, None]
        y = y * p["gamma"][None, :, None, None] + p["beta"][None, :, None, None]
        return jnp.maximum(y, 0.0)

    h = x
    for p in params:
        h = block(h, p)
    return x + h


if __name__ == "__main__":
    key = jax.random.PRNGKey(0)
    kx, kp = jax.random.split(key)
    N, C, H, W = 2, 4, 16, 16
    x = jax.random.normal(kx, (N, C, H, W), jnp.float32)   # NCHW like PyTorch
    params = init_params(kp, C, n_blocks=2)

    fwd = jax.jit(simple_fuse_block_2d)
    out = jax.block_until_ready(fwd(x, params))

    expected = jax.block_until_ready(ref_forward(x, params))
    # Tolerance is set for bf16 MXU inputs / bf16 writeback (f32 accumulation
    # and f32 residual add); the f32 reference matches well within ~1e-2.
    np.testing.assert_allclose(np.asarray(out), np.asarray(expected),
                               rtol=2e-2, atol=2e-2)
    print("KERNEL_OK")
</pallas_src>

<mosaic_0001>
module attributes {stable_mosaic.version = 11 : i64} {
  func.func @kernel(%arg0: i32, %arg1: memref<1x336x128xbf16, #tpu.memory_space<vmem>>, %arg2: memref<288x1xf32, #tpu.memory_space<vmem>>, %arg3: memref<9x128x128xbf16, #tpu.memory_space<vmem>>, %arg4: memref<1x128xf32, #tpu.memory_space<vmem>>, %arg5: memref<9x128x128xbf16, #tpu.memory_space<vmem>>, %arg6: memref<1x128xf32, #tpu.memory_space<vmem>>, %arg7: memref<1x288x128xbf16, #tpu.memory_space<vmem>>, %arg8: memref<352x128xbf16, #tpu.memory_space<vmem>>) attributes {dimension_semantics = [#tpu.dimension_semantics<parallel>], iteration_bounds = array<i64: 2>, scalar_prefetch = 0 : i64, scratch_operands = 1 : i64, tpu.core_type = #tpu.core_type<tc>, window_params = [{transform_indices = @transform_0, window_bounds = array<i64: 1, 336, 128>}, {pipeline_mode = #tpu.pipeline_mode<synchronous>, transform_indices = @transform_1, window_bounds = array<i64: 288, 1>}, {pipeline_mode = #tpu.pipeline_mode<synchronous>, transform_indices = @transform_2, window_bounds = array<i64: 9, 128, 128>}, {pipeline_mode = #tpu.pipeline_mode<synchronous>, transform_indices = @transform_3, window_bounds = array<i64: 1, 128>}, {pipeline_mode = #tpu.pipeline_mode<synchronous>, transform_indices = @transform_4, window_bounds = array<i64: 9, 128, 128>}, {pipeline_mode = #tpu.pipeline_mode<synchronous>, transform_indices = @transform_5, window_bounds = array<i64: 1, 128>}, {transform_indices = @transform_6, window_bounds = array<i64: 1, 288, 128>}]} {
    %cst = arith.constant 0.000000e+00 : bf16
    %0 = vector.broadcast %cst : bf16 to vector<32x128xbf16>
    %c0 = arith.constant 0 : index
    %c0_0 = arith.constant 0 : index
    %1 = vector.load %arg8[%c0, %c0_0] : memref<352x128xbf16, #tpu.memory_space<vmem>>, vector<32x128xbf16>
    tpu.vector_store %arg8[%c0, %c0_0], %0 {strides = array<i32>} : memref<352x128xbf16, #tpu.memory_space<vmem>>, vector<32x128xbf16>,
    %cst_1 = arith.constant 0.000000e+00 : bf16
    %2 = vector.broadcast %cst_1 : bf16 to vector<32x128xbf16>
    %c320 = arith.constant 320 : index
    %c0_2 = arith.constant 0 : index
    %3 = vector.load %arg8[%c320, %c0_2] : memref<352x128xbf16, #tpu.memory_space<vmem>>, vector<32x128xbf16>
    tpu.vector_store %arg8[%c320, %c0_2], %2 {strides = array<i32>} : memref<352x128xbf16, #tpu.memory_space<vmem>>, vector<32x128xbf16>,
    %c0_3 = arith.constant 0 : index
    %c0_4 = arith.constant 0 : index
    %4 = vector.load %arg2[%c0_3, %c0_4] : memref<288x1xf32, #tpu.memory_space<vmem>>, vector<288x1xf32>
    %c0_5 = arith.constant 0 : index
    %c0_6 = arith.constant 0 : index
    %c0_7 = arith.constant 0 : index
    %5 = vector.load %arg1[%c0_5, %c0_6, %c0_7] : memref<1x336x128xbf16, #tpu.memory_space<vmem>>, vector<1x288x128xbf16>
    %6 = vector.shape_cast %5 : vector<1x288x128xbf16> to vector<288x128xbf16>
    %c0_8 = arith.constant 0 : index
    %c0_9 = arith.constant 0 : index
    %c0_10 = arith.constant 0 : index
    %7 = vector.load %arg3[%c0_8, %c0_9, %c0_10] : memref<9x128x128xbf16, #tpu.memory_space<vmem>>, vector<1x128x128xbf16>
    %8 = vector.shape_cast %7 : vector<1x128x128xbf16> to vector<128x128xbf16>
    %cst_11 = arith.constant dense<0.000000e+00> : vector<288x128xf32>
    %9 = tpu.matmul %6, %8, %cst_11 {dimension_numbers = #tpu.dot_dimension_numbers<[1], [0], [0], [1], [0, 0, 1, 1], [], []>} : vector<288x128xbf16>, vector<128x128xbf16>, vector<288x128xf32> -> vector<288x128xf32>
    %c0_12 = arith.constant 0 : index
    %c1 = arith.constant 1 : index
    %c0_13 = arith.constant 0 : index
    %10 = vector.load %arg1[%c0_12, %c1, %c0_13] : memref<1x336x128xbf16, #tpu.memory_space<vmem>>, vector<1x288x128xbf16>
    %11 = vector.shape_cast %10 : vector<1x288x128xbf16> to vector<288x128xbf16>
    %c1_14 = arith.constant 1 : index
    %c0_15 = arith.constant 0 : index
    %c0_16 = arith.constant 0 : index
    %12 = vector.load %arg3[%c1_14, %c0_15, %c0_16] : memref<9x128x128xbf16, #tpu.memory_space<vmem>>, vector<1x128x128xbf16>
    %13 = vector.shape_cast %12 : vector<1x128x128xbf16> to vector<128x128xbf16>
    %cst_17 = arith.constant dense<0.000000e+00> : vector<288x128xf32>
    %14 = tpu.matmul %11, %13, %cst_17 {dimension_numbers = #tpu.dot_dimension_numbers<[1], [0], [0], [1], [0, 0, 1, 1], [], []>} : vector<288x128xbf16>, vector<128x128xbf16>, vector<288x128xf32> -> vector<288x128xf32>
    %15 = arith.addf %9, %14 : vector<288x128xf32>
    %c0_18 = arith.constant 0 : index
    %c2 = arith.constant 2 : index
    %c0_19 = arith.constant 0 : index
    %16 = vector.load %arg1[%c0_18, %c2, %c0_19] : memref<1x336x128xbf16, #tpu.memory_space<vmem>>, vector<1x288x128xbf16>
    %17 = vector.shape_cast %16 : vector<1x288x128xbf16> to vector<288x128xbf16>
    %c2_20 = arith.constant 2 : index
    %c0_21 = arith.constant 0 : index
    %c0_22 = arith.constant 0 : index
    %18 = vector.load %arg3[%c2_20, %c0_21, %c0_22] : memref<9x128x128xbf16, #tpu.memory_space<vmem>>, vector<1x128x128xbf16>
    %19 = vector.shape_cast %18 : vector<1x128x128xbf16> to vector<128x128xbf16>
    %cst_23 = arith.constant dense<0.000000e+00> : vector<288x128xf32>
    %20 = tpu.matmul %17, %19, %cst_23 {dimension_numbers = #tpu.dot_dimension_numbers<[1], [0], [0], [1], [0, 0, 1, 1], [], []>} : vector<288x128xbf16>, vector<128x128xbf16>, vector<288x128xf32> -> vector<288x128xf32>
    %21 = arith.addf %15, %20 : vector<288x128xf32>
    %c0_24 = arith.constant 0 : index
    %c18 = arith.constant 18 : index
    %c0_25 = arith.constant 0 : index
    %22 = vector.load %arg1[%c0_24, %c18, %c0_25] : memref<1x336x128xbf16, #tpu.memory_space<vmem>>, vector<1x288x128xbf16>
    %23 = vector.shape_cast %22 : vector<1x288x128xbf16> to vector<288x128xbf16>
    %c3 = arith.constant 3 : index
    %c0_26 = arith.constant 0 : index
    %c0_27 = arith.constant 0 : index
    %24 = vector.load %arg3[%c3, %c0_26, %c0_27] : memref<9x128x128xbf16, #tpu.memory_space<vmem>>, vector<1x128x128xbf16>
    %25 = vector.shape_cast %24 : vector<1x128x128xbf16> to vector<128x128xbf16>
    %cst_28 = arith.constant dense<0.000000e+00> : vector<288x128xf32>
    %26 = tpu.matmul %23, %25, %cst_28 {dimension_numbers = #tpu.dot_dimension_numbers<[1], [0], [0], [1], [0, 0, 1, 1], [], []>} : vector<288x128xbf16>, vector<128x128xbf16>, vector<288x128xf32> -> vector<288x128xf32>
    %27 = arith.addf %21, %26 : vector<288x128xf32>
    %c0_29 = arith.constant 0 : index
    %c19 = arith.constant 19 : index
    %c0_30 = arith.constant 0 : index
    %28 = vector.load %arg1[%c0_29, %c19, %c0_30] : memref<1x336x128xbf16, #tpu.memory_space<vmem>>, vector<1x288x128xbf16>
    %29 = vector.shape_cast %28 : vector<1x288x128xbf16> to vector<288x128xbf16>
    %c4 = arith.constant 4 : index
    %c0_31 = arith.constant 0 : index
    %c0_32 = arith.constant 0 : index
    %30 = vector.load %arg3[%c4, %c0_31, %c0_32] : memref<9x128x128xbf16, #tpu.memory_space<vmem>>, vector<1x128x128xbf16>
    %31 = vector.shape_cast %30 : vector<1x128x128xbf16> to vector<128x128xbf16>
    %cst_33 = arith.constant dense<0.000000e+00> : vector<288x128xf32>
    %32 = tpu.matmul %29, %31, %cst_33 {dimension_numbers = #tpu.dot_dimension_numbers<[1], [0], [0], [1], [0, 0, 1, 1], [], []>} : vector<288x128xbf16>, vector<128x128xbf16>, vector<288x128xf32> -> vector<288x128xf32>
    %33 = arith.addf %27, %32 : vector<288x128xf32>
    %c0_34 = arith.constant 0 : index
    %c20 = arith.constant 20 : index
    %c0_35 = arith.constant 0 : index
    %34 = vector.load %arg1[%c0_34, %c20, %c0_35] : memref<1x336x128xbf16, #tpu.memory_space<vmem>>, vector<1x288x128xbf16>
    %35 = vector.shape_cast %34 : vector<1x288x128xbf16> to vector<288x128xbf16>
    %c5 = arith.constant 5 : index
    %c0_36 = arith.constant 0 : index
    %c0_37 = arith.constant 0 : index
    %36 = vector.load %arg3[%c5, %c0_36, %c0_37] : memref<9x128x128xbf16, #tpu.memory_space<vmem>>, vector<1x128x128xbf16>
    %37 = vector.shape_cast %36 : vector<1x128x128xbf16> to vector<128x128xbf16>
    %cst_38 = arith.constant dense<0.000000e+00> : vector<288x128xf32>
    %38 = tpu.matmul %35, %37, %cst_38 {dimension_numbers = #tpu.dot_dimension_numbers<[1], [0], [0], [1], [0, 0, 1, 1], [], []>} : vector<288x128xbf16>, vector<128x128xbf16>, vector<288x128xf32> -> vector<288x128xf32>
    %39 = arith.addf %33, %38 : vector<288x128xf32>
    %c0_39 = arith.constant 0 : index
    %c36 = arith.constant 36 : index
    %c0_40 = arith.constant 0 : index
    %40 = vector.load %arg1[%c0_39, %c36, %c0_40] : memref<1x336x128xbf16, #tpu.memory_space<vmem>>, vector<1x288x128xbf16>
    %41 = vector.shape_cast %40 : vector<1x288x128xbf16> to vector<288x128xbf16>
    %c6 = arith.constant 6 : index
    %c0_41 = arith.constant 0 : index
    %c0_42 = arith.constant 0 : index
    %42 = vector.load %arg3[%c6, %c0_41, %c0_42] : memref<9x128x128xbf16, #tpu.memory_space<vmem>>, vector<1x128x128xbf16>
    %43 = vector.shape_cast %42 : vector<1x128x128xbf16> to vector<128x128xbf16>
    %cst_43 = arith.constant dense<0.000000e+00> : vector<288x128xf32>
    %44 = tpu.matmul %41, %43, %cst_43 {dimension_numbers = #tpu.dot_dimension_numbers<[1], [0], [0], [1], [0, 0, 1, 1], [], []>} : vector<288x128xbf16>, vector<128x128xbf16>, vector<288x128xf32> -> vector<288x128xf32>
    %45 = arith.addf %39, %44 : vector<288x128xf32>
    %c0_44 = arith.constant 0 : index
    %c37 = arith.constant 37 : index
    %c0_45 = arith.constant 0 : index
    %46 = vector.load %arg1[%c0_44, %c37, %c0_45] : memref<1x336x128xbf16, #tpu.memory_space<vmem>>, vector<1x288x128xbf16>
    %47 = vector.shape_cast %46 : vector<1x288x128xbf16> to vector<288x128xbf16>
    %c7 = arith.constant 7 : index
    %c0_46 = arith.constant 0 : index
    %c0_47 = arith.constant 0 : index
    %48 = vector.load %arg3[%c7, %c0_46, %c0_47] : memref<9x128x128xbf16, #tpu.memory_space<vmem>>, vector<1x128x128xbf16>
    %49 = vector.shape_cast %48 : vector<1x128x128xbf16> to vector<128x128xbf16>
    %cst_48 = arith.constant dense<0.000000e+00> : vector<288x128xf32>
    %50 = tpu.matmul %47, %49, %cst_48 {dimension_numbers = #tpu.dot_dimension_numbers<[1], [0], [0], [1], [0, 0, 1, 1], [], []>} : vector<288x128xbf16>, vector<128x128xbf16>, vector<288x128xf32> -> vector<288x128xf32>
    %51 = arith.addf %45, %50 : vector<288x128xf32>
    %c0_49 = arith.constant 0 : index
    %c38 = arith.constant 38 : index
    %c0_50 = arith.constant 0 : index
    %52 = vector.load %arg1[%c0_49, %c38, %c0_50] : memref<1x336x128xbf16, #tpu.memory_space<vmem>>, vector<1x288x128xbf16>
    %53 = vector.shape_cast %52 : vector<1x288x128xbf16> to vector<288x128xbf16>
    %c8 = arith.constant 8 : index
    %c0_51 = arith.constant 0 : index
    %c0_52 = arith.constant 0 : index
    %54 = vector.load %arg3[%c8, %c0_51, %c0_52] : memref<9x128x128xbf16, #tpu.memory_space<vmem>>, vector<1x128x128xbf16>
    %55 = vector.shape_cast %54 : vector<1x128x128xbf16> to vector<128x128xbf16>
    %cst_53 = arith.constant dense<0.000000e+00> : vector<288x128xf32>
    %56 = tpu.matmul %53, %55, %cst_53 {dimension_numbers = #tpu.dot_dimension_numbers<[1], [0], [0], [1], [0, 0, 1, 1], [], []>} : vector<288x128xbf16>, vector<128x128xbf16>, vector<288x128xf32> -> vector<288x128xf32>
    %57 = arith.addf %51, %56 : vector<288x128xf32>
    %c0_54 = arith.constant 0 : index
    %c0_55 = arith.constant 0 : index
    %58 = vector.load %arg4[%c0_54, %c0_55] : memref<1x128xf32, #tpu.memory_space<vmem>>, vector<1x128xf32>
    %59 = vector.broadcast %58 : vector<1x128xf32> to vector<288x128xf32>
    %60 = arith.addf %57, %59 : vector<288x128xf32>
    %cst_56 = arith.constant 0.000000e+00 : f32
    %61 = vector.broadcast %cst_56 : f32 to vector<288x128xf32>
    %62 = arith.maximumf %60, %61 : vector<288x128xf32>
    %63 = vector.broadcast %4 : vector<288x1xf32> to vector<288x128xf32>
    %64 = arith.mulf %62, %63 : vector<288x128xf32>
    %65 = arith.truncf %64 : vector<288x128xf32> to vector<288x128xbf16>
    %c32 = arith.constant 32 : index
    %c0_57 = arith.constant 0 : index
    %66 = vector.load %arg8[%c32, %c0_57] : memref<352x128xbf16, #tpu.memory_space<vmem>>, vector<288x128xbf16>
    tpu.vector_store %arg8[%c32, %c0_57], %65 {strides = array<i32>} : memref<352x128xbf16, #tpu.memory_space<vmem>>, vector<288x128xbf16>,
    %c13 = arith.constant 13 : index
    %c0_58 = arith.constant 0 : index
    %67 = vector.load %arg8[%c13, %c0_58] : memref<352x128xbf16, #tpu.memory_space<vmem>>, vector<288x128xbf16>
    %c0_59 = arith.constant 0 : index
    %c0_60 = arith.constant 0 : index
    %c0_61 = arith.constant 0 : index
    %68 = vector.load %arg5[%c0_59, %c0_60, %c0_61] : memref<9x128x128xbf16, #tpu.memory_space<vmem>>, vector<1x128x128xbf16>
    %69 = vector.shape_cast %68 : vector<1x128x128xbf16> to vector<128x128xbf16>
    %cst_62 = arith.constant dense<0.000000e+00> : vector<288x128xf32>
    %70 = tpu.matmul %67, %69, %cst_62 {dimension_numbers = #tpu.dot_dimension_numbers<[1], [0], [0], [1], [0, 0, 1, 1], [], []>} : vector<288x128xbf16>, vector<128x128xbf16>, vector<288x128xf32> -> vector<288x128xf32>
    %c14 = arith.constant 14 : index
    %c0_63 = arith.constant 0 : index
    %71 = vector.load %arg8[%c14, %c0_63] : memref<352x128xbf16, #tpu.memory_space<vmem>>, vector<288x128xbf16>
    %c1_64 = arith.constant 1 : index
    %c0_65 = arith.constant 0 : index
    %c0_66 = arith.constant 0 : index
    %72 = vector.load %arg5[%c1_64, %c0_65, %c0_66] : memref<9x128x128xbf16, #tpu.memory_space<vmem>>, vector<1x128x128xbf16>
    %73 = vector.shape_cast %72 : vector<1x128x128xbf16> to vector<128x128xbf16>
    %cst_67 = arith.constant dense<0.000000e+00> : vector<288x128xf32>
    %74 = tpu.matmul %71, %73, %cst_67 {dimension_numbers = #tpu.dot_dimension_numbers<[1], [0], [0], [1], [0, 0, 1, 1], [], []>} : vector<288x128xbf16>, vector<128x128xbf16>, vector<288x128xf32> -> vector<288x128xf32>
    %75 = arith.addf %70, %74 : vector<288x128xf32>
    %c15 = arith.constant 15 : index
    %c0_68 = arith.constant 0 : index
    %76 = vector.load %arg8[%c15, %c0_68] : memref<352x128xbf16, #tpu.memory_space<vmem>>, vector<288x128xbf16>
    %c2_69 = arith.constant 2 : index
    %c0_70 = arith.constant 0 : index
    %c0_71 = arith.constant 0 : index
    %77 = vector.load %arg5[%c2_69, %c0_70, %c0_71] : memref<9x128x128xbf16, #tpu.memory_space<vmem>>, vector<1x128x128xbf16>
    %78 = vector.shape_cast %77 : vector<1x128x128xbf16> to vector<128x128xbf16>
    %cst_72 = arith.constant dense<0.000000e+00> : vector<288x128xf32>
    %79 = tpu.matmul %76, %78, %cst_72 {dimension_numbers = #tpu.dot_dimension_numbers<[1], [0], [0], [1], [0, 0, 1, 1], [], []>} : vector<288x128xbf16>, vector<128x128xbf16>, vector<288x128xf32> -> vector<288x128xf32>
    %80 = arith.addf %75, %79 : vector<288x128xf32>
    %c31 = arith.constant 31 : index
    %c0_73 = arith.constant 0 : index
    %81 = vector.load %arg8[%c31, %c0_73] : memref<352x128xbf16, #tpu.memory_space<vmem>>, vector<288x128xbf16>
    %c3_74 = arith.constant 3 : index
    %c0_75 = arith.constant 0 : index
    %c0_76 = arith.constant 0 : index
    %82 = vector.load %arg5[%c3_74, %c0_75, %c0_76] : memref<9x128x128xbf16, #tpu.memory_space<vmem>>, vector<1x128x128xbf16>
    %83 = vector.shape_cast %82 : vector<1x128x128xbf16> to vector<128x128xbf16>
    %cst_77 = arith.constant dense<0.000000e+00> : vector<288x128xf32>
    %84 = tpu.matmul %81, %83, %cst_77 {dimension_numbers = #tpu.dot_dimension_numbers<[1], [0], [0], [1], [0, 0, 1, 1], [], []>} : vector<288x128xbf16>, vector<128x128xbf16>, vector<288x128xf32> -> vector<288x128xf32>
    %85 = arith.addf %80, %84 : vector<288x128xf32>
    %c32_78 = arith.constant 32 : index
    %c0_79 = arith.constant 0 : index
    %86 = vector.load %arg8[%c32_78, %c0_79] : memref<352x128xbf16, #tpu.memory_space<vmem>>, vector<288x128xbf16>
    %c4_80 = arith.constant 4 : index
    %c0_81 = arith.constant 0 : index
    %c0_82 = arith.constant 0 : index
    %87 = vector.load %arg5[%c4_80, %c0_81, %c0_82] : memref<9x128x128xbf16, #tpu.memory_space<vmem>>, vector<1x128x128xbf16>
    %88 = vector.shape_cast %87 : vector<1x128x128xbf16> to vector<128x128xbf16>
    %cst_83 = arith.constant dense<0.000000e+00> : vector<288x128xf32>
    %89 = tpu.matmul %86, %88, %cst_83 {dimension_numbers = #tpu.dot_dimension_numbers<[1], [0], [0], [1], [0, 0, 1, 1], [], []>} : vector<288x128xbf16>, vector<128x128xbf16>, vector<288x128xf32> -> vector<288x128xf32>
    %90 = arith.addf %85, %89 : vector<288x128xf32>
    %c33 = arith.constant 33 : index
    %c0_84 = arith.constant 0 : index
    %91 = vector.load %arg8[%c33, %c0_84] : memref<352x128xbf16, #tpu.memory_space<vmem>>, vector<288x128xbf16>
    %c5_85 = arith.constant 5 : index
    %c0_86 = arith.constant 0 : index
    %c0_87 = arith.constant 0 : index
    %92 = vector.load %arg5[%c5_85, %c0_86, %c0_87] : memref<9x128x128xbf16, #tpu.memory_space<vmem>>, vector<1x128x128xbf16>
    %93 = vector.shape_cast %92 : vector<1x128x128xbf16> to vector<128x128xbf16>
    %cst_88 = arith.constant dense<0.000000e+00> : vector<288x128xf32>
    %94 = tpu.matmul %91, %93, %cst_88 {dimension_numbers = #tpu.dot_dimension_numbers<[1], [0], [0], [1], [0, 0, 1, 1], [], []>} : vector<288x128xbf16>, vector<128x128xbf16>, vector<288x128xf32> -> vector<288x128xf32>
    %95 = arith.addf %90, %94 : vector<288x128xf32>
    %c49 = arith.constant 49 : index
    %c0_89 = arith.constant 0 : index
    %96 = vector.load %arg8[%c49, %c0_89] : memref<352x128xbf16, #tpu.memory_space<vmem>>, vector<288x128xbf16>
    %c6_90 = arith.constant 6 : index
    %c0_91 = arith.constant 0 : index
    %c0_92 = arith.constant 0 : index
    %97 = vector.load %arg5[%c6_90, %c0_91, %c0_92] : memref<9x128x128xbf16, #tpu.memory_space<vmem>>, vector<1x128x128xbf16>
    %98 = vector.shape_cast %97 : vector<1x128x128xbf16> to vector<128x128xbf16>
    %cst_93 = arith.constant dense<0.000000e+00> : vector<288x128xf32>
    %99 = tpu.matmul %96, %98, %cst_93 {dimension_numbers = #tpu.dot_dimension_numbers<[1], [0], [0], [1], [0, 0, 1, 1], [], []>} : vector<288x128xbf16>, vector<128x128xbf16>, vector<288x128xf32> -> vector<288x128xf32>
    %100 = arith.addf %95, %99 : vector<288x128xf32>
    %c50 = arith.constant 50 : index
    %c0_94 = arith.constant 0 : index
    %101 = vector.load %arg8[%c50, %c0_94] : memref<352x128xbf16, #tpu.memory_space<vmem>>, vector<288x128xbf16>
    %c7_95 = arith.constant 7 : index
    %c0_96 = arith.constant 0 : index
    %c0_97 = arith.constant 0 : index
    %102 = vector.load %arg5[%c7_95, %c0_96, %c0_97] : memref<9x128x128xbf16, #tpu.memory_space<vmem>>, vector<1x128x128xbf16>
    %103 = vector.shape_cast %102 : vector<1x128x128xbf16> to vector<128x128xbf16>
    %cst_98 = arith.constant dense<0.000000e+00> : vector<288x128xf32>
    %104 = tpu.matmul %101, %103, %cst_98 {dimension_numbers = #tpu.dot_dimension_numbers<[1], [0], [0], [1], [0, 0, 1, 1], [], []>} : vector<288x128xbf16>, vector<128x128xbf16>, vector<288x128xf32> -> vector<288x128xf32>
    %105 = arith.addf %100, %104 : vector<288x128xf32>
    %c51 = arith.constant 51 : index
    %c0_99 = arith.constant 0 : index
    %106 = vector.load %arg8[%c51, %c0_99] : memref<352x128xbf16, #tpu.memory_space<vmem>>, vector<288x128xbf16>
    %c8_100 = arith.constant 8 : index
    %c0_101 = arith.constant 0 : index
    %c0_102 = arith.constant 0 : index
    %107 = vector.load %arg5[%c8_100, %c0_101, %c0_102] : memref<9x128x128xbf16, #tpu.memory_space<vmem>>, vector<1x128x128xbf16>
    %108 = vector.shape_cast %107 : vector<1x128x128xbf16> to vector<128x128xbf16>
    %cst_103 = arith.constant dense<0.000000e+00> : vector<288x128xf32>
    %109 = tpu.matmul %106, %108, %cst_103 {dimension_numbers = #tpu.dot_dimension_numbers<[1], [0], [0], [1], [0, 0, 1, 1], [], []>} : vector<288x128xbf16>, vector<128x128xbf16>, vector<288x128xf32> -> vector<288x128xf32>
    %110 = arith.addf %105, %109 : vector<288x128xf32>
    %c0_104 = arith.constant 0 : index
    %c0_105 = arith.constant 0 : index
    %111 = vector.load %arg6[%c0_104, %c0_105] : memref<1x128xf32, #tpu.memory_space<vmem>>, vector<1x128xf32>
    %112 = vector.broadcast %111 : vector<1x128xf32> to vector<288x128xf32>
    %113 = arith.addf %110, %112 : vector<288x128xf32>
    %cst_106 = arith.constant 0.000000e+00 : f32
    %114 = vector.broadcast %cst_106 : f32 to vector<288x128xf32>
    %115 = arith.maximumf %113, %114 : vector<288x128xf32>
    %116 = arith.truncf %115 : vector<288x128xf32> to vector<288x128xbf16>
    %c0_107 = arith.constant 0 : index
    %c0_108 = arith.constant 0 : index
    %c0_109 = arith.constant 0 : index
    %117 = vector.load %arg7[%c0_107, %c0_108, %c0_109] : memref<1x288x128xbf16, #tpu.memory_space<vmem>>, vector<1x288x128xbf16>
    %118 = vector.shape_cast %117 : vector<1x288x128xbf16> to vector<288x128xbf16>
    %119 = vector.shape_cast %116 : vector<288x128xbf16> to vector<1x288x128xbf16>
    tpu.vector_store %arg7[%c0_107, %c0_108, %c0_109], %119 {strides = array<i32>} : memref<1x288x128xbf16, #tpu.memory_space<vmem>>, vector<1x288x128xbf16>,
    return
  }
  func.func @transform_0(%arg0: i32) -> (i32, i32, i32) {
    %c0_i32 = arith.constant 0 : i32
    %c0_i32_0 = arith.constant 0 : i32
    %c0_i32_1 = arith.constant 0 : i32
    return %arg0, %c0_i32, %c0_i32_0 : i32, i32, i32
  }
  func.func @transform_1(%arg0: i32) -> (i32, i32) {
    %c0_i32 = arith.constant 0 : i32
    %c0_i32_0 = arith.constant 0 : i32
    %c0_i32_1 = arith.constant 0 : i32
    return %c0_i32, %c0_i32_0 : i32, i32
  }
  func.func @transform_2(%arg0: i32) -> (i32, i32, i32) {
    %c0_i32 = arith.constant 0 : i32
    %c0_i32_0 = arith.constant 0 : i32
    %c0_i32_1 = arith.constant 0 : i32
    %c0_i32_2 = arith.constant 0 : i32
    return %c0_i32, %c0_i32_0, %c0_i32_1 : i32, i32, i32
  }
  func.func @transform_3(%arg0: i32) -> (i32, i32) {
    %c0_i32 = arith.constant 0 : i32
    %c0_i32_0 = arith.constant 0 : i32
    %c0_i32_1 = arith.constant 0 : i32
    return %c0_i32, %c0_i32_0 : i32, i32
  }
  func.func @transform_4(%arg0: i32) -> (i32, i32, i32) {
    %c0_i32 = arith.constant 0 : i32
    %c0_i32_0 = arith.constant 0 : i32
    %c0_i32_1 = arith.constant 0 : i32
    %c0_i32_2 = arith.constant 0 : i32
    return %c0_i32, %c0_i32_0, %c0_i32_1 : i32, i32, i32
  }
  func.func @transform_5(%arg0: i32) -> (i32, i32) {
    %c0_i32 = arith.constant 0 : i32
    %c0_i32_0 = arith.constant 0 : i32
    %c0_i32_1 = arith.constant 0 : i32
    return %c0_i32, %c0_i32_0 : i32, i32
  }
  func.func @transform_6(%arg0: i32) -> (i32, i32, i32) {
    %c0_i32 = arith.constant 0 : i32
    %c0_i32_0 = arith.constant 0 : i32
    %c0_i32_1 = arith.constant 0 : i32
    return %arg0, %c0_i32, %c0_i32_0 : i32, i32, i32
  }
}

</mosaic_0001>

<llo_original>
// kernel: simple_fuse_block_2d.1
$region0: #{simple_fuse_block_2d.1}
  #allocation0 [shape = 'u32[]', space=smem, size = 0x4, offset = 0x4, fixed_abs, tag = 'smem constant byte address 0x4 - core index']
  #allocation1 [shape = 'u32[144,128]{1,0:T(1,128)}', space=vmem, size = 0x12000, scoped, tag = 'internal scratch']
  #allocation2 [shape = 'bf16[352,128]{1,0:T(8,128)(2,1)}', space=vmem, size = 0x16000, scoped, tag = 'scratch operand']
  %s0 = inlined_call_operand.vmem [shape: bf16[2,336,128], index: 0, kind: input, shape index: {}]
  %s1 = inlined_call_operand.vmem [shape: f32[288,1], index: 1, kind: input, shape index: {}]
  %s2 = inlined_call_operand.vmem [shape: bf16[9,128,128], index: 2, kind: input, shape index: {}]
  %s3 = inlined_call_operand.vmem [shape: f32[1,128], index: 3, kind: input, shape index: {}]
  %s4 = inlined_call_operand.vmem [shape: bf16[9,128,128], index: 4, kind: input, shape index: {}]
  %s5 = inlined_call_operand.vmem [shape: f32[1,128], index: 5, kind: input, shape index: {}]
  %s6 = inlined_call_operand.vmem [shape: bf16[2,288,128], index: 6, kind: output, shape index: {}]
  %s7 = sld [smem:[#allocation0]]
  $region57: #{simple_fuse_block_2d.1} parent=0
    _
  %s9 = ssub.s32 1, %s7
  %s10 = scalar_select 0, %s9, %s7
  loop: start=0, step=1, limit=4
  $region2: #{simple_fuse_block_2d.1} parent=0 // loop_pre_header
    _
  $region3: #{simple_fuse_block_2d.1} parent=0 // loop_header
    %s12 = sphi 0, %s16
    %p13 = scmp.ge.s32.totalorder %s12, 4
    %s22 = sphi 0, %s24
    %s25 = sphi 0, %s22
    %s26 = sphi 0, %s25
    %s42 = sphi 0, %s26
    %s46 = sphi 0, %s46
    %s48 = sphi 0, %s46
    %s49 = sphi 0, %s48
    %s63 = sphi 0, %s49
    %s67 = sphi 0, %s67
    %s69 = sphi 0, %s67
    %s70 = sphi 0, %s69
    %s84 = sphi 0, %s70
    %s88 = sphi 0, %s88
    %s90 = sphi 0, %s88
    %s91 = sphi 0, %s90
    %s105 = sphi 0, %s91
    %s109 = sphi 0, %s109
    %s111 = sphi 0, %s109
    %s112 = sphi 0, %s111
    %s126 = sphi 0, %s112
    %s130 = sphi 0, %s130
    %s132 = sphi 0, %s130
    %s133 = sphi 0, %s132
    %s147 = sphi 0, %s133
    %s153 = sphi 0, %s155
    %s156 = sphi 0, %s153
    %s157 = sphi 0, %s156
    %s173 = sphi 0, %s157
  $region4: #{simple_fuse_block_2d.1} parent=0 // loop_header_branch
    %15 = sbr.rel (%p13) target = $region8
  $region5: #{simple_fuse_block_2d.1} parent=0 // loop_body
    %s17 = ssub.s32 %s12, 1
    %s18 = ssub.s32 %s12, 2
    %s19 = sadd.s32 %s12, 1
    %s20 = ssub.s32 %s12, %s19
    %p21 = scmp.eq.s32.totalorder %s20, 0
    %s23 = sadd.s32 %s22, 1
    %s24 = scalar_select %p21, %s22, %s23
    %p27 = pneg %p21
    %p28 = scmp.eq.s32.totalorder %s12, 1
    %p29 = por %p27, %p28
    %p30 = scmp.ne.s32.totalorder %s22, %s25
    %p31 = scmp.eq.s32.totalorder %s12, 0
    %p32 = por %p30, %p31
    %p33 = scmp.ne.s32.totalorder %s22, %s25
    %p34 = scmp.eq.s32.totalorder %s17, 1
    %p35 = por %p33, %p34
    %p36 = scmp.ne.s32.totalorder %s25, %s26
    %p37 = scmp.eq.s32.totalorder %s17, 0
    %p38 = por %p36, %p37
    %p39 = scmp.ne.s32.totalorder %s25, %s26
    %p40 = scmp.eq.s32.totalorder %s18, 1
    %p41 = por %p39, %p40
    %p43 = scmp.ne.s32.totalorder %s26, %s42
    %p44 = scmp.eq.s32.totalorder %s18, 0
    %p45 = por %p43, %p44
    %s47 = sadd.s32 %s46, 1
    %p50 = scmp.eq.s32.totalorder %s12, 1
    %p51 = scmp.ne.s32.totalorder %s46, %s48
    %p52 = scmp.eq.s32.totalorder %s12, 0
    %p53 = por %p51, %p52
    %p54 = scmp.ne.s32.totalorder %s46, %s48
    %p55 = scmp.eq.s32.totalorder %s17, 1
    %p56 = por %p54, %p55
    %p57 = scmp.ne.s32.totalorder %s48, %s49
    %p58 = scmp.eq.s32.totalorder %s17, 0
    %p59 = por %p57, %p58
    %p60 = scmp.ne.s32.totalorder %s48, %s49
    %p61 = scmp.eq.s32.totalorder %s18, 1
    %p62 = por %p60, %p61
    %p64 = scmp.ne.s32.totalorder %s49, %s63
    %p65 = scmp.eq.s32.totalorder %s18, 0
    %p66 = por %p64, %p65
    %s68 = sadd.s32 %s67, 1
    %p71 = scmp.eq.s32.totalorder %s12, 1
    %p72 = scmp.ne.s32.totalorder %s67, %s69
    %p73 = scmp.eq.s32.totalorder %s12, 0
    %p74 = por %p72, %p73
    %p75 = scmp.ne.s32.totalorder %s67, %s69
    %p76 = scmp.eq.s32.totalorder %s17, 1
    %p77 = por %p75, %p76
    %p78 = scmp.ne.s32.totalorder %s69, %s70
    %p79 = scmp.eq.s32.totalorder %s17, 0
    %p80 = por %p78, %p79
    %p81 = scmp.ne.s32.totalorder %s69, %s70
    %p82 = scmp.eq.s32.totalorder %s18, 1
    %p83 = por %p81, %p82
    %p85 = scmp.ne.s32.totalorder %s70, %s84
    %p86 = scmp.eq.s32.totalorder %s18, 0
    %p87 = por %p85, %p86
    %s89 = sadd.s32 %s88, 1
    %p92 = scmp.eq.s32.totalorder %s12, 1
    %p93 = scmp.ne.s32.totalorder %s88, %s90
    %p94 = scmp.eq.s32.totalorder %s12, 0
    %p95 = por %p93, %p94
    %p96 = scmp.ne.s32.totalorder %s88, %s90
    %p97 = scmp.eq.s32.totalorder %s17, 1
    %p98 = por %p96, %p97
    %p99 = scmp.ne.s32.totalorder %s90, %s91
    %p100 = scmp.eq.s32.totalorder %s17, 0
    %p101 = por %p99, %p100
    %p102 = scmp.ne.s32.totalorder %s90, %s91
    %p103 = scmp.eq.s32.totalorder %s18, 1
    %p104 = por %p102, %p103
    %p106 = scmp.ne.s32.totalorder %s91, %s105
    %p107 = scmp.eq.s32.totalorder %s18, 0
    %p108 = por %p106, %p107
    %s110 = sadd.s32 %s109, 1
    %p113 = scmp.eq.s32.totalorder %s12, 1
    %p114 = scmp.ne.s32.totalorder %s109, %s111
    %p115 = scmp.eq.s32.totalorder %s12, 0
    %p116 = por %p114, %p115
    %p117 = scmp.ne.s32.totalorder %s109, %s111
    %p118 = scmp.eq.s32.totalorder %s17, 1
    %p119 = por %p117, %p118
    %p120 = scmp.ne.s32.totalorder %s111, %s112
    %p121 = scmp.eq.s32.totalorder %s17, 0
    %p122 = por %p120, %p121
    %p123 = scmp.ne.s32.totalorder %s111, %s112
    %p124 = scmp.eq.s32.totalorder %s18, 1
    %p125 = por %p123, %p124
    %p127 = scmp.ne.s32.totalorder %s112, %s126
    %p128 = scmp.eq.s32.totalorder %s18, 0
    %p129 = por %p127, %p128
    %s131 = sadd.s32 %s130, 1
    %p134 = scmp.eq.s32.totalorder %s12, 1
    %p135 = scmp.ne.s32.totalorder %s130, %s132
    %p136 = scmp.eq.s32.totalorder %s12, 0
    %p137 = por %p135, %p136
    %p138 = scmp.ne.s32.totalorder %s130, %s132
    %p139 = scmp.eq.s32.totalorder %s17, 1
    %p140 = por %p138, %p139
    %p141 = scmp.ne.s32.totalorder %s132, %s133
    %p142 = scmp.eq.s32.totalorder %s17, 0
    %p143 = por %p141, %p142
    %p144 = scmp.ne.s32.totalorder %s132, %s133
    %p145 = scmp.eq.s32.totalorder %s18, 1
    %p146 = por %p144, %p145
    %p148 = scmp.ne.s32.totalorder %s133, %s147
    %p149 = scmp.eq.s32.totalorder %s18, 0
    %p150 = por %p148, %p149
    %s151 = ssub.s32 %s12, %s19
    %p152 = scmp.eq.s32.totalorder %s151, 0
    %s154 = sadd.s32 %s153, 1
    %s155 = scalar_select %p152, %s153, %s154
    %p158 = pneg %p152
    %p159 = scmp.eq.s32.totalorder %s12, 1
    %p160 = por %p158, %p159
    %p161 = scmp.ne.s32.totalorder %s153, %s156
    %p162 = scmp.eq.s32.totalorder %s12, 0
    %p163 = por %p161, %p162
    %p164 = scmp.ne.s32.totalorder %s153, %s156
    %p165 = scmp.eq.s32.totalorder %s17, 1
    %p166 = por %p164, %p165
    %p167 = scmp.ne.s32.totalorder %s156, %s157
    %p168 = scmp.eq.s32.totalorder %s17, 0
    %p169 = por %p167, %p168
    %p170 = scmp.ne.s32.totalorder %s156, %s157
    %p171 = scmp.eq.s32.totalorder %s18, 1
    %p172 = por %p170, %p171
    %p174 = scmp.ne.s32.totalorder %s157, %s173
    %p175 = scmp.eq.s32.totalorder %s18, 0
    %p176 = por %p174, %p175
    %p177 = scmp.le.s32.totalorder 1, %s12
    %p178 = scmp.lt.s32.totalorder %s12, 3
    %p179 = pnand %p177, %p178
    %p180 = pneg %p179
    // Predicated region
    $region9: #{simple_fuse_block_2d.1} parent=5 // pred_check
      _
    $region10: #{simple_fuse_block_2d.1} parent=5 // pred_check_branch
      %182 = sbr.rel (%p179) target = $region12
    $region11: #{simple_fuse_block_2d.1} parent=5 // pred_region
      %s183 = ssub.s32 %s12, 1
      // Predicated region
      $region13: #{simple_fuse_block_2d.1} parent=11 // pred_check
        %p184 = pneg %p59
      $region14: #{simple_fuse_block_2d.1} parent=11 // pred_check_branch
        %186 = sbr.rel (%p184) target = $region16
      $region15: #{simple_fuse_block_2d.1} parent=11 // pred_region
        _
      $region16: #{simple_fuse_block_2d.1} parent=11 // pred_fallthru
        _
      // Predicated region
      $region17: #{simple_fuse_block_2d.1} parent=11 // pred_check
        %p187 = pneg %p80
      $region18: #{simple_fuse_block_2d.1} parent=11 // pred_check_branch
        %189 = sbr.rel (%p187) target = $region20
      $region19: #{simple_fuse_block_2d.1} parent=11 // pred_region
        _
      $region20: #{simple_fuse_block_2d.1} parent=11 // pred_fallthru
        _
      // Predicated region
      $region21: #{simple_fuse_block_2d.1} parent=11 // pred_check
        %p190 = pneg %p101
      $region22: #{simple_fuse_block_2d.1} parent=11 // pred_check_branch
        %192 = sbr.rel (%p190) target = $region24
      $region23: #{simple_fuse_block_2d.1} parent=11 // pred_region
        _
      $region24: #{simple_fuse_block_2d.1} parent=11 // pred_fallthru
        _
      // Predicated region
      $region25: #{simple_fuse_block_2d.1} parent=11 // pred_check
        %p193 = pneg %p122
      $region26: #{simple_fuse_block_2d.1} parent=11 // pred_check_branch
        %195 = sbr.rel (%p193) target = $region28
      $region27: #{simple_fuse_block_2d.1} parent=11 // pred_region
        _
      $region28: #{simple_fuse_block_2d.1} parent=11 // pred_fallthru
        _
      // Predicated region
      $region29: #{simple_fuse_block_2d.1} parent=11 // pred_check
        %p196 = pneg %p143
      $region30: #{simple_fuse_block_2d.1} parent=11 // pred_check_branch
        %198 = sbr.rel (%p196) target = $region32
      $region31: #{simple_fuse_block_2d.1} parent=11 // pred_region
        _
      $region32: #{simple_fuse_block_2d.1} parent=11 // pred_fallthru
        _
    $region12: #{simple_fuse_block_2d.1} parent=5 // pred_fallthru
      _
    %p199 = scmp.lt.s32.totalorder %s12, 2
    // Predicated region
    $region33: #{simple_fuse_block_2d.1} parent=5 // pred_check
      %p200 = pneg %p199
    $region34: #{simple_fuse_block_2d.1} parent=5 // pred_check_branch
      %202 = sbr.rel (%p200) target = $region36
    $region35: #{simple_fuse_block_2d.1} parent=5 // pred_region
      // Predicated region
      $region37: #{simple_fuse_block_2d.1} parent=35 // pred_check
        %p203 = pneg %p32
      $region38: #{simple_fuse_block_2d.1} parent=35 // pred_check_branch
        %205 = sbr.rel (%p203) target = $region40
      $region39: #{simple_fuse_block_2d.1} parent=35 // pred_region
        %p206 = scmp.lt.s32.totalorder %s12, 1
        %s207 = scalar_select %p206, %s12, 1
        %s208 = smul.addr %s207, 42
        %s209 = smul.addr %s208, 4
        %s210 = scalar_lea.vmem %s0, %s209
      $region40: #{simple_fuse_block_2d.1} parent=35 // pred_fallthru
        _
    $region36: #{simple_fuse_block_2d.1} parent=5 // pred_fallthru
      _
    %p211 = scmp.le.s32.totalorder 1, %s12
    %p212 = scmp.lt.s32.totalorder %s12, 3
    %p213 = pnand %p211, %p212
    %p214 = pneg %p213
    // Predicated region
    $region41: #{simple_fuse_block_2d.1} parent=5 // pred_check
      _
    $region42: #{simple_fuse_block_2d.1} parent=5 // pred_check_branch
      %216 = sbr.rel (%p213) target = $region44
    $region43: #{simple_fuse_block_2d.1} parent=5 // pred_region
      %s217 = ssub.s32 %s12, 1
      %p218 = scmp.lt.s32.totalorder %s17, 1
      %s219 = scalar_select %p218, %s17, 1
      %s220 = smul.addr %s219, 42
      %s221 = smul.addr %s220, 4
      %s222 = scalar_lea.vmem %s0, %s221
      %p223 = pneg %p38
      %p224 = pneg %p35
      %p225 = pneg %p59
      %p226 = pneg %p56
      %p227 = pneg %p80
      %p228 = pneg %p77
      %p229 = pneg %p101
      %p230 = pneg %p98
      %p231 = pneg %p122
      %p232 = pneg %p119
      %p233 = pneg %p143
      %p234 = pneg %p140
      %p235 = pneg %p169
      %p236 = pneg %p166
      %p237 = scmp.lt.s32.totalorder %s17, 1
      %s238 = scalar_select %p237, %s17, 1
      %s239 = smul.addr %s238, 36
      %s240 = smul.addr %s239, 4
      %s241 = scalar_lea.vmem %s6, %s240
      %p242 = scmp.lt.s32.totalorder %s17, 1
      %s243 = scalar_select %p242, %s17, 1
      %s244 = smul.addr %s243, 42
      %s245 = smul.addr %s244, 4
      %s246 = scalar_lea.vmem %s0, %s245
      %p247 = scmp.lt.s32.totalorder %s17, 1
      %s248 = scalar_select %p247, %s17, 1
      %s249 = smul.addr %s248, 36
      %s250 = smul.addr %s249, 4
      %s251 = scalar_lea.vmem %s6, %s250
      %253 = vst [vmem:[#allocation2] sm:$0xf] 0
      %254 = vst [vmem:[#allocation2 + $0x4] sm:$0xf] 0
      %255 = vst [vmem:[#allocation2 + $0x8] sm:$0xf] 0
      %256 = vst [vmem:[#allocation2 + $0xc] sm:$0xf] 0
      %257 = vst [vmem:[#allocation2 + $0xa0] sm:$0xf] 0
      %258 = vst [vmem:[#allocation2 + $0xa4] sm:$0xf] 0
      %259 = vst [vmem:[#allocation2 + $0xa8] sm:$0xf] 0
      %260 = vst [vmem:[#allocation2 + $0xac] sm:$0xf] 0
      %v261 = vld [vmem:[%s1] sm:$0xff]
      %v262 = vld [vmem:[%s1 + $0x8] sm:$0xff]
      %v263 = vld [vmem:[%s1 + $0x10] sm:$0xff]
      %v264 = vld [vmem:[%s1 + $0x18] sm:$0xff]
      %v265 = vld [vmem:[%s1 + $0x20] sm:$0xff]
      %v266 = vld [vmem:[%s1 + $0x28] sm:$0xff]
      %v267 = vld [vmem:[%s1 + $0x30] sm:$0xff]
      %v268 = vld [vmem:[%s1 + $0x38] sm:$0xff]
      %v269 = vld [vmem:[%s1 + $0x40] sm:$0xff]
      %v270 = vld [vmem:[%s1 + $0x48] sm:$0xff]
      %v271 = vld [vmem:[%s1 + $0x50] sm:$0xff]
      %v272 = vld [vmem:[%s1 + $0x58] sm:$0xff]
      %v273 = vld [vmem:[%s1 + $0x60] sm:$0xff]
      %v274 = vld [vmem:[%s1 + $0x68] sm:$0xff]
      %v275 = vld [vmem:[%s1 + $0x70] sm:$0xff]
      %v276 = vld [vmem:[%s1 + $0x78] sm:$0xff]
      %v277 = vld [vmem:[%s1 + $0x80] sm:$0xff]
      %v278 = vld [vmem:[%s1 + $0x88] sm:$0xff]
      %v279 = vld [vmem:[%s1 + $0x90] sm:$0xff]
      %v280 = vld [vmem:[%s1 + $0x98] sm:$0xff]
      %v281 = vld [vmem:[%s1 + $0xa0] sm:$0xff]
      %v282 = vld [vmem:[%s1 + $0xa8] sm:$0xff]
      %v283 = vld [vmem:[%s1 + $0xb0] sm:$0xff]
      %v284 = vld [vmem:[%s1 + $0xb8] sm:$0xff]
      %v285 = vld [vmem:[%s1 + $0xc0] sm:$0xff]
      %v286 = vld [vmem:[%s1 + $0xc8] sm:$0xff]
      %v287 = vld [vmem:[%s1 + $0xd0] sm:$0xff]
      %v288 = vld [vmem:[%s1 + $0xd8] sm:$0xff]
      %v289 = vld [vmem:[%s1 + $0xe0] sm:$0xff]
      %v290 = vld [vmem:[%s1 + $0xe8] sm:$0xff]
      %v291 = vld [vmem:[%s1 + $0xf0] sm:$0xff]
      %v292 = vld [vmem:[%s1 + $0xf8] sm:$0xff]
      %v293 = vld [vmem:[%s1 + $0x100] sm:$0xff]
      %v294 = vld [vmem:[%s1 + $0x108] sm:$0xff]
      %v295 = vld [vmem:[%s1 + $0x110] sm:$0xff]
      %v296 = vld [vmem:[%s1 + $0x118] sm:$0xff]
      %v297 = vld [vmem:[%s246] sm:$0xf]
      %v298 = vld [vmem:[%s246 + $0x4] sm:$0xf]
      %v299 = vld [vmem:[%s246 + $0x8] sm:$0xf]
      %v300 = vld [vmem:[%s246 + $0xc] sm:$0xf]
      %v301 = vld [vmem:[%s246 + $0x10] sm:$0xf]
      %v302 = vld [vmem:[%s246 + $0x14] sm:$0xf]
      %v303 = vld [vmem:[%s246 + $0x18] sm:$0xf]
      %v304 = vld [vmem:[%s246 + $0x1c] sm:$0xf]
      %v305 = vld [vmem:[%s246 + $0x20] sm:$0xf]
      %v306 = vld [vmem:[%s246 + $0x24] sm:$0xf]
      %v307 = vld [vmem:[%s246 + $0x28] sm:$0xf]
      %v308 = vld [vmem:[%s246 + $0x2c] sm:$0xf]
      %v309 = vld [vmem:[%s246 + $0x30] sm:$0xf]
      %v310 = vld [vmem:[%s246 + $0x34] sm:$0xf]
      %v311 = vld [vmem:[%s246 + $0x38] sm:$0xf]
      %v312 = vld [vmem:[%s246 + $0x3c] sm:$0xf]
      %v313 = vld [vmem:[%s246 + $0x40] sm:$0xf]
      %v314 = vld [vmem:[%s246 + $0x44] sm:$0xf]
      %v315 = vld [vmem:[%s246 + $0x48] sm:$0xf]
      %v316 = vld [vmem:[%s246 + $0x4c] sm:$0xf]
      %v317 = vld [vmem:[%s246 + $0x50] sm:$0xf]
      %v318 = vld [vmem:[%s246 + $0x54] sm:$0xf]
      %v319 = vld [vmem:[%s246 + $0x58] sm:$0xf]
      %v320 = vld [vmem:[%s246 + $0x5c] sm:$0xf]
      %v321 = vld [vmem:[%s246 + $0x60] sm:$0xf]
      %v322 = vld [vmem:[%s246 + $0x64] sm:$0xf]
      %v323 = vld [vmem:[%s246 + $0x68] sm:$0xf]
      %v324 = vld [vmem:[%s246 + $0x6c] sm:$0xf]
      %v325 = vld [vmem:[%s246 + $0x70] sm:$0xf]
      %v326 = vld [vmem:[%s246 + $0x74] sm:$0xf]
      %v327 = vld [vmem:[%s246 + $0x78] sm:$0xf]
      %v328 = vld [vmem:[%s246 + $0x7c] sm:$0xf]
      %v329 = vld [vmem:[%s246 + $0x80] sm:$0xf]
      %v330 = vld [vmem:[%s246 + $0x84] sm:$0xf]
      %v331 = vld [vmem:[%s246 + $0x88] sm:$0xf]
      %v332 = vld [vmem:[%s246 + $0x8c] sm:$0xf]
      %v333 = vld [vmem:[%s2] sm:$0xf]
      %v334 = vld [vmem:[%s2 + $0x4] sm:$0xf]
      %v335 = vld [vmem:[%s2 + $0x8] sm:$0xf]
      %v336 = vld [vmem:[%s2 + $0xc] sm:$0xf]
      %v337 = vld [vmem:[%s2 + $0x10] sm:$0xf]
      %v338 = vld [vmem:[%s2 + $0x14] sm:$0xf]
      %v339 = vld [vmem:[%s2 + $0x18] sm:$0xf]
      %v340 = vld [vmem:[%s2 + $0x1c] sm:$0xf]
      %v341 = vld [vmem:[%s2 + $0x20] sm:$0xf]
      %v342 = vld [vmem:[%s2 + $0x24] sm:$0xf]
      %v343 = vld [vmem:[%s2 + $0x28] sm:$0xf]
      %v344 = vld [vmem:[%s2 + $0x2c] sm:$0xf]
      %v345 = vld [vmem:[%s2 + $0x30] sm:$0xf]
      %v346 = vld [vmem:[%s2 + $0x34] sm:$0xf]
      %v347 = vld [vmem:[%s2 + $0x38] sm:$0xf]
      %v348 = vld [vmem:[%s2 + $0x3c] sm:$0xf]
      %v349 = vld [vmem:[%s246 + $0x90] sm:$0x1]
      %s350 = scalar_lea.vmem %s2, 64
      %v351 = vld [vmem:[%s350] sm:$0xf]
      %v352 = vld [vmem:[%s350 + $0x4] sm:$0xf]
      %v353 = vld [vmem:[%s350 + $0x8] sm:$0xf]
      %v354 = vld [vmem:[%s350 + $0xc] sm:$0xf]
      %v355 = vld [vmem:[%s350 + $0x10] sm:$0xf]
      %v356 = vld [vmem:[%s350 + $0x14] sm:$0xf]
      %v357 = vld [vmem:[%s350 + $0x18] sm:$0xf]
      %v358 = vld [vmem:[%s350 + $0x1c] sm:$0xf]
      %v359 = vld [vmem:[%s350 + $0x20] sm:$0xf]
      %v360 = vld [vmem:[%s350 + $0x24] sm:$0xf]
      %v361 = vld [vmem:[%s350 + $0x28] sm:$0xf]
      %v362 = vld [vmem:[%s350 + $0x2c] sm:$0xf]
      %v363 = vld [vmem:[%s350 + $0x30] sm:$0xf]
      %v364 = vld [vmem:[%s350 + $0x34] sm:$0xf]
      %v365 = vld [vmem:[%s350 + $0x38] sm:$0xf]
      %v366 = vld [vmem:[%s350 + $0x3c] sm:$0xf]
      %v404 = vunpack.c.l.b16 %v297
      %v405 = vunpack.c.l.b16 %v298
      %v406 = vunpack.c.l.b16 %v299
      %v407 = vunpack.c.l.b16 %v300
      %v408 = vunpack.c.l.b16 %v301
      %v409 = vunpack.c.l.b16 %v302
      %v410 = vunpack.c.l.b16 %v303
      %v411 = vunpack.c.l.b16 %v304
      %v412 = vunpack.c.l.b16 %v305
      %v413 = vunpack.c.l.b16 %v306
      %v414 = vunpack.c.l.b16 %v307
      %v415 = vunpack.c.l.b16 %v308
      %v416 = vunpack.c.l.b16 %v309
      %v417 = vunpack.c.l.b16 %v310
      %v418 = vunpack.c.l.b16 %v311
      %v419 = vunpack.c.l.b16 %v312
      %v420 = vunpack.c.l.b16 %v313
      %v421 = vunpack.c.l.b16 %v314
      %v422 = vunpack.c.l.b16 %v315
      %v423 = vunpack.c.l.b16 %v316
      %v424 = vunpack.c.l.b16 %v317
      %v425 = vunpack.c.l.b16 %v318
      %v426 = vunpack.c.l.b16 %v319
      %v427 = vunpack.c.l.b16 %v320
      %v428 = vunpack.c.l.b16 %v321
      %v429 = vunpack.c.l.b16 %v322
      %v430 = vunpack.c.l.b16 %v323
      %v431 = vunpack.c.l.b16 %v324
      %v432 = vunpack.c.l.b16 %v325
      %v433 = vunpack.c.l.b16 %v326
      %v434 = vunpack.c.l.b16 %v327
      %v435 = vunpack.c.l.b16 %v328
      %v436 = vunpack.c.l.b16 %v329
      %v437 = vunpack.c.l.b16 %v330
      %v438 = vunpack.c.l.b16 %v331
      %v439 = vunpack.c.l.b16 %v332
      %v440 = vunpack.c.l.b16 %v349
      %v441 = vpack.c.b16 %v405, %v404
      %v442 = vpack.c.b16 %v407, %v406
      %v443 = vpack.c.b16 %v409, %v408
      %v444 = vpack.c.b16 %v411, %v410
      %v445 = vpack.c.b16 %v413, %v412
      %v446 = vpack.c.b16 %v415, %v414
      %v447 = vpack.c.b16 %v417, %v416
      %v448 = vpack.c.b16 %v419, %v418
      %v449 = vpack.c.b16 %v421, %v420
      %v450 = vpack.c.b16 %v423, %v422
      %v451 = vpack.c.b16 %v425, %v424
      %v452 = vpack.c.b16 %v427, %v426
      %v453 = vpack.c.b16 %v429, %v428
      %v454 = vpack.c.b16 %v431, %v430
      %v455 = vpack.c.b16 %v433, %v432
      %v456 = vpack.c.b16 %v435, %v434
      %v457 = vpack.c.b16 %v437, %v436
      %v458 = vpack.c.b16 %v439, %v438
      %v459 = vpack.c.b16 %v440, %v440
      %vm460 = vsmask.f32 7424
      %v462 = vshrl.u32 %v441, 16
      %v464 = vshll.u32 %v441, 16
      %v466 = vrot.slane %v464, 1
      %v467 = vor.u32 %v462, %v466
      %v469 = vshll.u32 %v442, 16
      %v471 = vrot.slane %v469, 1
      %v472 = vsel %vm460, %v467, %v471
      %v473 = vshrl.u32 %v442, 16
      %v475 = vor.u32 %v473, %v471
      %v477 = vshll.u32 %v443, 16
      %v479 = vrot.slane %v477, 1
      %v480 = vsel %vm460, %v475, %v479
      %v481 = vshrl.u32 %v443, 16
      %v483 = vor.u32 %v481, %v479
      %v485 = vshll.u32 %v444, 16
      %v487 = vrot.slane %v485, 1
      %v488 = vsel %vm460, %v483, %v487
      %v489 = vshrl.u32 %v444, 16
      %v491 = vor.u32 %v489, %v487
      %v493 = vshll.u32 %v445, 16
      %v495 = vrot.slane %v493, 1
      %v496 = vsel %vm460, %v491, %v495
      %v497 = vshrl.u32 %v445, 16
      %v499 = vor.u32 %v497, %v495
      %v501 = vshll.u32 %v446, 16
      %v503 = vrot.slane %v501, 1
      %v504 = vsel %vm460, %v499, %v503
      %v505 = vshrl.u32 %v446, 16
      %v507 = vor.u32 %v505, %v503
      %v509 = vshll.u32 %v447, 16
      %v511 = vrot.slane %v509, 1
      %v512 = vsel %vm460, %v507, %v511
      %v513 = vshrl.u32 %v447, 16
      %v515 = vor.u32 %v513, %v511
      %v517 = vshll.u32 %v448, 16
      %v519 = vrot.slane %v517, 1
      %v520 = vsel %vm460, %v515, %v519
      %v521 = vshrl.u32 %v448, 16
      %v523 = vor.u32 %v521, %v519
      %v525 = vshll.u32 %v449, 16
      %v527 = vrot.slane %v525, 1
      %v528 = vsel %vm460, %v523, %v527
      %v529 = vshrl.u32 %v449, 16
      %v531 = vor.u32 %v529, %v527
      %v533 = vshll.u32 %v450, 16
      %v535 = vrot.slane %v533, 1
      %v536 = vsel %vm460, %v531, %v535
      %v537 = vshrl.u32 %v450, 16
      %v539 = vor.u32 %v537, %v535
      %v541 = vshll.u32 %v451, 16
      %v543 = vrot.slane %v541, 1
      %v544 = vsel %vm460, %v539, %v543
      %v545 = vshrl.u32 %v451, 16
      %v547 = vor.u32 %v545, %v543
      %v549 = vshll.u32 %v452, 16
      %v551 = vrot.slane %v549, 1
      %v552 = vsel %vm460, %v547, %v551
      %v553 = vshrl.u32 %v452, 16
      %v555 = vor.u32 %v553, %v551
      %v557 = vshll.u32 %v453, 16
      %v559 = vrot.slane %v557, 1
      %v560 = vsel %vm460, %v555, %v559
      %v561 = vshrl.u32 %v453, 16
      %v563 = vor.u32 %v561, %v559
      %v565 = vshll.u32 %v454, 16
      %v567 = vrot.slane %v565, 1
      %v568 = vsel %vm460, %v563, %v567
      %v569 = vshrl.u32 %v454, 16
      %v571 = vor.u32 %v569, %v567
      %v573 = vshll.u32 %v455, 16
      %v575 = vrot.slane %v573, 1
      %v576 = vsel %vm460, %v571, %v575
      %v577 = vshrl.u32 %v455, 16
      %v579 = vor.u32 %v577, %v575
      %v581 = vshll.u32 %v456, 16
      %v583 = vrot.slane %v581, 1
      %v584 = vsel %vm460, %v579, %v583
      %v585 = vshrl.u32 %v456, 16
      %v587 = vor.u32 %v585, %v583
      %v589 = vshll.u32 %v457, 16
      %v591 = vrot.slane %v589, 1
      %v592 = vsel %vm460, %v587, %v591
      %v593 = vshrl.u32 %v457, 16
      %v595 = vor.u32 %v593, %v591
      %v597 = vshll.u32 %v458, 16
      %v599 = vrot.slane %v597, 1
      %v600 = vsel %vm460, %v595, %v599
      %v601 = vshrl.u32 %v458, 16
      %v603 = vor.u32 %v601, %v599
      %v605 = vshll.u32 %v459, 16
      %v607 = vrot.slane %v605, 1
      %v608 = vsel %vm460, %v603, %v607
      %v643 = vunpack.c.l.b16 %v351
      %v644 = vunpack.c.l.b16 %v352
      %v645 = vunpack.c.l.b16 %v353
      %v646 = vunpack.c.l.b16 %v354
      %v647 = vunpack.c.l.b16 %v355
      %v648 = vunpack.c.l.b16 %v356
      %v649 = vunpack.c.l.b16 %v357
      %v650 = vunpack.c.l.b16 %v358
      %v651 = vunpack.c.l.b16 %v359
      %v652 = vunpack.c.l.b16 %v360
      %v653 = vunpack.c.l.b16 %v361
      %v654 = vunpack.c.l.b16 %v362
      %v655 = vunpack.c.l.b16 %v363
      %v656 = vunpack.c.l.b16 %v364
      %v657 = vunpack.c.l.b16 %v365
      %v658 = vunpack.c.l.b16 %v366
      %v659 = vpack.c.b16 %v644, %v643
      %v660 = vpack.c.b16 %v646, %v645
      %v661 = vpack.c.b16 %v648, %v647
      %v662 = vpack.c.b16 %v650, %v649
      %v663 = vpack.c.b16 %v652, %v651
      %v664 = vpack.c.b16 %v654, %v653
      %v665 = vpack.c.b16 %v656, %v655
      %v666 = vpack.c.b16 %v658, %v657
      %675 = vmatprep.subr.bf16.mxu0 0
      %676 = vmatpush1.bf16.msra.mxu0 %v666
      %677 = vmatprep.subr.bf16.mxu0 0
      %678 = vmatpush1.bf16.msra.mxu0 %v665
      %679 = vmatprep.subr.bf16.mxu0 0
      %680 = vmatpush1.bf16.msra.mxu0 %v664
      %681 = vmatprep.subr.bf16.mxu0 0
      %682 = vmatpush1.bf16.msra.mxu0 %v663
      %683 = vmatprep.subr.bf16.mxu0 0
      %684 = vmatpush1.bf16.msra.mxu0 %v662
      %685 = vmatprep.subr.bf16.mxu0 0
      %686 = vmatpush1.bf16.msra.mxu0 %v661
      %687 = vmatprep.subr.bf16.mxu0 0
      %688 = vmatpush1.bf16.msra.mxu0 %v660
      %689 = vmatprep.subr.bf16.mxu0 0
      %690 = vmatpush1.bf16.msra.mxu0 %v659
      %691 = vmatprep.subr.bf16.mxu0 0
      %692 = vmatpush2.bf16.msra.mxu0 0
      %693 = vmatprep.subr.bf16.mxu0 0
      %694 = vmatpush2.bf16.msra.mxu0 0
      %695 = vmatprep.subr.bf16.mxu0 0
      %696 = vmatpush2.bf16.msra.mxu0 0
      %697 = vmatprep.subr.bf16.mxu0 0
      %698 = vmatpush2.bf16.msra.mxu0 0
      %699 = vmatprep.subr.bf16.mxu0 0
      %700 = vmatpush2.bf16.msra.mxu0 0
      %701 = vmatprep.subr.bf16.mxu0 0
      %702 = vmatpush2.bf16.msra.mxu0 0
      %703 = vmatprep.subr.bf16.mxu0 0
      %704 = vmatpush2.bf16.msra.mxu0 0
      %705 = vmatprep.subr.bf16.mxu0 0
      %706 = vmatpush2.bf16.msra.mxu0 0
      %707 = vmatprep.mubr.bf16.mxu0 0
      %708 = vmatmul.mubr.bf16.gmra.mxu0 %v472
      %v709 = vpop.f32.mrf.mxu0
      %v710 = vadd.f32 0.0, %v709
      %v711 = vpop.f32.mrf.mxu0
      %v712 = vpop.f32.mrf.mxu0
      %v713 = vadd.f32 0.0, %v712
      %v714 = vpop.f32.mrf.mxu0
      %715 = vmatprep.mubr.bf16.mxu0 0
      %716 = vmatmul.mubr.bf16.gmra.mxu0 %v480
      %v717 = vpop.f32.mrf.mxu0
      %v718 = vadd.f32 0.0, %v717
      %v719 = vpop.f32.mrf.mxu0
      %v720 = vpop.f32.mrf.mxu0
      %v721 = vadd.f32 0.0, %v720
      %v722 = vpop.f32.mrf.mxu0
      %723 = vmatprep.mubr.bf16.mxu0 0
      %724 = vmatmul.mubr.bf16.gmra.mxu0 %v488
      %v725 = vpop.f32.mrf.mxu0
      %v726 = vadd.f32 0.0, %v725
      %v727 = vpop.f32.mrf.mxu0
      %v728 = vpop.f32.mrf.mxu0
      %v729 = vadd.f32 0.0, %v728
      %v730 = vpop.f32.mrf.mxu0
      %731 = vmatprep.mubr.bf16.mxu0 0
      %732 = vmatmul.mubr.bf16.gmra.mxu0 %v496
      %v733 = vpop.f32.mrf.mxu0
      %v734 = vadd.f32 0.0, %v733
      %v735 = vpop.f32.mrf.mxu0
      %v736 = vpop.f32.mrf.mxu0
      %v737 = vadd.f32 0.0, %v736
      %v738 = vpop.f32.mrf.mxu0
      %739 = vmatprep.mubr.bf16.mxu0 0
      %740 = vmatmul.mubr.bf16.gmra.mxu0 %v504
      %v741 = vpop.f32.mrf.mxu0
      %v742 = vadd.f32 0.0, %v741
      %v743 = vpop.f32.mrf.mxu0
      %v744 = vpop.f32.mrf.mxu0
      %v745 = vadd.f32 0.0, %v744
      %v746 = vpop.f32.mrf.mxu0
      %747 = vmatprep.mubr.bf16.mxu0 0
      %748 = vmatmul.mubr.bf16.gmra.mxu0 %v512
      %v749 = vpop.f32.mrf.mxu0
      %v750 = vadd.f32 0.0, %v749
      %v751 = vpop.f32.mrf.mxu0
      %v752 = vpop.f32.mrf.mxu0
      %v753 = vadd.f32 0.0, %v752
      %v754 = vpop.f32.mrf.mxu0
      %755 = vmatprep.mubr.bf16.mxu0 0
      %756 = vmatmul.mubr.bf16.gmra.mxu0 %v520
      %v757 = vpop.f32.mrf.mxu0
      %v758 = vadd.f32 0.0, %v757
      %v759 = vpop.f32.mrf.mxu0
      %v760 = vpop.f32.mrf.mxu0
      %v761 = vadd.f32 0.0, %v760
      %v762 = vpop.f32.mrf.mxu0
      %763 = vmatprep.mubr.bf16.mxu0 0
      %764 = vmatmul.mubr.bf16.gmra.mxu0 %v528
      %v765 = vpop.f32.mrf.mxu0
      %v766 = vadd.f32 0.0, %v765
      %v767 = vpop.f32.mrf.mxu0
      %v768 = vpop.f32.mrf.mxu0
      %v769 = vadd.f32 0.0, %v768
      %v770 = vpop.f32.mrf.mxu0
      %771 = vmatprep.mubr.bf16.mxu0 0
      %772 = vmatmul.mubr.bf16.gmra.mxu0 %v536
      %v773 = vpop.f32.mrf.mxu0
      %v774 = vadd.f32 0.0, %v773
      %v775 = vpop.f32.mrf.mxu0
      %v776 = vpop.f32.mrf.mxu0
      %v777 = vadd.f32 0.0, %v776
      %v778 = vpop.f32.mrf.mxu0
      %779 = vmatprep.mubr.bf16.mxu0 0
      %780 = vmatmul.mubr.bf16.gmra.mxu0 %v544
      %v781 = vpop.f32.mrf.mxu0
      %v782 = vadd.f32 0.0, %v781
      %v783 = vpop.f32.mrf.mxu0
      %v784 = vpop.f32.mrf.mxu0
      %v785 = vadd.f32 0.0, %v784
      %v786 = vpop.f32.mrf.mxu0
      %787 = vmatprep.mubr.bf16.mxu0 0
      %788 = vmatmul.mubr.bf16.gmra.mxu0 %v552
      %v789 = vpop.f32.mrf.mxu0
      %v790 = vadd.f32 0.0, %v789
      %v791 = vpop.f32.mrf.mxu0
      %v792 = vpop.f32.mrf.mxu0
      %v793 = vadd.f32 0.0, %v792
      %v794 = vpop.f32.mrf.mxu0
      %795 = vmatprep.mubr.bf16.mxu0 0
      %796 = vmatmul.mubr.bf16.gmra.mxu0 %v560
      %v797 = vpop.f32.mrf.mxu0
      %v798 = vadd.f32 0.0, %v797
      %v799 = vpop.f32.mrf.mxu0
      %v800 = vpop.f32.mrf.mxu0
      %v801 = vadd.f32 0.0, %v800
      %v802 = vpop.f32.mrf.mxu0
      %803 = vmatprep.mubr.bf16.mxu0 0
      %804 = vmatmul.mubr.bf16.gmra.mxu0 %v568
      %v805 = vpop.f32.mrf.mxu0
      %v806 = vadd.f32 0.0, %v805
      %v807 = vpop.f32.mrf.mxu0
      %v808 = vpop.f32.mrf.mxu0
      %v809 = vadd.f32 0.0, %v808
      %v810 = vpop.f32.mrf.mxu0
      %811 = vmatprep.mubr.bf16.mxu0 0
      %812 = vmatmul.mubr.bf16.gmra.mxu0 %v576
      %v813 = vpop.f32.mrf.mxu0
      %v814 = vadd.f32 0.0, %v813
      %v815 = vpop.f32.mrf.mxu0
      %v816 = vpop.f32.mrf.mxu0
      %v817 = vadd.f32 0.0, %v816
      %v818 = vpop.f32.mrf.mxu0
      %819 = vmatprep.mubr.bf16.mxu0 0
      %820 = vmatmul.mubr.bf16.gmra.mxu0 %v584
      %v821 = vpop.f32.mrf.mxu0
      %v822 = vadd.f32 0.0, %v821
      %v823 = vpop.f32.mrf.mxu0
      %v824 = vpop.f32.mrf.mxu0
      %v825 = vadd.f32 0.0, %v824
      %v826 = vpop.f32.mrf.mxu0
      %827 = vmatprep.mubr.bf16.mxu0 0
      %828 = vmatmul.mubr.bf16.gmra.mxu0 %v592
      %v829 = vpop.f32.mrf.mxu0
      %v830 = vadd.f32 0.0, %v829
      %v831 = vpop.f32.mrf.mxu0
      %v832 = vpop.f32.mrf.mxu0
      %v833 = vadd.f32 0.0, %v832
      %v834 = vpop.f32.mrf.mxu0
      %835 = vmatprep.mubr.bf16.mxu0 0
      %836 = vmatmul.mubr.bf16.gmra.mxu0 %v600
      %v837 = vpop.f32.mrf.mxu0
      %v838 = vadd.f32 0.0, %v837
      %v839 = vpop.f32.mrf.mxu0
      %v840 = vpop.f32.mrf.mxu0
      %v841 = vadd.f32 0.0, %v840
      %v842 = vpop.f32.mrf.mxu0
      %843 = vmatprep.mubr.bf16.mxu0 0
      %844 = vmatmul.mubr.bf16.gmra.mxu0 %v608
      %v845 = vpop.f32.mrf.mxu0
      %v846 = vadd.f32 0.0, %v845
      %v847 = vpop.f32.mrf.mxu0
      %v848 = vpop.f32.mrf.mxu0
      %v849 = vadd.f32 0.0, %v848
      %v850 = vpop.f32.mrf.mxu0
      %851 = vdwg.mxu0
      %v886 = vunpack.c.l.b16 %v333
      %v887 = vunpack.c.l.b16 %v334
      %v888 = vunpack.c.l.b16 %v335
      %v889 = vunpack.c.l.b16 %v336
      %v890 = vunpack.c.l.b16 %v337
      %v891 = vunpack.c.l.b16 %v338
      %v892 = vunpack.c.l.b16 %v339
      %v893 = vunpack.c.l.b16 %v340
      %v894 = vunpack.c.l.b16 %v341
      %v895 = vunpack.c.l.b16 %v342
      %v896 = vunpack.c.l.b16 %v343
      %v897 = vunpack.c.l.b16 %v344
      %v898 = vunpack.c.l.b16 %v345
      %v899 = vunpack.c.l.b16 %v346
      %v900 = vunpack.c.l.b16 %v347
      %v901 = vunpack.c.l.b16 %v348
      %v902 = vpack.c.b16 %v887, %v886
      %v903 = vpack.c.b16 %v889, %v888
      %v904 = vpack.c.b16 %v891, %v890
      %v905 = vpack.c.b16 %v893, %v892
      %v906 = vpack.c.b16 %v895, %v894
      %v907 = vpack.c.b16 %v897, %v896
      %v908 = vpack.c.b16 %v899, %v898
      %v909 = vpack.c.b16 %v901, %v900
      %918 = vmatprep.subr.bf16.mxu0 0
      %919 = vmatpush1.bf16.msra.mxu0 %v909
      %920 = vmatprep.subr.bf16.mxu0 0
      %921 = vmatpush1.bf16.msra.mxu0 %v908
      %922 = vmatprep.subr.bf16.mxu0 0
      %923 = vmatpush1.bf16.msra.mxu0 %v907
      %924 = vmatprep.subr.bf16.mxu0 0
      %925 = vmatpush1.bf16.msra.mxu0 %v906
      %926 = vmatprep.subr.bf16.mxu0 0
      %927 = vmatpush1.bf16.msra.mxu0 %v905
      %928 = vmatprep.subr.bf16.mxu0 0
      %929 = vmatpush1.bf16.msra.mxu0 %v904
      %930 = vmatprep.subr.bf16.mxu0 0
      %931 = vmatpush1.bf16.msra.mxu0 %v903
      %932 = vmatprep.subr.bf16.mxu0 0
      %933 = vmatpush1.bf16.msra.mxu0 %v902
      %934 = vmatprep.subr.bf16.mxu0 0
      %935 = vmatpush2.bf16.msra.mxu0 0
      %936 = vmatprep.subr.bf16.mxu0 0
      %937 = vmatpush2.bf16.msra.mxu0 0
      %938 = vmatprep.subr.bf16.mxu0 0
      %939 = vmatpush2.bf16.msra.mxu0 0
      %940 = vmatprep.subr.bf16.mxu0 0
      %941 = vmatpush2.bf16.msra.mxu0 0
      %942 = vmatprep.subr.bf16.mxu0 0
      %943 = vmatpush2.bf16.msra.mxu0 0
      %944 = vmatprep.subr.bf16.mxu0 0
      %945 = vmatpush2.bf16.msra.mxu0 0
      %946 = vmatprep.subr.bf16.mxu0 0
      %947 = vmatpush2.bf16.msra.mxu0 0
      %948 = vmatprep.subr.bf16.mxu0 0
      %949 = vmatpush2.bf16.msra.mxu0 0
      %950 = vmatprep.mubr.bf16.mxu0 0
      %951 = vmatmul.mubr.bf16.gmra.mxu0 %v441
      %v952 = vpop.f32.mrf.mxu0
      %v953 = vadd.f32 %v710, %v952
      %v954 = vpop.f32.mrf.mxu0
      %v955 = vpop.f32.mrf.mxu0
      %v956 = vadd.f32 %v713, %v955
      %v957 = vpop.f32.mrf.mxu0
      %958 = vmatprep.mubr.bf16.mxu0 0
      %959 = vmatmul.mubr.bf16.gmra.mxu0 %v442
      %v960 = vpop.f32.mrf.mxu0
      %v961 = vadd.f32 %v718, %v960
      %v962 = vpop.f32.mrf.mxu0
      %v963 = vpop.f32.mrf.mxu0
      %v964 = vadd.f32 %v721, %v963
      %v965 = vpop.f32.mrf.mxu0
      %966 = vmatprep.mubr.bf16.mxu0 0
      %967 = vmatmul.mubr.bf16.gmra.mxu0 %v443
      %v968 = vpop.f32.mrf.mxu0
      %v969 = vadd.f32 %v726, %v968
      %v970 = vpop.f32.mrf.mxu0
      %v971 = vpop.f32.mrf.mxu0
      %v972 = vadd.f32 %v729, %v971
      %v973 = vpop.f32.mrf.mxu0
      %974 = vmatprep.mubr.bf16.mxu0 0
      %975 = vmatmul.mubr.bf16.gmra.mxu0 %v444
      %v976 = vpop.f32.mrf.mxu0
      %v977 = vadd.f32 %v734, %v976
      %v978 = vpop.f32.mrf.mxu0
      %v979 = vpop.f32.mrf.mxu0
      %v980 = vadd.f32 %v737, %v979
      %v981 = vpop.f32.mrf.mxu0
      %982 = vmatprep.mubr.bf16.mxu0 0
      %983 = vmatmul.mubr.bf16.gmra.mxu0 %v445
      %v984 = vpop.f32.mrf.mxu0
      %v985 = vadd.f32 %v742, %v984
      %v986 = vpop.f32.mrf.mxu0
      %v987 = vpop.f32.mrf.mxu0
      %v988 = vadd.f32 %v745, %v987
      %v989 = vpop.f32.mrf.mxu0
      %990 = vmatprep.mubr.bf16.mxu0 0
      %991 = vmatmul.mubr.bf16.gmra.mxu0 %v446
      %v992 = vpop.f32.mrf.mxu0
      %v993 = vadd.f32 %v750, %v992
      %v994 = vpop.f32.mrf.mxu0
      %v995 = vpop.f32.mrf.mxu0
      %v996 = vadd.f32 %v753, %v995
      %v997 = vpop.f32.mrf.mxu0
      %998 = vmatprep.mubr.bf16.mxu0 0
      %999 = vmatmul.mubr.bf16.gmra.mxu0 %v447
      %v1000 = vpop.f32.mrf.mxu0
      %v1001 = vadd.f32 %v758, %v1000
      %v1002 = vpop.f32.mrf.mxu0
      %v1003 = vpop.f32.mrf.mxu0
      %v1004 = vadd.f32 %v761, %v1003
      %v1005 = vpop.f32.mrf.mxu0
      %1006 = vmatprep.mubr.bf16.mxu0 0
      %1007 = vmatmul.mubr.bf16.gmra.mxu0 %v448
      %v1008 = vpop.f32.mrf.mxu0
      %v1009 = vadd.f32 %v766, %v1008
      %v1010 = vpop.f32.mrf.mxu0
      %v1011 = vpop.f32.mrf.mxu0
      %v1012 = vadd.f32 %v769, %v1011
      %v1013 = vpop.f32.mrf.mxu0
      %1014 = vmatprep.mubr.bf16.mxu0 0
      %1015 = vmatmul.mubr.bf16.gmra.mxu0 %v449
      %v1016 = vpop.f32.mrf.mxu0
      %v1017 = vadd.f32 %v774, %v1016
      %v1018 = vpop.f32.mrf.mxu0
      %v1019 = vpop.f32.mrf.mxu0
      %v1020 = vadd.f32 %v777, %v1019
      %v1021 = vpop.f32.mrf.mxu0
      %1022 = vmatprep.mubr.bf16.mxu0 0
      %1023 = vmatmul.mubr.bf16.gmra.mxu0 %v450
      %v1024 = vpop.f32.mrf.mxu0
      %v1025 = vadd.f32 %v782, %v1024
      %v1026 = vpop.f32.mrf.mxu0
      %v1027 = vpop.f32.mrf.mxu0
      %v1028 = vadd.f32 %v785, %v1027
      %v1029 = vpop.f32.mrf.mxu0
      %1030 = vmatprep.mubr.bf16.mxu0 0
      %1031 = vmatmul.mubr.bf16.gmra.mxu0 %v451
      %v1032 = vpop.f32.mrf.mxu0
      %v1033 = vadd.f32 %v790, %v1032
      %v1034 = vpop.f32.mrf.mxu0
      %v1035 = vpop.f32.mrf.mxu0
      %v1036 = vadd.f32 %v793, %v1035
      %v1037 = vpop.f32.mrf.mxu0
      %1038 = vmatprep.mubr.bf16.mxu0 0
      %1039 = vmatmul.mubr.bf16.gmra.mxu0 %v452
      %v1040 = vpop.f32.mrf.mxu0
      %v1041 = vadd.f32 %v798, %v1040
      %v1042 = vpop.f32.mrf.mxu0
      %v1043 = vpop.f32.mrf.mxu0
      %v1044 = vadd.f32 %v801, %v1043
      %v1045 = vpop.f32.mrf.mxu0
      %1046 = vmatprep.mubr.bf16.mxu0 0
      %1047 = vmatmul.mubr.bf16.gmra.mxu0 %v453
      %v1048 = vpop.f32.mrf.mxu0
      %v1049 = vadd.f32 %v806, %v1048
      %v1050 = vpop.f32.mrf.mxu0
      %v1051 = vpop.f32.mrf.mxu0
      %v1052 = vadd.f32 %v809, %v1051
      %v1053 = vpop.f32.mrf.mxu0
      %1054 = vmatprep.mubr.bf16.mxu0 0
      %1055 = vmatmul.mubr.bf16.gmra.mxu0 %v454
      %v1056 = vpop.f32.mrf.mxu0
      %v1057 = vadd.f32 %v814, %v1056
      %v1058 = vpop.f32.mrf.mxu0
      %v1059 = vpop.f32.mrf.mxu0
      %v1060 = vadd.f32 %v817, %v1059
      %v1061 = vpop.f32.mrf.mxu0
      %1062 = vmatprep.mubr.bf16.mxu0 0
      %1063 = vmatmul.mubr.bf16.gmra.mxu0 %v455
      %v1064 = vpop.f32.mrf.mxu0
      %v1065 = vadd.f32 %v822, %v1064
      %v1066 = vpop.f32.mrf.mxu0
      %v1067 = vpop.f32.mrf.mxu0
      %v1068 = vadd.f32 %v825, %v1067
      %v1069 = vpop.f32.mrf.mxu0
      %1070 = vmatprep.mubr.bf16.mxu0 0
      %1071 = vmatmul.mubr.bf16.gmra.mxu0 %v456
      %v1072 = vpop.f32.mrf.mxu0
      %v1073 = vadd.f32 %v830, %v1072
      %v1074 = vpop.f32.mrf.mxu0
      %v1075 = vpop.f32.mrf.mxu0
      %v1076 = vadd.f32 %v833, %v1075
      %v1077 = vpop.f32.mrf.mxu0
      %1078 = vmatprep.mubr.bf16.mxu0 0
      %1079 = vmatmul.mubr.bf16.gmra.mxu0 %v457
      %v1080 = vpop.f32.mrf.mxu0
      %v1081 = vadd.f32 %v838, %v1080
      %v1082 = vpop.f32.mrf.mxu0
      %v1083 = vpop.f32.mrf.mxu0
      %v1084 = vadd.f32 %v841, %v1083
      %v1085 = vpop.f32.mrf.mxu0
      %1086 = vmatprep.mubr.bf16.mxu0 0
      %1087 = vmatmul.mubr.bf16.gmra.mxu0 %v458
      %v1088 = vpop.f32.mrf.mxu0
      %v1089 = vadd.f32 %v846, %v1088
      %v1090 = vpop.f32.mrf.mxu0
      %v1091 = vpop.f32.mrf.mxu0
      %v1092 = vadd.f32 %v849, %v1091
      %v1093 = vpop.f32.mrf.mxu0
      %1094 = vdwg.mxu0
      %v1095 = vld [vmem:[%s246] sm:$0xe]
      %s1096 = scalar_lea.vmem %s2, 128
      %v1097 = vld [vmem:[%s1096] sm:$0xf]
      %v1098 = vld [vmem:[%s1096 + $0x4] sm:$0xf]
      %v1099 = vld [vmem:[%s1096 + $0x8] sm:$0xf]
      %v1100 = vld [vmem:[%s1096 + $0xc] sm:$0xf]
      %v1101 = vld [vmem:[%s1096 + $0x10] sm:$0xf]
      %v1102 = vld [vmem:[%s1096 + $0x14] sm:$0xf]
      %v1103 = vld [vmem:[%s1096 + $0x18] sm:$0xf]
      %v1104 = vld [vmem:[%s1096 + $0x1c] sm:$0xf]
      %v1105 = vld [vmem:[%s1096 + $0x20] sm:$0xf]
      %v1106 = vld [vmem:[%s1096 + $0x24] sm:$0xf]
      %v1107 = vld [vmem:[%s1096 + $0x28] sm:$0xf]
      %v1108 = vld [vmem:[%s1096 + $0x2c] sm:$0xf]
      %v1109 = vld [vmem:[%s1096 + $0x30] sm:$0xf]
      %v1110 = vld [vmem:[%s1096 + $0x34] sm:$0xf]
      %v1111 = vld [vmem:[%s1096 + $0x38] sm:$0xf]
      %v1112 = vld [vmem:[%s1096 + $0x3c] sm:$0xf]
      %v1114 = vunpack.c.l.b16 %v1095
      %v1115 = vpack.c.b16 %v405, %v1114
      %vm1116 = vcmask 1046528
      %v1117 = vrot.slane %v1115, 1
      %v1118 = vrot.slane %v442, 1
      %v1119 = vsel %vm1116, %v1117, %v1118
      %v1120 = vrot.slane %v443, 1
      %v1121 = vsel %vm1116, %v1118, %v1120
      %v1122 = vrot.slane %v444, 1
      %v1123 = vsel %vm1116, %v1120, %v1122
      %v1124 = vrot.slane %v445, 1
      %v1125 = vsel %vm1116, %v1122, %v1124
      %v1126 = vrot.slane %v446, 1
      %v1127 = vsel %vm1116, %v1124, %v1126
      %v1128 = vrot.slane %v447, 1
      %v1129 = vsel %vm1116, %v1126, %v1128
      %v1130 = vrot.slane %v448, 1
      %v1131 = vsel %vm1116, %v1128, %v1130
      %v1132 = vrot.slane %v449, 1
      %v1133 = vsel %vm1116, %v1130, %v1132
      %v1134 = vrot.slane %v450, 1
      %v1135 = vsel %vm1116, %v1132, %v1134
      %v1136 = vrot.slane %v451, 1
      %v1137 = vsel %vm1116, %v1134, %v1136
      %v1138 = vrot.slane %v452, 1
      %v1139 = vsel %vm1116, %v1136, %v1138
      %v1140 = vrot.slane %v453, 1
      %v1141 = vsel %vm1116, %v1138, %v1140
      %v1142 = vrot.slane %v454, 1
      %v1143 = vsel %vm1116, %v1140, %v1142
      %v1144 = vrot.slane %v455, 1
      %v1145 = vsel %vm1116, %v1142, %v1144
      %v1146 = vrot.slane %v456, 1
      %v1147 = vsel %vm1116, %v1144, %v1146
      %v1148 = vrot.slane %v457, 1
      %v1149 = vsel %vm1116, %v1146, %v1148
      %v1150 = vrot.slane %v458, 1
      %v1151 = vsel %vm1116, %v1148, %v1150
      %v1152 = vrot.slane %v459, 1
      %v1153 = vsel %vm1116, %v1150, %v1152
      %v1188 = vunpack.c.l.b16 %v1097
      %v1189 = vunpack.c.l.b16 %v1098
      %v1190 = vunpack.c.l.b16 %v1099
      %v1191 = vunpack.c.l.b16 %v1100
      %v1192 = vunpack.c.l.b16 %v1101
      %v1193 = vunpack.c.l.b16 %v1102
      %v1194 = vunpack.c.l.b16 %v1103
      %v1195 = vunpack.c.l.b16 %v1104
      %v1196 = vunpack.c.l.b16 %v1105
      %v1197 = vunpack.c.l.b16 %v1106
      %v1198 = vunpack.c.l.b16 %v1107
      %v1199 = vunpack.c.l.b16 %v1108
      %v1200 = vunpack.c.l.b16 %v1109
      %v1201 = vunpack.c.l.b16 %v1110
      %v1202 = vunpack.c.l.b16 %v1111
      %v1203 = vunpack.c.l.b16 %v1112
      %v1204 = vpack.c.b16 %v1189, %v1188
      %v1205 = vpack.c.b16 %v1191, %v1190
      %v1206 = vpack.c.b16 %v1193, %v1192
      %v1207 = vpack.c.b16 %v1195, %v1194
      %v1208 = vpack.c.b16 %v1197, %v1196
      %v1209 = vpack.c.b16 %v1199, %v1198
      %v1210 = vpack.c.b16 %v1201, %v1200
      %v1211 = vpack.c.b16 %v1203, %v1202
      %1220 = vmatprep.subr.bf16.mxu0 0
      %1221 = vmatpush1.bf16.msra.mxu0 %v1211
      %1222 = vmatprep.subr.bf16.mxu0 0
      %1223 = vmatpush1.bf16.msra.mxu0 %v1210
      %1224 = vmatprep.subr.bf16.mxu0 0
      %1225 = vmatpush1.bf16.msra.mxu0 %v1209
      %1226 = vmatprep.subr.bf16.mxu0 0
      %1227 = vmatpush1.bf16.msra.mxu0 %v1208
      %1228 = vmatprep.subr.bf16.mxu0 0
      %1229 = vmatpush1.bf16.msra.mxu0 %v1207
      %1230 = vmatprep.subr.bf16.mxu0 0
      %1231 = vmatpush1.bf16.msra.mxu0 %v1206
      %1232 = vmatprep.subr.bf16.mxu0 0
      %1233 = vmatpush1.bf16.msra.mxu0 %v1205
      %1234 = vmatprep.subr.bf16.mxu0 0
      %1235 = vmatpush1.bf16.msra.mxu0 %v1204
      %1236 = vmatprep.subr.bf16.mxu0 0
      %1237 = vmatpush2.bf16.msra.mxu0 0
      %1238 = vmatprep.subr.bf16.mxu0 0
      %1239 = vmatpush2.bf16.msra.mxu0 0
      %1240 = vmatprep.subr.bf16.mxu0 0
      %1241 = vmatpush2.bf16.msra.mxu0 0
      %1242 = vmatprep.subr.bf16.mxu0 0
      %1243 = vmatpush2.bf16.msra.mxu0 0
      %1244 = vmatprep.subr.bf16.mxu0 0
      %1245 = vmatpush2.bf16.msra.mxu0 0
      %1246 = vmatprep.subr.bf16.mxu0 0
      %1247 = vmatpush2.bf16.msra.mxu0 0
      %1248 = vmatprep.subr.bf16.mxu0 0
      %1249 = vmatpush2.bf16.msra.mxu0 0
      %1250 = vmatprep.subr.bf16.mxu0 0
      %1251 = vmatpush2.bf16.msra.mxu0 0
      %1252 = vmatprep.mubr.bf16.mxu0 0
      %1253 = vmatmul.mubr.bf16.gmra.mxu0 %v1119
      %v1254 = vpop.f32.mrf.mxu0
      %v1255 = vadd.f32 0.0, %v1254
      %v1256 = vpop.f32.mrf.mxu0
      %v1257 = vpop.f32.mrf.mxu0
      %v1258 = vadd.f32 0.0, %v1257
      %v1259 = vpop.f32.mrf.mxu0
      %1260 = vmatprep.mubr.bf16.mxu0 0
      %1261 = vmatmul.mubr.bf16.gmra.mxu0 %v1121
      %v1262 = vpop.f32.mrf.mxu0
      %v1263 = vadd.f32 0.0, %v1262
      %v1264 = vpop.f32.mrf.mxu0
      %v1265 = vpop.f32.mrf.mxu0
      %v1266 = vadd.f32 0.0, %v1265
      %v1267 = vpop.f32.mrf.mxu0
      %1268 = vmatprep.mubr.bf16.mxu0 0
      %1269 = vmatmul.mubr.bf16.gmra.mxu0 %v1123
      %v1270 = vpop.f32.mrf.mxu0
      %v1271 = vadd.f32 0.0, %v1270
      %v1272 = vpop.f32.mrf.mxu0
      %v1273 = vpop.f32.mrf.mxu0
      %v1274 = vadd.f32 0.0, %v1273
      %v1275 = vpop.f32.mrf.mxu0
      %1276 = vmatprep.mubr.bf16.mxu0 0
      %1277 = vmatmul.mubr.bf16.gmra.mxu0 %v1125
      %v1278 = vpop.f32.mrf.mxu0
      %v1279 = vadd.f32 0.0, %v1278
      %v1280 = vpop.f32.mrf.mxu0
      %v1281 = vpop.f32.mrf.mxu0
      %v1282 = vadd.f32 0.0, %v1281
      %v1283 = vpop.f32.mrf.mxu0
      %1284 = vmatprep.mubr.bf16.mxu0 0
      %1285 = vmatmul.mubr.bf16.gmra.mxu0 %v1127
      %v1286 = vpop.f32.mrf.mxu0
      %v1287 = vadd.f32 0.0, %v1286
      %v1288 = vpop.f32.mrf.mxu0
      %v1289 = vpop.f32.mrf.mxu0
      %v1290 = vadd.f32 0.0, %v1289
      %v1291 = vpop.f32.mrf.mxu0
      %1292 = vmatprep.mubr.bf16.mxu0 0
      %1293 = vmatmul.mubr.bf16.gmra.mxu0 %v1129
      %v1294 = vpop.f32.mrf.mxu0
      %v1295 = vadd.f32 0.0, %v1294
      %v1296 = vpop.f32.mrf.mxu0
      %v1297 = vpop.f32.mrf.mxu0
      %v1298 = vadd.f32 0.0, %v1297
      %v1299 = vpop.f32.mrf.mxu0
      %1300 = vmatprep.mubr.bf16.mxu0 0
      %1301 = vmatmul.mubr.bf16.gmra.mxu0 %v1131
      %v1302 = vpop.f32.mrf.mxu0
      %v1303 = vadd.f32 0.0, %v1302
      %v1304 = vpop.f32.mrf.mxu0
      %v1305 = vpop.f32.mrf.mxu0
      %v1306 = vadd.f32 0.0, %v1305
      %v1307 = vpop.f32.mrf.mxu0
      %1308 = vmatprep.mubr.bf16.mxu0 0
      %1309 = vmatmul.mubr.bf16.gmra.mxu0 %v1133
      %v1310 = vpop.f32.mrf.mxu0
      %v1311 = vadd.f32 0.0, %v1310
      %v1312 = vpop.f32.mrf.mxu0
      %v1313 = vpop.f32.mrf.mxu0
      %v1314 = vadd.f32 0.0, %v1313
      %v1315 = vpop.f32.mrf.mxu0
      %1316 = vmatprep.mubr.bf16.mxu0 0
      %1317 = vmatmul.mubr.bf16.gmra.mxu0 %v1135
      %v1318 = vpop.f32.mrf.mxu0
      %v1319 = vadd.f32 0.0, %v1318
      %v1320 = vpop.f32.mrf.mxu0
      %v1321 = vpop.f32.mrf.mxu0
      %v1322 = vadd.f32 0.0, %v1321
      %v1323 = vpop.f32.mrf.mxu0
      %1324 = vmatprep.mubr.bf16.mxu0 0
      %1325 = vmatmul.mubr.bf16.gmra.mxu0 %v1137
      %v1326 = vpop.f32.mrf.mxu0
      %v1327 = vadd.f32 0.0, %v1326
      %v1328 = vpop.f32.mrf.mxu0
      %v1329 = vpop.f32.mrf.mxu0
      %v1330 = vadd.f32 0.0, %v1329
      %v1331 = vpop.f32.mrf.mxu0
      %1332 = vmatprep.mubr.bf16.mxu0 0
      %1333 = vmatmul.mubr.bf16.gmra.mxu0 %v1139
      %v1334 = vpop.f32.mrf.mxu0
      %v1335 = vadd.f32 0.0, %v1334
      %v1336 = vpop.f32.mrf.mxu0
      %v1337 = vpop.f32.mrf.mxu0
      %v1338 = vadd.f32 0.0, %v1337
      %v1339 = vpop.f32.mrf.mxu0
      %1340 = vmatprep.mubr.bf16.mxu0 0
      %1341 = vmatmul.mubr.bf16.gmra.mxu0 %v1141
      %v1342 = vpop.f32.mrf.mxu0
      %v1343 = vadd.f32 0.0, %v1342
      %v1344 = vpop.f32.mrf.mxu0
      %v1345 = vpop.f32.mrf.mxu0
      %v1346 = vadd.f32 0.0, %v1345
      %v1347 = vpop.f32.mrf.mxu0
      %1348 = vmatprep.mubr.bf16.mxu0 0
      %1349 = vmatmul.mubr.bf16.gmra.mxu0 %v1143
      %v1350 = vpop.f32.mrf.mxu0
      %v1351 = vadd.f32 0.0, %v1350
      %v1352 = vpop.f32.mrf.mxu0
      %v1353 = vpop.f32.mrf.mxu0
      %v1354 = vadd.f32 0.0, %v1353
      %v1355 = vpop.f32.mrf.mxu0
      %1356 = vmatprep.mubr.bf16.mxu0 0
      %1357 = vmatmul.mubr.bf16.gmra.mxu0 %v1145
      %v1358 = vpop.f32.mrf.mxu0
      %v1359 = vadd.f32 0.0, %v1358
      %v1360 = vpop.f32.mrf.mxu0
      %v1361 = vpop.f32.mrf.mxu0
      %v1362 = vadd.f32 0.0, %v1361
      %v1363 = vpop.f32.mrf.mxu0
      %1364 = vmatprep.mubr.bf16.mxu0 0
      %1365 = vmatmul.mubr.bf16.gmra.mxu0 %v1147
      %v1366 = vpop.f32.mrf.mxu0
      %v1367 = vadd.f32 0.0, %v1366
      %v1368 = vpop.f32.mrf.mxu0
      %v1369 = vpop.f32.mrf.mxu0
      %v1370 = vadd.f32 0.0, %v1369
      %v1371 = vpop.f32.mrf.mxu0
      %1372 = vmatprep.mubr.bf16.mxu0 0
      %1373 = vmatmul.mubr.bf16.gmra.mxu0 %v1149
      %v1374 = vpop.f32.mrf.mxu0
      %v1375 = vadd.f32 0.0, %v1374
      %v1376 = vpop.f32.mrf.mxu0
      %v1377 = vpop.f32.mrf.mxu0
      %v1378 = vadd.f32 0.0, %v1377
      %v1379 = vpop.f32.mrf.mxu0
      %1380 = vmatprep.mubr.bf16.mxu0 0
      %1381 = vmatmul.mubr.bf16.gmra.mxu0 %v1151
      %v1382 = vpop.f32.mrf.mxu0
      %v1383 = vadd.f32 0.0, %v1382
      %v1384 = vpop.f32.mrf.mxu0
      %v1385 = vpop.f32.mrf.mxu0
      %v1386 = vadd.f32 0.0, %v1385
      %v1387 = vpop.f32.mrf.mxu0
      %1388 = vmatprep.mubr.bf16.mxu0 0
      %1389 = vmatmul.mubr.bf16.gmra.mxu0 %v1153
      %v1390 = vpop.f32.mrf.mxu0
      %v1391 = vadd.f32 0.0, %v1390
      %v1392 = vpop.f32.mrf.mxu0
      %v1393 = vpop.f32.mrf.mxu0
      %v1394 = vadd.f32 0.0, %v1393
      %v1395 = vpop.f32.mrf.mxu0
      %1396 = vdwg.mxu0
      %v1397 = vadd.f32 %v953, %v1255
      %v1398 = vadd.f32 %v956, %v1258
      %v1399 = vadd.f32 %v961, %v1263
      %v1400 = vadd.f32 %v964, %v1266
      %v1401 = vadd.f32 %v969, %v1271
      %v1402 = vadd.f32 %v972, %v1274
      %v1403 = vadd.f32 %v977, %v1279
      %v1404 = vadd.f32 %v980, %v1282
      %v1405 = vadd.f32 %v985, %v1287
      %v1406 = vadd.f32 %v988, %v1290
      %v1407 = vadd.f32 %v993, %v1295
      %v1408 = vadd.f32 %v996, %v1298
      %v1409 = vadd.f32 %v1001, %v1303
      %v1410 = vadd.f32 %v1004, %v1306
      %v1411 = vadd.f32 %v1009, %v1311
      %v1412 = vadd.f32 %v1012, %v1314
      %v1413 = vadd.f32 %v1017, %v1319
      %v1414 = vadd.f32 %v1020, %v1322
      %v1415 = vadd.f32 %v1025, %v1327
      %v1416 = vadd.f32 %v1028, %v1330
      %v1417 = vadd.f32 %v1033, %v1335
      %v1418 = vadd.f32 %v1036, %v1338
      %v1419 = vadd.f32 %v1041, %v1343
      %v1420 = vadd.f32 %v1044, %v1346
      %v1421 = vadd.f32 %v1049, %v1351
      %v1422 = vadd.f32 %v1052, %v1354
      %v1423 = vadd.f32 %v1057, %v1359
      %v1424 = vadd.f32 %v1060, %v1362
      %v1425 = vadd.f32 %v1065, %v1367
      %v1426 = vadd.f32 %v1068, %v1370
      %v1427 = vadd.f32 %v1073, %v1375
      %v1428 = vadd.f32 %v1076, %v1378
      %v1429 = vadd.f32 %v1081, %v1383
      %v1430 = vadd.f32 %v1084, %v1386
      %v1431 = vadd.f32 %v1089, %v1391
      %v1432 = vadd.f32 %v1092, %v1394
      %v1433 = vld [vmem:[%s246 + $0x8] sm:$0xe]
      %v1434 = vld [vmem:[%s246 + $0xc] sm:$0xf]
      %v1435 = vld [vmem:[%s246 + $0x10] sm:$0xf]
      %v1436 = vld [vmem:[%s246 + $0x14] sm:$0xf]
      %v1437 = vld [vmem:[%s246 + $0x18] sm:$0xf]
      %v1438 = vld [vmem:[%s246 + $0x1c] sm:$0xf]
      %v1439 = vld [vmem:[%s246 + $0x20] sm:$0xf]
      %v1440 = vld [vmem:[%s246 + $0x24] sm:$0xf]
      %v1441 = vld [vmem:[%s246 + $0x28] sm:$0xf]
      %v1442 = vld [vmem:[%s246 + $0x2c] sm:$0xf]
      %v1443 = vld [vmem:[%s246 + $0x30] sm:$0xf]
      %v1444 = vld [vmem:[%s246 + $0x34] sm:$0xf]
      %v1445 = vld [vmem:[%s246 + $0x38] sm:$0xf]
      %v1446 = vld [vmem:[%s246 + $0x3c] sm:$0xf]
      %v1447 = vld [vmem:[%s246 + $0x40] sm:$0xf]
      %v1448 = vld [vmem:[%s246 + $0x44] sm:$0xf]
      %v1449 = vld [vmem:[%s246 + $0x48] sm:$0xf]
      %v1450 = vld [vmem:[%s246 + $0x4c] sm:$0xf]
      %v1451 = vld [vmem:[%s246 + $0x50] sm:$0xf]
      %v1452 = vld [vmem:[%s246 + $0x54] sm:$0xf]
      %v1453 = vld [vmem:[%s246 + $0x58] sm:$0xf]
      %v1454 = vld [vmem:[%s246 + $0x5c] sm:$0xf]
      %v1455 = vld [vmem:[%s246 + $0x60] sm:$0xf]
      %v1456 = vld [vmem:[%s246 + $0x64] sm:$0xf]
      %v1457 = vld [vmem:[%s246 + $0x68] sm:$0xf]
      %v1458 = vld [vmem:[%s246 + $0x6c] sm:$0xf]
      %v1459 = vld [vmem:[%s246 + $0x70] sm:$0xf]
      %v1460 = vld [vmem:[%s246 + $0x74] sm:$0xf]
      %v1461 = vld [vmem:[%s246 + $0x78] sm:$0xf]
      %v1462 = vld [vmem:[%s246 + $0x7c] sm:$0xf]
      %v1463 = vld [vmem:[%s246 + $0x80] sm:$0xf]
      %v1464 = vld [vmem:[%s246 + $0x84] sm:$0xf]
      %v1465 = vld [vmem:[%s246 + $0x88] sm:$0xf]
      %v1466 = vld [vmem:[%s246 + $0x8c] sm:$0xf]
      %v1467 = vld [vmem:[%s246 + $0x90] sm:$0xf]
      %v1468 = vld [vmem:[%s246 + $0x94] sm:$0xf]
      %v1469 = vld [vmem:[%s246 + $0x98] sm:$0x1]
      %s1470 = scalar_lea.vmem %s2, 192
      %v1471 = vld [vmem:[%s1470] sm:$0xf]
      %v1472 = vld [vmem:[%s1470 + $0x4] sm:$0xf]
      %v1473 = vld [vmem:[%s1470 + $0x8] sm:$0xf]
      %v1474 = vld [vmem:[%s1470 + $0xc] sm:$0xf]
      %v1475 = vld [vmem:[%s1470 + $0x10] sm:$0xf]
      %v1476 = vld [vmem:[%s1470 + $0x14] sm:$0xf]
      %v1477 = vld [vmem:[%s1470 + $0x18] sm:$0xf]
      %v1478 = vld [vmem:[%s1470 + $0x1c] sm:$0xf]
      %v1479 = vld [vmem:[%s1470 + $0x20] sm:$0xf]
      %v1480 = vld [vmem:[%s1470 + $0x24] sm:$0xf]
      %v1481 = vld [vmem:[%s1470 + $0x28] sm:$0xf]
      %v1482 = vld [vmem:[%s1470 + $0x2c] sm:$0xf]
      %v1483 = vld [vmem:[%s1470 + $0x30] sm:$0xf]
      %v1484 = vld [vmem:[%s1470 + $0x34] sm:$0xf]
      %v1485 = vld [vmem:[%s1470 + $0x38] sm:$0xf]
      %v1486 = vld [vmem:[%s1470 + $0x3c] sm:$0xf]
      %v1524 = vunpack.c.l.b16 %v1433
      %v1525 = vunpack.c.l.b16 %v1434
      %v1526 = vunpack.c.l.b16 %v1435
      %v1527 = vunpack.c.l.b16 %v1436
      %v1528 = vunpack.c.l.b16 %v1437
      %v1529 = vunpack.c.l.b16 %v1438
      %v1530 = vunpack.c.l.b16 %v1439
      %v1531 = vunpack.c.l.b16 %v1440
      %v1532 = vunpack.c.l.b16 %v1441
      %v1533 = vunpack.c.l.b16 %v1442
      %v1534 = vunpack.c.l.b16 %v1443
      %v1535 = vunpack.c.l.b16 %v1444
      %v1536 = vunpack.c.l.b16 %v1445
      %v1537 = vunpack.c.l.b16 %v1446
      %v1538 = vunpack.c.l.b16 %v1447
      %v1539 = vunpack.c.l.b16 %v1448
      %v1540 = vunpack.c.l.b16 %v1449
      %v1541 = vunpack.c.l.b16 %v1450
      %v1542 = vunpack.c.l.b16 %v1451
      %v1543 = vunpack.c.l.b16 %v1452
      %v1544 = vunpack.c.l.b16 %v1453
      %v1545 = vunpack.c.l.b16 %v1454
      %v1546 = vunpack.c.l.b16 %v1455
      %v1547 = vunpack.c.l.b16 %v1456
      %v1548 = vunpack.c.l.b16 %v1457
      %v1549 = vunpack.c.l.b16 %v1458
      %v1550 = vunpack.c.l.b16 %v1459
      %v1551 = vunpack.c.l.b16 %v1460
      %v1552 = vunpack.c.l.b16 %v1461
      %v1553 = vunpack.c.l.b16 %v1462
      %v1554 = vunpack.c.l.b16 %v1463
      %v1555 = vunpack.c.l.b16 %v1464
      %v1556 = vunpack.c.l.b16 %v1465
      %v1557 = vunpack.c.l.b16 %v1466
      %v1558 = vunpack.c.l.b16 %v1467
      %v1559 = vunpack.c.l.b16 %v1468
      %v1560 = vunpack.c.l.b16 %v1469
      %v1561 = vpack.c.b16 %v1525, %v1524
      %v1562 = vpack.c.b16 %v1527, %v1526
      %v1563 = vpack.c.b16 %v1529, %v1528
      %v1564 = vpack.c.b16 %v1531, %v1530
      %v1565 = vpack.c.b16 %v1533, %v1532
      %v1566 = vpack.c.b16 %v1535, %v1534
      %v1567 = vpack.c.b16 %v1537, %v1536
      %v1568 = vpack.c.b16 %v1539, %v1538
      %v1569 = vpack.c.b16 %v1541, %v1540
      %v1570 = vpack.c.b16 %v1543, %v1542
      %v1571 = vpack.c.b16 %v1545, %v1544
      %v1572 = vpack.c.b16 %v1547, %v1546
      %v1573 = vpack.c.b16 %v1549, %v1548
      %v1574 = vpack.c.b16 %v1551, %v1550
      %v1575 = vpack.c.b16 %v1553, %v1552
      %v1576 = vpack.c.b16 %v1555, %v1554
      %v1577 = vpack.c.b16 %v1557, %v1556
      %v1578 = vpack.c.b16 %v1559, %v1558
      %v1579 = vpack.c.b16 %v1560, %v1560
      %v1580 = vrot.slane %v1561, 1
      %v1581 = vrot.slane %v1562, 1
      %v1582 = vsel %vm1116, %v1580, %v1581
      %v1583 = vrot.slane %v1563, 1
      %v1584 = vsel %vm1116, %v1581, %v1583
      %v1585 = vrot.slane %v1564, 1
      %v1586 = vsel %vm1116, %v1583, %v1585
      %v1587 = vrot.slane %v1565, 1
      %v1588 = vsel %vm1116, %v1585, %v1587
      %v1589 = vrot.slane %v1566, 1
      %v1590 = vsel %vm1116, %v1587, %v1589
      %v1591 = vrot.slane %v1567, 1
      %v1592 = vsel %vm1116, %v1589, %v1591
      %v1593 = vrot.slane %v1568, 1
      %v1594 = vsel %vm1116, %v1591, %v1593
      %v1595 = vrot.slane %v1569, 1
      %v1596 = vsel %vm1116, %v1593, %v1595
      %v1597 = vrot.slane %v1570, 1
      %v1598 = vsel %vm1116, %v1595, %v1597
      %v1599 = vrot.slane %v1571, 1
      %v1600 = vsel %vm1116, %v1597, %v1599
      %v1601 = vrot.slane %v1572, 1
      %v1602 = vsel %vm1116, %v1599, %v1601
      %v1603 = vrot.slane %v1573, 1
      %v1604 = vsel %vm1116, %v1601, %v1603
      %v1605 = vrot.slane %v1574, 1
      %v1606 = vsel %vm1116, %v1603, %v1605
      %v1607 = vrot.slane %v1575, 1
      %v1608 = vsel %vm1116, %v1605, %v1607
      %v1609 = vrot.slane %v1576, 1
      %v1610 = vsel %vm1116, %v1607, %v1609
      %v1611 = vrot.slane %v1577, 1
      %v1612 = vsel %vm1116, %v1609, %v1611
      %v1613 = vrot.slane %v1578, 1
      %v1614 = vsel %vm1116, %v1611, %v1613
      %v1615 = vrot.slane %v1579, 1
      %v1616 = vsel %vm1116, %v1613, %v1615
      %v1651 = vunpack.c.l.b16 %v1471
      %v1652 = vunpack.c.l.b16 %v1472
      %v1653 = vunpack.c.l.b16 %v1473
      %v1654 = vunpack.c.l.b16 %v1474
      %v1655 = vunpack.c.l.b16 %v1475
      %v1656 = vunpack.c.l.b16 %v1476
      %v1657 = vunpack.c.l.b16 %v1477
      %v1658 = vunpack.c.l.b16 %v1478
      %v1659 = vunpack.c.l.b16 %v1479
      %v1660 = vunpack.c.l.b16 %v1480
      %v1661 = vunpack.c.l.b16 %v1481
      %v1662 = vunpack.c.l.b16 %v1482
      %v1663 = vunpack.c.l.b16 %v1483
      %v1664 = vunpack.c.l.b16 %v1484
      %v1665 = vunpack.c.l.b16 %v1485
      %v1666 = vunpack.c.l.b16 %v1486
      %v1667 = vpack.c.b16 %v1652, %v1651
      %v1668 = vpack.c.b16 %v1654, %v1653
      %v1669 = vpack.c.b16 %v1656, %v1655
      %v1670 = vpack.c.b16 %v1658, %v1657
      %v1671 = vpack.c.b16 %v1660, %v1659
      %v1672 = vpack.c.b16 %v1662, %v1661
      %v1673 = vpack.c.b16 %v1664, %v1663
      %v1674 = vpack.c.b16 %v1666, %v1665
      %1683 = vmatprep.subr.bf16.mxu0 0
      %1684 = vmatpush1.bf16.msra.mxu0 %v1674
      %1685 = vmatprep.subr.bf16.mxu0 0
      %1686 = vmatpush1.bf16.msra.mxu0 %v1673
      %1687 = vmatprep.subr.bf16.mxu0 0
      %1688 = vmatpush1.bf16.msra.mxu0 %v1672
      %1689 = vmatprep.subr.bf16.mxu0 0
      %1690 = vmatpush1.bf16.msra.mxu0 %v1671
      %1691 = vmatprep.subr.bf16.mxu0 0
      %1692 = vmatpush1.bf16.msra.mxu0 %v1670
      %1693 = vmatprep.subr.bf16.mxu0 0
      %1694 = vmatpush1.bf16.msra.mxu0 %v1669
      %1695 = vmatprep.subr.bf16.mxu0 0
      %1696 = vmatpush1.bf16.msra.mxu0 %v1668
      %1697 = vmatprep.subr.bf16.mxu0 0
      %1698 = vmatpush1.bf16.msra.mxu0 %v1667
      %1699 = vmatprep.subr.bf16.mxu0 0
      %1700 = vmatpush2.bf16.msra.mxu0 0
      %1701 = vmatprep.subr.bf16.mxu0 0
      %1702 = vmatpush2.bf16.msra.mxu0 0
      %1703 = vmatprep.subr.bf16.mxu0 0
      %1704 = vmatpush2.bf16.msra.mxu0 0
      %1705 = vmatprep.subr.bf16.mxu0 0
      %1706 = vmatpush2.bf16.msra.mxu0 0
      %1707 = vmatprep.subr.bf16.mxu0 0
      %1708 = vmatpush2.bf16.msra.mxu0 0
      %1709 = vmatprep.subr.bf16.mxu0 0
      %1710 = vmatpush2.bf16.msra.mxu0 0
      %1711 = vmatprep.subr.bf16.mxu0 0
      %1712 = vmatpush2.bf16.msra.mxu0 0
      %1713 = vmatprep.subr.bf16.mxu0 0
      %1714 = vmatpush2.bf16.msra.mxu0 0
      %1715 = vmatprep.mubr.bf16.mxu0 0
      %1716 = vmatmul.mubr.bf16.gmra.mxu0 %v1582
      %v1717 = vpop.f32.mrf.mxu0
      %v1718 = vadd.f32 0.0, %v1717
      %v1719 = vpop.f32.mrf.mxu0
      %v1720 = vpop.f32.mrf.mxu0
      %v1721 = vadd.f32 0.0, %v1720
      %v1722 = vpop.f32.mrf.mxu0
      %1723 = vmatprep.mubr.bf16.mxu0 0
      %1724 = vmatmul.mubr.bf16.gmra.mxu0 %v1584
      %v1725 = vpop.f32.mrf.mxu0
      %v1726 = vadd.f32 0.0, %v1725
      %v1727 = vpop.f32.mrf.mxu0
      %v1728 = vpop.f32.mrf.mxu0
      %v1729 = vadd.f32 0.0, %v1728
      %v1730 = vpop.f32.mrf.mxu0
      %1731 = vmatprep.mubr.bf16.mxu0 0
      %1732 = vmatmul.mubr.bf16.gmra.mxu0 %v1586
      %v1733 = vpop.f32.mrf.mxu0
      %v1734 = vadd.f32 0.0, %v1733
      %v1735 = vpop.f32.mrf.mxu0
      %v1736 = vpop.f32.mrf.mxu0
      %v1737 = vadd.f32 0.0, %v1736
      %v1738 = vpop.f32.mrf.mxu0
      %1739 = vmatprep.mubr.bf16.mxu0 0
      %1740 = vmatmul.mubr.bf16.gmra.mxu0 %v1588
      %v1741 = vpop.f32.mrf.mxu0
      %v1742 = vadd.f32 0.0, %v1741
      %v1743 = vpop.f32.mrf.mxu0
      %v1744 = vpop.f32.mrf.mxu0
      %v1745 = vadd.f32 0.0, %v1744
      %v1746 = vpop.f32.mrf.mxu0
      %1747 = vmatprep.mubr.bf16.mxu0 0
      %1748 = vmatmul.mubr.bf16.gmra.mxu0 %v1590
      %v1749 = vpop.f32.mrf.mxu0
      %v1750 = vadd.f32 0.0, %v1749
      %v1751 = vpop.f32.mrf.mxu0
      %v1752 = vpop.f32.mrf.mxu0
      %v1753 = vadd.f32 0.0, %v1752
      %v1754 = vpop.f32.mrf.mxu0
      %1755 = vmatprep.mubr.bf16.mxu0 0
      %1756 = vmatmul.mubr.bf16.gmra.mxu0 %v1592
      %v1757 = vpop.f32.mrf.mxu0
      %v1758 = vadd.f32 0.0, %v1757
      %v1759 = vpop.f32.mrf.mxu0
      %v1760 = vpop.f32.mrf.mxu0
      %v1761 = vadd.f32 0.0, %v1760
      %v1762 = vpop.f32.mrf.mxu0
      %1763 = vmatprep.mubr.bf16.mxu0 0
      %1764 = vmatmul.mubr.bf16.gmra.mxu0 %v1594
      %v1765 = vpop.f32.mrf.mxu0
      %v1766 = vadd.f32 0.0, %v1765
      %v1767 = vpop.f32.mrf.mxu0
      %v1768 = vpop.f32.mrf.mxu0
      %v1769 = vadd.f32 0.0, %v1768
      %v1770 = vpop.f32.mrf.mxu0
      %1771 = vmatprep.mubr.bf16.mxu0 0
      %1772 = vmatmul.mubr.bf16.gmra.mxu0 %v1596
      %v1773 = vpop.f32.mrf.mxu0
      %v1774 = vadd.f32 0.0, %v1773
      %v1775 = vpop.f32.mrf.mxu0
      %v1776 = vpop.f32.mrf.mxu0
      %v1777 = vadd.f32 0.0, %v1776
      %v1778 = vpop.f32.mrf.mxu0
      %1779 = vmatprep.mubr.bf16.mxu0 0
      %1780 = vmatmul.mubr.bf16.gmra.mxu0 %v1598
      %v1781 = vpop.f32.mrf.mxu0
      %v1782 = vadd.f32 0.0, %v1781
      %v1783 = vpop.f32.mrf.mxu0
      %v1784 = vpop.f32.mrf.mxu0
      %v1785 = vadd.f32 0.0, %v1784
      %v1786 = vpop.f32.mrf.mxu0
      %1787 = vmatprep.mubr.bf16.mxu0 0
      %1788 = vmatmul.mubr.bf16.gmra.mxu0 %v1600
      %v1789 = vpop.f32.mrf.mxu0
      %v1790 = vadd.f32 0.0, %v1789
      %v1791 = vpop.f32.mrf.mxu0
      %v1792 = vpop.f32.mrf.mxu0
      %v1793 = vadd.f32 0.0, %v1792
      %v1794 = vpop.f32.mrf.mxu0
      %1795 = vmatprep.mubr.bf16.mxu0 0
      %1796 = vmatmul.mubr.bf16.gmra.mxu0 %v1602
      %v1797 = vpop.f32.mrf.mxu0
      %v1798 = vadd.f32 0.0, %v1797
      %v1799 = vpop.f32.mrf.mxu0
      %v1800 = vpop.f32.mrf.mxu0
      %v1801 = vadd.f32 0.0, %v1800
      %v1802 = vpop.f32.mrf.mxu0
      %1803 = vmatprep.mubr.bf16.mxu0 0
      %1804 = vmatmul.mubr.bf16.gmra.mxu0 %v1604
      %v1805 = vpop.f32.mrf.mxu0
      %v1806 = vadd.f32 0.0, %v1805
      %v1807 = vpop.f32.mrf.mxu0
      %v1808 = vpop.f32.mrf.mxu0
      %v1809 = vadd.f32 0.0, %v1808
      %v1810 = vpop.f32.mrf.mxu0
      %1811 = vmatprep.mubr.bf16.mxu0 0
      %1812 = vmatmul.mubr.bf16.gmra.mxu0 %v1606
      %v1813 = vpop.f32.mrf.mxu0
      %v1814 = vadd.f32 0.0, %v1813
      %v1815 = vpop.f32.mrf.mxu0
      %v1816 = vpop.f32.mrf.mxu0
      %v1817 = vadd.f32 0.0, %v1816
      %v1818 = vpop.f32.mrf.mxu0
      %1819 = vmatprep.mubr.bf16.mxu0 0
      %1820 = vmatmul.mubr.bf16.gmra.mxu0 %v1608
      %v1821 = vpop.f32.mrf.mxu0
      %v1822 = vadd.f32 0.0, %v1821
      %v1823 = vpop.f32.mrf.mxu0
      %v1824 = vpop.f32.mrf.mxu0
      %v1825 = vadd.f32 0.0, %v1824
      %v1826 = vpop.f32.mrf.mxu0
      %1827 = vmatprep.mubr.bf16.mxu0 0
      %1828 = vmatmul.mubr.bf16.gmra.mxu0 %v1610
      %v1829 = vpop.f32.mrf.mxu0
      %v1830 = vadd.f32 0.0, %v1829
      %v1831 = vpop.f32.mrf.mxu0
      %v1832 = vpop.f32.mrf.mxu0
      %v1833 = vadd.f32 0.0, %v1832
      %v1834 = vpop.f32.mrf.mxu0
      %1835 = vmatprep.mubr.bf16.mxu0 0
      %1836 = vmatmul.mubr.bf16.gmra.mxu0 %v1612
      %v1837 = vpop.f32.mrf.mxu0
      %v1838 = vadd.f32 0.0, %v1837
      %v1839 = vpop.f32.mrf.mxu0
      %v1840 = vpop.f32.mrf.mxu0
      %v1841 = vadd.f32 0.0, %v1840
      %v1842 = vpop.f32.mrf.mxu0
      %1843 = vmatprep.mubr.bf16.mxu0 0
      %1844 = vmatmul.mubr.bf16.gmra.mxu0 %v1614
      %v1845 = vpop.f32.mrf.mxu0
      %v1846 = vadd.f32 0.0, %v1845
      %v1847 = vpop.f32.mrf.mxu0
      %v1848 = vpop.f32.mrf.mxu0
      %v1849 = vadd.f32 0.0, %v1848
      %v1850 = vpop.f32.mrf.mxu0
      %1851 = vmatprep.mubr.bf16.mxu0 0
      %1852 = vmatmul.mubr.bf16.gmra.mxu0 %v1616
      %v1853 = vpop.f32.mrf.mxu0
      %v1854 = vadd.f32 0.0, %v1853
      %v1855 = vpop.f32.mrf.mxu0
      %v1856 = vpop.f32.mrf.mxu0
      %v1857 = vadd.f32 0.0, %v1856
      %v1858 = vpop.f32.mrf.mxu0
      %1859 = vdwg.mxu0
      %v1860 = vadd.f32 %v1397, %v1718
      %v1861 = vadd.f32 %v1398, %v1721
      %v1862 = vadd.f32 %v1399, %v1726
      %v1863 = vadd.f32 %v1400, %v1729
      %v1864 = vadd.f32 %v1401, %v1734
      %v1865 = vadd.f32 %v1402, %v1737
      %v1866 = vadd.f32 %v1403, %v1742
      %v1867 = vadd.f32 %v1404, %v1745
      %v1868 = vadd.f32 %v1405, %v1750
      %v1869 = vadd.f32 %v1406, %v1753
      %v1870 = vadd.f32 %v1407, %v1758
      %v1871 = vadd.f32 %v1408, %v1761
      %v1872 = vadd.f32 %v1409, %v1766
      %v1873 = vadd.f32 %v1410, %v1769
      %v1874 = vadd.f32 %v1411, %v1774
      %v1875 = vadd.f32 %v1412, %v1777
      %v1876 = vadd.f32 %v1413, %v1782
      %v1877 = vadd.f32 %v1414, %v1785
      %v1878 = vadd.f32 %v1415, %v1790
      %v1879 = vadd.f32 %v1416, %v1793
      %v1880 = vadd.f32 %v1417, %v1798
      %v1881 = vadd.f32 %v1418, %v1801
      %v1882 = vadd.f32 %v1419, %v1806
      %v1883 = vadd.f32 %v1420, %v1809
      %v1884 = vadd.f32 %v1421, %v1814
      %v1885 = vadd.f32 %v1422, %v1817
      %v1886 = vadd.f32 %v1423, %v1822
      %v1887 = vadd.f32 %v1424, %v1825
      %v1888 = vadd.f32 %v1425, %v1830
      %v1889 = vadd.f32 %v1426, %v1833
      %v1890 = vadd.f32 %v1427, %v1838
      %v1891 = vadd.f32 %v1428, %v1841
      %v1892 = vadd.f32 %v1429, %v1846
      %v1893 = vadd.f32 %v1430, %v1849
      %v1894 = vadd.f32 %v1431, %v1854
      %v1895 = vadd.f32 %v1432, %v1857
      %v1896 = vld [vmem:[%s246 + $0x98] sm:$0x3]
      %s1897 = scalar_lea.vmem %s2, 256
      %v1898 = vld [vmem:[%s1897] sm:$0xf]
      %v1899 = vld [vmem:[%s1897 + $0x4] sm:$0xf]
      %v1900 = vld [vmem:[%s1897 + $0x8] sm:$0xf]
      %v1901 = vld [vmem:[%s1897 + $0xc] sm:$0xf]
      %v1902 = vld [vmem:[%s1897 + $0x10] sm:$0xf]
      %v1903 = vld [vmem:[%s1897 + $0x14] sm:$0xf]
      %v1904 = vld [vmem:[%s1897 + $0x18] sm:$0xf]
      %v1905 = vld [vmem:[%s1897 + $0x1c] sm:$0xf]
      %v1906 = vld [vmem:[%s1897 + $0x20] sm:$0xf]
      %v1907 = vld [vmem:[%s1897 + $0x24] sm:$0xf]
      %v1908 = vld [vmem:[%s1897 + $0x28] sm:$0xf]
      %v1909 = vld [vmem:[%s1897 + $0x2c] sm:$0xf]
      %v1910 = vld [vmem:[%s1897 + $0x30] sm:$0xf]
      %v1911 = vld [vmem:[%s1897 + $0x34] sm:$0xf]
      %v1912 = vld [vmem:[%s1897 + $0x38] sm:$0xf]
      %v1913 = vld [vmem:[%s1897 + $0x3c] sm:$0xf]
      %v1915 = vunpack.c.l.b16 %v1896
      %v1916 = vpack.c.b16 %v1915, %v1915
      %vm1917 = vsmask.f32 6400
      %v1919 = vshrl.u32 %v1561, 16
      %v1921 = vrot.slane %v1919, 1
      %v1922 = vshll.u32 %v1561, 16
      %v1924 = vrot.slane %v1922, 2
      %v1925 = vor.u32 %v1921, %v1924
      %v1927 = vshrl.u32 %v1562, 16
      %v1929 = vrot.slane %v1927, 1
      %v1930 = vshll.u32 %v1562, 16
      %v1932 = vrot.slane %v1930, 2
      %v1933 = vor.u32 %v1929, %v1932
      %v1934 = vsel %vm1917, %v1925, %v1933
      %v1936 = vshrl.u32 %v1563, 16
      %v1938 = vrot.slane %v1936, 1
      %v1939 = vshll.u32 %v1563, 16
      %v1941 = vrot.slane %v1939, 2
      %v1942 = vor.u32 %v1938, %v1941
      %v1943 = vsel %vm1917, %v1933, %v1942
      %v1945 = vshrl.u32 %v1564, 16
      %v1947 = vrot.slane %v1945, 1
      %v1948 = vshll.u32 %v1564, 16
      %v1950 = vrot.slane %v1948, 2
      %v1951 = vor.u32 %v1947, %v1950
      %v1952 = vsel %vm1917, %v1942, %v1951
      %v1954 = vshrl.u32 %v1565, 16
      %v1956 = vrot.slane %v1954, 1
      %v1957 = vshll.u32 %v1565, 16
      %v1959 = vrot.slane %v1957, 2
      %v1960 = vor.u32 %v1956, %v1959
      %v1961 = vsel %vm1917, %v1951, %v1960
      %v1963 = vshrl.u32 %v1566, 16
      %v1965 = vrot.slane %v1963, 1
      %v1966 = vshll.u32 %v1566, 16
      %v1968 = vrot.slane %v1966, 2
      %v1969 = vor.u32 %v1965, %v1968
      %v1970 = vsel %vm1917, %v1960, %v1969
      %v1972 = vshrl.u32 %v1567, 16
      %v1974 = vrot.slane %v1972, 1
      %v1975 = vshll.u32 %v1567, 16
      %v1977 = vrot.slane %v1975, 2
      %v1978 = vor.u32 %v1974, %v1977
      %v1979 = vsel %vm1917, %v1969, %v1978
      %v1981 = vshrl.u32 %v1568, 16
      %v1983 = vrot.slane %v1981, 1
      %v1984 = vshll.u32 %v1568, 16
      %v1986 = vrot.slane %v1984, 2
      %v1987 = vor.u32 %v1983, %v1986
      %v1988 = vsel %vm1917, %v1978, %v1987
      %v1990 = vshrl.u32 %v1569, 16
      %v1992 = vrot.slane %v1990, 1
      %v1993 = vshll.u32 %v1569, 16
      %v1995 = vrot.slane %v1993, 2
      %v1996 = vor.u32 %v1992, %v1995
      %v1997 = vsel %vm1917, %v1987, %v1996
      %v1999 = vshrl.u32 %v1570, 16
      %v2001 = vrot.slane %v1999, 1
      %v2002 = vshll.u32 %v1570, 16
      %v2004 = vrot.slane %v2002, 2
      %v2005 = vor.u32 %v2001, %v2004
      %v2006 = vsel %vm1917, %v1996, %v2005
      %v2008 = vshrl.u32 %v1571, 16
      %v2010 = vrot.slane %v2008, 1
      %v2011 = vshll.u32 %v1571, 16
      %v2013 = vrot.slane %v2011, 2
      %v2014 = vor.u32 %v2010, %v2013
      %v2015 = vsel %vm1917, %v2005, %v2014
      %v2017 = vshrl.u32 %v1572, 16
      %v2019 = vrot.slane %v2017, 1
      %v2020 = vshll.u32 %v1572, 16
      %v2022 = vrot.slane %v2020, 2
      %v2023 = vor.u32 %v2019, %v2022
      %v2024 = vsel %vm1917, %v2014, %v2023
      %v2026 = vshrl.u32 %v1573, 16
      %v2028 = vrot.slane %v2026, 1
      %v2029 = vshll.u32 %v1573, 16
      %v2031 = vrot.slane %v2029, 2
      %v2032 = vor.u32 %v2028, %v2031
      %v2033 = vsel %vm1917, %v2023, %v2032
      %v2035 = vshrl.u32 %v1574, 16
      %v2037 = vrot.slane %v2035, 1
      %v2038 = vshll.u32 %v1574, 16
      %v2040 = vrot.slane %v2038, 2
      %v2041 = vor.u32 %v2037, %v2040
      %v2042 = vsel %vm1917, %v2032, %v2041
      %v2044 = vshrl.u32 %v1575, 16
      %v2046 = vrot.slane %v2044, 1
      %v2047 = vshll.u32 %v1575, 16
      %v2049 = vrot.slane %v2047, 2
      %v2050 = vor.u32 %v2046, %v2049
      %v2051 = vsel %vm1917, %v2041, %v2050
      %v2053 = vshrl.u32 %v1576, 16
      %v2055 = vrot.slane %v2053, 1
      %v2056 = vshll.u32 %v1576, 16
      %v2058 = vrot.slane %v2056, 2
      %v2059 = vor.u32 %v2055, %v2058
      %v2060 = vsel %vm1917, %v2050, %v2059
      %v2062 = vshrl.u32 %v1577, 16
      %v2064 = vrot.slane %v2062, 1
      %v2065 = vshll.u32 %v1577, 16
      %v2067 = vrot.slane %v2065, 2
      %v2068 = vor.u32 %v2064, %v2067
      %v2069 = vsel %vm1917, %v2059, %v2068
      %v2071 = vshrl.u32 %v1578, 16
      %v2073 = vrot.slane %v2071, 1
      %v2074 = vshll.u32 %v1578, 16
      %v2076 = vrot.slane %v2074, 2
      %v2077 = vor.u32 %v2073, %v2076
      %v2078 = vsel %vm1917, %v2068, %v2077
      %v2080 = vshrl.u32 %v1916, 16
      %v2082 = vrot.slane %v2080, 1
      %v2083 = vshll.u32 %v1916, 16
      %v2085 = vrot.slane %v2083, 2
      %v2086 = vor.u32 %v2082, %v2085
      %v2087 = vsel %vm1917, %v2077, %v2086
      %v2122 = vunpack.c.l.b16 %v1898
      %v2123 = vunpack.c.l.b16 %v1899
      %v2124 = vunpack.c.l.b16 %v1900
      %v2125 = vunpack.c.l.b16 %v1901
      %v2126 = vunpack.c.l.b16 %v1902
      %v2127 = vunpack.c.l.b16 %v1903
      %v2128 = vunpack.c.l.b16 %v1904
      %v2129 = vunpack.c.l.b16 %v1905
      %v2130 = vunpack.c.l.b16 %v1906
      %v2131 = vunpack.c.l.b16 %v1907
      %v2132 = vunpack.c.l.b16 %v1908
      %v2133 = vunpack.c.l.b16 %v1909
      %v2134 = vunpack.c.l.b16 %v1910
      %v2135 = vunpack.c.l.b16 %v1911
      %v2136 = vunpack.c.l.b16 %v1912
      %v2137 = vunpack.c.l.b16 %v1913
      %v2138 = vpack.c.b16 %v2123, %v2122
      %v2139 = vpack.c.b16 %v2125, %v2124
      %v2140 = vpack.c.b16 %v2127, %v2126
      %v2141 = vpack.c.b16 %v2129, %v2128
      %v2142 = vpack.c.b16 %v2131, %v2130
      %v2143 = vpack.c.b16 %v2133, %v2132
      %v2144 = vpack.c.b16 %v2135, %v2134
      %v2145 = vpack.c.b16 %v2137, %v2136
      %2154 = vmatprep.subr.bf16.mxu0 0
      %2155 = vmatpush1.bf16.msra.mxu0 %v2145
      %2156 = vmatprep.subr.bf16.mxu0 0
      %2157 = vmatpush1.bf16.msra.mxu0 %v2144
      %2158 = vmatprep.subr.bf16.mxu0 0
      %2159 = vmatpush1.bf16.msra.mxu0 %v2143
      %2160 = vmatprep.subr.bf16.mxu0 0
      %2161 = vmatpush1.bf16.msra.mxu0 %v2142
      %2162 = vmatprep.subr.bf16.mxu0 0
      %2163 = vmatpush1.bf16.msra.mxu0 %v2141
      %2164 = vmatprep.subr.bf16.mxu0 0
      %2165 = vmatpush1.bf16.msra.mxu0 %v2140
      %2166 = vmatprep.subr.bf16.mxu0 0
      %2167 = vmatpush1.bf16.msra.mxu0 %v2139
      %2168 = vmatprep.subr.bf16.mxu0 0
      %2169 = vmatpush1.bf16.msra.mxu0 %v2138
      %2170 = vmatprep.subr.bf16.mxu0 0
      %2171 = vmatpush2.bf16.msra.mxu0 0
      %2172 = vmatprep.subr.bf16.mxu0 0
      %2173 = vmatpush2.bf16.msra.mxu0 0
      %2174 = vmatprep.subr.bf16.mxu0 0
      %2175 = vmatpush2.bf16.msra.mxu0 0
      %2176 = vmatprep.subr.bf16.mxu0 0
      %2177 = vmatpush2.bf16.msra.mxu0 0
      %2178 = vmatprep.subr.bf16.mxu0 0
      %2179 = vmatpush2.bf16.msra.mxu0 0
      %2180 = vmatprep.subr.bf16.mxu0 0
      %2181 = vmatpush2.bf16.msra.mxu0 0
      %2182 = vmatprep.subr.bf16.mxu0 0
      %2183 = vmatpush2.bf16.msra.mxu0 0
      %2184 = vmatprep.subr.bf16.mxu0 0
      %2185 = vmatpush2.bf16.msra.mxu0 0
      %2186 = vmatprep.mubr.bf16.mxu0 0
      %2187 = vmatmul.mubr.bf16.gmra.mxu0 %v1934
      %v2188 = vpop.f32.mrf.mxu0
      %v2189 = vadd.f32 0.0, %v2188
      %v2190 = vpop.f32.mrf.mxu0
      %v2191 = vpop.f32.mrf.mxu0
      %v2192 = vadd.f32 0.0, %v2191
      %v2193 = vpop.f32.mrf.mxu0
      %2194 = vmatprep.mubr.bf16.mxu0 0
      %2195 = vmatmul.mubr.bf16.gmra.mxu0 %v1943
      %v2196 = vpop.f32.mrf.mxu0
      %v2197 = vadd.f32 0.0, %v2196
      %v2198 = vpop.f32.mrf.mxu0
      %v2199 = vpop.f32.mrf.mxu0
      %v2200 = vadd.f32 0.0, %v2199
      %v2201 = vpop.f32.mrf.mxu0
      %2202 = vmatprep.mubr.bf16.mxu0 0
      %2203 = vmatmul.mubr.bf16.gmra.mxu0 %v1952
      %v2204 = vpop.f32.mrf.mxu0
      %v2205 = vadd.f32 0.0, %v2204
      %v2206 = vpop.f32.mrf.mxu0
      %v2207 = vpop.f32.mrf.mxu0
      %v2208 = vadd.f32 0.0, %v2207
      %v2209 = vpop.f32.mrf.mxu0
      %2210 = vmatprep.mubr.bf16.mxu0 0
      %2211 = vmatmul.mubr.bf16.gmra.mxu0 %v1961
      %v2212 = vpop.f32.mrf.mxu0
      %v2213 = vadd.f32 0.0, %v2212
      %v2214 = vpop.f32.mrf.mxu0
      %v2215 = vpop.f32.mrf.mxu0
      %v2216 = vadd.f32 0.0, %v2215
      %v2217 = vpop.f32.mrf.mxu0
      %2218 = vmatprep.mubr.bf16.mxu0 0
      %2219 = vmatmul.mubr.bf16.gmra.mxu0 %v1970
      %v2220 = vpop.f32.mrf.mxu0
      %v2221 = vadd.f32 0.0, %v2220
      %v2222 = vpop.f32.mrf.mxu0
      %v2223 = vpop.f32.mrf.mxu0
      %v2224 = vadd.f32 0.0, %v2223
      %v2225 = vpop.f32.mrf.mxu0
      %2226 = vmatprep.mubr.bf16.mxu0 0
      %2227 = vmatmul.mubr.bf16.gmra.mxu0 %v1979
      %v2228 = vpop.f32.mrf.mxu0
      %v2229 = vadd.f32 0.0, %v2228
      %v2230 = vpop.f32.mrf.mxu0
      %v2231 = vpop.f32.mrf.mxu0
      %v2232 = vadd.f32 0.0, %v2231
      %v2233 = vpop.f32.mrf.mxu0
      %2234 = vmatprep.mubr.bf16.mxu0 0
      %2235 = vmatmul.mubr.bf16.gmra.mxu0 %v1988
      %v2236 = vpop.f32.mrf.mxu0
      %v2237 = vadd.f32 0.0, %v2236
      %v2238 = vpop.f32.mrf.mxu0
      %v2239 = vpop.f32.mrf.mxu0
      %v2240 = vadd.f32 0.0, %v2239
      %v2241 = vpop.f32.mrf.mxu0
      %2242 = vmatprep.mubr.bf16.mxu0 0
      %2243 = vmatmul.mubr.bf16.gmra.mxu0 %v1997
      %v2244 = vpop.f32.mrf.mxu0
      %v2245 = vadd.f32 0.0, %v2244
      %v2246 = vpop.f32.mrf.mxu0
      %v2247 = vpop.f32.mrf.mxu0
      %v2248 = vadd.f32 0.0, %v2247
      %v2249 = vpop.f32.mrf.mxu0
      %2250 = vmatprep.mubr.bf16.mxu0 0
      %2251 = vmatmul.mubr.bf16.gmra.mxu0 %v2006
      %v2252 = vpop.f32.mrf.mxu0
      %v2253 = vadd.f32 0.0, %v2252
      %v2254 = vpop.f32.mrf.mxu0
      %v2255 = vpop.f32.mrf.mxu0
      %v2256 = vadd.f32 0.0, %v2255
      %v2257 = vpop.f32.mrf.mxu0
      %2258 = vmatprep.mubr.bf16.mxu0 0
      %2259 = vmatmul.mubr.bf16.gmra.mxu0 %v2015
      %v2260 = vpop.f32.mrf.mxu0
      %v2261 = vadd.f32 0.0, %v2260
      %v2262 = vpop.f32.mrf.mxu0
      %v2263 = vpop.f32.mrf.mxu0
      %v2264 = vadd.f32 0.0, %v2263
      %v2265 = vpop.f32.mrf.mxu0
      %2266 = vmatprep.mubr.bf16.mxu0 0
      %2267 = vmatmul.mubr.bf16.gmra.mxu0 %v2024
      %v2268 = vpop.f32.mrf.mxu0
      %v2269 = vadd.f32 0.0, %v2268
      %v2270 = vpop.f32.mrf.mxu0
      %v2271 = vpop.f32.mrf.mxu0
      %v2272 = vadd.f32 0.0, %v2271
      %v2273 = vpop.f32.mrf.mxu0
      %2274 = vmatprep.mubr.bf16.mxu0 0
      %2275 = vmatmul.mubr.bf16.gmra.mxu0 %v2033
      %v2276 = vpop.f32.mrf.mxu0
      %v2277 = vadd.f32 0.0, %v2276
      %v2278 = vpop.f32.mrf.mxu0
      %v2279 = vpop.f32.mrf.mxu0
      %v2280 = vadd.f32 0.0, %v2279
      %v2281 = vpop.f32.mrf.mxu0
      %2282 = vmatprep.mubr.bf16.mxu0 0
      %2283 = vmatmul.mubr.bf16.gmra.mxu0 %v2042
      %v2284 = vpop.f32.mrf.mxu0
      %v2285 = vadd.f32 0.0, %v2284
      %v2286 = vpop.f32.mrf.mxu0
      %v2287 = vpop.f32.mrf.mxu0
      %v2288 = vadd.f32 0.0, %v2287
      %v2289 = vpop.f32.mrf.mxu0
      %2290 = vmatprep.mubr.bf16.mxu0 0
      %2291 = vmatmul.mubr.bf16.gmra.mxu0 %v2051
      %v2292 = vpop.f32.mrf.mxu0
      %v2293 = vadd.f32 0.0, %v2292
      %v2294 = vpop.f32.mrf.mxu0
      %v2295 = vpop.f32.mrf.mxu0
      %v2296 = vadd.f32 0.0, %v2295
      %v2297 = vpop.f32.mrf.mxu0
      %2298 = vmatprep.mubr.bf16.mxu0 0
      %2299 = vmatmul.mubr.bf16.gmra.mxu0 %v2060
      %v2300 = vpop.f32.mrf.mxu0
      %v2301 = vadd.f32 0.0, %v2300
      %v2302 = vpop.f32.mrf.mxu0
      %v2303 = vpop.f32.mrf.mxu0
      %v2304 = vadd.f32 0.0, %v2303
      %v2305 = vpop.f32.mrf.mxu0
      %2306 = vmatprep.mubr.bf16.mxu0 0
      %2307 = vmatmul.mubr.bf16.gmra.mxu0 %v2069
      %v2308 = vpop.f32.mrf.mxu0
      %v2309 = vadd.f32 0.0, %v2308
      %v2310 = vpop.f32.mrf.mxu0
      %v2311 = vpop.f32.mrf.mxu0
      %v2312 = vadd.f32 0.0, %v2311
      %v2313 = vpop.f32.mrf.mxu0
      %2314 = vmatprep.mubr.bf16.mxu0 0
      %2315 = vmatmul.mubr.bf16.gmra.mxu0 %v2078
      %v2316 = vpop.f32.mrf.mxu0
      %v2317 = vadd.f32 0.0, %v2316
      %v2318 = vpop.f32.mrf.mxu0
      %v2319 = vpop.f32.mrf.mxu0
      %v2320 = vadd.f32 0.0, %v2319
      %v2321 = vpop.f32.mrf.mxu0
      %2322 = vmatprep.mubr.bf16.mxu0 0
      %2323 = vmatmul.mubr.bf16.gmra.mxu0 %v2087
      %v2324 = vpop.f32.mrf.mxu0
      %v2325 = vadd.f32 0.0, %v2324
      %v2326 = vpop.f32.mrf.mxu0
      %v2327 = vpop.f32.mrf.mxu0
      %v2328 = vadd.f32 0.0, %v2327
      %v2329 = vpop.f32.mrf.mxu0
      %2330 = vdwg.mxu0
      %v2331 = vadd.f32 %v1860, %v2189
      %v2332 = vadd.f32 %v1861, %v2192
      %v2333 = vadd.f32 %v1862, %v2197
      %v2334 = vadd.f32 %v1863, %v2200
      %v2335 = vadd.f32 %v1864, %v2205
      %v2336 = vadd.f32 %v1865, %v2208
      %v2337 = vadd.f32 %v1866, %v2213
      %v2338 = vadd.f32 %v1867, %v2216
      %v2339 = vadd.f32 %v1868, %v2221
      %v2340 = vadd.f32 %v1869, %v2224
      %v2341 = vadd.f32 %v1870, %v2229
      %v2342 = vadd.f32 %v1871, %v2232
      %v2343 = vadd.f32 %v1872, %v2237
      %v2344 = vadd.f32 %v1873, %v2240
      %v2345 = vadd.f32 %v1874, %v2245
      %v2346 = vadd.f32 %v1875, %v2248
      %v2347 = vadd.f32 %v1876, %v2253
      %v2348 = vadd.f32 %v1877, %v2256
      %v2349 = vadd.f32 %v1878, %v2261
      %v2350 = vadd.f32 %v1879, %v2264
      %v2351 = vadd.f32 %v1880, %v2269
      %v2352 = vadd.f32 %v1881, %v2272
      %v2353 = vadd.f32 %v1882, %v2277
      %v2354 = vadd.f32 %v1883, %v2280
      %v2355 = vadd.f32 %v1884, %v2285
      %v2356 = vadd.f32 %v1885, %v2288
      %v2357 = vadd.f32 %v1886, %v2293
      %v2358 = vadd.f32 %v1887, %v2296
      %v2359 = vadd.f32 %v1888, %v2301
      %v2360 = vadd.f32 %v1889, %v2304
      %v2361 = vadd.f32 %v1890, %v2309
      %v2362 = vadd.f32 %v1891, %v2312
      %v2363 = vadd.f32 %v1892, %v2317
      %v2364 = vadd.f32 %v1893, %v2320
      %v2365 = vadd.f32 %v1894, %v2325
      %v2366 = vadd.f32 %v1895, %v2328
      %v2367 = vld [vmem:[%s246 + $0x8] sm:$0xc]
      %s2368 = scalar_lea.vmem %s2, 320
      %v2369 = vld [vmem:[%s2368] sm:$0xf]
      %v2370 = vld [vmem:[%s2368 + $0x4] sm:$0xf]
      %v2371 = vld [vmem:[%s2368 + $0x8] sm:$0xf]
      %v2372 = vld [vmem:[%s2368 + $0xc] sm:$0xf]
      %v2373 = vld [vmem:[%s2368 + $0x10] sm:$0xf]
      %v2374 = vld [vmem:[%s2368 + $0x14] sm:$0xf]
      %v2375 = vld [vmem:[%s2368 + $0x18] sm:$0xf]
      %v2376 = vld [vmem:[%s2368 + $0x1c] sm:$0xf]
      %v2377 = vld [vmem:[%s2368 + $0x20] sm:$0xf]
      %v2378 = vld [vmem:[%s2368 + $0x24] sm:$0xf]
      %v2379 = vld [vmem:[%s2368 + $0x28] sm:$0xf]
      %v2380 = vld [vmem:[%s2368 + $0x2c] sm:$0xf]
      %v2381 = vld [vmem:[%s2368 + $0x30] sm:$0xf]
      %v2382 = vld [vmem:[%s2368 + $0x34] sm:$0xf]
      %v2383 = vld [vmem:[%s2368 + $0x38] sm:$0xf]
      %v2384 = vld [vmem:[%s2368 + $0x3c] sm:$0xf]
      %v2386 = vunpack.c.l.b16 %v2367
      %v2387 = vpack.c.b16 %v1525, %v2386
      %vm2388 = vcmask 1045504
      %v2389 = vrot.slane %v2387, 2
      %v2390 = vrot.slane %v1562, 2
      %v2391 = vsel %vm2388, %v2389, %v2390
      %v2392 = vrot.slane %v1563, 2
      %v2393 = vsel %vm2388, %v2390, %v2392
      %v2394 = vrot.slane %v1564, 2
      %v2395 = vsel %vm2388, %v2392, %v2394
      %v2396 = vrot.slane %v1565, 2
      %v2397 = vsel %vm2388, %v2394, %v2396
      %v2398 = vrot.slane %v1566, 2
      %v2399 = vsel %vm2388, %v2396, %v2398
      %v2400 = vrot.slane %v1567, 2
      %v2401 = vsel %vm2388, %v2398, %v2400
      %v2402 = vrot.slane %v1568, 2
      %v2403 = vsel %vm2388, %v2400, %v2402
      %v2404 = vrot.slane %v1569, 2
      %v2405 = vsel %vm2388, %v2402, %v2404
      %v2406 = vrot.slane %v1570, 2
      %v2407 = vsel %vm2388, %v2404, %v2406
      %v2408 = vrot.slane %v1571, 2
      %v2409 = vsel %vm2388, %v2406, %v2408
      %v2410 = vrot.slane %v1572, 2
      %v2411 = vsel %vm2388, %v2408, %v2410
      %v2412 = vrot.slane %v1573, 2
      %v2413 = vsel %vm2388, %v2410, %v2412
      %v2414 = vrot.slane %v1574, 2
      %v2415 = vsel %vm2388, %v2412, %v2414
      %v2416 = vrot.slane %v1575, 2
      %v2417 = vsel %vm2388, %v2414, %v2416
      %v2418 = vrot.slane %v1576, 2
      %v2419 = vsel %vm2388, %v2416, %v2418
      %v2420 = vrot.slane %v1577, 2
      %v2421 = vsel %vm2388, %v2418, %v2420
      %v2422 = vrot.slane %v1578, 2
      %v2423 = vsel %vm2388, %v2420, %v2422
      %v2424 = vrot.slane %v1916, 2
      %v2425 = vsel %vm2388, %v2422, %v2424
      %v2460 = vunpack.c.l.b16 %v2369
      %v2461 = vunpack.c.l.b16 %v2370
      %v2462 = vunpack.c.l.b16 %v2371
      %v2463 = vunpack.c.l.b16 %v2372
      %v2464 = vunpack.c.l.b16 %v2373
      %v2465 = vunpack.c.l.b16 %v2374
      %v2466 = vunpack.c.l.b16 %v2375
      %v2467 = vunpack.c.l.b16 %v2376
      %v2468 = vunpack.c.l.b16 %v2377
      %v2469 = vunpack.c.l.b16 %v2378
      %v2470 = vunpack.c.l.b16 %v2379
      %v2471 = vunpack.c.l.b16 %v2380
      %v2472 = vunpack.c.l.b16 %v2381
      %v2473 = vunpack.c.l.b16 %v2382
      %v2474 = vunpack.c.l.b16 %v2383
      %v2475 = vunpack.c.l.b16 %v2384
      %v2476 = vpack.c.b16 %v2461, %v2460
      %v2477 = vpack.c.b16 %v2463, %v2462
      %v2478 = vpack.c.b16 %v2465, %v2464
      %v2479 = vpack.c.b16 %v2467, %v2466
      %v2480 = vpack.c.b16 %v2469, %v2468
      %v2481 = vpack.c.b16 %v2471, %v2470
      %v2482 = vpack.c.b16 %v2473, %v2472
      %v2483 = vpack.c.b16 %v2475, %v2474
      %2492 = vmatprep.subr.bf16.mxu0 0
      %2493 = vmatpush1.bf16.msra.mxu0 %v2483
      %2494 = vmatprep.subr.bf16.mxu0 0
      %2495 = vmatpush1.bf16.msra.mxu0 %v2482
      %2496 = vmatprep.subr.bf16.mxu0 0
      %2497 = vmatpush1.bf16.msra.mxu0 %v2481
      %2498 = vmatprep.subr.bf16.mxu0 0
      %2499 = vmatpush1.bf16.msra.mxu0 %v2480
      %2500 = vmatprep.subr.bf16.mxu0 0
      %2501 = vmatpush1.bf16.msra.mxu0 %v2479
      %2502 = vmatprep.subr.bf16.mxu0 0
      %2503 = vmatpush1.bf16.msra.mxu0 %v2478
      %2504 = vmatprep.subr.bf16.mxu0 0
      %2505 = vmatpush1.bf16.msra.mxu0 %v2477
      %2506 = vmatprep.subr.bf16.mxu0 0
      %2507 = vmatpush1.bf16.msra.mxu0 %v2476
      %2508 = vmatprep.subr.bf16.mxu0 0
      %2509 = vmatpush2.bf16.msra.mxu0 0
      %2510 = vmatprep.subr.bf16.mxu0 0
      %2511 = vmatpush2.bf16.msra.mxu0 0
      %2512 = vmatprep.subr.bf16.mxu0 0
      %2513 = vmatpush2.bf16.msra.mxu0 0
      %2514 = vmatprep.subr.bf16.mxu0 0
      %2515 = vmatpush2.bf16.msra.mxu0 0
      %2516 = vmatprep.subr.bf16.mxu0 0
      %2517 = vmatpush2.bf16.msra.mxu0 0
      %2518 = vmatprep.subr.bf16.mxu0 0
      %2519 = vmatpush2.bf16.msra.mxu0 0
      %2520 = vmatprep.subr.bf16.mxu0 0
      %2521 = vmatpush2.bf16.msra.mxu0 0
      %2522 = vmatprep.subr.bf16.mxu0 0
      %2523 = vmatpush2.bf16.msra.mxu0 0
      %2524 = vmatprep.mubr.bf16.mxu0 0
      %2525 = vmatmul.mubr.bf16.gmra.mxu0 %v2391
      %v2526 = vpop.f32.mrf.mxu0
      %v2527 = vadd.f32 0.0, %v2526
      %v2528 = vpop.f32.mrf.mxu0
      %v2529 = vpop.f32.mrf.mxu0
      %v2530 = vadd.f32 0.0, %v2529
      %v2531 = vpop.f32.mrf.mxu0
      %2532 = vmatprep.mubr.bf16.mxu0 0
      %2533 = vmatmul.mubr.bf16.gmra.mxu0 %v2393
      %v2534 = vpop.f32.mrf.mxu0
      %v2535 = vadd.f32 0.0, %v2534
      %v2536 = vpop.f32.mrf.mxu0
      %v2537 = vpop.f32.mrf.mxu0
      %v2538 = vadd.f32 0.0, %v2537
      %v2539 = vpop.f32.mrf.mxu0
      %2540 = vmatprep.mubr.bf16.mxu0 0
      %2541 = vmatmul.mubr.bf16.gmra.mxu0 %v2395
      %v2542 = vpop.f32.mrf.mxu0
      %v2543 = vadd.f32 0.0, %v2542
      %v2544 = vpop.f32.mrf.mxu0
      %v2545 = vpop.f32.mrf.mxu0
      %v2546 = vadd.f32 0.0, %v2545
      %v2547 = vpop.f32.mrf.mxu0
      %2548 = vmatprep.mubr.bf16.mxu0 0
      %2549 = vmatmul.mubr.bf16.gmra.mxu0 %v2397
      %v2550 = vpop.f32.mrf.mxu0
      %v2551 = vadd.f32 0.0, %v2550
      %v2552 = vpop.f32.mrf.mxu0
      %v2553 = vpop.f32.mrf.mxu0
      %v2554 = vadd.f32 0.0, %v2553
      %v2555 = vpop.f32.mrf.mxu0
      %2556 = vmatprep.mubr.bf16.mxu0 0
      %2557 = vmatmul.mubr.bf16.gmra.mxu0 %v2399
      %v2558 = vpop.f32.mrf.mxu0
      %v2559 = vadd.f32 0.0, %v2558
      %v2560 = vpop.f32.mrf.mxu0
      %v2561 = vpop.f32.mrf.mxu0
      %v2562 = vadd.f32 0.0, %v2561
      %v2563 = vpop.f32.mrf.mxu0
      %2564 = vmatprep.mubr.bf16.mxu0 0
      %2565 = vmatmul.mubr.bf16.gmra.mxu0 %v2401
      %v2566 = vpop.f32.mrf.mxu0
      %v2567 = vadd.f32 0.0, %v2566
      %v2568 = vpop.f32.mrf.mxu0
      %v2569 = vpop.f32.mrf.mxu0
      %v2570 = vadd.f32 0.0, %v2569
      %v2571 = vpop.f32.mrf.mxu0
      %2572 = vmatprep.mubr.bf16.mxu0 0
      %2573 = vmatmul.mubr.bf16.gmra.mxu0 %v2403
      %v2574 = vpop.f32.mrf.mxu0
      %v2575 = vadd.f32 0.0, %v2574
      %v2576 = vpop.f32.mrf.mxu0
      %v2577 = vpop.f32.mrf.mxu0
      %v2578 = vadd.f32 0.0, %v2577
      %v2579 = vpop.f32.mrf.mxu0
      %2580 = vmatprep.mubr.bf16.mxu0 0
      %2581 = vmatmul.mubr.bf16.gmra.mxu0 %v2405
      %v2582 = vpop.f32.mrf.mxu0
      %v2583 = vadd.f32 0.0, %v2582
      %v2584 = vpop.f32.mrf.mxu0
      %v2585 = vpop.f32.mrf.mxu0
      %v2586 = vadd.f32 0.0, %v2585
      %v2587 = vpop.f32.mrf.mxu0
      %2588 = vmatprep.mubr.bf16.mxu0 0
      %2589 = vmatmul.mubr.bf16.gmra.mxu0 %v2407
      %v2590 = vpop.f32.mrf.mxu0
      %v2591 = vadd.f32 0.0, %v2590
      %v2592 = vpop.f32.mrf.mxu0
      %v2593 = vpop.f32.mrf.mxu0
      %v2594 = vadd.f32 0.0, %v2593
      %v2595 = vpop.f32.mrf.mxu0
      %2596 = vmatprep.mubr.bf16.mxu0 0
      %2597 = vmatmul.mubr.bf16.gmra.mxu0 %v2409
      %v2598 = vpop.f32.mrf.mxu0
      %v2599 = vadd.f32 0.0, %v2598
      %v2600 = vpop.f32.mrf.mxu0
      %v2601 = vpop.f32.mrf.mxu0
      %v2602 = vadd.f32 0.0, %v2601
      %v2603 = vpop.f32.mrf.mxu0
      %2604 = vmatprep.mubr.bf16.mxu0 0
      %2605 = vmatmul.mubr.bf16.gmra.mxu0 %v2411
      %v2606 = vpop.f32.mrf.mxu0
      %v2607 = vadd.f32 0.0, %v2606
      %v2608 = vpop.f32.mrf.mxu0
      %v2609 = vpop.f32.mrf.mxu0
      %v2610 = vadd.f32 0.0, %v2609
      %v2611 = vpop.f32.mrf.mxu0
      %2612 = vmatprep.mubr.bf16.mxu0 0
      %2613 = vmatmul.mubr.bf16.gmra.mxu0 %v2413
      %v2614 = vpop.f32.mrf.mxu0
      %v2615 = vadd.f32 0.0, %v2614
      %v2616 = vpop.f32.mrf.mxu0
      %v2617 = vpop.f32.mrf.mxu0
      %v2618 = vadd.f32 0.0, %v2617
      %v2619 = vpop.f32.mrf.mxu0
      %2620 = vmatprep.mubr.bf16.mxu0 0
      %2621 = vmatmul.mubr.bf16.gmra.mxu0 %v2415
      %v2622 = vpop.f32.mrf.mxu0
      %v2623 = vadd.f32 0.0, %v2622
      %v2624 = vpop.f32.mrf.mxu0
      %v2625 = vpop.f32.mrf.mxu0
      %v2626 = vadd.f32 0.0, %v2625
      %v2627 = vpop.f32.mrf.mxu0
      %2628 = vmatprep.mubr.bf16.mxu0 0
      %2629 = vmatmul.mubr.bf16.gmra.mxu0 %v2417
      %v2630 = vpop.f32.mrf.mxu0
      %v2631 = vadd.f32 0.0, %v2630
      %v2632 = vpop.f32.mrf.mxu0
      %v2633 = vpop.f32.mrf.mxu0
      %v2634 = vadd.f32 0.0, %v2633
      %v2635 = vpop.f32.mrf.mxu0
      %2636 = vmatprep.mubr.bf16.mxu0 0
      %2637 = vmatmul.mubr.bf16.gmra.mxu0 %v2419
      %v2638 = vpop.f32.mrf.mxu0
      %v2639 = vadd.f32 0.0, %v2638
      %v2640 = vpop.f32.mrf.mxu0
      %v2641 = vpop.f32.mrf.mxu0
      %v2642 = vadd.f32 0.0, %v2641
      %v2643 = vpop.f32.mrf.mxu0
      %2644 = vmatprep.mubr.bf16.mxu0 0
      %2645 = vmatmul.mubr.bf16.gmra.mxu0 %v2421
      %v2646 = vpop.f32.mrf.mxu0
      %v2647 = vadd.f32 0.0, %v2646
      %v2648 = vpop.f32.mrf.mxu0
      %v2649 = vpop.f32.mrf.mxu0
      %v2650 = vadd.f32 0.0, %v2649
      %v2651 = vpop.f32.mrf.mxu0
      %2652 = vmatprep.mubr.bf16.mxu0 0
      %2653 = vmatmul.mubr.bf16.gmra.mxu0 %v2423
      %v2654 = vpop.f32.mrf.mxu0
      %v2655 = vadd.f32 0.0, %v2654
      %v2656 = vpop.f32.mrf.mxu0
      %v2657 = vpop.f32.mrf.mxu0
      %v2658 = vadd.f32 0.0, %v2657
      %v2659 = vpop.f32.mrf.mxu0
      %2660 = vmatprep.mubr.bf16.mxu0 0
      %2661 = vmatmul.mubr.bf16.gmra.mxu0 %v2425
      %v2662 = vpop.f32.mrf.mxu0
      %v2663 = vadd.f32 0.0, %v2662
      %v2664 = vpop.f32.mrf.mxu0
      %v2665 = vpop.f32.mrf.mxu0
      %v2666 = vadd.f32 0.0, %v2665
      %v2667 = vpop.f32.mrf.mxu0
      %2668 = vdwg.mxu0
      %v2669 = vadd.f32 %v2331, %v2527
      %v2670 = vadd.f32 %v2332, %v2530
      %v2671 = vadd.f32 %v2333, %v2535
      %v2672 = vadd.f32 %v2334, %v2538
      %v2673 = vadd.f32 %v2335, %v2543
      %v2674 = vadd.f32 %v2336, %v2546
      %v2675 = vadd.f32 %v2337, %v2551
      %v2676 = vadd.f32 %v2338, %v2554
      %v2677 = vadd.f32 %v2339, %v2559
      %v2678 = vadd.f32 %v2340, %v2562
      %v2679 = vadd.f32 %v2341, %v2567
      %v2680 = vadd.f32 %v2342, %v2570
      %v2681 = vadd.f32 %v2343, %v2575
      %v2682 = vadd.f32 %v2344, %v2578
      %v2683 = vadd.f32 %v2345, %v2583
      %v2684 = vadd.f32 %v2346, %v2586
      %v2685 = vadd.f32 %v2347, %v2591
      %v2686 = vadd.f32 %v2348, %v2594
      %v2687 = vadd.f32 %v2349, %v2599
      %v2688 = vadd.f32 %v2350, %v2602
      %v2689 = vadd.f32 %v2351, %v2607
      %v2690 = vadd.f32 %v2352, %v2610
      %v2691 = vadd.f32 %v2353, %v2615
      %v2692 = vadd.f32 %v2354, %v2618
      %v2693 = vadd.f32 %v2355, %v2623
      %v2694 = vadd.f32 %v2356, %v2626
      %v2695 = vadd.f32 %v2357, %v2631
      %v2696 = vadd.f32 %v2358, %v2634
      %v2697 = vadd.f32 %v2359, %v2639
      %v2698 = vadd.f32 %v2360, %v2642
      %v2699 = vadd.f32 %v2361, %v2647
      %v2700 = vadd.f32 %v2362, %v2650
      %v2701 = vadd.f32 %v2363, %v2655
      %v2702 = vadd.f32 %v2364, %v2658
      %v2703 = vadd.f32 %v2365, %v2663
      %v2704 = vadd.f32 %v2366, %v2666
      %v2705 = vld [vmem:[%s246 + $0x10] sm:$0xc]
      %v2706 = vld [vmem:[%s246 + $0x14] sm:$0xf]
      %v2707 = vld [vmem:[%s246 + $0x18] sm:$0xf]
      %v2708 = vld [vmem:[%s246 + $0x1c] sm:$0xf]
      %v2709 = vld [vmem:[%s246 + $0x20] sm:$0xf]
      %v2710 = vld [vmem:[%s246 + $0x24] sm:$0xf]
      %v2711 = vld [vmem:[%s246 + $0x28] sm:$0xf]
      %v2712 = vld [vmem:[%s246 + $0x2c] sm:$0xf]
      %v2713 = vld [vmem:[%s246 + $0x30] sm:$0xf]
      %v2714 = vld [vmem:[%s246 + $0x34] sm:$0xf]
      %v2715 = vld [vmem:[%s246 + $0x38] sm:$0xf]
      %v2716 = vld [vmem:[%s246 + $0x3c] sm:$0xf]
      %v2717 = vld [vmem:[%s246 + $0x40] sm:$0xf]
      %v2718 = vld [vmem:[%s246 + $0x44] sm:$0xf]
      %v2719 = vld [vmem:[%s246 + $0x48] sm:$0xf]
      %v2720 = vld [vmem:[%s246 + $0x4c] sm:$0xf]
      %v2721 = vld [vmem:[%s246 + $0x50] sm:$0xf]
      %v2722 = vld [vmem:[%s246 + $0x54] sm:$0xf]
      %v2723 = vld [vmem:[%s246 + $0x58] sm:$0xf]
      %v2724 = vld [vmem:[%s246 + $0x5c] sm:$0xf]
      %v2725 = vld [vmem:[%s246 + $0x60] sm:$0xf]
      %v2726 = vld [vmem:[%s246 + $0x64] sm:$0xf]
      %v2727 = vld [vmem:[%s246 + $0x68] sm:$0xf]
      %v2728 = vld [vmem:[%s246 + $0x6c] sm:$0xf]
      %v2729 = vld [vmem:[%s246 + $0x70] sm:$0xf]
      %v2730 = vld [vmem:[%s246 + $0x74] sm:$0xf]
      %v2731 = vld [vmem:[%s246 + $0x78] sm:$0xf]
      %v2732 = vld [vmem:[%s246 + $0x7c] sm:$0xf]
      %v2733 = vld [vmem:[%s246 + $0x80] sm:$0xf]
      %v2734 = vld [vmem:[%s246 + $0x84] sm:$0xf]
      %v2735 = vld [vmem:[%s246 + $0x88] sm:$0xf]
      %v2736 = vld [vmem:[%s246 + $0x8c] sm:$0xf]
      %v2737 = vld [vmem:[%s246 + $0x90] sm:$0xf]
      %v2738 = vld [vmem:[%s246 + $0x94] sm:$0xf]
      %v2739 = vld [vmem:[%s246 + $0x98] sm:$0xf]
      %v2740 = vld [vmem:[%s246 + $0x9c] sm:$0xf]
      %v2741 = vld [vmem:[%s246 + $0xa0] sm:$0x3]
      %s2742 = scalar_lea.vmem %s2, 384
      %v2743 = vld [vmem:[%s2742] sm:$0xf]
      %v2744 = vld [vmem:[%s2742 + $0x4] sm:$0xf]
      %v2745 = vld [vmem:[%s2742 + $0x8] sm:$0xf]
      %v2746 = vld [vmem:[%s2742 + $0xc] sm:$0xf]
      %v2747 = vld [vmem:[%s2742 + $0x10] sm:$0xf]
      %v2748 = vld [vmem:[%s2742 + $0x14] sm:$0xf]
      %v2749 = vld [vmem:[%s2742 + $0x18] sm:$0xf]
      %v2750 = vld [vmem:[%s2742 + $0x1c] sm:$0xf]
      %v2751 = vld [vmem:[%s2742 + $0x20] sm:$0xf]
      %v2752 = vld [vmem:[%s2742 + $0x24] sm:$0xf]
      %v2753 = vld [vmem:[%s2742 + $0x28] sm:$0xf]
      %v2754 = vld [vmem:[%s2742 + $0x2c] sm:$0xf]
      %v2755 = vld [vmem:[%s2742 + $0x30] sm:$0xf]
      %v2756 = vld [vmem:[%s2742 + $0x34] sm:$0xf]
      %v2757 = vld [vmem:[%s2742 + $0x38] sm:$0xf]
      %v2758 = vld [vmem:[%s2742 + $0x3c] sm:$0xf]
      %v2796 = vunpack.c.l.b16 %v2705
      %v2797 = vunpack.c.l.b16 %v2706
      %v2798 = vunpack.c.l.b16 %v2707
      %v2799 = vunpack.c.l.b16 %v2708
      %v2800 = vunpack.c.l.b16 %v2709
      %v2801 = vunpack.c.l.b16 %v2710
      %v2802 = vunpack.c.l.b16 %v2711
      %v2803 = vunpack.c.l.b16 %v2712
      %v2804 = vunpack.c.l.b16 %v2713
      %v2805 = vunpack.c.l.b16 %v2714
      %v2806 = vunpack.c.l.b16 %v2715
      %v2807 = vunpack.c.l.b16 %v2716
      %v2808 = vunpack.c.l.b16 %v2717
      %v2809 = vunpack.c.l.b16 %v2718
      %v2810 = vunpack.c.l.b16 %v2719
      %v2811 = vunpack.c.l.b16 %v2720
      %v2812 = vunpack.c.l.b16 %v2721
      %v2813 = vunpack.c.l.b16 %v2722
      %v2814 = vunpack.c.l.b16 %v2723
      %v2815 = vunpack.c.l.b16 %v2724
      %v2816 = vunpack.c.l.b16 %v2725
      %v2817 = vunpack.c.l.b16 %v2726
      %v2818 = vunpack.c.l.b16 %v2727
      %v2819 = vunpack.c.l.b16 %v2728
      %v2820 = vunpack.c.l.b16 %v2729
      %v2821 = vunpack.c.l.b16 %v2730
      %v2822 = vunpack.c.l.b16 %v2731
      %v2823 = vunpack.c.l.b16 %v2732
      %v2824 = vunpack.c.l.b16 %v2733
      %v2825 = vunpack.c.l.b16 %v2734
      %v2826 = vunpack.c.l.b16 %v2735
      %v2827 = vunpack.c.l.b16 %v2736
      %v2828 = vunpack.c.l.b16 %v2737
      %v2829 = vunpack.c.l.b16 %v2738
      %v2830 = vunpack.c.l.b16 %v2739
      %v2831 = vunpack.c.l.b16 %v2740
      %v2832 = vunpack.c.l.b16 %v2741
      %v2833 = vpack.c.b16 %v2797, %v2796
      %v2834 = vpack.c.b16 %v2799, %v2798
      %v2835 = vpack.c.b16 %v2801, %v2800
      %v2836 = vpack.c.b16 %v2803, %v2802
      %v2837 = vpack.c.b16 %v2805, %v2804
      %v2838 = vpack.c.b16 %v2807, %v2806
      %v2839 = vpack.c.b16 %v2809, %v2808
      %v2840 = vpack.c.b16 %v2811, %v2810
      %v2841 = vpack.c.b16 %v2813, %v2812
      %v2842 = vpack.c.b16 %v2815, %v2814
      %v2843 = vpack.c.b16 %v2817, %v2816
      %v2844 = vpack.c.b16 %v2819, %v2818
      %v2845 = vpack.c.b16 %v2821, %v2820
      %v2846 = vpack.c.b16 %v2823, %v2822
      %v2847 = vpack.c.b16 %v2825, %v2824
      %v2848 = vpack.c.b16 %v2827, %v2826
      %v2849 = vpack.c.b16 %v2829, %v2828
      %v2850 = vpack.c.b16 %v2831, %v2830
      %v2851 = vpack.c.b16 %v2832, %v2832
      %v2852 = vrot.slane %v2833, 2
      %v2853 = vrot.slane %v2834, 2
      %v2854 = vsel %vm2388, %v2852, %v2853
      %v2855 = vrot.slane %v2835, 2
      %v2856 = vsel %vm2388, %v2853, %v2855
      %v2857 = vrot.slane %v2836, 2
      %v2858 = vsel %vm2388, %v2855, %v2857
      %v2859 = vrot.slane %v2837, 2
      %v2860 = vsel %vm2388, %v2857, %v2859
      %v2861 = vrot.slane %v2838, 2
      %v2862 = vsel %vm2388, %v2859, %v2861
      %v2863 = vrot.slane %v2839, 2
      %v2864 = vsel %vm2388, %v2861, %v2863
      %v2865 = vrot.slane %v2840, 2
      %v2866 = vsel %vm2388, %v2863, %v2865
      %v2867 = vrot.slane %v2841, 2
      %v2868 = vsel %vm2388, %v2865, %v2867
      %v2869 = vrot.slane %v2842, 2
      %v2870 = vsel %vm2388, %v2867, %v2869
      %v2871 = vrot.slane %v2843, 2
      %v2872 = vsel %vm2388, %v2869, %v2871
      %v2873 = vrot.slane %v2844, 2
      %v2874 = vsel %vm2388, %v2871, %v2873
      %v2875 = vrot.slane %v2845, 2
      %v2876 = vsel %vm2388, %v2873, %v2875
      %v2877 = vrot.slane %v2846, 2
      %v2878 = vsel %vm2388, %v2875, %v2877
      %v2879 = vrot.slane %v2847, 2
      %v2880 = vsel %vm2388, %v2877, %v2879
      %v2881 = vrot.slane %v2848, 2
      %v2882 = vsel %vm2388, %v2879, %v2881
      %v2883 = vrot.slane %v2849, 2
      %v2884 = vsel %vm2388, %v2881, %v2883
      %v2885 = vrot.slane %v2850, 2
      %v2886 = vsel %vm2388, %v2883, %v2885
      %v2887 = vrot.slane %v2851, 2
      %v2888 = vsel %vm2388, %v2885, %v2887
      %v2923 = vunpack.c.l.b16 %v2743
      %v2924 = vunpack.c.l.b16 %v2744
      %v2925 = vunpack.c.l.b16 %v2745
      %v2926 = vunpack.c.l.b16 %v2746
      %v2927 = vunpack.c.l.b16 %v2747
      %v2928 = vunpack.c.l.b16 %v2748
      %v2929 = vunpack.c.l.b16 %v2749
      %v2930 = vunpack.c.l.b16 %v2750
      %v2931 = vunpack.c.l.b16 %v2751
      %v2932 = vunpack.c.l.b16 %v2752
      %v2933 = vunpack.c.l.b16 %v2753
      %v2934 = vunpack.c.l.b16 %v2754
      %v2935 = vunpack.c.l.b16 %v2755
      %v2936 = vunpack.c.l.b16 %v2756
      %v2937 = vunpack.c.l.b16 %v2757
      %v2938 = vunpack.c.l.b16 %v2758
      %v2939 = vpack.c.b16 %v2924, %v2923
      %v2940 = vpack.c.b16 %v2926, %v2925
      %v2941 = vpack.c.b16 %v2928, %v2927
      %v2942 = vpack.c.b16 %v2930, %v2929
      %v2943 = vpack.c.b16 %v2932, %v2931
      %v2944 = vpack.c.b16 %v2934, %v2933
      %v2945 = vpack.c.b16 %v2936, %v2935
      %v2946 = vpack.c.b16 %v2938, %v2937
      %2955 = vmatprep.subr.bf16.mxu0 0
      %2956 = vmatpush1.bf16.msra.mxu0 %v2946
      %2957 = vmatprep.subr.bf16.mxu0 0
      %2958 = vmatpush1.bf16.msra.mxu0 %v2945
      %2959 = vmatprep.subr.bf16.mxu0 0
      %2960 = vmatpush1.bf16.msra.mxu0 %v2944
      %2961 = vmatprep.subr.bf16.mxu0 0
      %2962 = vmatpush1.bf16.msra.mxu0 %v2943
      %2963 = vmatprep.subr.bf16.mxu0 0
      %2964 = vmatpush1.bf16.msra.mxu0 %v2942
      %2965 = vmatprep.subr.bf16.mxu0 0
      %2966 = vmatpush1.bf16.msra.mxu0 %v2941
      %2967 = vmatprep.subr.bf16.mxu0 0
      %2968 = vmatpush1.bf16.msra.mxu0 %v2940
      %2969 = vmatprep.subr.bf16.mxu0 0
      %2970 = vmatpush1.bf16.msra.mxu0 %v2939
      %2971 = vmatprep.subr.bf16.mxu0 0
      %2972 = vmatpush2.bf16.msra.mxu0 0
      %2973 = vmatprep.subr.bf16.mxu0 0
      %2974 = vmatpush2.bf16.msra.mxu0 0
      %2975 = vmatprep.subr.bf16.mxu0 0
      %2976 = vmatpush2.bf16.msra.mxu0 0
      %2977 = vmatprep.subr.bf16.mxu0 0
      %2978 = vmatpush2.bf16.msra.mxu0 0
      %2979 = vmatprep.subr.bf16.mxu0 0
      %2980 = vmatpush2.bf16.msra.mxu0 0
      %2981 = vmatprep.subr.bf16.mxu0 0
      %2982 = vmatpush2.bf16.msra.mxu0 0
      %2983 = vmatprep.subr.bf16.mxu0 0
      %2984 = vmatpush2.bf16.msra.mxu0 0
      %2985 = vmatprep.subr.bf16.mxu0 0
      %2986 = vmatpush2.bf16.msra.mxu0 0
      %2987 = vmatprep.mubr.bf16.mxu0 0
      %2988 = vmatmul.mubr.bf16.gmra.mxu0 %v2854
      %v2989 = vpop.f32.mrf.mxu0
      %v2990 = vadd.f32 0.0, %v2989
      %v2991 = vpop.f32.mrf.mxu0
      %v2992 = vpop.f32.mrf.mxu0
      %v2993 = vadd.f32 0.0, %v2992
      %v2994 = vpop.f32.mrf.mxu0
      %2995 = vmatprep.mubr.bf16.mxu0 0
      %2996 = vmatmul.mubr.bf16.gmra.mxu0 %v2856
      %v2997 = vpop.f32.mrf.mxu0
      %v2998 = vadd.f32 0.0, %v2997
      %v2999 = vpop.f32.mrf.mxu0
      %v3000 = vpop.f32.mrf.mxu0
      %v3001 = vadd.f32 0.0, %v3000
      %v3002 = vpop.f32.mrf.mxu0
      %3003 = vmatprep.mubr.bf16.mxu0 0
      %3004 = vmatmul.mubr.bf16.gmra.mxu0 %v2858
      %v3005 = vpop.f32.mrf.mxu0
      %v3006 = vadd.f32 0.0, %v3005
      %v3007 = vpop.f32.mrf.mxu0
      %v3008 = vpop.f32.mrf.mxu0
      %v3009 = vadd.f32 0.0, %v3008
      %v3010 = vpop.f32.mrf.mxu0
      %3011 = vmatprep.mubr.bf16.mxu0 0
      %3012 = vmatmul.mubr.bf16.gmra.mxu0 %v2860
      %v3013 = vpop.f32.mrf.mxu0
      %v3014 = vadd.f32 0.0, %v3013
      %v3015 = vpop.f32.mrf.mxu0
      %v3016 = vpop.f32.mrf.mxu0
      %v3017 = vadd.f32 0.0, %v3016
      %v3018 = vpop.f32.mrf.mxu0
      %3019 = vmatprep.mubr.bf16.mxu0 0
      %3020 = vmatmul.mubr.bf16.gmra.mxu0 %v2862
      %v3021 = vpop.f32.mrf.mxu0
      %v3022 = vadd.f32 0.0, %v3021
      %v3023 = vpop.f32.mrf.mxu0
      %v3024 = vpop.f32.mrf.mxu0
      %v3025 = vadd.f32 0.0, %v3024
      %v3026 = vpop.f32.mrf.mxu0
      %3027 = vmatprep.mubr.bf16.mxu0 0
      %3028 = vmatmul.mubr.bf16.gmra.mxu0 %v2864
      %v3029 = vpop.f32.mrf.mxu0
      %v3030 = vadd.f32 0.0, %v3029
      %v3031 = vpop.f32.mrf.mxu0
      %v3032 = vpop.f32.mrf.mxu0
      %v3033 = vadd.f32 0.0, %v3032
      %v3034 = vpop.f32.mrf.mxu0
      %3035 = vmatprep.mubr.bf16.mxu0 0
      %3036 = vmatmul.mubr.bf16.gmra.mxu0 %v2866
      %v3037 = vpop.f32.mrf.mxu0
      %v3038 = vadd.f32 0.0, %v3037
      %v3039 = vpop.f32.mrf.mxu0
      %v3040 = vpop.f32.mrf.mxu0
      %v3041 = vadd.f32 0.0, %v3040
      %v3042 = vpop.f32.mrf.mxu0
      %3043 = vmatprep.mubr.bf16.mxu0 0
      %3044 = vmatmul.mubr.bf16.gmra.mxu0 %v2868
      %v3045 = vpop.f32.mrf.mxu0
      %v3046 = vadd.f32 0.0, %v3045
      %v3047 = vpop.f32.mrf.mxu0
      %v3048 = vpop.f32.mrf.mxu0
      %v3049 = vadd.f32 0.0, %v3048
      %v3050 = vpop.f32.mrf.mxu0
      %3051 = vmatprep.mubr.bf16.mxu0 0
      %3052 = vmatmul.mubr.bf16.gmra.mxu0 %v2870
      %v3053 = vpop.f32.mrf.mxu0
      %v3054 = vadd.f32 0.0, %v3053
      %v3055 = vpop.f32.mrf.mxu0
      %v3056 = vpop.f32.mrf.mxu0
      %v3057 = vadd.f32 0.0, %v3056
      %v3058 = vpop.f32.mrf.mxu0
      %3059 = vmatprep.mubr.bf16.mxu0 0
      %3060 = vmatmul.mubr.bf16.gmra.mxu0 %v2872
      %v3061 = vpop.f32.mrf.mxu0
      %v3062 = vadd.f32 0.0, %v3061
      %v3063 = vpop.f32.mrf.mxu0
      %v3064 = vpop.f32.mrf.mxu0
      %v3065 = vadd.f32 0.0, %v3064
      %v3066 = vpop.f32.mrf.mxu0
      %3067 = vmatprep.mubr.bf16.mxu0 0
      %3068 = vmatmul.mubr.bf16.gmra.mxu0 %v2874
      %v3069 = vpop.f32.mrf.mxu0
      %v3070 = vadd.f32 0.0, %v3069
      %v3071 = vpop.f32.mrf.mxu0
      %v3072 = vpop.f32.mrf.mxu0
      %v3073 = vadd.f32 0.0, %v3072
      %v3074 = vpop.f32.mrf.mxu0
      %3075 = vmatprep.mubr.bf16.mxu0 0
      %3076 = vmatmul.mubr.bf16.gmra.mxu0 %v2876
      %v3077 = vpop.f32.mrf.mxu0
      %v3078 = vadd.f32 0.0, %v3077
      %v3079 = vpop.f32.mrf.mxu0
      %v3080 = vpop.f32.mrf.mxu0
      %v3081 = vadd.f32 0.0, %v3080
      %v3082 = vpop.f32.mrf.mxu0
      %3083 = vmatprep.mubr.bf16.mxu0 0
      %3084 = vmatmul.mubr.bf16.gmra.mxu0 %v2878
      %v3085 = vpop.f32.mrf.mxu0
      %v3086 = vadd.f32 0.0, %v3085
      %v3087 = vpop.f32.mrf.mxu0
      %v3088 = vpop.f32.mrf.mxu0
      %v3089 = vadd.f32 0.0, %v3088
      %v3090 = vpop.f32.mrf.mxu0
      %3091 = vmatprep.mubr.bf16.mxu0 0
      %3092 = vmatmul.mubr.bf16.gmra.mxu0 %v2880
      %v3093 = vpop.f32.mrf.mxu0
      %v3094 = vadd.f32 0.0, %v3093
      %v3095 = vpop.f32.mrf.mxu0
      %v3096 = vpop.f32.mrf.mxu0
      %v3097 = vadd.f32 0.0, %v3096
      %v3098 = vpop.f32.mrf.mxu0
      %3099 = vmatprep.mubr.bf16.mxu0 0
      %3100 = vmatmul.mubr.bf16.gmra.mxu0 %v2882
      %v3101 = vpop.f32.mrf.mxu0
      %v3102 = vadd.f32 0.0, %v3101
      %v3103 = vpop.f32.mrf.mxu0
      %v3104 = vpop.f32.mrf.mxu0
      %v3105 = vadd.f32 0.0, %v3104
      %v3106 = vpop.f32.mrf.mxu0
      %3107 = vmatprep.mubr.bf16.mxu0 0
      %3108 = vmatmul.mubr.bf16.gmra.mxu0 %v2884
      %v3109 = vpop.f32.mrf.mxu0
      %v3110 = vadd.f32 0.0, %v3109
      %v3111 = vpop.f32.mrf.mxu0
      %v3112 = vpop.f32.mrf.mxu0
      %v3113 = vadd.f32 0.0, %v3112
      %v3114 = vpop.f32.mrf.mxu0
      %3115 = vmatprep.mubr.bf16.mxu0 0
      %3116 = vmatmul.mubr.bf16.gmra.mxu0 %v2886
      %v3117 = vpop.f32.mrf.mxu0
      %v3118 = vadd.f32 0.0, %v3117
      %v3119 = vpop.f32.mrf.mxu0
      %v3120 = vpop.f32.mrf.mxu0
      %v3121 = vadd.f32 0.0, %v3120
      %v3122 = vpop.f32.mrf.mxu0
      %3123 = vmatprep.mubr.bf16.mxu0 0
      %3124 = vmatmul.mubr.bf16.gmra.mxu0 %v2888
      %v3125 = vpop.f32.mrf.mxu0
      %v3126 = vadd.f32 0.0, %v3125
      %v3127 = vpop.f32.mrf.mxu0
      %v3128 = vpop.f32.mrf.mxu0
      %v3129 = vadd.f32 0.0, %v3128
      %v3130 = vpop.f32.mrf.mxu0
      %3131 = vdwg.mxu0
      %v3132 = vadd.f32 %v2669, %v2990
      %v3133 = vadd.f32 %v2670, %v2993
      %v3134 = vadd.f32 %v2671, %v2998
      %v3135 = vadd.f32 %v2672, %v3001
      %v3136 = vadd.f32 %v2673, %v3006
      %v3137 = vadd.f32 %v2674, %v3009
      %v3138 = vadd.f32 %v2675, %v3014
      %v3139 = vadd.f32 %v2676, %v3017
      %v3140 = vadd.f32 %v2677, %v3022
      %v3141 = vadd.f32 %v2678, %v3025
      %v3142 = vadd.f32 %v2679, %v3030
      %v3143 = vadd.f32 %v2680, %v3033
      %v3144 = vadd.f32 %v2681, %v3038
      %v3145 = vadd.f32 %v2682, %v3041
      %v3146 = vadd.f32 %v2683, %v3046
      %v3147 = vadd.f32 %v2684, %v3049
      %v3148 = vadd.f32 %v2685, %v3054
      %v3149 = vadd.f32 %v2686, %v3057
      %v3150 = vadd.f32 %v2687, %v3062
      %v3151 = vadd.f32 %v2688, %v3065
      %v3152 = vadd.f32 %v2689, %v3070
      %v3153 = vadd.f32 %v2690, %v3073
      %v3154 = vadd.f32 %v2691, %v3078
      %v3155 = vadd.f32 %v2692, %v3081
      %v3156 = vadd.f32 %v2693, %v3086
      %v3157 = vadd.f32 %v2694, %v3089
      %v3158 = vadd.f32 %v2695, %v3094
      %v3159 = vadd.f32 %v2696, %v3097
      %v3160 = vadd.f32 %v2697, %v3102
      %v3161 = vadd.f32 %v2698, %v3105
      %v3162 = vadd.f32 %v2699, %v3110
      %v3163 = vadd.f32 %v2700, %v3113
      %v3164 = vadd.f32 %v2701, %v3118
      %v3165 = vadd.f32 %v2702, %v3121
      %v3166 = vadd.f32 %v2703, %v3126
      %v3167 = vadd.f32 %v2704, %v3129
      %v3168 = vld [vmem:[%s246 + $0xa0] sm:$0x7]
      %s3169 = scalar_lea.vmem %s2, 448
      %v3170 = vld [vmem:[%s3169] sm:$0xf]
      %v3171 = vld [vmem:[%s3169 + $0x4] sm:$0xf]
      %v3172 = vld [vmem:[%s3169 + $0x8] sm:$0xf]
      %v3173 = vld [vmem:[%s3169 + $0xc] sm:$0xf]
      %v3174 = vld [vmem:[%s3169 + $0x10] sm:$0xf]
      %v3175 = vld [vmem:[%s3169 + $0x14] sm:$0xf]
      %v3176 = vld [vmem:[%s3169 + $0x18] sm:$0xf]
      %v3177 = vld [vmem:[%s3169 + $0x1c] sm:$0xf]
      %v3178 = vld [vmem:[%s3169 + $0x20] sm:$0xf]
      %v3179 = vld [vmem:[%s3169 + $0x24] sm:$0xf]
      %v3180 = vld [vmem:[%s3169 + $0x28] sm:$0xf]
      %v3181 = vld [vmem:[%s3169 + $0x2c] sm:$0xf]
      %v3182 = vld [vmem:[%s3169 + $0x30] sm:$0xf]
      %v3183 = vld [vmem:[%s3169 + $0x34] sm:$0xf]
      %v3184 = vld [vmem:[%s3169 + $0x38] sm:$0xf]
      %v3185 = vld [vmem:[%s3169 + $0x3c] sm:$0xf]
      %v3187 = vunpack.c.l.b16 %v3168
      %v3188 = vpack.c.b16 %v3187, %v3187
      %vm3189 = vsmask.f32 5376
      %v3191 = vshrl.u32 %v2833, 16
      %v3193 = vrot.slane %v3191, 2
      %v3194 = vshll.u32 %v2833, 16
      %v3196 = vrot.slane %v3194, 3
      %v3197 = vor.u32 %v3193, %v3196
      %v3199 = vshrl.u32 %v2834, 16
      %v3201 = vrot.slane %v3199, 2
      %v3202 = vshll.u32 %v2834, 16
      %v3204 = vrot.slane %v3202, 3
      %v3205 = vor.u32 %v3201, %v3204
      %v3206 = vsel %vm3189, %v3197, %v3205
      %v3208 = vshrl.u32 %v2835, 16
      %v3210 = vrot.slane %v3208, 2
      %v3211 = vshll.u32 %v2835, 16
      %v3213 = vrot.slane %v3211, 3
      %v3214 = vor.u32 %v3210, %v3213
      %v3215 = vsel %vm3189, %v3205, %v3214
      %v3217 = vshrl.u32 %v2836, 16
      %v3219 = vrot.slane %v3217, 2
      %v3220 = vshll.u32 %v2836, 16
      %v3222 = vrot.slane %v3220, 3
      %v3223 = vor.u32 %v3219, %v3222
      %v3224 = vsel %vm3189, %v3214, %v3223
      %v3226 = vshrl.u32 %v2837, 16
      %v3228 = vrot.slane %v3226, 2
      %v3229 = vshll.u32 %v2837, 16
      %v3231 = vrot.slane %v3229, 3
      %v3232 = vor.u32 %v3228, %v3231
      %v3233 = vsel %vm3189, %v3223, %v3232
      %v3235 = vshrl.u32 %v2838, 16
      %v3237 = vrot.slane %v3235, 2
      %v3238 = vshll.u32 %v2838, 16
      %v3240 = vrot.slane %v3238, 3
      %v3241 = vor.u32 %v3237, %v3240
      %v3242 = vsel %vm3189, %v3232, %v3241
      %v3244 = vshrl.u32 %v2839, 16
      %v3246 = vrot.slane %v3244, 2
      %v3247 = vshll.u32 %v2839, 16
      %v3249 = vrot.slane %v3247, 3
      %v3250 = vor.u32 %v3246, %v3249
      %v3251 = vsel %vm3189, %v3241, %v3250
      %v3253 = vshrl.u32 %v2840, 16
      %v3255 = vrot.slane %v3253, 2
      %v3256 = vshll.u32 %v2840, 16
      %v3258 = vrot.slane %v3256, 3
      %v3259 = vor.u32 %v3255, %v3258
      %v3260 = vsel %vm3189, %v3250, %v3259
      %v3262 = vshrl.u32 %v2841, 16
      %v3264 = vrot.slane %v3262, 2
      %v3265 = vshll.u32 %v2841, 16
      %v3267 = vrot.slane %v3265, 3
      %v3268 = vor.u32 %v3264, %v3267
      %v3269 = vsel %vm3189, %v3259, %v3268
      %v3271 = vshrl.u32 %v2842, 16
      %v3273 = vrot.slane %v3271, 2
      %v3274 = vshll.u32 %v2842, 16
      %v3276 = vrot.slane %v3274, 3
      %v3277 = vor.u32 %v3273, %v3276
      %v3278 = vsel %vm3189, %v3268, %v3277
      %v3280 = vshrl.u32 %v2843, 16
      %v3282 = vrot.slane %v3280, 2
      %v3283 = vshll.u32 %v2843, 16
      %v3285 = vrot.slane %v3283, 3
      %v3286 = vor.u32 %v3282, %v3285
      %v3287 = vsel %vm3189, %v3277, %v3286
      %v3289 = vshrl.u32 %v2844, 16
      %v3291 = vrot.slane %v3289, 2
      %v3292 = vshll.u32 %v2844, 16
      %v3294 = vrot.slane %v3292, 3
      %v3295 = vor.u32 %v3291, %v3294
      %v3296 = vsel %vm3189, %v3286, %v3295
      %v3298 = vshrl.u32 %v2845, 16
      %v3300 = vrot.slane %v3298, 2
      %v3301 = vshll.u32 %v2845, 16
      %v3303 = vrot.slane %v3301, 3
      %v3304 = vor.u32 %v3300, %v3303
      %v3305 = vsel %vm3189, %v3295, %v3304
      %v3307 = vshrl.u32 %v2846, 16
      %v3309 = vrot.slane %v3307, 2
      %v3310 = vshll.u32 %v2846, 16
      %v3312 = vrot.slane %v3310, 3
      %v3313 = vor.u32 %v3309, %v3312
      %v3314 = vsel %vm3189, %v3304, %v3313
      %v3316 = vshrl.u32 %v2847, 16
      %v3318 = vrot.slane %v3316, 2
      %v3319 = vshll.u32 %v2847, 16
      %v3321 = vrot.slane %v3319, 3
      %v3322 = vor.u32 %v3318, %v3321
      %v3323 = vsel %vm3189, %v3313, %v3322
      %v3325 = vshrl.u32 %v2848, 16
      %v3327 = vrot.slane %v3325, 2
      %v3328 = vshll.u32 %v2848, 16
      %v3330 = vrot.slane %v3328, 3
      %v3331 = vor.u32 %v3327, %v3330
      %v3332 = vsel %vm3189, %v3322, %v3331
      %v3334 = vshrl.u32 %v2849, 16
      %v3336 = vrot.slane %v3334, 2
      %v3337 = vshll.u32 %v2849, 16
      %v3339 = vrot.slane %v3337, 3
      %v3340 = vor.u32 %v3336, %v3339
      %v3341 = vsel %vm3189, %v3331, %v3340
      %v3343 = vshrl.u32 %v2850, 16
      %v3345 = vrot.slane %v3343, 2
      %v3346 = vshll.u32 %v2850, 16
      %v3348 = vrot.slane %v3346, 3
      %v3349 = vor.u32 %v3345, %v3348
      %v3350 = vsel %vm3189, %v3340, %v3349
      %v3352 = vshrl.u32 %v3188, 16
      %v3354 = vrot.slane %v3352, 2
      %v3355 = vshll.u32 %v3188, 16
      %v3357 = vrot.slane %v3355, 3
      %v3358 = vor.u32 %v3354, %v3357
      %v3359 = vsel %vm3189, %v3349, %v3358
      %v3394 = vunpack.c.l.b16 %v3170
      %v3395 = vunpack.c.l.b16 %v3171
      %v3396 = vunpack.c.l.b16 %v3172
      %v3397 = vunpack.c.l.b16 %v3173
      %v3398 = vunpack.c.l.b16 %v3174
      %v3399 = vunpack.c.l.b16 %v3175
      %v3400 = vunpack.c.l.b16 %v3176
      %v3401 = vunpack.c.l.b16 %v3177
      %v3402 = vunpack.c.l.b16 %v3178
      %v3403 = vunpack.c.l.b16 %v3179
      %v3404 = vunpack.c.l.b16 %v3180
      %v3405 = vunpack.c.l.b16 %v3181
      %v3406 = vunpack.c.l.b16 %v3182
      %v3407 = vunpack.c.l.b16 %v3183
      %v3408 = vunpack.c.l.b16 %v3184
      %v3409 = vunpack.c.l.b16 %v3185
      %v3410 = vpack.c.b16 %v3395, %v3394
      %v3411 = vpack.c.b16 %v3397, %v3396
      %v3412 = vpack.c.b16 %v3399, %v3398
      %v3413 = vpack.c.b16 %v3401, %v3400
      %v3414 = vpack.c.b16 %v3403, %v3402
      %v3415 = vpack.c.b16 %v3405, %v3404
      %v3416 = vpack.c.b16 %v3407, %v3406
      %v3417 = vpack.c.b16 %v3409, %v3408
      %3426 = vmatprep.subr.bf16.mxu0 0
      %3427 = vmatpush1.bf16.msra.mxu0 %v3417
      %3428 = vmatprep.subr.bf16.mxu0 0
      %3429 = vmatpush1.bf16.msra.mxu0 %v3416
      %3430 = vmatprep.subr.bf16.mxu0 0
      %3431 = vmatpush1.bf16.msra.mxu0 %v3415
      %3432 = vmatprep.subr.bf16.mxu0 0
      %3433 = vmatpush1.bf16.msra.mxu0 %v3414
      %3434 = vmatprep.subr.bf16.mxu0 0
      %3435 = vmatpush1.bf16.msra.mxu0 %v3413
      %3436 = vmatprep.subr.bf16.mxu0 0
      %3437 = vmatpush1.bf16.msra.mxu0 %v3412
      %3438 = vmatprep.subr.bf16.mxu0 0
      %3439 = vmatpush1.bf16.msra.mxu0 %v3411
      %3440 = vmatprep.subr.bf16.mxu0 0
      %3441 = vmatpush1.bf16.msra.mxu0 %v3410
      %3442 = vmatprep.subr.bf16.mxu0 0
      %3443 = vmatpush2.bf16.msra.mxu0 0
      %3444 = vmatprep.subr.bf16.mxu0 0
      %3445 = vmatpush2.bf16.msra.mxu0 0
      %3446 = vmatprep.subr.bf16.mxu0 0
      %3447 = vmatpush2.bf16.msra.mxu0 0
      %3448 = vmatprep.subr.bf16.mxu0 0
      %3449 = vmatpush2.bf16.msra.mxu0 0
      %3450 = vmatprep.subr.bf16.mxu0 0
      %3451 = vmatpush2.bf16.msra.mxu0 0
      %3452 = vmatprep.subr.bf16.mxu0 0
      %3453 = vmatpush2.bf16.msra.mxu0 0
      %3454 = vmatprep.subr.bf16.mxu0 0
      %3455 = vmatpush2.bf16.msra.mxu0 0
      %3456 = vmatprep.subr.bf16.mxu0 0
      %3457 = vmatpush2.bf16.msra.mxu0 0
      %3458 = vmatprep.mubr.bf16.mxu0 0
      %3459 = vmatmul.mubr.bf16.gmra.mxu0 %v3206
      %v3460 = vpop.f32.mrf.mxu0
      %v3461 = vadd.f32 0.0, %v3460
      %v3462 = vpop.f32.mrf.mxu0
      %v3463 = vpop.f32.mrf.mxu0
      %v3464 = vadd.f32 0.0, %v3463
      %v3465 = vpop.f32.mrf.mxu0
      %3466 = vmatprep.mubr.bf16.mxu0 0
      %3467 = vmatmul.mubr.bf16.gmra.mxu0 %v3215
      %v3468 = vpop.f32.mrf.mxu0
      %v3469 = vadd.f32 0.0, %v3468
      %v3470 = vpop.f32.mrf.mxu0
      %v3471 = vpop.f32.mrf.mxu0
      %v3472 = vadd.f32 0.0, %v3471
      %v3473 = vpop.f32.mrf.mxu0
      %3474 = vmatprep.mubr.bf16.mxu0 0
      %3475 = vmatmul.mubr.bf16.gmra.mxu0 %v3224
      %v3476 = vpop.f32.mrf.mxu0
      %v3477 = vadd.f32 0.0, %v3476
      %v3478 = vpop.f32.mrf.mxu0
      %v3479 = vpop.f32.mrf.mxu0
      %v3480 = vadd.f32 0.0, %v3479
      %v3481 = vpop.f32.mrf.mxu0
      %3482 = vmatprep.mubr.bf16.mxu0 0
      %3483 = vmatmul.mubr.bf16.gmra.mxu0 %v3233
      %v3484 = vpop.f32.mrf.mxu0
      %v3485 = vadd.f32 0.0, %v3484
      %v3486 = vpop.f32.mrf.mxu0
      %v3487 = vpop.f32.mrf.mxu0
      %v3488 = vadd.f32 0.0, %v3487
      %v3489 = vpop.f32.mrf.mxu0
      %3490 = vmatprep.mubr.bf16.mxu0 0
      %3491 = vmatmul.mubr.bf16.gmra.mxu0 %v3242
      %v3492 = vpop.f32.mrf.mxu0
      %v3493 = vadd.f32 0.0, %v3492
      %v3494 = vpop.f32.mrf.mxu0
      %v3495 = vpop.f32.mrf.mxu0
      %v3496 = vadd.f32 0.0, %v3495
      %v3497 = vpop.f32.mrf.mxu0
      %3498 = vmatprep.mubr.bf16.mxu0 0
      %3499 = vmatmul.mubr.bf16.gmra.mxu0 %v3251
      %v3500 = vpop.f32.mrf.mxu0
      %v3501 = vadd.f32 0.0, %v3500
      %v3502 = vpop.f32.mrf.mxu0
      %v3503 = vpop.f32.mrf.mxu0
      %v3504 = vadd.f32 0.0, %v3503
      %v3505 = vpop.f32.mrf.mxu0
      %3506 = vmatprep.mubr.bf16.mxu0 0
      %3507 = vmatmul.mubr.bf16.gmra.mxu0 %v3260
      %v3508 = vpop.f32.mrf.mxu0
      %v3509 = vadd.f32 0.0, %v3508
      %v3510 = vpop.f32.mrf.mxu0
      %v3511 = vpop.f32.mrf.mxu0
      %v3512 = vadd.f32 0.0, %v3511
      %v3513 = vpop.f32.mrf.mxu0
      %3514 = vmatprep.mubr.bf16.mxu0 0
      %3515 = vmatmul.mubr.bf16.gmra.mxu0 %v3269
      %v3516 = vpop.f32.mrf.mxu0
      %v3517 = vadd.f32 0.0, %v3516
      %v3518 = vpop.f32.mrf.mxu0
      %v3519 = vpop.f32.mrf.mxu0
      %v3520 = vadd.f32 0.0, %v3519
      %v3521 = vpop.f32.mrf.mxu0
      %3522 = vmatprep.mubr.bf16.mxu0 0
      %3523 = vmatmul.mubr.bf16.gmra.mxu0 %v3278
      %v3524 = vpop.f32.mrf.mxu0
      %v3525 = vadd.f32 0.0, %v3524
      %v3526 = vpop.f32.mrf.mxu0
      %v3527 = vpop.f32.mrf.mxu0
      %v3528 = vadd.f32 0.0, %v3527
      %v3529 = vpop.f32.mrf.mxu0
      %3530 = vmatprep.mubr.bf16.mxu0 0
      %3531 = vmatmul.mubr.bf16.gmra.mxu0 %v3287
      %v3532 = vpop.f32.mrf.mxu0
      %v3533 = vadd.f32 0.0, %v3532
      %v3534 = vpop.f32.mrf.mxu0
      %v3535 = vpop.f32.mrf.mxu0
      %v3536 = vadd.f32 0.0, %v3535
      %v3537 = vpop.f32.mrf.mxu0
      %3538 = vmatprep.mubr.bf16.mxu0 0
      %3539 = vmatmul.mubr.bf16.gmra.mxu0 %v3296
      %v3540 = vpop.f32.mrf.mxu0
      %v3541 = vadd.f32 0.0, %v3540
      %v3542 = vpop.f32.mrf.mxu0
      %v3543 = vpop.f32.mrf.mxu0
      %v3544 = vadd.f32 0.0, %v3543
      %v3545 = vpop.f32.mrf.mxu0
      %3546 = vmatprep.mubr.bf16.mxu0 0
      %3547 = vmatmul.mubr.bf16.gmra.mxu0 %v3305
      %v3548 = vpop.f32.mrf.mxu0
      %v3549 = vadd.f32 0.0, %v3548
      %v3550 = vpop.f32.mrf.mxu0
      %v3551 = vpop.f32.mrf.mxu0
      %v3552 = vadd.f32 0.0, %v3551
      %v3553 = vpop.f32.mrf.mxu0
      %3554 = vmatprep.mubr.bf16.mxu0 0
      %3555 = vmatmul.mubr.bf16.gmra.mxu0 %v3314
      %v3556 = vpop.f32.mrf.mxu0
      %v3557 = vadd.f32 0.0, %v3556
      %v3558 = vpop.f32.mrf.mxu0
      %v3559 = vpop.f32.mrf.mxu0
      %v3560 = vadd.f32 0.0, %v3559
      %v3561 = vpop.f32.mrf.mxu0
      %3562 = vmatprep.mubr.bf16.mxu0 0
      %3563 = vmatmul.mubr.bf16.gmra.mxu0 %v3323
      %v3564 = vpop.f32.mrf.mxu0
      %v3565 = vadd.f32 0.0, %v3564
      %v3566 = vpop.f32.mrf.mxu0
      %v3567 = vpop.f32.mrf.mxu0
      %v3568 = vadd.f32 0.0, %v3567
      %v3569 = vpop.f32.mrf.mxu0
      %3570 = vmatprep.mubr.bf16.mxu0 0
      %3571 = vmatmul.mubr.bf16.gmra.mxu0 %v3332
      %v3572 = vpop.f32.mrf.mxu0
      %v3573 = vadd.f32 0.0, %v3572
      %v3574 = vpop.f32.mrf.mxu0
      %v3575 = vpop.f32.mrf.mxu0
      %v3576 = vadd.f32 0.0, %v3575
      %v3577 = vpop.f32.mrf.mxu0
      %3578 = vmatprep.mubr.bf16.mxu0 0
      %3579 = vmatmul.mubr.bf16.gmra.mxu0 %v3341
      %v3580 = vpop.f32.mrf.mxu0
      %v3581 = vadd.f32 0.0, %v3580
      %v3582 = vpop.f32.mrf.mxu0
      %v3583 = vpop.f32.mrf.mxu0
      %v3584 = vadd.f32 0.0, %v3583
      %v3585 = vpop.f32.mrf.mxu0
      %3586 = vmatprep.mubr.bf16.mxu0 0
      %3587 = vmatmul.mubr.bf16.gmra.mxu0 %v3350
      %v3588 = vpop.f32.mrf.mxu0
      %v3589 = vadd.f32 0.0, %v3588
      %v3590 = vpop.f32.mrf.mxu0
      %v3591 = vpop.f32.mrf.mxu0
      %v3592 = vadd.f32 0.0, %v3591
      %v3593 = vpop.f32.mrf.mxu0
      %3594 = vmatprep.mubr.bf16.mxu0 0
      %3595 = vmatmul.mubr.bf16.gmra.mxu0 %v3359
      %v3596 = vpop.f32.mrf.mxu0
      %v3597 = vadd.f32 0.0, %v3596
      %v3598 = vpop.f32.mrf.mxu0
      %v3599 = vpop.f32.mrf.mxu0
      %v3600 = vadd.f32 0.0, %v3599
      %v3601 = vpop.f32.mrf.mxu0
      %3602 = vdwg.mxu0
      %v3603 = vadd.f32 %v3132, %v3461
      %v3604 = vadd.f32 %v3133, %v3464
      %v3605 = vadd.f32 %v3134, %v3469
      %v3606 = vadd.f32 %v3135, %v3472
      %v3607 = vadd.f32 %v3136, %v3477
      %v3608 = vadd.f32 %v3137, %v3480
      %v3609 = vadd.f32 %v3138, %v3485
      %v3610 = vadd.f32 %v3139, %v3488
      %v3611 = vadd.f32 %v3140, %v3493
      %v3612 = vadd.f32 %v3141, %v3496
      %v3613 = vadd.f32 %v3142, %v3501
      %v3614 = vadd.f32 %v3143, %v3504
      %v3615 = vadd.f32 %v3144, %v3509
      %v3616 = vadd.f32 %v3145, %v3512
      %v3617 = vadd.f32 %v3146, %v3517
      %v3618 = vadd.f32 %v3147, %v3520
      %v3619 = vadd.f32 %v3148, %v3525
      %v3620 = vadd.f32 %v3149, %v3528
      %v3621 = vadd.f32 %v3150, %v3533
      %v3622 = vadd.f32 %v3151, %v3536
      %v3623 = vadd.f32 %v3152, %v3541
      %v3624 = vadd.f32 %v3153, %v3544
      %v3625 = vadd.f32 %v3154, %v3549
      %v3626 = vadd.f32 %v3155, %v3552
      %v3627 = vadd.f32 %v3156, %v3557
      %v3628 = vadd.f32 %v3157, %v3560
      %v3629 = vadd.f32 %v3158, %v3565
      %v3630 = vadd.f32 %v3159, %v3568
      %v3631 = vadd.f32 %v3160, %v3573
      %v3632 = vadd.f32 %v3161, %v3576
      %v3633 = vadd.f32 %v3162, %v3581
      %v3634 = vadd.f32 %v3163, %v3584
      %v3635 = vadd.f32 %v3164, %v3589
      %v3636 = vadd.f32 %v3165, %v3592
      %v3637 = vadd.f32 %v3166, %v3597
      %v3638 = vadd.f32 %v3167, %v3600
      %v3639 = vld [vmem:[%s246 + $0x10] sm:$0x8]
      %s3640 = scalar_lea.vmem %s2, 512
      %v3641 = vld [vmem:[%s3640] sm:$0xf]
      %v3642 = vld [vmem:[%s3640 + $0x4] sm:$0xf]
      %v3643 = vld [vmem:[%s3640 + $0x8] sm:$0xf]
      %v3644 = vld [vmem:[%s3640 + $0xc] sm:$0xf]
      %v3645 = vld [vmem:[%s3640 + $0x10] sm:$0xf]
      %v3646 = vld [vmem:[%s3640 + $0x14] sm:$0xf]
      %v3647 = vld [vmem:[%s3640 + $0x18] sm:$0xf]
      %v3648 = vld [vmem:[%s3640 + $0x1c] sm:$0xf]
      %v3649 = vld [vmem:[%s3640 + $0x20] sm:$0xf]
      %v3650 = vld [vmem:[%s3640 + $0x24] sm:$0xf]
      %v3651 = vld [vmem:[%s3640 + $0x28] sm:$0xf]
      %v3652 = vld [vmem:[%s3640 + $0x2c] sm:$0xf]
      %v3653 = vld [vmem:[%s3640 + $0x30] sm:$0xf]
      %v3654 = vld [vmem:[%s3640 + $0x34] sm:$0xf]
      %v3655 = vld [vmem:[%s3640 + $0x38] sm:$0xf]
      %v3656 = vld [vmem:[%s3640 + $0x3c] sm:$0xf]
      %v3658 = vunpack.c.l.b16 %v3639
      %v3659 = vpack.c.b16 %v2797, %v3658
      %vm3660 = vcmask 1044480
      %v3661 = vrot.slane %v3659, 3
      %v3662 = vrot.slane %v2834, 3
      %v3663 = vsel %vm3660, %v3661, %v3662
      %v3664 = vrot.slane %v2835, 3
      %v3665 = vsel %vm3660, %v3662, %v3664
      %v3666 = vrot.slane %v2836, 3
      %v3667 = vsel %vm3660, %v3664, %v3666
      %v3668 = vrot.slane %v2837, 3
      %v3669 = vsel %vm3660, %v3666, %v3668
      %v3670 = vrot.slane %v2838, 3
      %v3671 = vsel %vm3660, %v3668, %v3670
      %v3672 = vrot.slane %v2839, 3
      %v3673 = vsel %vm3660, %v3670, %v3672
      %v3674 = vrot.slane %v2840, 3
      %v3675 = vsel %vm3660, %v3672, %v3674
      %v3676 = vrot.slane %v2841, 3
      %v3677 = vsel %vm3660, %v3674, %v3676
      %v3678 = vrot.slane %v2842, 3
      %v3679 = vsel %vm3660, %v3676, %v3678
      %v3680 = vrot.slane %v2843, 3
      %v3681 = vsel %vm3660, %v3678, %v3680
      %v3682 = vrot.slane %v2844, 3
      %v3683 = vsel %vm3660, %v3680, %v3682
      %v3684 = vrot.slane %v2845, 3
      %v3685 = vsel %vm3660, %v3682, %v3684
      %v3686 = vrot.slane %v2846, 3
      %v3687 = vsel %vm3660, %v3684, %v3686
      %v3688 = vrot.slane %v2847, 3
      %v3689 = vsel %vm3660, %v3686, %v3688
      %v3690 = vrot.slane %v2848, 3
      %v3691 = vsel %vm3660, %v3688, %v3690
      %v3692 = vrot.slane %v2849, 3
      %v3693 = vsel %vm3660, %v3690, %v3692
      %v3694 = vrot.slane %v2850, 3
      %v3695 = vsel %vm3660, %v3692, %v3694
      %v3696 = vrot.slane %v3188, 3
      %v3697 = vsel %vm3660, %v3694, %v3696
      %v3732 = vunpack.c.l.b16 %v3641
      %v3733 = vunpack.c.l.b16 %v3642
      %v3734 = vunpack.c.l.b16 %v3643
      %v3735 = vunpack.c.l.b16 %v3644
      %v3736 = vunpack.c.l.b16 %v3645
      %v3737 = vunpack.c.l.b16 %v3646
      %v3738 = vunpack.c.l.b16 %v3647
      %v3739 = vunpack.c.l.b16 %v3648
      %v3740 = vunpack.c.l.b16 %v3649
      %v3741 = vunpack.c.l.b16 %v3650
      %v3742 = vunpack.c.l.b16 %v3651
      %v3743 = vunpack.c.l.b16 %v3652
      %v3744 = vunpack.c.l.b16 %v3653
      %v3745 = vunpack.c.l.b16 %v3654
      %v3746 = vunpack.c.l.b16 %v3655
      %v3747 = vunpack.c.l.b16 %v3656
      %v3748 = vpack.c.b16 %v3733, %v3732
      %v3749 = vpack.c.b16 %v3735, %v3734
      %v3750 = vpack.c.b16 %v3737, %v3736
      %v3751 = vpack.c.b16 %v3739, %v3738
      %v3752 = vpack.c.b16 %v3741, %v3740
      %v3753 = vpack.c.b16 %v3743, %v3742
      %v3754 = vpack.c.b16 %v3745, %v3744
      %v3755 = vpack.c.b16 %v3747, %v3746
      %3764 = vmatprep.subr.bf16.mxu0 0
      %3765 = vmatpush1.bf16.msra.mxu0 %v3755
      %3766 = vmatprep.subr.bf16.mxu0 0
      %3767 = vmatpush1.bf16.msra.mxu0 %v3754
      %3768 = vmatprep.subr.bf16.mxu0 0
      %3769 = vmatpush1.bf16.msra.mxu0 %v3753
      %3770 = vmatprep.subr.bf16.mxu0 0
      %3771 = vmatpush1.bf16.msra.mxu0 %v3752
      %3772 = vmatprep.subr.bf16.mxu0 0
      %3773 = vmatpush1.bf16.msra.mxu0 %v3751
      %3774 = vmatprep.subr.bf16.mxu0 0
      %3775 = vmatpush1.bf16.msra.mxu0 %v3750
      %3776 = vmatprep.subr.bf16.mxu0 0
      %3777 = vmatpush1.bf16.msra.mxu0 %v3749
      %3778 = vmatprep.subr.bf16.mxu0 0
      %3779 = vmatpush1.bf16.msra.mxu0 %v3748
      %3780 = vmatprep.subr.bf16.mxu0 0
      %3781 = vmatpush2.bf16.msra.mxu0 0
      %3782 = vmatprep.subr.bf16.mxu0 0
      %3783 = vmatpush2.bf16.msra.mxu0 0
      %3784 = vmatprep.subr.bf16.mxu0 0
      %3785 = vmatpush2.bf16.msra.mxu0 0
      %3786 = vmatprep.subr.bf16.mxu0 0
      %3787 = vmatpush2.bf16.msra.mxu0 0
      %3788 = vmatprep.subr.bf16.mxu0 0
      %3789 = vmatpush2.bf16.msra.mxu0 0
      %3790 = vmatprep.subr.bf16.mxu0 0
      %3791 = vmatpush2.bf16.msra.mxu0 0
      %3792 = vmatprep.subr.bf16.mxu0 0
      %3793 = vmatpush2.bf16.msra.mxu0 0
      %3794 = vmatprep.subr.bf16.mxu0 0
      %3795 = vmatpush2.bf16.msra.mxu0 0
      %3796 = vmatprep.mubr.bf16.mxu0 0
      %3797 = vmatmul.mubr.bf16.gmra.mxu0 %v3663
      %v3798 = vpop.f32.mrf.mxu0
      %v3799 = vadd.f32 0.0, %v3798
      %v3800 = vpop.f32.mrf.mxu0
      %v3801 = vpop.f32.mrf.mxu0
      %v3802 = vadd.f32 0.0, %v3801
      %v3803 = vpop.f32.mrf.mxu0
      %3804 = vmatprep.mubr.bf16.mxu0 0
      %3805 = vmatmul.mubr.bf16.gmra.mxu0 %v3665
      %v3806 = vpop.f32.mrf.mxu0
      %v3807 = vadd.f32 0.0, %v3806
      %v3808 = vpop.f32.mrf.mxu0
      %v3809 = vpop.f32.mrf.mxu0
      %v3810 = vadd.f32 0.0, %v3809
      %v3811 = vpop.f32.mrf.mxu0
      %3812 = vmatprep.mubr.bf16.mxu0 0
      %3813 = vmatmul.mubr.bf16.gmra.mxu0 %v3667
      %v3814 = vpop.f32.mrf.mxu0
      %v3815 = vadd.f32 0.0, %v3814
      %v3816 = vpop.f32.mrf.mxu0
      %v3817 = vpop.f32.mrf.mxu0
      %v3818 = vadd.f32 0.0, %v3817
      %v3819 = vpop.f32.mrf.mxu0
      %3820 = vmatprep.mubr.bf16.mxu0 0
      %3821 = vmatmul.mubr.bf16.gmra.mxu0 %v3669
      %v3822 = vpop.f32.mrf.mxu0
      %v3823 = vadd.f32 0.0, %v3822
      %v3824 = vpop.f32.mrf.mxu0
      %v3825 = vpop.f32.mrf.mxu0
      %v3826 = vadd.f32 0.0, %v3825
      %v3827 = vpop.f32.mrf.mxu0
      %3828 = vmatprep.mubr.bf16.mxu0 0
      %3829 = vmatmul.mubr.bf16.gmra.mxu0 %v3671
      %v3830 = vpop.f32.mrf.mxu0
      %v3831 = vadd.f32 0.0, %v3830
      %v3832 = vpop.f32.mrf.mxu0
      %v3833 = vpop.f32.mrf.mxu0
      %v3834 = vadd.f32 0.0, %v3833
      %v3835 = vpop.f32.mrf.mxu0
      %3836 = vmatprep.mubr.bf16.mxu0 0
      %3837 = vmatmul.mubr.bf16.gmra.mxu0 %v3673
      %v3838 = vpop.f32.mrf.mxu0
      %v3839 = vadd.f32 0.0, %v3838
      %v3840 = vpop.f32.mrf.mxu0
      %v3841 = vpop.f32.mrf.mxu0
      %v3842 = vadd.f32 0.0, %v3841
      %v3843 = vpop.f32.mrf.mxu0
      %3844 = vmatprep.mubr.bf16.mxu0 0
      %3845 = vmatmul.mubr.bf16.gmra.mxu0 %v3675
      %v3846 = vpop.f32.mrf.mxu0
      %v3847 = vadd.f32 0.0, %v3846
      %v3848 = vpop.f32.mrf.mxu0
      %v3849 = vpop.f32.mrf.mxu0
      %v3850 = vadd.f32 0.0, %v3849
      %v3851 = vpop.f32.mrf.mxu0
      %3852 = vmatprep.mubr.bf16.mxu0 0
      %3853 = vmatmul.mubr.bf16.gmra.mxu0 %v3677
      %v3854 = vpop.f32.mrf.mxu0
      %v3855 = vadd.f32 0.0, %v3854
      %v3856 = vpop.f32.mrf.mxu0
      %v3857 = vpop.f32.mrf.mxu0
      %v3858 = vadd.f32 0.0, %v3857
      %v3859 = vpop.f32.mrf.mxu0
      %3860 = vmatprep.mubr.bf16.mxu0 0
      %3861 = vmatmul.mubr.bf16.gmra.mxu0 %v3679
      %v3862 = vpop.f32.mrf.mxu0
      %v3863 = vadd.f32 0.0, %v3862
      %v3864 = vpop.f32.mrf.mxu0
      %v3865 = vpop.f32.mrf.mxu0
      %v3866 = vadd.f32 0.0, %v3865
      %v3867 = vpop.f32.mrf.mxu0
      %3868 = vmatprep.mubr.bf16.mxu0 0
      %3869 = vmatmul.mubr.bf16.gmra.mxu0 %v3681
      %v3870 = vpop.f32.mrf.mxu0
      %v3871 = vadd.f32 0.0, %v3870
      %v3872 = vpop.f32.mrf.mxu0
      %v3873 = vpop.f32.mrf.mxu0
      %v3874 = vadd.f32 0.0, %v3873
      %v3875 = vpop.f32.mrf.mxu0
      %3876 = vmatprep.mubr.bf16.mxu0 0
      %3877 = vmatmul.mubr.bf16.gmra.mxu0 %v3683
      %v3878 = vpop.f32.mrf.mxu0
      %v3879 = vadd.f32 0.0, %v3878
      %v3880 = vpop.f32.mrf.mxu0
      %v3881 = vpop.f32.mrf.mxu0
      %v3882 = vadd.f32 0.0, %v3881
      %v3883 = vpop.f32.mrf.mxu0
      %3884 = vmatprep.mubr.bf16.mxu0 0
      %3885 = vmatmul.mubr.bf16.gmra.mxu0 %v3685
      %v3886 = vpop.f32.mrf.mxu0
      %v3887 = vadd.f32 0.0, %v3886
      %v3888 = vpop.f32.mrf.mxu0
      %v3889 = vpop.f32.mrf.mxu0
      %v3890 = vadd.f32 0.0, %v3889
      %v3891 = vpop.f32.mrf.mxu0
      %3892 = vmatprep.mubr.bf16.mxu0 0
      %3893 = vmatmul.mubr.bf16.gmra.mxu0 %v3687
      %v3894 = vpop.f32.mrf.mxu0
      %v3895 = vadd.f32 0.0, %v3894
      %v3896 = vpop.f32.mrf.mxu0
      %v3897 = vpop.f32.mrf.mxu0
      %v3898 = vadd.f32 0.0, %v3897
      %v3899 = vpop.f32.mrf.mxu0
      %3900 = vmatprep.mubr.bf16.mxu0 0
      %3901 = vmatmul.mubr.bf16.gmra.mxu0 %v3689
      %v3902 = vpop.f32.mrf.mxu0
      %v3903 = vadd.f32 0.0, %v3902
      %v3904 = vpop.f32.mrf.mxu0
      %v3905 = vpop.f32.mrf.mxu0
      %v3906 = vadd.f32 0.0, %v3905
      %v3907 = vpop.f32.mrf.mxu0
      %3908 = vmatprep.mubr.bf16.mxu0 0
      %3909 = vmatmul.mubr.bf16.gmra.mxu0 %v3691
      %v3910 = vpop.f32.mrf.mxu0
      %v3911 = vadd.f32 0.0, %v3910
      %v3912 = vpop.f32.mrf.mxu0
      %v3913 = vpop.f32.mrf.mxu0
      %v3914 = vadd.f32 0.0, %v3913
      %v3915 = vpop.f32.mrf.mxu0
      %3916 = vmatprep.mubr.bf16.mxu0 0
      %3917 = vmatmul.mubr.bf16.gmra.mxu0 %v3693
      %v3918 = vpop.f32.mrf.mxu0
      %v3919 = vadd.f32 0.0, %v3918
      %v3920 = vpop.f32.mrf.mxu0
      %v3921 = vpop.f32.mrf.mxu0
      %v3922 = vadd.f32 0.0, %v3921
      %v3923 = vpop.f32.mrf.mxu0
      %3924 = vmatprep.mubr.bf16.mxu0 0
      %3925 = vmatmul.mubr.bf16.gmra.mxu0 %v3695
      %v3926 = vpop.f32.mrf.mxu0
      %v3927 = vadd.f32 0.0, %v3926
      %v3928 = vpop.f32.mrf.mxu0
      %v3929 = vpop.f32.mrf.mxu0
      %v3930 = vadd.f32 0.0, %v3929
      %v3931 = vpop.f32.mrf.mxu0
      %3932 = vmatprep.mubr.bf16.mxu0 0
      %3933 = vmatmul.mubr.bf16.gmra.mxu0 %v3697
      %v3934 = vpop.f32.mrf.mxu0
      %v3935 = vadd.f32 0.0, %v3934
      %v3936 = vpop.f32.mrf.mxu0
      %v3937 = vpop.f32.mrf.mxu0
      %v3938 = vadd.f32 0.0, %v3937
      %v3939 = vpop.f32.mrf.mxu0
      %3940 = vdwg.mxu0
      %v3941 = vadd.f32 %v3603, %v3799
      %v3942 = vadd.f32 %v3604, %v3802
      %v3943 = vadd.f32 %v3605, %v3807
      %v3944 = vadd.f32 %v3606, %v3810
      %v3945 = vadd.f32 %v3607, %v3815
      %v3946 = vadd.f32 %v3608, %v3818
      %v3947 = vadd.f32 %v3609, %v3823
      %v3948 = vadd.f32 %v3610, %v3826
      %v3949 = vadd.f32 %v3611, %v3831
      %v3950 = vadd.f32 %v3612, %v3834
      %v3951 = vadd.f32 %v3613, %v3839
      %v3952 = vadd.f32 %v3614, %v3842
      %v3953 = vadd.f32 %v3615, %v3847
      %v3954 = vadd.f32 %v3616, %v3850
      %v3955 = vadd.f32 %v3617, %v3855
      %v3956 = vadd.f32 %v3618, %v3858
      %v3957 = vadd.f32 %v3619, %v3863
      %v3958 = vadd.f32 %v3620, %v3866
      %v3959 = vadd.f32 %v3621, %v3871
      %v3960 = vadd.f32 %v3622, %v3874
      %v3961 = vadd.f32 %v3623, %v3879
      %v3962 = vadd.f32 %v3624, %v3882
      %v3963 = vadd.f32 %v3625, %v3887
      %v3964 = vadd.f32 %v3626, %v3890
      %v3965 = vadd.f32 %v3627, %v3895
      %v3966 = vadd.f32 %v3628, %v3898
      %v3967 = vadd.f32 %v3629, %v3903
      %v3968 = vadd.f32 %v3630, %v3906
      %v3969 = vadd.f32 %v3631, %v3911
      %v3970 = vadd.f32 %v3632, %v3914
      %v3971 = vadd.f32 %v3633, %v3919
      %v3972 = vadd.f32 %v3634, %v3922
      %v3973 = vadd.f32 %v3635, %v3927
      %v3974 = vadd.f32 %v3636, %v3930
      %v3975 = vadd.f32 %v3637, %v3935
      %v3976 = vadd.f32 %v3638, %v3938
      %v3977 = vld [vmem:[%s3] sm:$0x1]
      %v3979 = vlaneseq
      %v3980 = vshrl.u32 %v3979, 7
      %v3981 = vsub.s32 0, %v3980
      %v3982 = vrot.slane %v3977, %v3981
      %v3984 = vadd.f32 %v3941, %v3982
      %v3985 = vadd.f32 %v3942, %v3982
      %v3986 = vadd.f32 %v3943, %v3982
      %v3987 = vadd.f32 %v3944, %v3982
      %v3988 = vadd.f32 %v3945, %v3982
      %v3989 = vadd.f32 %v3946, %v3982
      %v3990 = vadd.f32 %v3947, %v3982
      %v3991 = vadd.f32 %v3948, %v3982
      %v3992 = vadd.f32 %v3949, %v3982
      %v3993 = vadd.f32 %v3950, %v3982
      %v3994 = vadd.f32 %v3951, %v3982
      %v3995 = vadd.f32 %v3952, %v3982
      %v3996 = vadd.f32 %v3953, %v3982
      %v3997 = vadd.f32 %v3954, %v3982
      %v3998 = vadd.f32 %v3955, %v3982
      %v3999 = vadd.f32 %v3956, %v3982
      %v4000 = vadd.f32 %v3957, %v3982
      %v4001 = vadd.f32 %v3958, %v3982
      %v4002 = vadd.f32 %v3959, %v3982
      %v4003 = vadd.f32 %v3960, %v3982
      %v4004 = vadd.f32 %v3961, %v3982
      %v4005 = vadd.f32 %v3962, %v3982
      %v4006 = vadd.f32 %v3963, %v3982
      %v4007 = vadd.f32 %v3964, %v3982
      %v4008 = vadd.f32 %v3965, %v3982
      %v4009 = vadd.f32 %v3966, %v3982
      %v4010 = vadd.f32 %v3967, %v3982
      %v4011 = vadd.f32 %v3968, %v3982
      %v4012 = vadd.f32 %v3969, %v3982
      %v4013 = vadd.f32 %v3970, %v3982
      %v4014 = vadd.f32 %v3971, %v3982
      %v4015 = vadd.f32 %v3972, %v3982
      %v4016 = vadd.f32 %v3973, %v3982
      %v4017 = vadd.f32 %v3974, %v3982
      %v4018 = vadd.f32 %v3975, %v3982
      %v4019 = vadd.f32 %v3976, %v3982
      %v4020 = vmax.f32 %v3984, 0.0
      %v4021 = vmax.f32 %v3985, 0.0
      %v4022 = vmax.f32 %v3986, 0.0
      %v4023 = vmax.f32 %v3987, 0.0
      %v4024 = vmax.f32 %v3988, 0.0
      %v4025 = vmax.f32 %v3989, 0.0
      %v4026 = vmax.f32 %v3990, 0.0
      %v4027 = vmax.f32 %v3991, 0.0
      %v4028 = vmax.f32 %v3992, 0.0
      %v4029 = vmax.f32 %v3993, 0.0
      %v4030 = vmax.f32 %v3994, 0.0
      %v4031 = vmax.f32 %v3995, 0.0
      %v4032 = vmax.f32 %v3996, 0.0
      %v4033 = vmax.f32 %v3997, 0.0
      %v4034 = vmax.f32 %v3998, 0.0
      %v4035 = vmax.f32 %v3999, 0.0
      %v4036 = vmax.f32 %v4000, 0.0
      %v4037 = vmax.f32 %v4001, 0.0
      %v4038 = vmax.f32 %v4002, 0.0
      %v4039 = vmax.f32 %v4003, 0.0
      %v4040 = vmax.f32 %v4004, 0.0
      %v4041 = vmax.f32 %v4005, 0.0
      %v4042 = vmax.f32 %v4006, 0.0
      %v4043 = vmax.f32 %v4007, 0.0
      %v4044 = vmax.f32 %v4008, 0.0
      %v4045 = vmax.f32 %v4009, 0.0
      %v4046 = vmax.f32 %v4010, 0.0
      %v4047 = vmax.f32 %v4011, 0.0
      %v4048 = vmax.f32 %v4012, 0.0
      %v4049 = vmax.f32 %v4013, 0.0
      %v4050 = vmax.f32 %v4014, 0.0
      %v4051 = vmax.f32 %v4015, 0.0
      %v4052 = vmax.f32 %v4016, 0.0
      %v4053 = vmax.f32 %v4017, 0.0
      %v4054 = vmax.f32 %v4018, 0.0
      %v4055 = vmax.f32 %v4019, 0.0
      %4057 = vset.pattern.permute.xlu0 0
      %4058 = vperm.xlu0 %4057, %v261
      %v4059 = vpop.permute.xlu0 %4058
      %4062 = vset.pattern.permute.xlu0 0
      %4063 = vperm.xlu0 %4062, %v262
      %v4064 = vpop.permute.xlu0 %4063
      %4067 = vset.pattern.permute.xlu0 0
      %4068 = vperm.xlu0 %4067, %v263
      %v4069 = vpop.permute.xlu0 %4068
      %4072 = vset.pattern.permute.xlu0 0
      %4073 = vperm.xlu0 %4072, %v264
      %v4074 = vpop.permute.xlu0 %4073
      %4077 = vset.pattern.permute.xlu0 0
      %4078 = vperm.xlu0 %4077, %v265
      %v4079 = vpop.permute.xlu0 %4078
      %4082 = vset.pattern.permute.xlu0 0
      %4083 = vperm.xlu0 %4082, %v266
      %v4084 = vpop.permute.xlu0 %4083
      %4087 = vset.pattern.permute.xlu0 0
      %4088 = vperm.xlu0 %4087, %v267
      %v4089 = vpop.permute.xlu0 %4088
      %4092 = vset.pattern.permute.xlu0 0
      %4093 = vperm.xlu0 %4092, %v268
      %v4094 = vpop.permute.xlu0 %4093
      %4097 = vset.pattern.permute.xlu0 0
      %4098 = vperm.xlu0 %4097, %v269
      %v4099 = vpop.permute.xlu0 %4098
      %4102 = vset.pattern.permute.xlu0 0
      %4103 = vperm.xlu0 %4102, %v270
      %v4104 = vpop.permute.xlu0 %4103
      %4107 = vset.pattern.permute.xlu0 0
      %4108 = vperm.xlu0 %4107, %v271
      %v4109 = vpop.permute.xlu0 %4108
      %4112 = vset.pattern.permute.xlu0 0
      %4113 = vperm.xlu0 %4112, %v272
      %v4114 = vpop.permute.xlu0 %4113
      %4117 = vset.pattern.permute.xlu0 0
      %4118 = vperm.xlu0 %4117, %v273
      %v4119 = vpop.permute.xlu0 %4118
      %4122 = vset.pattern.permute.xlu0 0
      %4123 = vperm.xlu0 %4122, %v274
      %v4124 = vpop.permute.xlu0 %4123
      %4127 = vset.pattern.permute.xlu0 0
      %4128 = vperm.xlu0 %4127, %v275
      %v4129 = vpop.permute.xlu0 %4128
      %4132 = vset.pattern.permute.xlu0 0
      %4133 = vperm.xlu0 %4132, %v276
      %v4134 = vpop.permute.xlu0 %4133
      %4137 = vset.pattern.permute.xlu0 0
      %4138 = vperm.xlu0 %4137, %v277
      %v4139 = vpop.permute.xlu0 %4138
      %4142 = vset.pattern.permute.xlu0 0
      %4143 = vperm.xlu0 %4142, %v278
      %v4144 = vpop.permute.xlu0 %4143
      %4147 = vset.pattern.permute.xlu0 0
      %4148 = vperm.xlu0 %4147, %v279
      %v4149 = vpop.permute.xlu0 %4148
      %4152 = vset.pattern.permute.xlu0 0
      %4153 = vperm.xlu0 %4152, %v280
      %v4154 = vpop.permute.xlu0 %4153
      %4157 = vset.pattern.permute.xlu0 0
      %4158 = vperm.xlu0 %4157, %v281
      %v4159 = vpop.permute.xlu0 %4158
      %4162 = vset.pattern.permute.xlu0 0
      %4163 = vperm.xlu0 %4162, %v282
      %v4164 = vpop.permute.xlu0 %4163
      %4167 = vset.pattern.permute.xlu0 0
      %4168 = vperm.xlu0 %4167, %v283
      %v4169 = vpop.permute.xlu0 %4168
      %4172 = vset.pattern.permute.xlu0 0
      %4173 = vperm.xlu0 %4172, %v284
      %v4174 = vpop.permute.xlu0 %4173
      %4177 = vset.pattern.permute.xlu0 0
      %4178 = vperm.xlu0 %4177, %v285
      %v4179 = vpop.permute.xlu0 %4178
      %4182 = vset.pattern.permute.xlu0 0
      %4183 = vperm.xlu0 %4182, %v286
      %v4184 = vpop.permute.xlu0 %4183
      %4187 = vset.pattern.permute.xlu0 0
      %4188 = vperm.xlu0 %4187, %v287
      %v4189 = vpop.permute.xlu0 %4188
      %4192 = vset.pattern.permute.xlu0 0
      %4193 = vperm.xlu0 %4192, %v288
      %v4194 = vpop.permute.xlu0 %4193
      %4197 = vset.pattern.permute.xlu0 0
      %4198 = vperm.xlu0 %4197, %v289
      %v4199 = vpop.permute.xlu0 %4198
      %4202 = vset.pattern.permute.xlu0 0
      %4203 = vperm.xlu0 %4202, %v290
      %v4204 = vpop.permute.xlu0 %4203
      %4207 = vset.pattern.permute.xlu0 0
      %4208 = vperm.xlu0 %4207, %v291
      %v4209 = vpop.permute.xlu0 %4208
      %4212 = vset.pattern.permute.xlu0 0
      %4213 = vperm.xlu0 %4212, %v292
      %v4214 = vpop.permute.xlu0 %4213
      %4217 = vset.pattern.permute.xlu0 0
      %4218 = vperm.xlu0 %4217, %v293
      %v4219 = vpop.permute.xlu0 %4218
      %4222 = vset.pattern.permute.xlu0 0
      %4223 = vperm.xlu0 %4222, %v294
      %v4224 = vpop.permute.xlu0 %4223
      %4227 = vset.pattern.permute.xlu0 0
      %4228 = vperm.xlu0 %4227, %v295
      %v4229 = vpop.permute.xlu0 %4228
      %4232 = vset.pattern.permute.xlu0 0
      %4233 = vperm.xlu0 %4232, %v296
      %v4234 = vpop.permute.xlu0 %4233
      %v4236 = vmul.f32 %v4020, %v4059
      %v4237 = vmul.f32 %v4021, %v4064
      %v4238 = vmul.f32 %v4022, %v4069
      %v4239 = vmul.f32 %v4023, %v4074
      %v4240 = vmul.f32 %v4024, %v4079
      %v4241 = vmul.f32 %v4025, %v4084
      %v4242 = vmul.f32 %v4026, %v4089
      %v4243 = vmul.f32 %v4027, %v4094
      %v4244 = vmul.f32 %v4028, %v4099
      %v4245 = vmul.f32 %v4029, %v4104
      %v4246 = vmul.f32 %v4030, %v4109
      %v4247 = vmul.f32 %v4031, %v4114
      %v4248 = vmul.f32 %v4032, %v4119
      %v4249 = vmul.f32 %v4033, %v4124
      %v4250 = vmul.f32 %v4034, %v4129
      %v4251 = vmul.f32 %v4035, %v4134
      %v4252 = vmul.f32 %v4036, %v4139
      %v4253 = vmul.f32 %v4037, %v4144
      %v4254 = vmul.f32 %v4038, %v4149
      %v4255 = vmul.f32 %v4039, %v4154
      %v4256 = vmul.f32 %v4040, %v4159
      %v4257 = vmul.f32 %v4041, %v4164
      %v4258 = vmul.f32 %v4042, %v4169
      %v4259 = vmul.f32 %v4043, %v4174
      %v4260 = vmul.f32 %v4044, %v4179
      %v4261 = vmul.f32 %v4045, %v4184
      %v4262 = vmul.f32 %v4046, %v4189
      %v4263 = vmul.f32 %v4047, %v4194
      %v4264 = vmul.f32 %v4048, %v4199
      %v4265 = vmul.f32 %v4049, %v4204
      %v4266 = vmul.f32 %v4050, %v4209
      %v4267 = vmul.f32 %v4051, %v4214
      %v4268 = vmul.f32 %v4052, %v4219
      %v4269 = vmul.f32 %v4053, %v4224
      %v4270 = vmul.f32 %v4054, %v4229
      %v4271 = vmul.f32 %v4055, %v4234
      %v4272 = vpack.c.bf16 %v4237, %v4236
      %v4273 = vpack.c.bf16 %v4239, %v4238
      %v4274 = vpack.c.bf16 %v4241, %v4240
      %v4275 = vpack.c.bf16 %v4243, %v4242
      %v4276 = vpack.c.bf16 %v4245, %v4244
      %v4277 = vpack.c.bf16 %v4247, %v4246
      %v4278 = vpack.c.bf16 %v4249, %v4248
      %v4279 = vpack.c.bf16 %v4251, %v4250
      %v4280 = vpack.c.bf16 %v4253, %v4252
      %v4281 = vpack.c.bf16 %v4255, %v4254
      %v4282 = vpack.c.bf16 %v4257, %v4256
      %v4283 = vpack.c.bf16 %v4259, %v4258
      %v4284 = vpack.c.bf16 %v4261, %v4260
      %v4285 = vpack.c.bf16 %v4263, %v4262
      %v4286 = vpack.c.bf16 %v4265, %v4264
      %v4287 = vpack.c.bf16 %v4267, %v4266
      %v4288 = vpack.c.bf16 %v4269, %v4268
      %v4289 = vpack.c.bf16 %v4271, %v4270
      %v4308 = vunpack.c.l.b16 %v4272
      %v4309 = vunpack.c.h.b16 %v4272
      %v4310 = vunpack.c.l.b16 %v4273
      %v4311 = vunpack.c.h.b16 %v4273
      %v4312 = vunpack.c.l.b16 %v4274
      %v4313 = vunpack.c.h.b16 %v4274
      %v4314 = vunpack.c.l.b16 %v4275
      %v4315 = vunpack.c.h.b16 %v4275
      %v4316 = vunpack.c.l.b16 %v4276
      %v4317 = vunpack.c.h.b16 %v4276
      %v4318 = vunpack.c.l.b16 %v4277
      %v4319 = vunpack.c.h.b16 %v4277
      %v4320 = vunpack.c.l.b16 %v4278
      %v4321 = vunpack.c.h.b16 %v4278
      %v4322 = vunpack.c.l.b16 %v4279
      %v4323 = vunpack.c.h.b16 %v4279
      %v4324 = vunpack.c.l.b16 %v4280
      %v4325 = vunpack.c.h.b16 %v4280
      %v4326 = vunpack.c.l.b16 %v4281
      %v4327 = vunpack.c.h.b16 %v4281
      %v4328 = vunpack.c.l.b16 %v4282
      %v4329 = vunpack.c.h.b16 %v4282
      %v4330 = vunpack.c.l.b16 %v4283
      %v4331 = vunpack.c.h.b16 %v4283
      %v4332 = vunpack.c.l.b16 %v4284
      %v4333 = vunpack.c.h.b16 %v4284
      %v4334 = vunpack.c.l.b16 %v4285
      %v4335 = vunpack.c.h.b16 %v4285
      %v4336 = vunpack.c.l.b16 %v4286
      %v4337 = vunpack.c.h.b16 %v4286
      %v4338 = vunpack.c.l.b16 %v4287
      %v4339 = vunpack.c.h.b16 %v4287
      %v4340 = vunpack.c.l.b16 %v4288
      %v4341 = vunpack.c.h.b16 %v4288
      %v4342 = vunpack.c.l.b16 %v4289
      %v4343 = vunpack.c.h.b16 %v4289
      %v4344 = vpack.c.b16 %v4308, %v4308
      %v4345 = vpack.c.b16 %v4309, %v4309
      %v4346 = vpack.c.b16 %v4310, %v4310
      %v4347 = vpack.c.b16 %v4311, %v4311
      %v4348 = vpack.c.b16 %v4312, %v4312
      %v4349 = vpack.c.b16 %v4313, %v4313
      %v4350 = vpack.c.b16 %v4314, %v4314
      %v4351 = vpack.c.b16 %v4315, %v4315
      %v4352 = vpack.c.b16 %v4316, %v4316
      %v4353 = vpack.c.b16 %v4317, %v4317
      %v4354 = vpack.c.b16 %v4318, %v4318
      %v4355 = vpack.c.b16 %v4319, %v4319
      %v4356 = vpack.c.b16 %v4320, %v4320
      %v4357 = vpack.c.b16 %v4321, %v4321
      %v4358 = vpack.c.b16 %v4322, %v4322
      %v4359 = vpack.c.b16 %v4323, %v4323
      %v4360 = vpack.c.b16 %v4324, %v4324
      %v4361 = vpack.c.b16 %v4325, %v4325
      %v4362 = vpack.c.b16 %v4326, %v4326
      %v4363 = vpack.c.b16 %v4327, %v4327
      %v4364 = vpack.c.b16 %v4328, %v4328
      %v4365 = vpack.c.b16 %v4329, %v4329
      %v4366 = vpack.c.b16 %v4330, %v4330
      %v4367 = vpack.c.b16 %v4331, %v4331
      %v4368 = vpack.c.b16 %v4332, %v4332
      %v4369 = vpack.c.b16 %v4333, %v4333
      %v4370 = vpack.c.b16 %v4334, %v4334
      %v4371 = vpack.c.b16 %v4335, %v4335
      %v4372 = vpack.c.b16 %v4336, %v4336
      %v4373 = vpack.c.b16 %v4337, %v4337
      %v4374 = vpack.c.b16 %v4338, %v4338
      %v4375 = vpack.c.b16 %v4339, %v4339
      %v4376 = vpack.c.b16 %v4340, %v4340
      %v4377 = vpack.c.b16 %v4341, %v4341
      %v4378 = vpack.c.b16 %v4342, %v4342
      %v4379 = vpack.c.b16 %v4343, %v4343
      %4416 = vst [vmem:[#allocation2 + $0x10] sm:$0xf] %v4344
      %4417 = vst [vmem:[#allocation2 + $0x14] sm:$0xf] %v4345
      %4418 = vst [vmem:[#allocation2 + $0x18] sm:$0xf] %v4346
      %4419 = vst [vmem:[#allocation2 + $0x1c] sm:$0xf] %v4347
      %4420 = vst [vmem:[#allocation2 + $0x20] sm:$0xf] %v4348
      %4421 = vst [vmem:[#allocation2 + $0x24] sm:$0xf] %v4349
      %4422 = vst [vmem:[#allocation2 + $0x28] sm:$0xf] %v4350
      %4423 = vst [vmem:[#allocation2 + $0x2c] sm:$0xf] %v4351
      %4424 = vst [vmem:[#allocation2 + $0x30] sm:$0xf] %v4352
      %4425 = vst [vmem:[#allocation2 + $0x34] sm:$0xf] %v4353
      %4426 = vst [vmem:[#allocation2 + $0x38] sm:$0xf] %v4354
      %4427 = vst [vmem:[#allocation2 + $0x3c] sm:$0xf] %v4355
      %4428 = vst [vmem:[#allocation2 + $0x40] sm:$0xf] %v4356
      %4429 = vst [vmem:[#allocation2 + $0x44] sm:$0xf] %v4357
      %4430 = vst [vmem:[#allocation2 + $0x48] sm:$0xf] %v4358
      %4431 = vst [vmem:[#allocation2 + $0x4c] sm:$0xf] %v4359
      %4432 = vst [vmem:[#allocation2 + $0x50] sm:$0xf] %v4360
      %4433 = vst [vmem:[#allocation2 + $0x54] sm:$0xf] %v4361
      %4434 = vst [vmem:[#allocation2 + $0x58] sm:$0xf] %v4362
      %4435 = vst [vmem:[#allocation2 + $0x5c] sm:$0xf] %v4363
      %4436 = vst [vmem:[#allocation2 + $0x60] sm:$0xf] %v4364
      %4437 = vst [vmem:[#allocation2 + $0x64] sm:$0xf] %v4365
      %4438 = vst [vmem:[#allocation2 + $0x68] sm:$0xf] %v4366
      %4439 = vst [vmem:[#allocation2 + $0x6c] sm:$0xf] %v4367
      %4440 = vst [vmem:[#allocation2 + $0x70] sm:$0xf] %v4368
      %4441 = vst [vmem:[#allocation2 + $0x74] sm:$0xf] %v4369
      %4442 = vst [vmem:[#allocation2 + $0x78] sm:$0xf] %v4370
      %4443 = vst [vmem:[#allocation2 + $0x7c] sm:$0xf] %v4371
      %4444 = vst [vmem:[#allocation2 + $0x80] sm:$0xf] %v4372
      %4445 = vst [vmem:[#allocation2 + $0x84] sm:$0xf] %v4373
      %4446 = vst [vmem:[#allocation2 + $0x88] sm:$0xf] %v4374
      %4447 = vst [vmem:[#allocation2 + $0x8c] sm:$0xf] %v4375
      %4448 = vst [vmem:[#allocation2 + $0x90] sm:$0xf] %v4376
      %4449 = vst [vmem:[#allocation2 + $0x94] sm:$0xf] %v4377
      %4450 = vst [vmem:[#allocation2 + $0x98] sm:$0xf] %v4378
      %4451 = vst [vmem:[#allocation2 + $0x9c] sm:$0xf] %v4379
      %v4452 = vld [vmem:[#allocation2 + $0x4] sm:$0xc]
      %v4453 = vld [vmem:[#allocation2 + $0x8] sm:$0xf]
      %v4454 = vld [vmem:[#allocation2 + $0xc] sm:$0xf]
      %v4455 = vld [vmem:[#allocation2 + $0x10] sm:$0xf]
      %v4456 = vld [vmem:[#allocation2 + $0x14] sm:$0xf]
      %v4457 = vld [vmem:[#allocation2 + $0x18] sm:$0xf]
      %v4458 = vld [vmem:[#allocation2 + $0x1c] sm:$0xf]
      %v4459 = vld [vmem:[#allocation2 + $0x20] sm:$0xf]
      %v4460 = vld [vmem:[#allocation2 + $0x24] sm:$0xf]
      %v4461 = vld [vmem:[#allocation2 + $0x28] sm:$0xf]
      %v4462 = vld [vmem:[#allocation2 + $0x2c] sm:$0xf]
      %v4463 = vld [vmem:[#allocation2 + $0x30] sm:$0xf]
      %v4464 = vld [vmem:[#allocation2 + $0x34] sm:$0xf]
      %v4465 = vld [vmem:[#allocation2 + $0x38] sm:$0xf]
      %v4466 = vld [vmem:[#allocation2 + $0x3c] sm:$0xf]
      %v4467 = vld [vmem:[#allocation2 + $0x40] sm:$0xf]
      %v4468 = vld [vmem:[#allocation2 + $0x44] sm:$0xf]
      %v4469 = vld [vmem:[#allocation2 + $0x48] sm:$0xf]
      %v4470 = vld [vmem:[#allocation2 + $0x4c] sm:$0xf]
      %v4471 = vld [vmem:[#allocation2 + $0x50] sm:$0xf]
      %v4472 = vld [vmem:[#allocation2 + $0x54] sm:$0xf]
      %v4473 = vld [vmem:[#allocation2 + $0x58] sm:$0xf]
      %v4474 = vld [vmem:[#allocation2 + $0x5c] sm:$0xf]
      %v4475 = vld [vmem:[#allocation2 + $0x60] sm:$0xf]
      %v4476 = vld [vmem:[#allocation2 + $0x64] sm:$0xf]
      %v4477 = vld [vmem:[#allocation2 + $0x68] sm:$0xf]
      %v4478 = vld [vmem:[#allocation2 + $0x6c] sm:$0xf]
      %v4479 = vld [vmem:[#allocation2 + $0x70] sm:$0xf]
      %v4480 = vld [vmem:[#allocation2 + $0x74] sm:$0xf]
      %v4481 = vld [vmem:[#allocation2 + $0x78] sm:$0xf]
      %v4482 = vld [vmem:[#allocation2 + $0x7c] sm:$0xf]
      %v4483 = vld [vmem:[#allocation2 + $0x80] sm:$0xf]
      %v4484 = vld [vmem:[#allocation2 + $0x84] sm:$0xf]
      %v4485 = vld [vmem:[#allocation2 + $0x88] sm:$0xf]
      %v4486 = vld [vmem:[#allocation2 + $0x8c] sm:$0xf]
      %v4487 = vld [vmem:[#allocation2 + $0x90] sm:$0xf]
      %v4488 = vld [vmem:[#allocation2 + $0x94] sm:$0x7]
      %v4489 = vld [vmem:[%s4] sm:$0xf]
      %v4490 = vld [vmem:[%s4 + $0x4] sm:$0xf]
      %v4491 = vld [vmem:[%s4 + $0x8] sm:$0xf]
      %v4492 = vld [vmem:[%s4 + $0xc] sm:$0xf]
      %v4493 = vld [vmem:[%s4 + $0x10] sm:$0xf]
      %v4494 = vld [vmem:[%s4 + $0x14] sm:$0xf]
      %v4495 = vld [vmem:[%s4 + $0x18] sm:$0xf]
      %v4496 = vld [vmem:[%s4 + $0x1c] sm:$0xf]
      %v4497 = vld [vmem:[%s4 + $0x20] sm:$0xf]
      %v4498 = vld [vmem:[%s4 + $0x24] sm:$0xf]
      %v4499 = vld [vmem:[%s4 + $0x28] sm:$0xf]
      %v4500 = vld [vmem:[%s4 + $0x2c] sm:$0xf]
      %v4501 = vld [vmem:[%s4 + $0x30] sm:$0xf]
      %v4502 = vld [vmem:[%s4 + $0x34] sm:$0xf]
      %v4503 = vld [vmem:[%s4 + $0x38] sm:$0xf]
      %v4504 = vld [vmem:[%s4 + $0x3c] sm:$0xf]
      %v4505 = vld [vmem:[#allocation2 + $0x4] sm:$0x8]
      %s4506 = scalar_lea.vmem %s4, 64
      %v4507 = vld [vmem:[%s4506] sm:$0xf]
      %v4508 = vld [vmem:[%s4506 + $0x4] sm:$0xf]
      %v4509 = vld [vmem:[%s4506 + $0x8] sm:$0xf]
      %v4510 = vld [vmem:[%s4506 + $0xc] sm:$0xf]
      %v4511 = vld [vmem:[%s4506 + $0x10] sm:$0xf]
      %v4512 = vld [vmem:[%s4506 + $0x14] sm:$0xf]
      %v4513 = vld [vmem:[%s4506 + $0x18] sm:$0xf]
      %v4514 = vld [vmem:[%s4506 + $0x1c] sm:$0xf]
      %v4515 = vld [vmem:[%s4506 + $0x20] sm:$0xf]
      %v4516 = vld [vmem:[%s4506 + $0x24] sm:$0xf]
      %v4517 = vld [vmem:[%s4506 + $0x28] sm:$0xf]
      %v4518 = vld [vmem:[%s4506 + $0x2c] sm:$0xf]
      %v4519 = vld [vmem:[%s4506 + $0x30] sm:$0xf]
      %v4520 = vld [vmem:[%s4506 + $0x34] sm:$0xf]
      %v4521 = vld [vmem:[%s4506 + $0x38] sm:$0xf]
      %v4522 = vld [vmem:[%s4506 + $0x3c] sm:$0xf]
      %v4560 = vunpack.c.l.b16 %v4505
      %v4561 = vunpack.c.l.b16 %v4453
      %v4562 = vunpack.c.l.b16 %v4454
      %v4563 = vunpack.c.l.b16 %v4455
      %v4564 = vunpack.c.l.b16 %v4456
      %v4565 = vunpack.c.l.b16 %v4457
      %v4566 = vunpack.c.l.b16 %v4458
      %v4567 = vunpack.c.l.b16 %v4459
      %v4568 = vunpack.c.l.b16 %v4460
      %v4569 = vunpack.c.l.b16 %v4461
      %v4570 = vunpack.c.l.b16 %v4462
      %v4571 = vunpack.c.l.b16 %v4463
      %v4572 = vunpack.c.l.b16 %v4464
      %v4573 = vunpack.c.l.b16 %v4465
      %v4574 = vunpack.c.l.b16 %v4466
      %v4575 = vunpack.c.l.b16 %v4467
      %v4576 = vunpack.c.l.b16 %v4468
      %v4577 = vunpack.c.l.b16 %v4469
      %v4578 = vunpack.c.l.b16 %v4470
      %v4579 = vunpack.c.l.b16 %v4471
      %v4580 = vunpack.c.l.b16 %v4472
      %v4581 = vunpack.c.l.b16 %v4473
      %v4582 = vunpack.c.l.b16 %v4474
      %v4583 = vunpack.c.l.b16 %v4475
      %v4584 = vunpack.c.l.b16 %v4476
      %v4585 = vunpack.c.l.b16 %v4477
      %v4586 = vunpack.c.l.b16 %v4478
      %v4587 = vunpack.c.l.b16 %v4479
      %v4588 = vunpack.c.l.b16 %v4480
      %v4589 = vunpack.c.l.b16 %v4481
      %v4590 = vunpack.c.l.b16 %v4482
      %v4591 = vunpack.c.l.b16 %v4483
      %v4592 = vunpack.c.l.b16 %v4484
      %v4593 = vunpack.c.l.b16 %v4485
      %v4594 = vunpack.c.l.b16 %v4486
      %v4595 = vunpack.c.l.b16 %v4487
      %v4596 = vunpack.c.l.b16 %v4488
      %v4597 = vpack.c.b16 %v4561, %v4560
      %v4598 = vpack.c.b16 %v4563, %v4562
      %v4599 = vpack.c.b16 %v4565, %v4564
      %v4600 = vpack.c.b16 %v4567, %v4566
      %v4601 = vpack.c.b16 %v4569, %v4568
      %v4602 = vpack.c.b16 %v4571, %v4570
      %v4603 = vpack.c.b16 %v4573, %v4572
      %v4604 = vpack.c.b16 %v4575, %v4574
      %v4605 = vpack.c.b16 %v4577, %v4576
      %v4606 = vpack.c.b16 %v4579, %v4578
      %v4607 = vpack.c.b16 %v4581, %v4580
      %v4608 = vpack.c.b16 %v4583, %v4582
      %v4609 = vpack.c.b16 %v4585, %v4584
      %v4610 = vpack.c.b16 %v4587, %v4586
      %v4611 = vpack.c.b16 %v4589, %v4588
      %v4612 = vpack.c.b16 %v4591, %v4590
      %v4613 = vpack.c.b16 %v4593, %v4592
      %v4614 = vpack.c.b16 %v4595, %v4594
      %v4615 = vpack.c.b16 %v4596, %v4596
      %v4616 = vrot.slane %v4597, 3
      %v4617 = vrot.slane %v4598, 3
      %v4618 = vsel %vm3660, %v4616, %v4617
      %v4619 = vrot.slane %v4599, 3
      %v4620 = vsel %vm3660, %v4617, %v4619
      %v4621 = vrot.slane %v4600, 3
      %v4622 = vsel %vm3660, %v4619, %v4621
      %v4623 = vrot.slane %v4601, 3
      %v4624 = vsel %vm3660, %v4621, %v4623
      %v4625 = vrot.slane %v4602, 3
      %v4626 = vsel %vm3660, %v4623, %v4625
      %v4627 = vrot.slane %v4603, 3
      %v4628 = vsel %vm3660, %v4625, %v4627
      %v4629 = vrot.slane %v4604, 3
      %v4630 = vsel %vm3660, %v4627, %v4629
      %v4631 = vrot.slane %v4605, 3
      %v4632 = vsel %vm3660, %v4629, %v4631
      %v4633 = vrot.slane %v4606, 3
      %v4634 = vsel %vm3660, %v4631, %v4633
      %v4635 = vrot.slane %v4607, 3
      %v4636 = vsel %vm3660, %v4633, %v4635
      %v4637 = vrot.slane %v4608, 3
      %v4638 = vsel %vm3660, %v4635, %v4637
      %v4639 = vrot.slane %v4609, 3
      %v4640 = vsel %vm3660, %v4637, %v4639
      %v4641 = vrot.slane %v4610, 3
      %v4642 = vsel %vm3660, %v4639, %v4641
      %v4643 = vrot.slane %v4611, 3
      %v4644 = vsel %vm3660, %v4641, %v4643
      %v4645 = vrot.slane %v4612, 3
      %v4646 = vsel %vm3660, %v4643, %v4645
      %v4647 = vrot.slane %v4613, 3
      %v4648 = vsel %vm3660, %v4645, %v4647
      %v4649 = vrot.slane %v4614, 3
      %v4650 = vsel %vm3660, %v4647, %v4649
      %v4651 = vrot.slane %v4615, 3
      %v4652 = vsel %vm3660, %v4649, %v4651
      %v4687 = vunpack.c.l.b16 %v4507
      %v4688 = vunpack.c.l.b16 %v4508
      %v4689 = vunpack.c.l.b16 %v4509
      %v4690 = vunpack.c.l.b16 %v4510
      %v4691 = vunpack.c.l.b16 %v4511
      %v4692 = vunpack.c.l.b16 %v4512
      %v4693 = vunpack.c.l.b16 %v4513
      %v4694 = vunpack.c.l.b16 %v4514
      %v4695 = vunpack.c.l.b16 %v4515
      %v4696 = vunpack.c.l.b16 %v4516
      %v4697 = vunpack.c.l.b16 %v4517
      %v4698 = vunpack.c.l.b16 %v4518
      %v4699 = vunpack.c.l.b16 %v4519
      %v4700 = vunpack.c.l.b16 %v4520
      %v4701 = vunpack.c.l.b16 %v4521
      %v4702 = vunpack.c.l.b16 %v4522
      %v4703 = vpack.c.b16 %v4688, %v4687
      %v4704 = vpack.c.b16 %v4690, %v4689
      %v4705 = vpack.c.b16 %v4692, %v4691
      %v4706 = vpack.c.b16 %v4694, %v4693
      %v4707 = vpack.c.b16 %v4696, %v4695
      %v4708 = vpack.c.b16 %v4698, %v4697
      %v4709 = vpack.c.b16 %v4700, %v4699
      %v4710 = vpack.c.b16 %v4702, %v4701
      %4719 = vmatprep.subr.bf16.mxu0 0
      %4720 = vmatpush1.bf16.msra.mxu0 %v4710
      %4721 = vmatprep.subr.bf16.mxu0 0
      %4722 = vmatpush1.bf16.msra.mxu0 %v4709
      %4723 = vmatprep.subr.bf16.mxu0 0
      %4724 = vmatpush1.bf16.msra.mxu0 %v4708
      %4725 = vmatprep.subr.bf16.mxu0 0
      %4726 = vmatpush1.bf16.msra.mxu0 %v4707
      %4727 = vmatprep.subr.bf16.mxu0 0
      %4728 = vmatpush1.bf16.msra.mxu0 %v4706
      %4729 = vmatprep.subr.bf16.mxu0 0
      %4730 = vmatpush1.bf16.msra.mxu0 %v4705
      %4731 = vmatprep.subr.bf16.mxu0 0
      %4732 = vmatpush1.bf16.msra.mxu0 %v4704
      %4733 = vmatprep.subr.bf16.mxu0 0
      %4734 = vmatpush1.bf16.msra.mxu0 %v4703
      %4735 = vmatprep.subr.bf16.mxu0 0
      %4736 = vmatpush2.bf16.msra.mxu0 0
      %4737 = vmatprep.subr.bf16.mxu0 0
      %4738 = vmatpush2.bf16.msra.mxu0 0
      %4739 = vmatprep.subr.bf16.mxu0 0
      %4740 = vmatpush2.bf16.msra.mxu0 0
      %4741 = vmatprep.subr.bf16.mxu0 0
      %4742 = vmatpush2.bf16.msra.mxu0 0
      %4743 = vmatprep.subr.bf16.mxu0 0
      %4744 = vmatpush2.bf16.msra.mxu0 0
      %4745 = vmatprep.subr.bf16.mxu0 0
      %4746 = vmatpush2.bf16.msra.mxu0 0
      %4747 = vmatprep.subr.bf16.mxu0 0
      %4748 = vmatpush2.bf16.msra.mxu0 0
      %4749 = vmatprep.subr.bf16.mxu0 0
      %4750 = vmatpush2.bf16.msra.mxu0 0
      %4751 = vmatprep.mubr.bf16.mxu0 0
      %4752 = vmatmul.mubr.bf16.gmra.mxu0 %v4618
      %v4753 = vpop.f32.mrf.mxu0
      %v4754 = vadd.f32 0.0, %v4753
      %v4755 = vpop.f32.mrf.mxu0
      %v4756 = vpop.f32.mrf.mxu0
      %v4757 = vadd.f32 0.0, %v4756
      %v4758 = vpop.f32.mrf.mxu0
      %4759 = vmatprep.mubr.bf16.mxu0 0
      %4760 = vmatmul.mubr.bf16.gmra.mxu0 %v4620
      %v4761 = vpop.f32.mrf.mxu0
      %v4762 = vadd.f32 0.0, %v4761
      %v4763 = vpop.f32.mrf.mxu0
      %v4764 = vpop.f32.mrf.mxu0
      %v4765 = vadd.f32 0.0, %v4764
      %v4766 = vpop.f32.mrf.mxu0
      %4767 = vmatprep.mubr.bf16.mxu0 0
      %4768 = vmatmul.mubr.bf16.gmra.mxu0 %v4622
      %v4769 = vpop.f32.mrf.mxu0
      %v4770 = vadd.f32 0.0, %v4769
      %v4771 = vpop.f32.mrf.mxu0
      %v4772 = vpop.f32.mrf.mxu0
      %v4773 = vadd.f32 0.0, %v4772
      %v4774 = vpop.f32.mrf.mxu0
      %4775 = vmatprep.mubr.bf16.mxu0 0
      %4776 = vmatmul.mubr.bf16.gmra.mxu0 %v4624
      %v4777 = vpop.f32.mrf.mxu0
      %v4778 = vadd.f32 0.0, %v4777
      %v4779 = vpop.f32.mrf.mxu0
      %v4780 = vpop.f32.mrf.mxu0
      %v4781 = vadd.f32 0.0, %v4780
      %v4782 = vpop.f32.mrf.mxu0
      %4783 = vmatprep.mubr.bf16.mxu0 0
      %4784 = vmatmul.mubr.bf16.gmra.mxu0 %v4626
      %v4785 = vpop.f32.mrf.mxu0
      %v4786 = vadd.f32 0.0, %v4785
      %v4787 = vpop.f32.mrf.mxu0
      %v4788 = vpop.f32.mrf.mxu0
      %v4789 = vadd.f32 0.0, %v4788
      %v4790 = vpop.f32.mrf.mxu0
      %4791 = vmatprep.mubr.bf16.mxu0 0
      %4792 = vmatmul.mubr.bf16.gmra.mxu0 %v4628
      %v4793 = vpop.f32.mrf.mxu0
      %v4794 = vadd.f32 0.0, %v4793
      %v4795 = vpop.f32.mrf.mxu0
      %v4796 = vpop.f32.mrf.mxu0
      %v4797 = vadd.f32 0.0, %v4796
      %v4798 = vpop.f32.mrf.mxu0
      %4799 = vmatprep.mubr.bf16.mxu0 0
      %4800 = vmatmul.mubr.bf16.gmra.mxu0 %v4630
      %v4801 = vpop.f32.mrf.mxu0
      %v4802 = vadd.f32 0.0, %v4801
      %v4803 = vpop.f32.mrf.mxu0
      %v4804 = vpop.f32.mrf.mxu0
      %v4805 = vadd.f32 0.0, %v4804
      %v4806 = vpop.f32.mrf.mxu0
      %4807 = vmatprep.mubr.bf16.mxu0 0
      %4808 = vmatmul.mubr.bf16.gmra.mxu0 %v4632
      %v4809 = vpop.f32.mrf.mxu0
      %v4810 = vadd.f32 0.0, %v4809
      %v4811 = vpop.f32.mrf.mxu0
      %v4812 = vpop.f32.mrf.mxu0
      %v4813 = vadd.f32 0.0, %v4812
      %v4814 = vpop.f32.mrf.mxu0
      %4815 = vmatprep.mubr.bf16.mxu0 0
      %4816 = vmatmul.mubr.bf16.gmra.mxu0 %v4634
      %v4817 = vpop.f32.mrf.mxu0
      %v4818 = vadd.f32 0.0, %v4817
      %v4819 = vpop.f32.mrf.mxu0
      %v4820 = vpop.f32.mrf.mxu0
      %v4821 = vadd.f32 0.0, %v4820
      %v4822 = vpop.f32.mrf.mxu0
      %4823 = vmatprep.mubr.bf16.mxu0 0
      %4824 = vmatmul.mubr.bf16.gmra.mxu0 %v4636
      %v4825 = vpop.f32.mrf.mxu0
      %v4826 = vadd.f32 0.0, %v4825
      %v4827 = vpop.f32.mrf.mxu0
      %v4828 = vpop.f32.mrf.mxu0
      %v4829 = vadd.f32 0.0, %v4828
      %v4830 = vpop.f32.mrf.mxu0
      %4831 = vmatprep.mubr.bf16.mxu0 0
      %4832 = vmatmul.mubr.bf16.gmra.mxu0 %v4638
      %v4833 = vpop.f32.mrf.mxu0
      %v4834 = vadd.f32 0.0, %v4833
      %v4835 = vpop.f32.mrf.mxu0
      %v4836 = vpop.f32.mrf.mxu0
      %v4837 = vadd.f32 0.0, %v4836
      %v4838 = vpop.f32.mrf.mxu0
      %4839 = vmatprep.mubr.bf16.mxu0 0
      %4840 = vmatmul.mubr.bf16.gmra.mxu0 %v4640
      %v4841 = vpop.f32.mrf.mxu0
      %v4842 = vadd.f32 0.0, %v4841
      %v4843 = vpop.f32.mrf.mxu0
      %v4844 = vpop.f32.mrf.mxu0
      %v4845 = vadd.f32 0.0, %v4844
      %v4846 = vpop.f32.mrf.mxu0
      %4847 = vmatprep.mubr.bf16.mxu0 0
      %4848 = vmatmul.mubr.bf16.gmra.mxu0 %v4642
      %v4849 = vpop.f32.mrf.mxu0
      %v4850 = vadd.f32 0.0, %v4849
      %v4851 = vpop.f32.mrf.mxu0
      %v4852 = vpop.f32.mrf.mxu0
      %v4853 = vadd.f32 0.0, %v4852
      %v4854 = vpop.f32.mrf.mxu0
      %4855 = vmatprep.mubr.bf16.mxu0 0
      %4856 = vmatmul.mubr.bf16.gmra.mxu0 %v4644
      %v4857 = vpop.f32.mrf.mxu0
      %v4858 = vadd.f32 0.0, %v4857
      %v4859 = vpop.f32.mrf.mxu0
      %v4860 = vpop.f32.mrf.mxu0
      %v4861 = vadd.f32 0.0, %v4860
      %v4862 = vpop.f32.mrf.mxu0
      %4863 = vmatprep.mubr.bf16.mxu0 0
      %4864 = vmatmul.mubr.bf16.gmra.mxu0 %v4646
      %v4865 = vpop.f32.mrf.mxu0
      %v4866 = vadd.f32 0.0, %v4865
      %v4867 = vpop.f32.mrf.mxu0
      %v4868 = vpop.f32.mrf.mxu0
      %v4869 = vadd.f32 0.0, %v4868
      %v4870 = vpop.f32.mrf.mxu0
      %4871 = vmatprep.mubr.bf16.mxu0 0
      %4872 = vmatmul.mubr.bf16.gmra.mxu0 %v4648
      %v4873 = vpop.f32.mrf.mxu0
      %v4874 = vadd.f32 0.0, %v4873
      %v4875 = vpop.f32.mrf.mxu0
      %v4876 = vpop.f32.mrf.mxu0
      %v4877 = vadd.f32 0.0, %v4876
      %v4878 = vpop.f32.mrf.mxu0
      %4879 = vmatprep.mubr.bf16.mxu0 0
      %4880 = vmatmul.mubr.bf16.gmra.mxu0 %v4650
      %v4881 = vpop.f32.mrf.mxu0
      %v4882 = vadd.f32 0.0, %v4881
      %v4883 = vpop.f32.mrf.mxu0
      %v4884 = vpop.f32.mrf.mxu0
      %v4885 = vadd.f32 0.0, %v4884
      %v4886 = vpop.f32.mrf.mxu0
      %4887 = vmatprep.mubr.bf16.mxu0 0
      %4888 = vmatmul.mubr.bf16.gmra.mxu0 %v4652
      %v4889 = vpop.f32.mrf.mxu0
      %v4890 = vadd.f32 0.0, %v4889
      %v4891 = vpop.f32.mrf.mxu0
      %v4892 = vpop.f32.mrf.mxu0
      %v4893 = vadd.f32 0.0, %v4892
      %v4894 = vpop.f32.mrf.mxu0
      %4895 = vdwg.mxu0
      %v4897 = vunpack.c.l.b16 %v4452
      %v4898 = vpack.c.b16 %v4561, %v4897
      %v4900 = vshrl.u32 %v4898, 16
      %v4902 = vrot.slane %v4900, 2
      %v4903 = vshll.u32 %v4898, 16
      %v4905 = vrot.slane %v4903, 3
      %v4906 = vor.u32 %v4902, %v4905
      %v4908 = vshrl.u32 %v4598, 16
      %v4910 = vrot.slane %v4908, 2
      %v4911 = vshll.u32 %v4598, 16
      %v4913 = vrot.slane %v4911, 3
      %v4914 = vor.u32 %v4910, %v4913
      %v4915 = vsel %vm3189, %v4906, %v4914
      %v4917 = vshrl.u32 %v4599, 16
      %v4919 = vrot.slane %v4917, 2
      %v4920 = vshll.u32 %v4599, 16
      %v4922 = vrot.slane %v4920, 3
      %v4923 = vor.u32 %v4919, %v4922
      %v4924 = vsel %vm3189, %v4914, %v4923
      %v4926 = vshrl.u32 %v4600, 16
      %v4928 = vrot.slane %v4926, 2
      %v4929 = vshll.u32 %v4600, 16
      %v4931 = vrot.slane %v4929, 3
      %v4932 = vor.u32 %v4928, %v4931
      %v4933 = vsel %vm3189, %v4923, %v4932
      %v4935 = vshrl.u32 %v4601, 16
      %v4937 = vrot.slane %v4935, 2
      %v4938 = vshll.u32 %v4601, 16
      %v4940 = vrot.slane %v4938, 3
      %v4941 = vor.u32 %v4937, %v4940
      %v4942 = vsel %vm3189, %v4932, %v4941
      %v4944 = vshrl.u32 %v4602, 16
      %v4946 = vrot.slane %v4944, 2
      %v4947 = vshll.u32 %v4602, 16
      %v4949 = vrot.slane %v4947, 3
      %v4950 = vor.u32 %v4946, %v4949
      %v4951 = vsel %vm3189, %v4941, %v4950
      %v4953 = vshrl.u32 %v4603, 16
      %v4955 = vrot.slane %v4953, 2
      %v4956 = vshll.u32 %v4603, 16
      %v4958 = vrot.slane %v4956, 3
      %v4959 = vor.u32 %v4955, %v4958
      %v4960 = vsel %vm3189, %v4950, %v4959
      %v4962 = vshrl.u32 %v4604, 16
      %v4964 = vrot.slane %v4962, 2
      %v4965 = vshll.u32 %v4604, 16
      %v4967 = vrot.slane %v4965, 3
      %v4968 = vor.u32 %v4964, %v4967
      %v4969 = vsel %vm3189, %v4959, %v4968
      %v4971 = vshrl.u32 %v4605, 16
      %v4973 = vrot.slane %v4971, 2
      %v4974 = vshll.u32 %v4605, 16
      %v4976 = vrot.slane %v4974, 3
      %v4977 = vor.u32 %v4973, %v4976
      %v4978 = vsel %vm3189, %v4968, %v4977
      %v4980 = vshrl.u32 %v4606, 16
      %v4982 = vrot.slane %v4980, 2
      %v4983 = vshll.u32 %v4606, 16
      %v4985 = vrot.slane %v4983, 3
      %v4986 = vor.u32 %v4982, %v4985
      %v4987 = vsel %vm3189, %v4977, %v4986
      %v4989 = vshrl.u32 %v4607, 16
      %v4991 = vrot.slane %v4989, 2
      %v4992 = vshll.u32 %v4607, 16
      %v4994 = vrot.slane %v4992, 3
      %v4995 = vor.u32 %v4991, %v4994
      %v4996 = vsel %vm3189, %v4986, %v4995
      %v4998 = vshrl.u32 %v4608, 16
      %v5000 = vrot.slane %v4998, 2
      %v5001 = vshll.u32 %v4608, 16
      %v5003 = vrot.slane %v5001, 3
      %v5004 = vor.u32 %v5000, %v5003
      %v5005 = vsel %vm3189, %v4995, %v5004
      %v5007 = vshrl.u32 %v4609, 16
      %v5009 = vrot.slane %v5007, 2
      %v5010 = vshll.u32 %v4609, 16
      %v5012 = vrot.slane %v5010, 3
      %v5013 = vor.u32 %v5009, %v5012
      %v5014 = vsel %vm3189, %v5004, %v5013
      %v5016 = vshrl.u32 %v4610, 16
      %v5018 = vrot.slane %v5016, 2
      %v5019 = vshll.u32 %v4610, 16
      %v5021 = vrot.slane %v5019, 3
      %v5022 = vor.u32 %v5018, %v5021
      %v5023 = vsel %vm3189, %v5013, %v5022
      %v5025 = vshrl.u32 %v4611, 16
      %v5027 = vrot.slane %v5025, 2
      %v5028 = vshll.u32 %v4611, 16
      %v5030 = vrot.slane %v5028, 3
      %v5031 = vor.u32 %v5027, %v5030
      %v5032 = vsel %vm3189, %v5022, %v5031
      %v5034 = vshrl.u32 %v4612, 16
      %v5036 = vrot.slane %v5034, 2
      %v5037 = vshll.u32 %v4612, 16
      %v5039 = vrot.slane %v5037, 3
      %v5040 = vor.u32 %v5036, %v5039
      %v5041 = vsel %vm3189, %v5031, %v5040
      %v5043 = vshrl.u32 %v4613, 16
      %v5045 = vrot.slane %v5043, 2
      %v5046 = vshll.u32 %v4613, 16
      %v5048 = vrot.slane %v5046, 3
      %v5049 = vor.u32 %v5045, %v5048
      %v5050 = vsel %vm3189, %v5040, %v5049
      %v5052 = vshrl.u32 %v4614, 16
      %v5054 = vrot.slane %v5052, 2
      %v5055 = vshll.u32 %v4614, 16
      %v5057 = vrot.slane %v5055, 3
      %v5058 = vor.u32 %v5054, %v5057
      %v5059 = vsel %vm3189, %v5049, %v5058
      %v5061 = vshrl.u32 %v4615, 16
      %v5063 = vrot.slane %v5061, 2
      %v5064 = vshll.u32 %v4615, 16
      %v5066 = vrot.slane %v5064, 3
      %v5067 = vor.u32 %v5063, %v5066
      %v5068 = vsel %vm3189, %v5058, %v5067
      %v5103 = vunpack.c.l.b16 %v4489
      %v5104 = vunpack.c.l.b16 %v4490
      %v5105 = vunpack.c.l.b16 %v4491
      %v5106 = vunpack.c.l.b16 %v4492
      %v5107 = vunpack.c.l.b16 %v4493
      %v5108 = vunpack.c.l.b16 %v4494
      %v5109 = vunpack.c.l.b16 %v4495
      %v5110 = vunpack.c.l.b16 %v4496
      %v5111 = vunpack.c.l.b16 %v4497
      %v5112 = vunpack.c.l.b16 %v4498
      %v5113 = vunpack.c.l.b16 %v4499
      %v5114 = vunpack.c.l.b16 %v4500
      %v5115 = vunpack.c.l.b16 %v4501
      %v5116 = vunpack.c.l.b16 %v4502
      %v5117 = vunpack.c.l.b16 %v4503
      %v5118 = vunpack.c.l.b16 %v4504
      %v5119 = vpack.c.b16 %v5104, %v5103
      %v5120 = vpack.c.b16 %v5106, %v5105
      %v5121 = vpack.c.b16 %v5108, %v5107
      %v5122 = vpack.c.b16 %v5110, %v5109
      %v5123 = vpack.c.b16 %v5112, %v5111
      %v5124 = vpack.c.b16 %v5114, %v5113
      %v5125 = vpack.c.b16 %v5116, %v5115
      %v5126 = vpack.c.b16 %v5118, %v5117
      %5135 = vmatprep.subr.bf16.mxu0 0
      %5136 = vmatpush1.bf16.msra.mxu0 %v5126
      %5137 = vmatprep.subr.bf16.mxu0 0
      %5138 = vmatpush1.bf16.msra.mxu0 %v5125
      %5139 = vmatprep.subr.bf16.mxu0 0
      %5140 = vmatpush1.bf16.msra.mxu0 %v5124
      %5141 = vmatprep.subr.bf16.mxu0 0
      %5142 = vmatpush1.bf16.msra.mxu0 %v5123
      %5143 = vmatprep.subr.bf16.mxu0 0
      %5144 = vmatpush1.bf16.msra.mxu0 %v5122
      %5145 = vmatprep.subr.bf16.mxu0 0
      %5146 = vmatpush1.bf16.msra.mxu0 %v5121
      %5147 = vmatprep.subr.bf16.mxu0 0
      %5148 = vmatpush1.bf16.msra.mxu0 %v5120
      %5149 = vmatprep.subr.bf16.mxu0 0
      %5150 = vmatpush1.bf16.msra.mxu0 %v5119
      %5151 = vmatprep.subr.bf16.mxu0 0
      %5152 = vmatpush2.bf16.msra.mxu0 0
      %5153 = vmatprep.subr.bf16.mxu0 0
      %5154 = vmatpush2.bf16.msra.mxu0 0
      %5155 = vmatprep.subr.bf16.mxu0 0
      %5156 = vmatpush2.bf16.msra.mxu0 0
      %5157 = vmatprep.subr.bf16.mxu0 0
      %5158 = vmatpush2.bf16.msra.mxu0 0
      %5159 = vmatprep.subr.bf16.mxu0 0
      %5160 = vmatpush2.bf16.msra.mxu0 0
      %5161 = vmatprep.subr.bf16.mxu0 0
      %5162 = vmatpush2.bf16.msra.mxu0 0
      %5163 = vmatprep.subr.bf16.mxu0 0
      %5164 = vmatpush2.bf16.msra.mxu0 0
      %5165 = vmatprep.subr.bf16.mxu0 0
      %5166 = vmatpush2.bf16.msra.mxu0 0
      %5167 = vmatprep.mubr.bf16.mxu0 0
      %5168 = vmatmul.mubr.bf16.gmra.mxu0 %v4915
      %v5169 = vpop.f32.mrf.mxu0
      %v5170 = vadd.f32 %v4754, %v5169
      %v5171 = vpop.f32.mrf.mxu0
      %v5172 = vpop.f32.mrf.mxu0
      %v5173 = vadd.f32 %v4757, %v5172
      %v5174 = vpop.f32.mrf.mxu0
      %5175 = vmatprep.mubr.bf16.mxu0 0
      %5176 = vmatmul.mubr.bf16.gmra.mxu0 %v4924
      %v5177 = vpop.f32.mrf.mxu0
      %v5178 = vadd.f32 %v4762, %v5177
      %v5179 = vpop.f32.mrf.mxu0
      %v5180 = vpop.f32.mrf.mxu0
      %v5181 = vadd.f32 %v4765, %v5180
      %v5182 = vpop.f32.mrf.mxu0
      %5183 = vmatprep.mubr.bf16.mxu0 0
      %5184 = vmatmul.mubr.bf16.gmra.mxu0 %v4933
      %v5185 = vpop.f32.mrf.mxu0
      %v5186 = vadd.f32 %v4770, %v5185
      %v5187 = vpop.f32.mrf.mxu0
      %v5188 = vpop.f32.mrf.mxu0
      %v5189 = vadd.f32 %v4773, %v5188
      %v5190 = vpop.f32.mrf.mxu0
      %5191 = vmatprep.mubr.bf16.mxu0 0
      %5192 = vmatmul.mubr.bf16.gmra.mxu0 %v4942
      %v5193 = vpop.f32.mrf.mxu0
      %v5194 = vadd.f32 %v4778, %v5193
      %v5195 = vpop.f32.mrf.mxu0
      %v5196 = vpop.f32.mrf.mxu0
      %v5197 = vadd.f32 %v4781, %v5196
      %v5198 = vpop.f32.mrf.mxu0
      %5199 = vmatprep.mubr.bf16.mxu0 0
      %5200 = vmatmul.mubr.bf16.gmra.mxu0 %v4951
      %v5201 = vpop.f32.mrf.mxu0
      %v5202 = vadd.f32 %v4786, %v5201
      %v5203 = vpop.f32.mrf.mxu0
      %v5204 = vpop.f32.mrf.mxu0
      %v5205 = vadd.f32 %v4789, %v5204
      %v5206 = vpop.f32.mrf.mxu0
      %5207 = vmatprep.mubr.bf16.mxu0 0
      %5208 = vmatmul.mubr.bf16.gmra.mxu0 %v4960
      %v5209 = vpop.f32.mrf.mxu0
      %v5210 = vadd.f32 %v4794, %v5209
      %v5211 = vpop.f32.mrf.mxu0
      %v5212 = vpop.f32.mrf.mxu0
      %v5213 = vadd.f32 %v4797, %v5212
      %v5214 = vpop.f32.mrf.mxu0
      %5215 = vmatprep.mubr.bf16.mxu0 0
      %5216 = vmatmul.mubr.bf16.gmra.mxu0 %v4969
      %v5217 = vpop.f32.mrf.mxu0
      %v5218 = vadd.f32 %v4802, %v5217
      %v5219 = vpop.f32.mrf.mxu0
      %v5220 = vpop.f32.mrf.mxu0
      %v5221 = vadd.f32 %v4805, %v5220
      %v5222 = vpop.f32.mrf.mxu0
      %5223 = vmatprep.mubr.bf16.mxu0 0
      %5224 = vmatmul.mubr.bf16.gmra.mxu0 %v4978
      %v5225 = vpop.f32.mrf.mxu0
      %v5226 = vadd.f32 %v4810, %v5225
      %v5227 = vpop.f32.mrf.mxu0
      %v5228 = vpop.f32.mrf.mxu0
      %v5229 = vadd.f32 %v4813, %v5228
      %v5230 = vpop.f32.mrf.mxu0
      %5231 = vmatprep.mubr.bf16.mxu0 0
      %5232 = vmatmul.mubr.bf16.gmra.mxu0 %v4987
      %v5233 = vpop.f32.mrf.mxu0
      %v5234 = vadd.f32 %v4818, %v5233
      %v5235 = vpop.f32.mrf.mxu0
      %v5236 = vpop.f32.mrf.mxu0
      %v5237 = vadd.f32 %v4821, %v5236
      %v5238 = vpop.f32.mrf.mxu0
      %5239 = vmatprep.mubr.bf16.mxu0 0
      %5240 = vmatmul.mubr.bf16.gmra.mxu0 %v4996
      %v5241 = vpop.f32.mrf.mxu0
      %v5242 = vadd.f32 %v4826, %v5241
      %v5243 = vpop.f32.mrf.mxu0
      %v5244 = vpop.f32.mrf.mxu0
      %v5245 = vadd.f32 %v4829, %v5244
      %v5246 = vpop.f32.mrf.mxu0
      %5247 = vmatprep.mubr.bf16.mxu0 0
      %5248 = vmatmul.mubr.bf16.gmra.mxu0 %v5005
      %v5249 = vpop.f32.mrf.mxu0
      %v5250 = vadd.f32 %v4834, %v5249
      %v5251 = vpop.f32.mrf.mxu0
      %v5252 = vpop.f32.mrf.mxu0
      %v5253 = vadd.f32 %v4837, %v5252
      %v5254 = vpop.f32.mrf.mxu0
      %5255 = vmatprep.mubr.bf16.mxu0 0
      %5256 = vmatmul.mubr.bf16.gmra.mxu0 %v5014
      %v5257 = vpop.f32.mrf.mxu0
      %v5258 = vadd.f32 %v4842, %v5257
      %v5259 = vpop.f32.mrf.mxu0
      %v5260 = vpop.f32.mrf.mxu0
      %v5261 = vadd.f32 %v4845, %v5260
      %v5262 = vpop.f32.mrf.mxu0
      %5263 = vmatprep.mubr.bf16.mxu0 0
      %5264 = vmatmul.mubr.bf16.gmra.mxu0 %v5023
      %v5265 = vpop.f32.mrf.mxu0
      %v5266 = vadd.f32 %v4850, %v5265
      %v5267 = vpop.f32.mrf.mxu0
      %v5268 = vpop.f32.mrf.mxu0
      %v5269 = vadd.f32 %v4853, %v5268
      %v5270 = vpop.f32.mrf.mxu0
      %5271 = vmatprep.mubr.bf16.mxu0 0
      %5272 = vmatmul.mubr.bf16.gmra.mxu0 %v5032
      %v5273 = vpop.f32.mrf.mxu0
      %v5274 = vadd.f32 %v4858, %v5273
      %v5275 = vpop.f32.mrf.mxu0
      %v5276 = vpop.f32.mrf.mxu0
      %v5277 = vadd.f32 %v4861, %v5276
      %v5278 = vpop.f32.mrf.mxu0
      %5279 = vmatprep.mubr.bf16.mxu0 0
      %5280 = vmatmul.mubr.bf16.gmra.mxu0 %v5041
      %v5281 = vpop.f32.mrf.mxu0
      %v5282 = vadd.f32 %v4866, %v5281
      %v5283 = vpop.f32.mrf.mxu0
      %v5284 = vpop.f32.mrf.mxu0
      %v5285 = vadd.f32 %v4869, %v5284
      %v5286 = vpop.f32.mrf.mxu0
      %5287 = vmatprep.mubr.bf16.mxu0 0
      %5288 = vmatmul.mubr.bf16.gmra.mxu0 %v5050
      %v5289 = vpop.f32.mrf.mxu0
      %v5290 = vadd.f32 %v4874, %v5289
      %v5291 = vpop.f32.mrf.mxu0
      %v5292 = vpop.f32.mrf.mxu0
      %v5293 = vadd.f32 %v4877, %v5292
      %v5294 = vpop.f32.mrf.mxu0
      %5295 = vmatprep.mubr.bf16.mxu0 0
      %5296 = vmatmul.mubr.bf16.gmra.mxu0 %v5059
      %v5297 = vpop.f32.mrf.mxu0
      %v5298 = vadd.f32 %v4882, %v5297
      %v5299 = vpop.f32.mrf.mxu0
      %v5300 = vpop.f32.mrf.mxu0
      %v5301 = vadd.f32 %v4885, %v5300
      %v5302 = vpop.f32.mrf.mxu0
      %5303 = vmatprep.mubr.bf16.mxu0 0
      %5304 = vmatmul.mubr.bf16.gmra.mxu0 %v5068
      %v5305 = vpop.f32.mrf.mxu0
      %v5306 = vadd.f32 %v4890, %v5305
      %v5307 = vpop.f32.mrf.mxu0
      %v5308 = vpop.f32.mrf.mxu0
      %v5309 = vadd.f32 %v4893, %v5308
      %v5310 = vpop.f32.mrf.mxu0
      %5311 = vdwg.mxu0
      %v5312 = vld [vmem:[#allocation2 + $0x94] sm:$0xf]
      %s5313 = scalar_lea.vmem %s4, 128
      %v5314 = vld [vmem:[%s5313] sm:$0xf]
      %v5315 = vld [vmem:[%s5313 + $0x4] sm:$0xf]
      %v5316 = vld [vmem:[%s5313 + $0x8] sm:$0xf]
      %v5317 = vld [vmem:[%s5313 + $0xc] sm:$0xf]
      %v5318 = vld [vmem:[%s5313 + $0x10] sm:$0xf]
      %v5319 = vld [vmem:[%s5313 + $0x14] sm:$0xf]
      %v5320 = vld [vmem:[%s5313 + $0x18] sm:$0xf]
      %v5321 = vld [vmem:[%s5313 + $0x1c] sm:$0xf]
      %v5322 = vld [vmem:[%s5313 + $0x20] sm:$0xf]
      %v5323 = vld [vmem:[%s5313 + $0x24] sm:$0xf]
      %v5324 = vld [vmem:[%s5313 + $0x28] sm:$0xf]
      %v5325 = vld [vmem:[%s5313 + $0x2c] sm:$0xf]
      %v5326 = vld [vmem:[%s5313 + $0x30] sm:$0xf]
      %v5327 = vld [vmem:[%s5313 + $0x34] sm:$0xf]
      %v5328 = vld [vmem:[%s5313 + $0x38] sm:$0xf]
      %v5329 = vld [vmem:[%s5313 + $0x3c] sm:$0xf]
      %v5331 = vunpack.c.l.b16 %v5312
      %v5332 = vpack.c.b16 %v5331, %v5331
      %vm5333 = vsmask.f32 4352
      %v5335 = vshrl.u32 %v4597, 16
      %v5337 = vrot.slane %v5335, 3
      %v5338 = vshll.u32 %v4597, 16
      %v5340 = vrot.slane %v5338, 4
      %v5341 = vor.u32 %v5337, %v5340
      %v5342 = vrot.slane %v4908, 3
      %v5343 = vrot.slane %v4911, 4
      %v5344 = vor.u32 %v5342, %v5343
      %v5345 = vsel %vm5333, %v5341, %v5344
      %v5346 = vrot.slane %v4917, 3
      %v5347 = vrot.slane %v4920, 4
      %v5348 = vor.u32 %v5346, %v5347
      %v5349 = vsel %vm5333, %v5344, %v5348
      %v5350 = vrot.slane %v4926, 3
      %v5351 = vrot.slane %v4929, 4
      %v5352 = vor.u32 %v5350, %v5351
      %v5353 = vsel %vm5333, %v5348, %v5352
      %v5354 = vrot.slane %v4935, 3
      %v5355 = vrot.slane %v4938, 4
      %v5356 = vor.u32 %v5354, %v5355
      %v5357 = vsel %vm5333, %v5352, %v5356
      %v5358 = vrot.slane %v4944, 3
      %v5359 = vrot.slane %v4947, 4
      %v5360 = vor.u32 %v5358, %v5359
      %v5361 = vsel %vm5333, %v5356, %v5360
      %v5362 = vrot.slane %v4953, 3
      %v5363 = vrot.slane %v4956, 4
      %v5364 = vor.u32 %v5362, %v5363
      %v5365 = vsel %vm5333, %v5360, %v5364
      %v5366 = vrot.slane %v4962, 3
      %v5367 = vrot.slane %v4965, 4
      %v5368 = vor.u32 %v5366, %v5367
      %v5369 = vsel %vm5333, %v5364, %v5368
      %v5370 = vrot.slane %v4971, 3
      %v5371 = vrot.slane %v4974, 4
      %v5372 = vor.u32 %v5370, %v5371
      %v5373 = vsel %vm5333, %v5368, %v5372
      %v5374 = vrot.slane %v4980, 3
      %v5375 = vrot.slane %v4983, 4
      %v5376 = vor.u32 %v5374, %v5375
      %v5377 = vsel %vm5333, %v5372, %v5376
      %v5378 = vrot.slane %v4989, 3
      %v5379 = vrot.slane %v4992, 4
      %v5380 = vor.u32 %v5378, %v5379
      %v5381 = vsel %vm5333, %v5376, %v5380
      %v5382 = vrot.slane %v4998, 3
      %v5383 = vrot.slane %v5001, 4
      %v5384 = vor.u32 %v5382, %v5383
      %v5385 = vsel %vm5333, %v5380, %v5384
      %v5386 = vrot.slane %v5007, 3
      %v5387 = vrot.slane %v5010, 4
      %v5388 = vor.u32 %v5386, %v5387
      %v5389 = vsel %vm5333, %v5384, %v5388
      %v5390 = vrot.slane %v5016, 3
      %v5391 = vrot.slane %v5019, 4
      %v5392 = vor.u32 %v5390, %v5391
      %v5393 = vsel %vm5333, %v5388, %v5392
      %v5394 = vrot.slane %v5025, 3
      %v5395 = vrot.slane %v5028, 4
      %v5396 = vor.u32 %v5394, %v5395
      %v5397 = vsel %vm5333, %v5392, %v5396
      %v5398 = vrot.slane %v5034, 3
      %v5399 = vrot.slane %v5037, 4
      %v5400 = vor.u32 %v5398, %v5399
      %v5401 = vsel %vm5333, %v5396, %v5400
      %v5402 = vrot.slane %v5043, 3
      %v5403 = vrot.slane %v5046, 4
      %v5404 = vor.u32 %v5402, %v5403
      %v5405 = vsel %vm5333, %v5400, %v5404
      %v5406 = vrot.slane %v5052, 3
      %v5407 = vrot.slane %v5055, 4
      %v5408 = vor.u32 %v5406, %v5407
      %v5409 = vsel %vm5333, %v5404, %v5408
      %v5411 = vshrl.u32 %v5332, 16
      %v5413 = vrot.slane %v5411, 3
      %v5414 = vshll.u32 %v5332, 16
      %v5416 = vrot.slane %v5414, 4
      %v5417 = vor.u32 %v5413, %v5416
      %v5418 = vsel %vm5333, %v5408, %v5417
      %v5453 = vunpack.c.l.b16 %v5314
      %v5454 = vunpack.c.l.b16 %v5315
      %v5455 = vunpack.c.l.b16 %v5316
      %v5456 = vunpack.c.l.b16 %v5317
      %v5457 = vunpack.c.l.b16 %v5318
      %v5458 = vunpack.c.l.b16 %v5319
      %v5459 = vunpack.c.l.b16 %v5320
      %v5460 = vunpack.c.l.b16 %v5321
      %v5461 = vunpack.c.l.b16 %v5322
      %v5462 = vunpack.c.l.b16 %v5323
      %v5463 = vunpack.c.l.b16 %v5324
      %v5464 = vunpack.c.l.b16 %v5325
      %v5465 = vunpack.c.l.b16 %v5326
      %v5466 = vunpack.c.l.b16 %v5327
      %v5467 = vunpack.c.l.b16 %v5328
      %v5468 = vunpack.c.l.b16 %v5329
      %v5469 = vpack.c.b16 %v5454, %v5453
      %v5470 = vpack.c.b16 %v5456, %v5455
      %v5471 = vpack.c.b16 %v5458, %v5457
      %v5472 = vpack.c.b16 %v5460, %v5459
      %v5473 = vpack.c.b16 %v5462, %v5461
      %v5474 = vpack.c.b16 %v5464, %v5463
      %v5475 = vpack.c.b16 %v5466, %v5465
      %v5476 = vpack.c.b16 %v5468, %v5467
      %5485 = vmatprep.subr.bf16.mxu0 0
      %5486 = vmatpush1.bf16.msra.mxu0 %v5476
      %5487 = vmatprep.subr.bf16.mxu0 0
      %5488 = vmatpush1.bf16.msra.mxu0 %v5475
      %5489 = vmatprep.subr.bf16.mxu0 0
      %5490 = vmatpush1.bf16.msra.mxu0 %v5474
      %5491 = vmatprep.subr.bf16.mxu0 0
      %5492 = vmatpush1.bf16.msra.mxu0 %v5473
      %5493 = vmatprep.subr.bf16.mxu0 0
      %5494 = vmatpush1.bf16.msra.mxu0 %v5472
      %5495 = vmatprep.subr.bf16.mxu0 0
      %5496 = vmatpush1.bf16.msra.mxu0 %v5471
      %5497 = vmatprep.subr.bf16.mxu0 0
      %5498 = vmatpush1.bf16.msra.mxu0 %v5470
      %5499 = vmatprep.subr.bf16.mxu0 0
      %5500 = vmatpush1.bf16.msra.mxu0 %v5469
      %5501 = vmatprep.subr.bf16.mxu0 0
      %5502 = vmatpush2.bf16.msra.mxu0 0
      %5503 = vmatprep.subr.bf16.mxu0 0
      %5504 = vmatpush2.bf16.msra.mxu0 0
      %5505 = vmatprep.subr.bf16.mxu0 0
      %5506 = vmatpush2.bf16.msra.mxu0 0
      %5507 = vmatprep.subr.bf16.mxu0 0
      %5508 = vmatpush2.bf16.msra.mxu0 0
      %5509 = vmatprep.subr.bf16.mxu0 0
      %5510 = vmatpush2.bf16.msra.mxu0 0
      %5511 = vmatprep.subr.bf16.mxu0 0
      %5512 = vmatpush2.bf16.msra.mxu0 0
      %5513 = vmatprep.subr.bf16.mxu0 0
      %5514 = vmatpush2.bf16.msra.mxu0 0
      %5515 = vmatprep.subr.bf16.mxu0 0
      %5516 = vmatpush2.bf16.msra.mxu0 0
      %5517 = vmatprep.mubr.bf16.mxu0 0
      %5518 = vmatmul.mubr.bf16.gmra.mxu0 %v5345
      %v5519 = vpop.f32.mrf.mxu0
      %v5520 = vadd.f32 0.0, %v5519
      %v5521 = vpop.f32.mrf.mxu0
      %v5522 = vpop.f32.mrf.mxu0
      %v5523 = vadd.f32 0.0, %v5522
      %v5524 = vpop.f32.mrf.mxu0
      %5525 = vmatprep.mubr.bf16.mxu0 0
      %5526 = vmatmul.mubr.bf16.gmra.mxu0 %v5349
      %v5527 = vpop.f32.mrf.mxu0
      %v5528 = vadd.f32 0.0, %v5527
      %v5529 = vpop.f32.mrf.mxu0
      %v5530 = vpop.f32.mrf.mxu0
      %v5531 = vadd.f32 0.0, %v5530
      %v5532 = vpop.f32.mrf.mxu0
      %5533 = vmatprep.mubr.bf16.mxu0 0
      %5534 = vmatmul.mubr.bf16.gmra.mxu0 %v5353
      %v5535 = vpop.f32.mrf.mxu0
      %v5536 = vadd.f32 0.0, %v5535
      %v5537 = vpop.f32.mrf.mxu0
      %v5538 = vpop.f32.mrf.mxu0
      %v5539 = vadd.f32 0.0, %v5538
      %v5540 = vpop.f32.mrf.mxu0
      %5541 = vmatprep.mubr.bf16.mxu0 0
      %5542 = vmatmul.mubr.bf16.gmra.mxu0 %v5357
      %v5543 = vpop.f32.mrf.mxu0
      %v5544 = vadd.f32 0.0, %v5543
      %v5545 = vpop.f32.mrf.mxu0
      %v5546 = vpop.f32.mrf.mxu0
      %v5547 = vadd.f32 0.0, %v5546
      %v5548 = vpop.f32.mrf.mxu0
      %5549 = vmatprep.mubr.bf16.mxu0 0
      %5550 = vmatmul.mubr.bf16.gmra.mxu0 %v5361
      %v5551 = vpop.f32.mrf.mxu0
      %v5552 = vadd.f32 0.0, %v5551
      %v5553 = vpop.f32.mrf.mxu0
      %v5554 = vpop.f32.mrf.mxu0
      %v5555 = vadd.f32 0.0, %v5554
      %v5556 = vpop.f32.mrf.mxu0
      %5557 = vmatprep.mubr.bf16.mxu0 0
      %5558 = vmatmul.mubr.bf16.gmra.mxu0 %v5365
      %v5559 = vpop.f32.mrf.mxu0
      %v5560 = vadd.f32 0.0, %v5559
      %v5561 = vpop.f32.mrf.mxu0
      %v5562 = vpop.f32.mrf.mxu0
      %v5563 = vadd.f32 0.0, %v5562
      %v5564 = vpop.f32.mrf.mxu0
      %5565 = vmatprep.mubr.bf16.mxu0 0
      %5566 = vmatmul.mubr.bf16.gmra.mxu0 %v5369
      %v5567 = vpop.f32.mrf.mxu0
      %v5568 = vadd.f32 0.0, %v5567
      %v5569 = vpop.f32.mrf.mxu0
      %v5570 = vpop.f32.mrf.mxu0
      %v5571 = vadd.f32 0.0, %v5570
      %v5572 = vpop.f32.mrf.mxu0
      %5573 = vmatprep.mubr.bf16.mxu0 0
      %5574 = vmatmul.mubr.bf16.gmra.mxu0 %v5373
      %v5575 = vpop.f32.mrf.mxu0
      %v5576 = vadd.f32 0.0, %v5575
      %v5577 = vpop.f32.mrf.mxu0
      %v5578 = vpop.f32.mrf.mxu0
      %v5579 = vadd.f32 0.0, %v5578
      %v5580 = vpop.f32.mrf.mxu0
      %5581 = vmatprep.mubr.bf16.mxu0 0
      %5582 = vmatmul.mubr.bf16.gmra.mxu0 %v5377
      %v5583 = vpop.f32.mrf.mxu0
      %v5584 = vadd.f32 0.0, %v5583
      %v5585 = vpop.f32.mrf.mxu0
      %v5586 = vpop.f32.mrf.mxu0
      %v5587 = vadd.f32 0.0, %v5586
      %v5588 = vpop.f32.mrf.mxu0
      %5589 = vmatprep.mubr.bf16.mxu0 0
      %5590 = vmatmul.mubr.bf16.gmra.mxu0 %v5381
      %v5591 = vpop.f32.mrf.mxu0
      %v5592 = vadd.f32 0.0, %v5591
      %v5593 = vpop.f32.mrf.mxu0
      %v5594 = vpop.f32.mrf.mxu0
      %v5595 = vadd.f32 0.0, %v5594
      %v5596 = vpop.f32.mrf.mxu0
      %5597 = vmatprep.mubr.bf16.mxu0 0
      %5598 = vmatmul.mubr.bf16.gmra.mxu0 %v5385
      %v5599 = vpop.f32.mrf.mxu0
      %v5600 = vadd.f32 0.0, %v5599
      %v5601 = vpop.f32.mrf.mxu0
      %v5602 = vpop.f32.mrf.mxu0
      %v5603 = vadd.f32 0.0, %v5602
      %v5604 = vpop.f32.mrf.mxu0
      %5605 = vmatprep.mubr.bf16.mxu0 0
      %5606 = vmatmul.mubr.bf16.gmra.mxu0 %v5389
      %v5607 = vpop.f32.mrf.mxu0
      %v5608 = vadd.f32 0.0, %v5607
      %v5609 = vpop.f32.mrf.mxu0
      %v5610 = vpop.f32.mrf.mxu0
      %v5611 = vadd.f32 0.0, %v5610
      %v5612 = vpop.f32.mrf.mxu0
      %5613 = vmatprep.mubr.bf16.mxu0 0
      %5614 = vmatmul.mubr.bf16.gmra.mxu0 %v5393
      %v5615 = vpop.f32.mrf.mxu0
      %v5616 = vadd.f32 0.0, %v5615
      %v5617 = vpop.f32.mrf.mxu0
      %v5618 = vpop.f32.mrf.mxu0
      %v5619 = vadd.f32 0.0, %v5618
      %v5620 = vpop.f32.mrf.mxu0
      %5621 = vmatprep.mubr.bf16.mxu0 0
      %5622 = vmatmul.mubr.bf16.gmra.mxu0 %v5397
      %v5623 = vpop.f32.mrf.mxu0
      %v5624 = vadd.f32 0.0, %v5623
      %v5625 = vpop.f32.mrf.mxu0
      %v5626 = vpop.f32.mrf.mxu0
      %v5627 = vadd.f32 0.0, %v5626
      %v5628 = vpop.f32.mrf.mxu0
      %5629 = vmatprep.mubr.bf16.mxu0 0
      %5630 = vmatmul.mubr.bf16.gmra.mxu0 %v5401
      %v5631 = vpop.f32.mrf.mxu0
      %v5632 = vadd.f32 0.0, %v5631
      %v5633 = vpop.f32.mrf.mxu0
      %v5634 = vpop.f32.mrf.mxu0
      %v5635 = vadd.f32 0.0, %v5634
      %v5636 = vpop.f32.mrf.mxu0
      %5637 = vmatprep.mubr.bf16.mxu0 0
      %5638 = vmatmul.mubr.bf16.gmra.mxu0 %v5405
      %v5639 = vpop.f32.mrf.mxu0
      %v5640 = vadd.f32 0.0, %v5639
      %v5641 = vpop.f32.mrf.mxu0
      %v5642 = vpop.f32.mrf.mxu0
      %v5643 = vadd.f32 0.0, %v5642
      %v5644 = vpop.f32.mrf.mxu0
      %5645 = vmatprep.mubr.bf16.mxu0 0
      %5646 = vmatmul.mubr.bf16.gmra.mxu0 %v5409
      %v5647 = vpop.f32.mrf.mxu0
      %v5648 = vadd.f32 0.0, %v5647
      %v5649 = vpop.f32.mrf.mxu0
      %v5650 = vpop.f32.mrf.mxu0
      %v5651 = vadd.f32 0.0, %v5650
      %v5652 = vpop.f32.mrf.mxu0
      %5653 = vmatprep.mubr.bf16.mxu0 0
      %5654 = vmatmul.mubr.bf16.gmra.mxu0 %v5418
      %v5655 = vpop.f32.mrf.mxu0
      %v5656 = vadd.f32 0.0, %v5655
      %v5657 = vpop.f32.mrf.mxu0
      %v5658 = vpop.f32.mrf.mxu0
      %v5659 = vadd.f32 0.0, %v5658
      %v5660 = vpop.f32.mrf.mxu0
      %5661 = vdwg.mxu0
      %v5662 = vadd.f32 %v5170, %v5520
      %v5663 = vadd.f32 %v5173, %v5523
      %v5664 = vadd.f32 %v5178, %v5528
      %v5665 = vadd.f32 %v5181, %v5531
      %v5666 = vadd.f32 %v5186, %v5536
      %v5667 = vadd.f32 %v5189, %v5539
      %v5668 = vadd.f32 %v5194, %v5544
      %v5669 = vadd.f32 %v5197, %v5547
      %v5670 = vadd.f32 %v5202, %v5552
      %v5671 = vadd.f32 %v5205, %v5555
      %v5672 = vadd.f32 %v5210, %v5560
      %v5673 = vadd.f32 %v5213, %v5563
      %v5674 = vadd.f32 %v5218, %v5568
      %v5675 = vadd.f32 %v5221, %v5571
      %v5676 = vadd.f32 %v5226, %v5576
      %v5677 = vadd.f32 %v5229, %v5579
      %v5678 = vadd.f32 %v5234, %v5584
      %v5679 = vadd.f32 %v5237, %v5587
      %v5680 = vadd.f32 %v5242, %v5592
      %v5681 = vadd.f32 %v5245, %v5595
      %v5682 = vadd.f32 %v5250, %v5600
      %v5683 = vadd.f32 %v5253, %v5603
      %v5684 = vadd.f32 %v5258, %v5608
      %v5685 = vadd.f32 %v5261, %v5611
      %v5686 = vadd.f32 %v5266, %v5616
      %v5687 = vadd.f32 %v5269, %v5619
      %v5688 = vadd.f32 %v5274, %v5624
      %v5689 = vadd.f32 %v5277, %v5627
      %v5690 = vadd.f32 %v5282, %v5632
      %v5691 = vadd.f32 %v5285, %v5635
      %v5692 = vadd.f32 %v5290, %v5640
      %v5693 = vadd.f32 %v5293, %v5643
      %v5694 = vadd.f32 %v5298, %v5648
      %v5695 = vadd.f32 %v5301, %v5651
      %v5696 = vadd.f32 %v5306, %v5656
      %v5697 = vadd.f32 %v5309, %v5659
      %v5698 = vld [vmem:[#allocation2 + $0xc] sm:$0x8]
      %v5699 = vld [vmem:[#allocation2 + $0x10] sm:$0xf]
      %v5700 = vld [vmem:[#allocation2 + $0x14] sm:$0xf]
      %v5701 = vld [vmem:[#allocation2 + $0x18] sm:$0xf]
      %v5702 = vld [vmem:[#allocation2 + $0x1c] sm:$0xf]
      %v5703 = vld [vmem:[#allocation2 + $0x20] sm:$0xf]
      %v5704 = vld [vmem:[#allocation2 + $0x24] sm:$0xf]
      %v5705 = vld [vmem:[#allocation2 + $0x28] sm:$0xf]
      %v5706 = vld [vmem:[#allocation2 + $0x2c] sm:$0xf]
      %v5707 = vld [vmem:[#allocation2 + $0x30] sm:$0xf]
      %v5708 = vld [vmem:[#allocation2 + $0x34] sm:$0xf]
      %v5709 = vld [vmem:[#allocation2 + $0x38] sm:$0xf]
      %v5710 = vld [vmem:[#allocation2 + $0x3c] sm:$0xf]
      %v5711 = vld [vmem:[#allocation2 + $0x40] sm:$0xf]
      %v5712 = vld [vmem:[#allocation2 + $0x44] sm:$0xf]
      %v5713 = vld [vmem:[#allocation2 + $0x48] sm:$0xf]
      %v5714 = vld [vmem:[#allocation2 + $0x4c] sm:$0xf]
      %v5715 = vld [vmem:[#allocation2 + $0x50] sm:$0xf]
      %v5716 = vld [vmem:[#allocation2 + $0x54] sm:$0xf]
      %v5717 = vld [vmem:[#allocation2 + $0x58] sm:$0xf]
      %v5718 = vld [vmem:[#allocation2 + $0x5c] sm:$0xf]
      %v5719 = vld [vmem:[#allocation2 + $0x60] sm:$0xf]
      %v5720 = vld [vmem:[#allocation2 + $0x64] sm:$0xf]
      %v5721 = vld [vmem:[#allocation2 + $0x68] sm:$0xf]
      %v5722 = vld [vmem:[#allocation2 + $0x6c] sm:$0xf]
      %v5723 = vld [vmem:[#allocation2 + $0x70] sm:$0xf]
      %v5724 = vld [vmem:[#allocation2 + $0x74] sm:$0xf]
      %v5725 = vld [vmem:[#allocation2 + $0x78] sm:$0xf]
      %v5726 = vld [vmem:[#allocation2 + $0x7c] sm:$0xf]
      %v5727 = vld [vmem:[#allocation2 + $0x80] sm:$0xf]
      %v5728 = vld [vmem:[#allocation2 + $0x84] sm:$0xf]
      %v5729 = vld [vmem:[#allocation2 + $0x88] sm:$0xf]
      %v5730 = vld [vmem:[#allocation2 + $0x8c] sm:$0xf]
      %v5731 = vld [vmem:[#allocation2 + $0x90] sm:$0xf]
      %v5732 = vld [vmem:[#allocation2 + $0x94] sm:$0xf]
      %v5733 = vld [vmem:[#allocation2 + $0x98] sm:$0xf]
      %v5734 = vld [vmem:[#allocation2 + $0x9c] sm:$0xf]
      %s5735 = scalar_lea.vmem %s4, 192
      %v5736 = vld [vmem:[%s5735] sm:$0xf]
      %v5737 = vld [vmem:[%s5735 + $0x4] sm:$0xf]
      %v5738 = vld [vmem:[%s5735 + $0x8] sm:$0xf]
      %v5739 = vld [vmem:[%s5735 + $0xc] sm:$0xf]
      %v5740 = vld [vmem:[%s5735 + $0x10] sm:$0xf]
      %v5741 = vld [vmem:[%s5735 + $0x14] sm:$0xf]
      %v5742 = vld [vmem:[%s5735 + $0x18] sm:$0xf]
      %v5743 = vld [vmem:[%s5735 + $0x1c] sm:$0xf]
      %v5744 = vld [vmem:[%s5735 + $0x20] sm:$0xf]
      %v5745 = vld [vmem:[%s5735 + $0x24] sm:$0xf]
      %v5746 = vld [vmem:[%s5735 + $0x28] sm:$0xf]
      %v5747 = vld [vmem:[%s5735 + $0x2c] sm:$0xf]
      %v5748 = vld [vmem:[%s5735 + $0x30] sm:$0xf]
      %v5749 = vld [vmem:[%s5735 + $0x34] sm:$0xf]
      %v5750 = vld [vmem:[%s5735 + $0x38] sm:$0xf]
      %v5751 = vld [vmem:[%s5735 + $0x3c] sm:$0xf]
      %v5789 = vunpack.c.l.b16 %v5698
      %v5790 = vunpack.c.l.b16 %v5699
      %v5791 = vunpack.c.l.b16 %v5700
      %v5792 = vunpack.c.l.b16 %v5701
      %v5793 = vunpack.c.l.b16 %v5702
      %v5794 = vunpack.c.l.b16 %v5703
      %v5795 = vunpack.c.l.b16 %v5704
      %v5796 = vunpack.c.l.b16 %v5705
      %v5797 = vunpack.c.l.b16 %v5706
      %v5798 = vunpack.c.l.b16 %v5707
      %v5799 = vunpack.c.l.b16 %v5708
      %v5800 = vunpack.c.l.b16 %v5709
      %v5801 = vunpack.c.l.b16 %v5710
      %v5802 = vunpack.c.l.b16 %v5711
      %v5803 = vunpack.c.l.b16 %v5712
      %v5804 = vunpack.c.l.b16 %v5713
      %v5805 = vunpack.c.l.b16 %v5714
      %v5806 = vunpack.c.l.b16 %v5715
      %v5807 = vunpack.c.l.b16 %v5716
      %v5808 = vunpack.c.l.b16 %v5717
      %v5809 = vunpack.c.l.b16 %v5718
      %v5810 = vunpack.c.l.b16 %v5719
      %v5811 = vunpack.c.l.b16 %v5720
      %v5812 = vunpack.c.l.b16 %v5721
      %v5813 = vunpack.c.l.b16 %v5722
      %v5814 = vunpack.c.l.b16 %v5723
      %v5815 = vunpack.c.l.b16 %v5724
      %v5816 = vunpack.c.l.b16 %v5725
      %v5817 = vunpack.c.l.b16 %v5726
      %v5818 = vunpack.c.l.b16 %v5727
      %v5819 = vunpack.c.l.b16 %v5728
      %v5820 = vunpack.c.l.b16 %v5729
      %v5821 = vunpack.c.l.b16 %v5730
      %v5822 = vunpack.c.l.b16 %v5731
      %v5823 = vunpack.c.l.b16 %v5732
      %v5824 = vunpack.c.l.b16 %v5733
      %v5825 = vunpack.c.l.b16 %v5734
      %v5826 = vpack.c.b16 %v5790, %v5789
      %v5827 = vpack.c.b16 %v5792, %v5791
      %v5828 = vpack.c.b16 %v5794, %v5793
      %v5829 = vpack.c.b16 %v5796, %v5795
      %v5830 = vpack.c.b16 %v5798, %v5797
      %v5831 = vpack.c.b16 %v5800, %v5799
      %v5832 = vpack.c.b16 %v5802, %v5801
      %v5833 = vpack.c.b16 %v5804, %v5803
      %v5834 = vpack.c.b16 %v5806, %v5805
      %v5835 = vpack.c.b16 %v5808, %v5807
      %v5836 = vpack.c.b16 %v5810, %v5809
      %v5837 = vpack.c.b16 %v5812, %v5811
      %v5838 = vpack.c.b16 %v5814, %v5813
      %v5839 = vpack.c.b16 %v5816, %v5815
      %v5840 = vpack.c.b16 %v5818, %v5817
      %v5841 = vpack.c.b16 %v5820, %v5819
      %v5842 = vpack.c.b16 %v5822, %v5821
      %v5843 = vpack.c.b16 %v5824, %v5823
      %v5844 = vpack.c.b16 %v5825, %v5825
      %v5846 = vshrl.u32 %v5826, 16
      %v5848 = vrot.slane %v5846, 3
      %v5849 = vshll.u32 %v5826, 16
      %v5851 = vrot.slane %v5849, 4
      %v5852 = vor.u32 %v5848, %v5851
      %v5854 = vshrl.u32 %v5827, 16
      %v5856 = vrot.slane %v5854, 3
      %v5857 = vshll.u32 %v5827, 16
      %v5859 = vrot.slane %v5857, 4
      %v5860 = vor.u32 %v5856, %v5859
      %v5861 = vsel %vm5333, %v5852, %v5860
      %v5863 = vshrl.u32 %v5828, 16
      %v5865 = vrot.slane %v5863, 3
      %v5866 = vshll.u32 %v5828, 16
      %v5868 = vrot.slane %v5866, 4
      %v5869 = vor.u32 %v5865, %v5868
      %v5870 = vsel %vm5333, %v5860, %v5869
      %v5872 = vshrl.u32 %v5829, 16
      %v5874 = vrot.slane %v5872, 3
      %v5875 = vshll.u32 %v5829, 16
      %v5877 = vrot.slane %v5875, 4
      %v5878 = vor.u32 %v5874, %v5877
      %v5879 = vsel %vm5333, %v5869, %v5878
      %v5881 = vshrl.u32 %v5830, 16
      %v5883 = vrot.slane %v5881, 3
      %v5884 = vshll.u32 %v5830, 16
      %v5886 = vrot.slane %v5884, 4
      %v5887 = vor.u32 %v5883, %v5886
      %v5888 = vsel %vm5333, %v5878, %v5887
      %v5890 = vshrl.u32 %v5831, 16
      %v5892 = vrot.slane %v5890, 3
      %v5893 = vshll.u32 %v5831, 16
      %v5895 = vrot.slane %v5893, 4
      %v5896 = vor.u32 %v5892, %v5895
      %v5897 = vsel %vm5333, %v5887, %v5896
      %v5899 = vshrl.u32 %v5832, 16
      %v5901 = vrot.slane %v5899, 3
      %v5902 = vshll.u32 %v5832, 16
      %v5904 = vrot.slane %v5902, 4
      %v5905 = vor.u32 %v5901, %v5904
      %v5906 = vsel %vm5333, %v5896, %v5905
      %v5908 = vshrl.u32 %v5833, 16
      %v5910 = vrot.slane %v5908, 3
      %v5911 = vshll.u32 %v5833, 16
      %v5913 = vrot.slane %v5911, 4
      %v5914 = vor.u32 %v5910, %v5913
      %v5915 = vsel %vm5333, %v5905, %v5914
      %v5917 = vshrl.u32 %v5834, 16
      %v5919 = vrot.slane %v5917, 3
      %v5920 = vshll.u32 %v5834, 16
      %v5922 = vrot.slane %v5920, 4
      %v5923 = vor.u32 %v5919, %v5922
      %v5924 = vsel %vm5333, %v5914, %v5923
      %v5926 = vshrl.u32 %v5835, 16
      %v5928 = vrot.slane %v5926, 3
      %v5929 = vshll.u32 %v5835, 16
      %v5931 = vrot.slane %v5929, 4
      %v5932 = vor.u32 %v5928, %v5931
      %v5933 = vsel %vm5333, %v5923, %v5932
      %v5935 = vshrl.u32 %v5836, 16
      %v5937 = vrot.slane %v5935, 3
      %v5938 = vshll.u32 %v5836, 16
      %v5940 = vrot.slane %v5938, 4
      %v5941 = vor.u32 %v5937, %v5940
      %v5942 = vsel %vm5333, %v5932, %v5941
      %v5944 = vshrl.u32 %v5837, 16
      %v5946 = vrot.slane %v5944, 3
      %v5947 = vshll.u32 %v5837, 16
      %v5949 = vrot.slane %v5947, 4
      %v5950 = vor.u32 %v5946, %v5949
      %v5951 = vsel %vm5333, %v5941, %v5950
      %v5953 = vshrl.u32 %v5838, 16
      %v5955 = vrot.slane %v5953, 3
      %v5956 = vshll.u32 %v5838, 16
      %v5958 = vrot.slane %v5956, 4
      %v5959 = vor.u32 %v5955, %v5958
      %v5960 = vsel %vm5333, %v5950, %v5959
      %v5962 = vshrl.u32 %v5839, 16
      %v5964 = vrot.slane %v5962, 3
      %v5965 = vshll.u32 %v5839, 16
      %v5967 = vrot.slane %v5965, 4
      %v5968 = vor.u32 %v5964, %v5967
      %v5969 = vsel %vm5333, %v5959, %v5968
      %v5971 = vshrl.u32 %v5840, 16
      %v5973 = vrot.slane %v5971, 3
      %v5974 = vshll.u32 %v5840, 16
      %v5976 = vrot.slane %v5974, 4
      %v5977 = vor.u32 %v5973, %v5976
      %v5978 = vsel %vm5333, %v5968, %v5977
      %v5980 = vshrl.u32 %v5841, 16
      %v5982 = vrot.slane %v5980, 3
      %v5983 = vshll.u32 %v5841, 16
      %v5985 = vrot.slane %v5983, 4
      %v5986 = vor.u32 %v5982, %v5985
      %v5987 = vsel %vm5333, %v5977, %v5986
      %v5989 = vshrl.u32 %v5842, 16
      %v5991 = vrot.slane %v5989, 3
      %v5992 = vshll.u32 %v5842, 16
      %v5994 = vrot.slane %v5992, 4
      %v5995 = vor.u32 %v5991, %v5994
      %v5996 = vsel %vm5333, %v5986, %v5995
      %v5998 = vshrl.u32 %v5843, 16
      %v6000 = vrot.slane %v5998, 3
      %v6001 = vshll.u32 %v5843, 16
      %v6003 = vrot.slane %v6001, 4
      %v6004 = vor.u32 %v6000, %v6003
      %v6005 = vsel %vm5333, %v5995, %v6004
      %v6007 = vshrl.u32 %v5844, 16
      %v6009 = vrot.slane %v6007, 3
      %v6010 = vshll.u32 %v5844, 16
      %v6012 = vrot.slane %v6010, 4
      %v6013 = vor.u32 %v6009, %v6012
      %v6014 = vsel %vm5333, %v6004, %v6013
      %v6049 = vunpack.c.l.b16 %v5736
      %v6050 = vunpack.c.l.b16 %v5737
      %v6051 = vunpack.c.l.b16 %v5738
      %v6052 = vunpack.c.l.b16 %v5739
      %v6053 = vunpack.c.l.b16 %v5740
      %v6054 = vunpack.c.l.b16 %v5741
      %v6055 = vunpack.c.l.b16 %v5742
      %v6056 = vunpack.c.l.b16 %v5743
      %v6057 = vunpack.c.l.b16 %v5744
      %v6058 = vunpack.c.l.b16 %v5745
      %v6059 = vunpack.c.l.b16 %v5746
      %v6060 = vunpack.c.l.b16 %v5747
      %v6061 = vunpack.c.l.b16 %v5748
      %v6062 = vunpack.c.l.b16 %v5749
      %v6063 = vunpack.c.l.b16 %v5750
      %v6064 = vunpack.c.l.b16 %v5751
      %v6065 = vpack.c.b16 %v6050, %v6049
      %v6066 = vpack.c.b16 %v6052, %v6051
      %v6067 = vpack.c.b16 %v6054, %v6053
      %v6068 = vpack.c.b16 %v6056, %v6055
      %v6069 = vpack.c.b16 %v6058, %v6057
      %v6070 = vpack.c.b16 %v6060, %v6059
      %v6071 = vpack.c.b16 %v6062, %v6061
      %v6072 = vpack.c.b16 %v6064, %v6063
      %6081 = vmatprep.subr.bf16.mxu0 0
      %6082 = vmatpush1.bf16.msra.mxu0 %v6072
      %6083 = vmatprep.subr.bf16.mxu0 0
      %6084 = vmatpush1.bf16.msra.mxu0 %v6071
      %6085 = vmatprep.subr.bf16.mxu0 0
      %6086 = vmatpush1.bf16.msra.mxu0 %v6070
      %6087 = vmatprep.subr.bf16.mxu0 0
      %6088 = vmatpush1.bf16.msra.mxu0 %v6069
      %6089 = vmatprep.subr.bf16.mxu0 0
      %6090 = vmatpush1.bf16.msra.mxu0 %v6068
      %6091 = vmatprep.subr.bf16.mxu0 0
      %6092 = vmatpush1.bf16.msra.mxu0 %v6067
      %6093 = vmatprep.subr.bf16.mxu0 0
      %6094 = vmatpush1.bf16.msra.mxu0 %v6066
      %6095 = vmatprep.subr.bf16.mxu0 0
      %6096 = vmatpush1.bf16.msra.mxu0 %v6065
      %6097 = vmatprep.subr.bf16.mxu0 0
      %6098 = vmatpush2.bf16.msra.mxu0 0
      %6099 = vmatprep.subr.bf16.mxu0 0
      %6100 = vmatpush2.bf16.msra.mxu0 0
      %6101 = vmatprep.subr.bf16.mxu0 0
      %6102 = vmatpush2.bf16.msra.mxu0 0
      %6103 = vmatprep.subr.bf16.mxu0 0
      %6104 = vmatpush2.bf16.msra.mxu0 0
      %6105 = vmatprep.subr.bf16.mxu0 0
      %6106 = vmatpush2.bf16.msra.mxu0 0
      %6107 = vmatprep.subr.bf16.mxu0 0
      %6108 = vmatpush2.bf16.msra.mxu0 0
      %6109 = vmatprep.subr.bf16.mxu0 0
      %6110 = vmatpush2.bf16.msra.mxu0 0
      %6111 = vmatprep.subr.bf16.mxu0 0
      %6112 = vmatpush2.bf16.msra.mxu0 0
      %6113 = vmatprep.mubr.bf16.mxu0 0
      %6114 = vmatmul.mubr.bf16.gmra.mxu0 %v5861
      %v6115 = vpop.f32.mrf.mxu0
      %v6116 = vadd.f32 0.0, %v6115
      %v6117 = vpop.f32.mrf.mxu0
      %v6118 = vpop.f32.mrf.mxu0
      %v6119 = vadd.f32 0.0, %v6118
      %v6120 = vpop.f32.mrf.mxu0
      %6121 = vmatprep.mubr.bf16.mxu0 0
      %6122 = vmatmul.mubr.bf16.gmra.mxu0 %v5870
      %v6123 = vpop.f32.mrf.mxu0
      %v6124 = vadd.f32 0.0, %v6123
      %v6125 = vpop.f32.mrf.mxu0
      %v6126 = vpop.f32.mrf.mxu0
      %v6127 = vadd.f32 0.0, %v6126
      %v6128 = vpop.f32.mrf.mxu0
      %6129 = vmatprep.mubr.bf16.mxu0 0
      %6130 = vmatmul.mubr.bf16.gmra.mxu0 %v5879
      %v6131 = vpop.f32.mrf.mxu0
      %v6132 = vadd.f32 0.0, %v6131
      %v6133 = vpop.f32.mrf.mxu0
      %v6134 = vpop.f32.mrf.mxu0
      %v6135 = vadd.f32 0.0, %v6134
      %v6136 = vpop.f32.mrf.mxu0
      %6137 = vmatprep.mubr.bf16.mxu0 0
      %6138 = vmatmul.mubr.bf16.gmra.mxu0 %v5888
      %v6139 = vpop.f32.mrf.mxu0
      %v6140 = vadd.f32 0.0, %v6139
      %v6141 = vpop.f32.mrf.mxu0
      %v6142 = vpop.f32.mrf.mxu0
      %v6143 = vadd.f32 0.0, %v6142
      %v6144 = vpop.f32.mrf.mxu0
      %6145 = vmatprep.mubr.bf16.mxu0 0
      %6146 = vmatmul.mubr.bf16.gmra.mxu0 %v5897
      %v6147 = vpop.f32.mrf.mxu0
      %v6148 = vadd.f32 0.0, %v6147
      %v6149 = vpop.f32.mrf.mxu0
      %v6150 = vpop.f32.mrf.mxu0
      %v6151 = vadd.f32 0.0, %v6150
      %v6152 = vpop.f32.mrf.mxu0
      %6153 = vmatprep.mubr.bf16.mxu0 0
      %6154 = vmatmul.mubr.bf16.gmra.mxu0 %v5906
      %v6155 = vpop.f32.mrf.mxu0
      %v6156 = vadd.f32 0.0, %v6155
      %v6157 = vpop.f32.mrf.mxu0
      %v6158 = vpop.f32.mrf.mxu0
      %v6159 = vadd.f32 0.0, %v6158
      %v6160 = vpop.f32.mrf.mxu0
      %6161 = vmatprep.mubr.bf16.mxu0 0
      %6162 = vmatmul.mubr.bf16.gmra.mxu0 %v5915
      %v6163 = vpop.f32.mrf.mxu0
      %v6164 = vadd.f32 0.0, %v6163
      %v6165 = vpop.f32.mrf.mxu0
      %v6166 = vpop.f32.mrf.mxu0
      %v6167 = vadd.f32 0.0, %v6166
      %v6168 = vpop.f32.mrf.mxu0
      %6169 = vmatprep.mubr.bf16.mxu0 0
      %6170 = vmatmul.mubr.bf16.gmra.mxu0 %v5924
      %v6171 = vpop.f32.mrf.mxu0
      %v6172 = vadd.f32 0.0, %v6171
      %v6173 = vpop.f32.mrf.mxu0
      %v6174 = vpop.f32.mrf.mxu0
      %v6175 = vadd.f32 0.0, %v6174
      %v6176 = vpop.f32.mrf.mxu0
      %6177 = vmatprep.mubr.bf16.mxu0 0
      %6178 = vmatmul.mubr.bf16.gmra.mxu0 %v5933
      %v6179 = vpop.f32.mrf.mxu0
      %v6180 = vadd.f32 0.0, %v6179
      %v6181 = vpop.f32.mrf.mxu0
      %v6182 = vpop.f32.mrf.mxu0
      %v6183 = vadd.f32 0.0, %v6182
      %v6184 = vpop.f32.mrf.mxu0
      %6185 = vmatprep.mubr.bf16.mxu0 0
      %6186 = vmatmul.mubr.bf16.gmra.mxu0 %v5942
      %v6187 = vpop.f32.mrf.mxu0
      %v6188 = vadd.f32 0.0, %v6187
      %v6189 = vpop.f32.mrf.mxu0
      %v6190 = vpop.f32.mrf.mxu0
      %v6191 = vadd.f32 0.0, %v6190
      %v6192 = vpop.f32.mrf.mxu0
      %6193 = vmatprep.mubr.bf16.mxu0 0
      %6194 = vmatmul.mubr.bf16.gmra.mxu0 %v5951
      %v6195 = vpop.f32.mrf.mxu0
      %v6196 = vadd.f32 0.0, %v6195
      %v6197 = vpop.f32.mrf.mxu0
      %v6198 = vpop.f32.mrf.mxu0
      %v6199 = vadd.f32 0.0, %v6198
      %v6200 = vpop.f32.mrf.mxu0
      %6201 = vmatprep.mubr.bf16.mxu0 0
      %6202 = vmatmul.mubr.bf16.gmra.mxu0 %v5960
      %v6203 = vpop.f32.mrf.mxu0
      %v6204 = vadd.f32 0.0, %v6203
      %v6205 = vpop.f32.mrf.mxu0
      %v6206 = vpop.f32.mrf.mxu0
      %v6207 = vadd.f32 0.0, %v6206
      %v6208 = vpop.f32.mrf.mxu0
      %6209 = vmatprep.mubr.bf16.mxu0 0
      %6210 = vmatmul.mubr.bf16.gmra.mxu0 %v5969
      %v6211 = vpop.f32.mrf.mxu0
      %v6212 = vadd.f32 0.0, %v6211
      %v6213 = vpop.f32.mrf.mxu0
      %v6214 = vpop.f32.mrf.mxu0
      %v6215 = vadd.f32 0.0, %v6214
      %v6216 = vpop.f32.mrf.mxu0
      %6217 = vmatprep.mubr.bf16.mxu0 0
      %6218 = vmatmul.mubr.bf16.gmra.mxu0 %v5978
      %v6219 = vpop.f32.mrf.mxu0
      %v6220 = vadd.f32 0.0, %v6219
      %v6221 = vpop.f32.mrf.mxu0
      %v6222 = vpop.f32.mrf.mxu0
      %v6223 = vadd.f32 0.0, %v6222
      %v6224 = vpop.f32.mrf.mxu0
      %6225 = vmatprep.mubr.bf16.mxu0 0
      %6226 = vmatmul.mubr.bf16.gmra.mxu0 %v5987
      %v6227 = vpop.f32.mrf.mxu0
      %v6228 = vadd.f32 0.0, %v6227
      %v6229 = vpop.f32.mrf.mxu0
      %v6230 = vpop.f32.mrf.mxu0
      %v6231 = vadd.f32 0.0, %v6230
      %v6232 = vpop.f32.mrf.mxu0
      %6233 = vmatprep.mubr.bf16.mxu0 0
      %6234 = vmatmul.mubr.bf16.gmra.mxu0 %v5996
      %v6235 = vpop.f32.mrf.mxu0
      %v6236 = vadd.f32 0.0, %v6235
      %v6237 = vpop.f32.mrf.mxu0
      %v6238 = vpop.f32.mrf.mxu0
      %v6239 = vadd.f32 0.0, %v6238
      %v6240 = vpop.f32.mrf.mxu0
      %6241 = vmatprep.mubr.bf16.mxu0 0
      %6242 = vmatmul.mubr.bf16.gmra.mxu0 %v6005
      %v6243 = vpop.f32.mrf.mxu0
      %v6244 = vadd.f32 0.0, %v6243
      %v6245 = vpop.f32.mrf.mxu0
      %v6246 = vpop.f32.mrf.mxu0
      %v6247 = vadd.f32 0.0, %v6246
      %v6248 = vpop.f32.mrf.mxu0
      %6249 = vmatprep.mubr.bf16.mxu0 0
      %6250 = vmatmul.mubr.bf16.gmra.mxu0 %v6014
      %v6251 = vpop.f32.mrf.mxu0
      %v6252 = vadd.f32 0.0, %v6251
      %v6253 = vpop.f32.mrf.mxu0
      %v6254 = vpop.f32.mrf.mxu0
      %v6255 = vadd.f32 0.0, %v6254
      %v6256 = vpop.f32.mrf.mxu0
      %6257 = vdwg.mxu0
      %v6258 = vadd.f32 %v5662, %v6116
      %v6259 = vadd.f32 %v5663, %v6119
      %v6260 = vadd.f32 %v5664, %v6124
      %v6261 = vadd.f32 %v5665, %v6127
      %v6262 = vadd.f32 %v5666, %v6132
      %v6263 = vadd.f32 %v5667, %v6135
      %v6264 = vadd.f32 %v5668, %v6140
      %v6265 = vadd.f32 %v5669, %v6143
      %v6266 = vadd.f32 %v5670, %v6148
      %v6267 = vadd.f32 %v5671, %v6151
      %v6268 = vadd.f32 %v5672, %v6156
      %v6269 = vadd.f32 %v5673, %v6159
      %v6270 = vadd.f32 %v5674, %v6164
      %v6271 = vadd.f32 %v5675, %v6167
      %v6272 = vadd.f32 %v5676, %v6172
      %v6273 = vadd.f32 %v5677, %v6175
      %v6274 = vadd.f32 %v5678, %v6180
      %v6275 = vadd.f32 %v5679, %v6183
      %v6276 = vadd.f32 %v5680, %v6188
      %v6277 = vadd.f32 %v5681, %v6191
      %v6278 = vadd.f32 %v5682, %v6196
      %v6279 = vadd.f32 %v5683, %v6199
      %v6280 = vadd.f32 %v5684, %v6204
      %v6281 = vadd.f32 %v5685, %v6207
      %v6282 = vadd.f32 %v5686, %v6212
      %v6283 = vadd.f32 %v5687, %v6215
      %v6284 = vadd.f32 %v5688, %v6220
      %v6285 = vadd.f32 %v5689, %v6223
      %v6286 = vadd.f32 %v5690, %v6228
      %v6287 = vadd.f32 %v5691, %v6231
      %v6288 = vadd.f32 %v5692, %v6236
      %v6289 = vadd.f32 %v5693, %v6239
      %v6290 = vadd.f32 %v5694, %v6244
      %v6291 = vadd.f32 %v5695, %v6247
      %v6292 = vadd.f32 %v5696, %v6252
      %v6293 = vadd.f32 %v5697, %v6255
      %s6294 = scalar_lea.vmem %s4, 256
      %v6295 = vld [vmem:[%s6294] sm:$0xf]
      %v6296 = vld [vmem:[%s6294 + $0x4] sm:$0xf]
      %v6297 = vld [vmem:[%s6294 + $0x8] sm:$0xf]
      %v6298 = vld [vmem:[%s6294 + $0xc] sm:$0xf]
      %v6299 = vld [vmem:[%s6294 + $0x10] sm:$0xf]
      %v6300 = vld [vmem:[%s6294 + $0x14] sm:$0xf]
      %v6301 = vld [vmem:[%s6294 + $0x18] sm:$0xf]
      %v6302 = vld [vmem:[%s6294 + $0x1c] sm:$0xf]
      %v6303 = vld [vmem:[%s6294 + $0x20] sm:$0xf]
      %v6304 = vld [vmem:[%s6294 + $0x24] sm:$0xf]
      %v6305 = vld [vmem:[%s6294 + $0x28] sm:$0xf]
      %v6306 = vld [vmem:[%s6294 + $0x2c] sm:$0xf]
      %v6307 = vld [vmem:[%s6294 + $0x30] sm:$0xf]
      %v6308 = vld [vmem:[%s6294 + $0x34] sm:$0xf]
      %v6309 = vld [vmem:[%s6294 + $0x38] sm:$0xf]
      %v6310 = vld [vmem:[%s6294 + $0x3c] sm:$0xf]
      %v6311 = vpack.c.b16 %v5791, %v5790
      %v6312 = vpack.c.b16 %v5793, %v5792
      %v6313 = vpack.c.b16 %v5795, %v5794
      %v6314 = vpack.c.b16 %v5797, %v5796
      %v6315 = vpack.c.b16 %v5799, %v5798
      %v6316 = vpack.c.b16 %v5801, %v5800
      %v6317 = vpack.c.b16 %v5803, %v5802
      %v6318 = vpack.c.b16 %v5805, %v5804
      %v6319 = vpack.c.b16 %v5807, %v5806
      %v6320 = vpack.c.b16 %v5809, %v5808
      %v6321 = vpack.c.b16 %v5811, %v5810
      %v6322 = vpack.c.b16 %v5813, %v5812
      %v6323 = vpack.c.b16 %v5815, %v5814
      %v6324 = vpack.c.b16 %v5817, %v5816
      %v6325 = vpack.c.b16 %v5819, %v5818
      %v6326 = vpack.c.b16 %v5821, %v5820
      %v6327 = vpack.c.b16 %v5823, %v5822
      %v6328 = vpack.c.b16 %v5825, %v5824
      %v6363 = vunpack.c.l.b16 %v6295
      %v6364 = vunpack.c.l.b16 %v6296
      %v6365 = vunpack.c.l.b16 %v6297
      %v6366 = vunpack.c.l.b16 %v6298
      %v6367 = vunpack.c.l.b16 %v6299
      %v6368 = vunpack.c.l.b16 %v6300
      %v6369 = vunpack.c.l.b16 %v6301
      %v6370 = vunpack.c.l.b16 %v6302
      %v6371 = vunpack.c.l.b16 %v6303
      %v6372 = vunpack.c.l.b16 %v6304
      %v6373 = vunpack.c.l.b16 %v6305
      %v6374 = vunpack.c.l.b16 %v6306
      %v6375 = vunpack.c.l.b16 %v6307
      %v6376 = vunpack.c.l.b16 %v6308
      %v6377 = vunpack.c.l.b16 %v6309
      %v6378 = vunpack.c.l.b16 %v6310
      %v6379 = vpack.c.b16 %v6364, %v6363
      %v6380 = vpack.c.b16 %v6366, %v6365
      %v6381 = vpack.c.b16 %v6368, %v6367
      %v6382 = vpack.c.b16 %v6370, %v6369
      %v6383 = vpack.c.b16 %v6372, %v6371
      %v6384 = vpack.c.b16 %v6374, %v6373
      %v6385 = vpack.c.b16 %v6376, %v6375
      %v6386 = vpack.c.b16 %v6378, %v6377
      %6395 = vmatprep.subr.bf16.mxu0 0
      %6396 = vmatpush1.bf16.msra.mxu0 %v6386
      %6397 = vmatprep.subr.bf16.mxu0 0
      %6398 = vmatpush1.bf16.msra.mxu0 %v6385
      %6399 = vmatprep.subr.bf16.mxu0 0
      %6400 = vmatpush1.bf16.msra.mxu0 %v6384
      %6401 = vmatprep.subr.bf16.mxu0 0
      %6402 = vmatpush1.bf16.msra.mxu0 %v6383
      %6403 = vmatprep.subr.bf16.mxu0 0
      %6404 = vmatpush1.bf16.msra.mxu0 %v6382
      %6405 = vmatprep.subr.bf16.mxu0 0
      %6406 = vmatpush1.bf16.msra.mxu0 %v6381
      %6407 = vmatprep.subr.bf16.mxu0 0
      %6408 = vmatpush1.bf16.msra.mxu0 %v6380
      %6409 = vmatprep.subr.bf16.mxu0 0
      %6410 = vmatpush1.bf16.msra.mxu0 %v6379
      %6411 = vmatprep.subr.bf16.mxu0 0
      %6412 = vmatpush2.bf16.msra.mxu0 0
      %6413 = vmatprep.subr.bf16.mxu0 0
      %6414 = vmatpush2.bf16.msra.mxu0 0
      %6415 = vmatprep.subr.bf16.mxu0 0
      %6416 = vmatpush2.bf16.msra.mxu0 0
      %6417 = vmatprep.subr.bf16.mxu0 0
      %6418 = vmatpush2.bf16.msra.mxu0 0
      %6419 = vmatprep.subr.bf16.mxu0 0
      %6420 = vmatpush2.bf16.msra.mxu0 0
      %6421 = vmatprep.subr.bf16.mxu0 0
      %6422 = vmatpush2.bf16.msra.mxu0 0
      %6423 = vmatprep.subr.bf16.mxu0 0
      %6424 = vmatpush2.bf16.msra.mxu0 0
      %6425 = vmatprep.subr.bf16.mxu0 0
      %6426 = vmatpush2.bf16.msra.mxu0 0
      %6427 = vmatprep.mubr.bf16.mxu0 0
      %6428 = vmatmul.mubr.bf16.gmra.mxu0 %v6311
      %v6429 = vpop.f32.mrf.mxu0
      %v6430 = vadd.f32 0.0, %v6429
      %v6431 = vpop.f32.mrf.mxu0
      %v6432 = vpop.f32.mrf.mxu0
      %v6433 = vadd.f32 0.0, %v6432
      %v6434 = vpop.f32.mrf.mxu0
      %6435 = vmatprep.mubr.bf16.mxu0 0
      %6436 = vmatmul.mubr.bf16.gmra.mxu0 %v6312
      %v6437 = vpop.f32.mrf.mxu0
      %v6438 = vadd.f32 0.0, %v6437
      %v6439 = vpop.f32.mrf.mxu0
      %v6440 = vpop.f32.mrf.mxu0
      %v6441 = vadd.f32 0.0, %v6440
      %v6442 = vpop.f32.mrf.mxu0
      %6443 = vmatprep.mubr.bf16.mxu0 0
      %6444 = vmatmul.mubr.bf16.gmra.mxu0 %v6313
      %v6445 = vpop.f32.mrf.mxu0
      %v6446 = vadd.f32 0.0, %v6445
      %v6447 = vpop.f32.mrf.mxu0
      %v6448 = vpop.f32.mrf.mxu0
      %v6449 = vadd.f32 0.0, %v6448
      %v6450 = vpop.f32.mrf.mxu0
      %6451 = vmatprep.mubr.bf16.mxu0 0
      %6452 = vmatmul.mubr.bf16.gmra.mxu0 %v6314
      %v6453 = vpop.f32.mrf.mxu0
      %v6454 = vadd.f32 0.0, %v6453
      %v6455 = vpop.f32.mrf.mxu0
      %v6456 = vpop.f32.mrf.mxu0
      %v6457 = vadd.f32 0.0, %v6456
      %v6458 = vpop.f32.mrf.mxu0
      %6459 = vmatprep.mubr.bf16.mxu0 0
      %6460 = vmatmul.mubr.bf16.gmra.mxu0 %v6315
      %v6461 = vpop.f32.mrf.mxu0
      %v6462 = vadd.f32 0.0, %v6461
      %v6463 = vpop.f32.mrf.mxu0
      %v6464 = vpop.f32.mrf.mxu0
      %v6465 = vadd.f32 0.0, %v6464
      %v6466 = vpop.f32.mrf.mxu0
      %6467 = vmatprep.mubr.bf16.mxu0 0
      %6468 = vmatmul.mubr.bf16.gmra.mxu0 %v6316
      %v6469 = vpop.f32.mrf.mxu0
      %v6470 = vadd.f32 0.0, %v6469
      %v6471 = vpop.f32.mrf.mxu0
      %v6472 = vpop.f32.mrf.mxu0
      %v6473 = vadd.f32 0.0, %v6472
      %v6474 = vpop.f32.mrf.mxu0
      %6475 = vmatprep.mubr.bf16.mxu0 0
      %6476 = vmatmul.mubr.bf16.gmra.mxu0 %v6317
      %v6477 = vpop.f32.mrf.mxu0
      %v6478 = vadd.f32 0.0, %v6477
      %v6479 = vpop.f32.mrf.mxu0
      %v6480 = vpop.f32.mrf.mxu0
      %v6481 = vadd.f32 0.0, %v6480
      %v6482 = vpop.f32.mrf.mxu0
      %6483 = vmatprep.mubr.bf16.mxu0 0
      %6484 = vmatmul.mubr.bf16.gmra.mxu0 %v6318
      %v6485 = vpop.f32.mrf.mxu0
      %v6486 = vadd.f32 0.0, %v6485
      %v6487 = vpop.f32.mrf.mxu0
      %v6488 = vpop.f32.mrf.mxu0
      %v6489 = vadd.f32 0.0, %v6488
      %v6490 = vpop.f32.mrf.mxu0
      %6491 = vmatprep.mubr.bf16.mxu0 0
      %6492 = vmatmul.mubr.bf16.gmra.mxu0 %v6319
      %v6493 = vpop.f32.mrf.mxu0
      %v6494 = vadd.f32 0.0, %v6493
      %v6495 = vpop.f32.mrf.mxu0
      %v6496 = vpop.f32.mrf.mxu0
      %v6497 = vadd.f32 0.0, %v6496
      %v6498 = vpop.f32.mrf.mxu0
      %6499 = vmatprep.mubr.bf16.mxu0 0
      %6500 = vmatmul.mubr.bf16.gmra.mxu0 %v6320
      %v6501 = vpop.f32.mrf.mxu0
      %v6502 = vadd.f32 0.0, %v6501
      %v6503 = vpop.f32.mrf.mxu0
      %v6504 = vpop.f32.mrf.mxu0
      %v6505 = vadd.f32 0.0, %v6504
      %v6506 = vpop.f32.mrf.mxu0
      %6507 = vmatprep.mubr.bf16.mxu0 0
      %6508 = vmatmul.mubr.bf16.gmra.mxu0 %v6321
      %v6509 = vpop.f32.mrf.mxu0
      %v6510 = vadd.f32 0.0, %v6509
      %v6511 = vpop.f32.mrf.mxu0
      %v6512 = vpop.f32.mrf.mxu0
      %v6513 = vadd.f32 0.0, %v6512
      %v6514 = vpop.f32.mrf.mxu0
      %6515 = vmatprep.mubr.bf16.mxu0 0
      %6516 = vmatmul.mubr.bf16.gmra.mxu0 %v6322
      %v6517 = vpop.f32.mrf.mxu0
      %v6518 = vadd.f32 0.0, %v6517
      %v6519 = vpop.f32.mrf.mxu0
      %v6520 = vpop.f32.mrf.mxu0
      %v6521 = vadd.f32 0.0, %v6520
      %v6522 = vpop.f32.mrf.mxu0
      %6523 = vmatprep.mubr.bf16.mxu0 0
      %6524 = vmatmul.mubr.bf16.gmra.mxu0 %v6323
      %v6525 = vpop.f32.mrf.mxu0
      %v6526 = vadd.f32 0.0, %v6525
      %v6527 = vpop.f32.mrf.mxu0
      %v6528 = vpop.f32.mrf.mxu0
      %v6529 = vadd.f32 0.0, %v6528
      %v6530 = vpop.f32.mrf.mxu0
      %6531 = vmatprep.mubr.bf16.mxu0 0
      %6532 = vmatmul.mubr.bf16.gmra.mxu0 %v6324
      %v6533 = vpop.f32.mrf.mxu0
      %v6534 = vadd.f32 0.0, %v6533
      %v6535 = vpop.f32.mrf.mxu0
      %v6536 = vpop.f32.mrf.mxu0
      %v6537 = vadd.f32 0.0, %v6536
      %v6538 = vpop.f32.mrf.mxu0
      %6539 = vmatprep.mubr.bf16.mxu0 0
      %6540 = vmatmul.mubr.bf16.gmra.mxu0 %v6325
      %v6541 = vpop.f32.mrf.mxu0
      %v6542 = vadd.f32 0.0, %v6541
      %v6543 = vpop.f32.mrf.mxu0
      %v6544 = vpop.f32.mrf.mxu0
      %v6545 = vadd.f32 0.0, %v6544
      %v6546 = vpop.f32.mrf.mxu0
      %6547 = vmatprep.mubr.bf16.mxu0 0
      %6548 = vmatmul.mubr.bf16.gmra.mxu0 %v6326
      %v6549 = vpop.f32.mrf.mxu0
      %v6550 = vadd.f32 0.0, %v6549
      %v6551 = vpop.f32.mrf.mxu0
      %v6552 = vpop.f32.mrf.mxu0
      %v6553 = vadd.f32 0.0, %v6552
      %v6554 = vpop.f32.mrf.mxu0
      %6555 = vmatprep.mubr.bf16.mxu0 0
      %6556 = vmatmul.mubr.bf16.gmra.mxu0 %v6327
      %v6557 = vpop.f32.mrf.mxu0
      %v6558 = vadd.f32 0.0, %v6557
      %v6559 = vpop.f32.mrf.mxu0
      %v6560 = vpop.f32.mrf.mxu0
      %v6561 = vadd.f32 0.0, %v6560
      %v6562 = vpop.f32.mrf.mxu0
      %6563 = vmatprep.mubr.bf16.mxu0 0
      %6564 = vmatmul.mubr.bf16.gmra.mxu0 %v6328
      %v6565 = vpop.f32.mrf.mxu0
      %v6566 = vadd.f32 0.0, %v6565
      %v6567 = vpop.f32.mrf.mxu0
      %v6568 = vpop.f32.mrf.mxu0
      %v6569 = vadd.f32 0.0, %v6568
      %v6570 = vpop.f32.mrf.mxu0
      %6571 = vdwg.mxu0
      %v6572 = vadd.f32 %v6258, %v6430
      %v6573 = vadd.f32 %v6259, %v6433
      %v6574 = vadd.f32 %v6260, %v6438
      %v6575 = vadd.f32 %v6261, %v6441
      %v6576 = vadd.f32 %v6262, %v6446
      %v6577 = vadd.f32 %v6263, %v6449
      %v6578 = vadd.f32 %v6264, %v6454
      %v6579 = vadd.f32 %v6265, %v6457
      %v6580 = vadd.f32 %v6266, %v6462
      %v6581 = vadd.f32 %v6267, %v6465
      %v6582 = vadd.f32 %v6268, %v6470
      %v6583 = vadd.f32 %v6269, %v6473
      %v6584 = vadd.f32 %v6270, %v6478
      %v6585 = vadd.f32 %v6271, %v6481
      %v6586 = vadd.f32 %v6272, %v6486
      %v6587 = vadd.f32 %v6273, %v6489
      %v6588 = vadd.f32 %v6274, %v6494
      %v6589 = vadd.f32 %v6275, %v6497
      %v6590 = vadd.f32 %v6276, %v6502
      %v6591 = vadd.f32 %v6277, %v6505
      %v6592 = vadd.f32 %v6278, %v6510
      %v6593 = vadd.f32 %v6279, %v6513
      %v6594 = vadd.f32 %v6280, %v6518
      %v6595 = vadd.f32 %v6281, %v6521
      %v6596 = vadd.f32 %v6282, %v6526
      %v6597 = vadd.f32 %v6283, %v6529
      %v6598 = vadd.f32 %v6284, %v6534
      %v6599 = vadd.f32 %v6285, %v6537
      %v6600 = vadd.f32 %v6286, %v6542
      %v6601 = vadd.f32 %v6287, %v6545
      %v6602 = vadd.f32 %v6288, %v6550
      %v6603 = vadd.f32 %v6289, %v6553
      %v6604 = vadd.f32 %v6290, %v6558
      %v6605 = vadd.f32 %v6291, %v6561
      %v6606 = vadd.f32 %v6292, %v6566
      %v6607 = vadd.f32 %v6293, %v6569
      %v6608 = vld [vmem:[#allocation2 + $0x10] sm:$0xf]
      %v6609 = vld [vmem:[#allocation2 + $0x14] sm:$0xf]
      %v6610 = vld [vmem:[#allocation2 + $0x18] sm:$0xf]
      %v6611 = vld [vmem:[#allocation2 + $0x1c] sm:$0xf]
      %v6612 = vld [vmem:[#allocation2 + $0x20] sm:$0xf]
      %v6613 = vld [vmem:[#allocation2 + $0x24] sm:$0xf]
      %v6614 = vld [vmem:[#allocation2 + $0x28] sm:$0xf]
      %v6615 = vld [vmem:[#allocation2 + $0x2c] sm:$0xf]
      %v6616 = vld [vmem:[#allocation2 + $0x30] sm:$0xf]
      %v6617 = vld [vmem:[#allocation2 + $0x34] sm:$0xf]
      %v6618 = vld [vmem:[#allocation2 + $0x38] sm:$0xf]
      %v6619 = vld [vmem:[#allocation2 + $0x3c] sm:$0xf]
      %v6620 = vld [vmem:[#allocation2 + $0x40] sm:$0xf]
      %v6621 = vld [vmem:[#allocation2 + $0x44] sm:$0xf]
      %v6622 = vld [vmem:[#allocation2 + $0x48] sm:$0xf]
      %v6623 = vld [vmem:[#allocation2 + $0x4c] sm:$0xf]
      %v6624 = vld [vmem:[#allocation2 + $0x50] sm:$0xf]
      %v6625 = vld [vmem:[#allocation2 + $0x54] sm:$0xf]
      %v6626 = vld [vmem:[#allocation2 + $0x58] sm:$0xf]
      %v6627 = vld [vmem:[#allocation2 + $0x5c] sm:$0xf]
      %v6628 = vld [vmem:[#allocation2 + $0x60] sm:$0xf]
      %v6629 = vld [vmem:[#allocation2 + $0x64] sm:$0xf]
      %v6630 = vld [vmem:[#allocation2 + $0x68] sm:$0xf]
      %v6631 = vld [vmem:[#allocation2 + $0x6c] sm:$0xf]
      %v6632 = vld [vmem:[#allocation2 + $0x70] sm:$0xf]
      %v6633 = vld [vmem:[#allocation2 + $0x74] sm:$0xf]
      %v6634 = vld [vmem:[#allocation2 + $0x78] sm:$0xf]
      %v6635 = vld [vmem:[#allocation2 + $0x7c] sm:$0xf]
      %v6636 = vld [vmem:[#allocation2 + $0x80] sm:$0xf]
      %v6637 = vld [vmem:[#allocation2 + $0x84] sm:$0xf]
      %v6638 = vld [vmem:[#allocation2 + $0x88] sm:$0xf]
      %v6639 = vld [vmem:[#allocation2 + $0x8c] sm:$0xf]
      %v6640 = vld [vmem:[#allocation2 + $0x90] sm:$0xf]
      %v6641 = vld [vmem:[#allocation2 + $0x94] sm:$0xf]
      %v6642 = vld [vmem:[#allocation2 + $0x98] sm:$0xf]
      %v6643 = vld [vmem:[#allocation2 + $0x9c] sm:$0xf]
      %v6644 = vld [vmem:[#allocation2 + $0xa0] sm:$0x1]
      %s6645 = scalar_lea.vmem %s4, 320
      %v6646 = vld [vmem:[%s6645] sm:$0xf]
      %v6647 = vld [vmem:[%s6645 + $0x4] sm:$0xf]
      %v6648 = vld [vmem:[%s6645 + $0x8] sm:$0xf]
      %v6649 = vld [vmem:[%s6645 + $0xc] sm:$0xf]
      %v6650 = vld [vmem:[%s6645 + $0x10] sm:$0xf]
      %v6651 = vld [vmem:[%s6645 + $0x14] sm:$0xf]
      %v6652 = vld [vmem:[%s6645 + $0x18] sm:$0xf]
      %v6653 = vld [vmem:[%s6645 + $0x1c] sm:$0xf]
      %v6654 = vld [vmem:[%s6645 + $0x20] sm:$0xf]
      %v6655 = vld [vmem:[%s6645 + $0x24] sm:$0xf]
      %v6656 = vld [vmem:[%s6645 + $0x28] sm:$0xf]
      %v6657 = vld [vmem:[%s6645 + $0x2c] sm:$0xf]
      %v6658 = vld [vmem:[%s6645 + $0x30] sm:$0xf]
      %v6659 = vld [vmem:[%s6645 + $0x34] sm:$0xf]
      %v6660 = vld [vmem:[%s6645 + $0x38] sm:$0xf]
      %v6661 = vld [vmem:[%s6645 + $0x3c] sm:$0xf]
      %v6699 = vunpack.c.l.b16 %v6608
      %v6700 = vunpack.c.l.b16 %v6609
      %v6701 = vunpack.c.l.b16 %v6610
      %v6702 = vunpack.c.l.b16 %v6611
      %v6703 = vunpack.c.l.b16 %v6612
      %v6704 = vunpack.c.l.b16 %v6613
      %v6705 = vunpack.c.l.b16 %v6614
      %v6706 = vunpack.c.l.b16 %v6615
      %v6707 = vunpack.c.l.b16 %v6616
      %v6708 = vunpack.c.l.b16 %v6617
      %v6709 = vunpack.c.l.b16 %v6618
      %v6710 = vunpack.c.l.b16 %v6619
      %v6711 = vunpack.c.l.b16 %v6620
      %v6712 = vunpack.c.l.b16 %v6621
      %v6713 = vunpack.c.l.b16 %v6622
      %v6714 = vunpack.c.l.b16 %v6623
      %v6715 = vunpack.c.l.b16 %v6624
      %v6716 = vunpack.c.l.b16 %v6625
      %v6717 = vunpack.c.l.b16 %v6626
      %v6718 = vunpack.c.l.b16 %v6627
      %v6719 = vunpack.c.l.b16 %v6628
      %v6720 = vunpack.c.l.b16 %v6629
      %v6721 = vunpack.c.l.b16 %v6630
      %v6722 = vunpack.c.l.b16 %v6631
      %v6723 = vunpack.c.l.b16 %v6632
      %v6724 = vunpack.c.l.b16 %v6633
      %v6725 = vunpack.c.l.b16 %v6634
      %v6726 = vunpack.c.l.b16 %v6635
      %v6727 = vunpack.c.l.b16 %v6636
      %v6728 = vunpack.c.l.b16 %v6637
      %v6729 = vunpack.c.l.b16 %v6638
      %v6730 = vunpack.c.l.b16 %v6639
      %v6731 = vunpack.c.l.b16 %v6640
      %v6732 = vunpack.c.l.b16 %v6641
      %v6733 = vunpack.c.l.b16 %v6642
      %v6734 = vunpack.c.l.b16 %v6643
      %v6735 = vunpack.c.l.b16 %v6644
      %v6736 = vpack.c.b16 %v6700, %v6699
      %v6737 = vpack.c.b16 %v6702, %v6701
      %v6738 = vpack.c.b16 %v6704, %v6703
      %v6739 = vpack.c.b16 %v6706, %v6705
      %v6740 = vpack.c.b16 %v6708, %v6707
      %v6741 = vpack.c.b16 %v6710, %v6709
      %v6742 = vpack.c.b16 %v6712, %v6711
      %v6743 = vpack.c.b16 %v6714, %v6713
      %v6744 = vpack.c.b16 %v6716, %v6715
      %v6745 = vpack.c.b16 %v6718, %v6717
      %v6746 = vpack.c.b16 %v6720, %v6719
      %v6747 = vpack.c.b16 %v6722, %v6721
      %v6748 = vpack.c.b16 %v6724, %v6723
      %v6749 = vpack.c.b16 %v6726, %v6725
      %v6750 = vpack.c.b16 %v6728, %v6727
      %v6751 = vpack.c.b16 %v6730, %v6729
      %v6752 = vpack.c.b16 %v6732, %v6731
      %v6753 = vpack.c.b16 %v6734, %v6733
      %v6754 = vpack.c.b16 %v6735, %v6735
      %v6756 = vshrl.u32 %v6736, 16
      %v6758 = vshll.u32 %v6736, 16
      %v6760 = vrot.slane %v6758, 1
      %v6761 = vor.u32 %v6756, %v6760
      %v6763 = vshll.u32 %v6737, 16
      %v6765 = vrot.slane %v6763, 1
      %v6766 = vsel %vm460, %v6761, %v6765
      %v6767 = vshrl.u32 %v6737, 16
      %v6769 = vor.u32 %v6767, %v6765
      %v6771 = vshll.u32 %v6738, 16
      %v6773 = vrot.slane %v6771, 1
      %v6774 = vsel %vm460, %v6769, %v6773
      %v6775 = vshrl.u32 %v6738, 16
      %v6777 = vor.u32 %v6775, %v6773
      %v6779 = vshll.u32 %v6739, 16
      %v6781 = vrot.slane %v6779, 1
      %v6782 = vsel %vm460, %v6777, %v6781
      %v6783 = vshrl.u32 %v6739, 16
      %v6785 = vor.u32 %v6783, %v6781
      %v6787 = vshll.u32 %v6740, 16
      %v6789 = vrot.slane %v6787, 1
      %v6790 = vsel %vm460, %v6785, %v6789
      %v6791 = vshrl.u32 %v6740, 16
      %v6793 = vor.u32 %v6791, %v6789
      %v6795 = vshll.u32 %v6741, 16
      %v6797 = vrot.slane %v6795, 1
      %v6798 = vsel %vm460, %v6793, %v6797
      %v6799 = vshrl.u32 %v6741, 16
      %v6801 = vor.u32 %v6799, %v6797
      %v6803 = vshll.u32 %v6742, 16
      %v6805 = vrot.slane %v6803, 1
      %v6806 = vsel %vm460, %v6801, %v6805
      %v6807 = vshrl.u32 %v6742, 16
      %v6809 = vor.u32 %v6807, %v6805
      %v6811 = vshll.u32 %v6743, 16
      %v6813 = vrot.slane %v6811, 1
      %v6814 = vsel %vm460, %v6809, %v6813
      %v6815 = vshrl.u32 %v6743, 16
      %v6817 = vor.u32 %v6815, %v6813
      %v6819 = vshll.u32 %v6744, 16
      %v6821 = vrot.slane %v6819, 1
      %v6822 = vsel %vm460, %v6817, %v6821
      %v6823 = vshrl.u32 %v6744, 16
      %v6825 = vor.u32 %v6823, %v6821
      %v6827 = vshll.u32 %v6745, 16
      %v6829 = vrot.slane %v6827, 1
      %v6830 = vsel %vm460, %v6825, %v6829
      %v6831 = vshrl.u32 %v6745, 16
      %v6833 = vor.u32 %v6831, %v6829
      %v6835 = vshll.u32 %v6746, 16
      %v6837 = vrot.slane %v6835, 1
      %v6838 = vsel %vm460, %v6833, %v6837
      %v6839 = vshrl.u32 %v6746, 16
      %v6841 = vor.u32 %v6839, %v6837
      %v6843 = vshll.u32 %v6747, 16
      %v6845 = vrot.slane %v6843, 1
      %v6846 = vsel %vm460, %v6841, %v6845
      %v6847 = vshrl.u32 %v6747, 16
      %v6849 = vor.u32 %v6847, %v6845
      %v6851 = vshll.u32 %v6748, 16
      %v6853 = vrot.slane %v6851, 1
      %v6854 = vsel %vm460, %v6849, %v6853
      %v6855 = vshrl.u32 %v6748, 16
      %v6857 = vor.u32 %v6855, %v6853
      %v6859 = vshll.u32 %v6749, 16
      %v6861 = vrot.slane %v6859, 1
      %v6862 = vsel %vm460, %v6857, %v6861
      %v6863 = vshrl.u32 %v6749, 16
      %v6865 = vor.u32 %v6863, %v6861
      %v6867 = vshll.u32 %v6750, 16
      %v6869 = vrot.slane %v6867, 1
      %v6870 = vsel %vm460, %v6865, %v6869
      %v6871 = vshrl.u32 %v6750, 16
      %v6873 = vor.u32 %v6871, %v6869
      %v6875 = vshll.u32 %v6751, 16
      %v6877 = vrot.slane %v6875, 1
      %v6878 = vsel %vm460, %v6873, %v6877
      %v6879 = vshrl.u32 %v6751, 16
      %v6881 = vor.u32 %v6879, %v6877
      %v6883 = vshll.u32 %v6752, 16
      %v6885 = vrot.slane %v6883, 1
      %v6886 = vsel %vm460, %v6881, %v6885
      %v6887 = vshrl.u32 %v6752, 16
      %v6889 = vor.u32 %v6887, %v6885
      %v6891 = vshll.u32 %v6753, 16
      %v6893 = vrot.slane %v6891, 1
      %v6894 = vsel %vm460, %v6889, %v6893
      %v6895 = vshrl.u32 %v6753, 16
      %v6897 = vor.u32 %v6895, %v6893
      %v6899 = vshll.u32 %v6754, 16
      %v6901 = vrot.slane %v6899, 1
      %v6902 = vsel %vm460, %v6897, %v6901
      %v6937 = vunpack.c.l.b16 %v6646
      %v6938 = vunpack.c.l.b16 %v6647
      %v6939 = vunpack.c.l.b16 %v6648
      %v6940 = vunpack.c.l.b16 %v6649
      %v6941 = vunpack.c.l.b16 %v6650
      %v6942 = vunpack.c.l.b16 %v6651
      %v6943 = vunpack.c.l.b16 %v6652
      %v6944 = vunpack.c.l.b16 %v6653
      %v6945 = vunpack.c.l.b16 %v6654
      %v6946 = vunpack.c.l.b16 %v6655
      %v6947 = vunpack.c.l.b16 %v6656
      %v6948 = vunpack.c.l.b16 %v6657
      %v6949 = vunpack.c.l.b16 %v6658
      %v6950 = vunpack.c.l.b16 %v6659
      %v6951 = vunpack.c.l.b16 %v6660
      %v6952 = vunpack.c.l.b16 %v6661
      %v6953 = vpack.c.b16 %v6938, %v6937
      %v6954 = vpack.c.b16 %v6940, %v6939
      %v6955 = vpack.c.b16 %v6942, %v6941
      %v6956 = vpack.c.b16 %v6944, %v6943
      %v6957 = vpack.c.b16 %v6946, %v6945
      %v6958 = vpack.c.b16 %v6948, %v6947
      %v6959 = vpack.c.b16 %v6950, %v6949
      %v6960 = vpack.c.b16 %v6952, %v6951
      %6969 = vmatprep.subr.bf16.mxu0 0
      %6970 = vmatpush1.bf16.msra.mxu0 %v6960
      %6971 = vmatprep.subr.bf16.mxu0 0
      %6972 = vmatpush1.bf16.msra.mxu0 %v6959
      %6973 = vmatprep.subr.bf16.mxu0 0
      %6974 = vmatpush1.bf16.msra.mxu0 %v6958
      %6975 = vmatprep.subr.bf16.mxu0 0
      %6976 = vmatpush1.bf16.msra.mxu0 %v6957
      %6977 = vmatprep.subr.bf16.mxu0 0
      %6978 = vmatpush1.bf16.msra.mxu0 %v6956
      %6979 = vmatprep.subr.bf16.mxu0 0
      %6980 = vmatpush1.bf16.msra.mxu0 %v6955
      %6981 = vmatprep.subr.bf16.mxu0 0
      %6982 = vmatpush1.bf16.msra.mxu0 %v6954
      %6983 = vmatprep.subr.bf16.mxu0 0
      %6984 = vmatpush1.bf16.msra.mxu0 %v6953
      %6985 = vmatprep.subr.bf16.mxu0 0
      %6986 = vmatpush2.bf16.msra.mxu0 0
      %6987 = vmatprep.subr.bf16.mxu0 0
      %6988 = vmatpush2.bf16.msra.mxu0 0
      %6989 = vmatprep.subr.bf16.mxu0 0
      %6990 = vmatpush2.bf16.msra.mxu0 0
      %6991 = vmatprep.subr.bf16.mxu0 0
      %6992 = vmatpush2.bf16.msra.mxu0 0
      %6993 = vmatprep.subr.bf16.mxu0 0
      %6994 = vmatpush2.bf16.msra.mxu0 0
      %6995 = vmatprep.subr.bf16.mxu0 0
      %6996 = vmatpush2.bf16.msra.mxu0 0
      %6997 = vmatprep.subr.bf16.mxu0 0
      %6998 = vmatpush2.bf16.msra.mxu0 0
      %6999 = vmatprep.subr.bf16.mxu0 0
      %7000 = vmatpush2.bf16.msra.mxu0 0
      %7001 = vmatprep.mubr.bf16.mxu0 0
      %7002 = vmatmul.mubr.bf16.gmra.mxu0 %v6766
      %v7003 = vpop.f32.mrf.mxu0
      %v7004 = vadd.f32 0.0, %v7003
      %v7005 = vpop.f32.mrf.mxu0
      %v7006 = vpop.f32.mrf.mxu0
      %v7007 = vadd.f32 0.0, %v7006
      %v7008 = vpop.f32.mrf.mxu0
      %7009 = vmatprep.mubr.bf16.mxu0 0
      %7010 = vmatmul.mubr.bf16.gmra.mxu0 %v6774
      %v7011 = vpop.f32.mrf.mxu0
      %v7012 = vadd.f32 0.0, %v7011
      %v7013 = vpop.f32.mrf.mxu0
      %v7014 = vpop.f32.mrf.mxu0
      %v7015 = vadd.f32 0.0, %v7014
      %v7016 = vpop.f32.mrf.mxu0
      %7017 = vmatprep.mubr.bf16.mxu0 0
      %7018 = vmatmul.mubr.bf16.gmra.mxu0 %v6782
      %v7019 = vpop.f32.mrf.mxu0
      %v7020 = vadd.f32 0.0, %v7019
      %v7021 = vpop.f32.mrf.mxu0
      %v7022 = vpop.f32.mrf.mxu0
      %v7023 = vadd.f32 0.0, %v7022
      %v7024 = vpop.f32.mrf.mxu0
      %7025 = vmatprep.mubr.bf16.mxu0 0
      %7026 = vmatmul.mubr.bf16.gmra.mxu0 %v6790
      %v7027 = vpop.f32.mrf.mxu0
      %v7028 = vadd.f32 0.0, %v7027
      %v7029 = vpop.f32.mrf.mxu0
      %v7030 = vpop.f32.mrf.mxu0
      %v7031 = vadd.f32 0.0, %v7030
      %v7032 = vpop.f32.mrf.mxu0
      %7033 = vmatprep.mubr.bf16.mxu0 0
      %7034 = vmatmul.mubr.bf16.gmra.mxu0 %v6798
      %v7035 = vpop.f32.mrf.mxu0
      %v7036 = vadd.f32 0.0, %v7035
      %v7037 = vpop.f32.mrf.mxu0
      %v7038 = vpop.f32.mrf.mxu0
      %v7039 = vadd.f32 0.0, %v7038
      %v7040 = vpop.f32.mrf.mxu0
      %7041 = vmatprep.mubr.bf16.mxu0 0
      %7042 = vmatmul.mubr.bf16.gmra.mxu0 %v6806
      %v7043 = vpop.f32.mrf.mxu0
      %v7044 = vadd.f32 0.0, %v7043
      %v7045 = vpop.f32.mrf.mxu0
      %v7046 = vpop.f32.mrf.mxu0
      %v7047 = vadd.f32 0.0, %v7046
      %v7048 = vpop.f32.mrf.mxu0
      %7049 = vmatprep.mubr.bf16.mxu0 0
      %7050 = vmatmul.mubr.bf16.gmra.mxu0 %v6814
      %v7051 = vpop.f32.mrf.mxu0
      %v7052 = vadd.f32 0.0, %v7051
      %v7053 = vpop.f32.mrf.mxu0
      %v7054 = vpop.f32.mrf.mxu0
      %v7055 = vadd.f32 0.0, %v7054
      %v7056 = vpop.f32.mrf.mxu0
      %7057 = vmatprep.mubr.bf16.mxu0 0
      %7058 = vmatmul.mubr.bf16.gmra.mxu0 %v6822
      %v7059 = vpop.f32.mrf.mxu0
      %v7060 = vadd.f32 0.0, %v7059
      %v7061 = vpop.f32.mrf.mxu0
      %v7062 = vpop.f32.mrf.mxu0
      %v7063 = vadd.f32 0.0, %v7062
      %v7064 = vpop.f32.mrf.mxu0
      %7065 = vmatprep.mubr.bf16.mxu0 0
      %7066 = vmatmul.mubr.bf16.gmra.mxu0 %v6830
      %v7067 = vpop.f32.mrf.mxu0
      %v7068 = vadd.f32 0.0, %v7067
      %v7069 = vpop.f32.mrf.mxu0
      %v7070 = vpop.f32.mrf.mxu0
      %v7071 = vadd.f32 0.0, %v7070
      %v7072 = vpop.f32.mrf.mxu0
      %7073 = vmatprep.mubr.bf16.mxu0 0
      %7074 = vmatmul.mubr.bf16.gmra.mxu0 %v6838
      %v7075 = vpop.f32.mrf.mxu0
      %v7076 = vadd.f32 0.0, %v7075
      %v7077 = vpop.f32.mrf.mxu0
      %v7078 = vpop.f32.mrf.mxu0
      %v7079 = vadd.f32 0.0, %v7078
      %v7080 = vpop.f32.mrf.mxu0
      %7081 = vmatprep.mubr.bf16.mxu0 0
      %7082 = vmatmul.mubr.bf16.gmra.mxu0 %v6846
      %v7083 = vpop.f32.mrf.mxu0
      %v7084 = vadd.f32 0.0, %v7083
      %v7085 = vpop.f32.mrf.mxu0
      %v7086 = vpop.f32.mrf.mxu0
      %v7087 = vadd.f32 0.0, %v7086
      %v7088 = vpop.f32.mrf.mxu0
      %7089 = vmatprep.mubr.bf16.mxu0 0
      %7090 = vmatmul.mubr.bf16.gmra.mxu0 %v6854
      %v7091 = vpop.f32.mrf.mxu0
      %v7092 = vadd.f32 0.0, %v7091
      %v7093 = vpop.f32.mrf.mxu0
      %v7094 = vpop.f32.mrf.mxu0
      %v7095 = vadd.f32 0.0, %v7094
      %v7096 = vpop.f32.mrf.mxu0
      %7097 = vmatprep.mubr.bf16.mxu0 0
      %7098 = vmatmul.mubr.bf16.gmra.mxu0 %v6862
      %v7099 = vpop.f32.mrf.mxu0
      %v7100 = vadd.f32 0.0, %v7099
      %v7101 = vpop.f32.mrf.mxu0
      %v7102 = vpop.f32.mrf.mxu0
      %v7103 = vadd.f32 0.0, %v7102
      %v7104 = vpop.f32.mrf.mxu0
      %7105 = vmatprep.mubr.bf16.mxu0 0
      %7106 = vmatmul.mubr.bf16.gmra.mxu0 %v6870
      %v7107 = vpop.f32.mrf.mxu0
      %v7108 = vadd.f32 0.0, %v7107
      %v7109 = vpop.f32.mrf.mxu0
      %v7110 = vpop.f32.mrf.mxu0
      %v7111 = vadd.f32 0.0, %v7110
      %v7112 = vpop.f32.mrf.mxu0
      %7113 = vmatprep.mubr.bf16.mxu0 0
      %7114 = vmatmul.mubr.bf16.gmra.mxu0 %v6878
      %v7115 = vpop.f32.mrf.mxu0
      %v7116 = vadd.f32 0.0, %v7115
      %v7117 = vpop.f32.mrf.mxu0
      %v7118 = vpop.f32.mrf.mxu0
      %v7119 = vadd.f32 0.0, %v7118
      %v7120 = vpop.f32.mrf.mxu0
      %7121 = vmatprep.mubr.bf16.mxu0 0
      %7122 = vmatmul.mubr.bf16.gmra.mxu0 %v6886
      %v7123 = vpop.f32.mrf.mxu0
      %v7124 = vadd.f32 0.0, %v7123
      %v7125 = vpop.f32.mrf.mxu0
      %v7126 = vpop.f32.mrf.mxu0
      %v7127 = vadd.f32 0.0, %v7126
      %v7128 = vpop.f32.mrf.mxu0
      %7129 = vmatprep.mubr.bf16.mxu0 0
      %7130 = vmatmul.mubr.bf16.gmra.mxu0 %v6894
      %v7131 = vpop.f32.mrf.mxu0
      %v7132 = vadd.f32 0.0, %v7131
      %v7133 = vpop.f32.mrf.mxu0
      %v7134 = vpop.f32.mrf.mxu0
      %v7135 = vadd.f32 0.0, %v7134
      %v7136 = vpop.f32.mrf.mxu0
      %7137 = vmatprep.mubr.bf16.mxu0 0
      %7138 = vmatmul.mubr.bf16.gmra.mxu0 %v6902
      %v7139 = vpop.f32.mrf.mxu0
      %v7140 = vadd.f32 0.0, %v7139
      %v7141 = vpop.f32.mrf.mxu0
      %v7142 = vpop.f32.mrf.mxu0
      %v7143 = vadd.f32 0.0, %v7142
      %v7144 = vpop.f32.mrf.mxu0
      %7145 = vdwg.mxu0
      %v7146 = vadd.f32 %v6572, %v7004
      %v7147 = vadd.f32 %v6573, %v7007
      %v7148 = vadd.f32 %v6574, %v7012
      %v7149 = vadd.f32 %v6575, %v7015
      %v7150 = vadd.f32 %v6576, %v7020
      %v7151 = vadd.f32 %v6577, %v7023
      %v7152 = vadd.f32 %v6578, %v7028
      %v7153 = vadd.f32 %v6579, %v7031
      %v7154 = vadd.f32 %v6580, %v7036
      %v7155 = vadd.f32 %v6581, %v7039
      %v7156 = vadd.f32 %v6582, %v7044
      %v7157 = vadd.f32 %v6583, %v7047
      %v7158 = vadd.f32 %v6584, %v7052
      %v7159 = vadd.f32 %v6585, %v7055
      %v7160 = vadd.f32 %v6586, %v7060
      %v7161 = vadd.f32 %v6587, %v7063
      %v7162 = vadd.f32 %v6588, %v7068
      %v7163 = vadd.f32 %v6589, %v7071
      %v7164 = vadd.f32 %v6590, %v7076
      %v7165 = vadd.f32 %v6591, %v7079
      %v7166 = vadd.f32 %v6592, %v7084
      %v7167 = vadd.f32 %v6593, %v7087
      %v7168 = vadd.f32 %v6594, %v7092
      %v7169 = vadd.f32 %v6595, %v7095
      %v7170 = vadd.f32 %v6596, %v7100
      %v7171 = vadd.f32 %v6597, %v7103
      %v7172 = vadd.f32 %v6598, %v7108
      %v7173 = vadd.f32 %v6599, %v7111
      %v7174 = vadd.f32 %v6600, %v7116
      %v7175 = vadd.f32 %v6601, %v7119
      %v7176 = vadd.f32 %v6602, %v7124
      %v7177 = vadd.f32 %v6603, %v7127
      %v7178 = vadd.f32 %v6604, %v7132
      %v7179 = vadd.f32 %v6605, %v7135
      %v7180 = vadd.f32 %v6606, %v7140
      %v7181 = vadd.f32 %v6607, %v7143
      %v7182 = vld [vmem:[#allocation2 + $0x18] sm:$0xf]
      %v7183 = vld [vmem:[#allocation2 + $0x1c] sm:$0xf]
      %v7184 = vld [vmem:[#allocation2 + $0x20] sm:$0xf]
      %v7185 = vld [vmem:[#allocation2 + $0x24] sm:$0xf]
      %v7186 = vld [vmem:[#allocation2 + $0x28] sm:$0xf]
      %v7187 = vld [vmem:[#allocation2 + $0x2c] sm:$0xf]
      %v7188 = vld [vmem:[#allocation2 + $0x30] sm:$0xf]
      %v7189 = vld [vmem:[#allocation2 + $0x34] sm:$0xf]
      %v7190 = vld [vmem:[#allocation2 + $0x38] sm:$0xf]
      %v7191 = vld [vmem:[#allocation2 + $0x3c] sm:$0xf]
      %v7192 = vld [vmem:[#allocation2 + $0x40] sm:$0xf]
      %v7193 = vld [vmem:[#allocation2 + $0x44] sm:$0xf]
      %v7194 = vld [vmem:[#allocation2 + $0x48] sm:$0xf]
      %v7195 = vld [vmem:[#allocation2 + $0x4c] sm:$0xf]
      %v7196 = vld [vmem:[#allocation2 + $0x50] sm:$0xf]
      %v7197 = vld [vmem:[#allocation2 + $0x54] sm:$0xf]
      %v7198 = vld [vmem:[#allocation2 + $0x58] sm:$0xf]
      %v7199 = vld [vmem:[#allocation2 + $0x5c] sm:$0xf]
      %v7200 = vld [vmem:[#allocation2 + $0x60] sm:$0xf]
      %v7201 = vld [vmem:[#allocation2 + $0x64] sm:$0xf]
      %v7202 = vld [vmem:[#allocation2 + $0x68] sm:$0xf]
      %v7203 = vld [vmem:[#allocation2 + $0x6c] sm:$0xf]
      %v7204 = vld [vmem:[#allocation2 + $0x70] sm:$0xf]
      %v7205 = vld [vmem:[#allocation2 + $0x74] sm:$0xf]
      %v7206 = vld [vmem:[#allocation2 + $0x78] sm:$0xf]
      %v7207 = vld [vmem:[#allocation2 + $0x7c] sm:$0xf]
      %v7208 = vld [vmem:[#allocation2 + $0x80] sm:$0xf]
      %v7209 = vld [vmem:[#allocation2 + $0x84] sm:$0xf]
      %v7210 = vld [vmem:[#allocation2 + $0x88] sm:$0xf]
      %v7211 = vld [vmem:[#allocation2 + $0x8c] sm:$0xf]
      %v7212 = vld [vmem:[#allocation2 + $0x90] sm:$0xf]
      %v7213 = vld [vmem:[#allocation2 + $0x94] sm:$0xf]
      %v7214 = vld [vmem:[#allocation2 + $0x98] sm:$0xf]
      %v7215 = vld [vmem:[#allocation2 + $0x9c] sm:$0xf]
      %v7216 = vld [vmem:[#allocation2 + $0xa0] sm:$0xf]
      %v7217 = vld [vmem:[#allocation2 + $0xa4] sm:$0xf]
      %v7218 = vld [vmem:[#allocation2 + $0xa8] sm:$0x1]
      %s7219 = scalar_lea.vmem %s4, 384
      %v7220 = vld [vmem:[%s7219] sm:$0xf]
      %v7221 = vld [vmem:[%s7219 + $0x4] sm:$0xf]
      %v7222 = vld [vmem:[%s7219 + $0x8] sm:$0xf]
      %v7223 = vld [vmem:[%s7219 + $0xc] sm:$0xf]
      %v7224 = vld [vmem:[%s7219 + $0x10] sm:$0xf]
      %v7225 = vld [vmem:[%s7219 + $0x14] sm:$0xf]
      %v7226 = vld [vmem:[%s7219 + $0x18] sm:$0xf]
      %v7227 = vld [vmem:[%s7219 + $0x1c] sm:$0xf]
      %v7228 = vld [vmem:[%s7219 + $0x20] sm:$0xf]
      %v7229 = vld [vmem:[%s7219 + $0x24] sm:$0xf]
      %v7230 = vld [vmem:[%s7219 + $0x28] sm:$0xf]
      %v7231 = vld [vmem:[%s7219 + $0x2c] sm:$0xf]
      %v7232 = vld [vmem:[%s7219 + $0x30] sm:$0xf]
      %v7233 = vld [vmem:[%s7219 + $0x34] sm:$0xf]
      %v7234 = vld [vmem:[%s7219 + $0x38] sm:$0xf]
      %v7235 = vld [vmem:[%s7219 + $0x3c] sm:$0xf]
      %v7273 = vunpack.c.l.b16 %v7182
      %v7274 = vunpack.c.l.b16 %v7183
      %v7275 = vunpack.c.l.b16 %v7184
      %v7276 = vunpack.c.l.b16 %v7185
      %v7277 = vunpack.c.l.b16 %v7186
      %v7278 = vunpack.c.l.b16 %v7187
      %v7279 = vunpack.c.l.b16 %v7188
      %v7280 = vunpack.c.l.b16 %v7189
      %v7281 = vunpack.c.l.b16 %v7190
      %v7282 = vunpack.c.l.b16 %v7191
      %v7283 = vunpack.c.l.b16 %v7192
      %v7284 = vunpack.c.l.b16 %v7193
      %v7285 = vunpack.c.l.b16 %v7194
      %v7286 = vunpack.c.l.b16 %v7195
      %v7287 = vunpack.c.l.b16 %v7196
      %v7288 = vunpack.c.l.b16 %v7197
      %v7289 = vunpack.c.l.b16 %v7198
      %v7290 = vunpack.c.l.b16 %v7199
      %v7291 = vunpack.c.l.b16 %v7200
      %v7292 = vunpack.c.l.b16 %v7201
      %v7293 = vunpack.c.l.b16 %v7202
      %v7294 = vunpack.c.l.b16 %v7203
      %v7295 = vunpack.c.l.b16 %v7204
      %v7296 = vunpack.c.l.b16 %v7205
      %v7297 = vunpack.c.l.b16 %v7206
      %v7298 = vunpack.c.l.b16 %v7207
      %v7299 = vunpack.c.l.b16 %v7208
      %v7300 = vunpack.c.l.b16 %v7209
      %v7301 = vunpack.c.l.b16 %v7210
      %v7302 = vunpack.c.l.b16 %v7211
      %v7303 = vunpack.c.l.b16 %v7212
      %v7304 = vunpack.c.l.b16 %v7213
      %v7305 = vunpack.c.l.b16 %v7214
      %v7306 = vunpack.c.l.b16 %v7215
      %v7307 = vunpack.c.l.b16 %v7216
      %v7308 = vunpack.c.l.b16 %v7217
      %v7309 = vunpack.c.l.b16 %v7218
      %v7310 = vpack.c.b16 %v7274, %v7273
      %v7311 = vpack.c.b16 %v7276, %v7275
      %v7312 = vpack.c.b16 %v7278, %v7277
      %v7313 = vpack.c.b16 %v7280, %v7279
      %v7314 = vpack.c.b16 %v7282, %v7281
      %v7315 = vpack.c.b16 %v7284, %v7283
      %v7316 = vpack.c.b16 %v7286, %v7285
      %v7317 = vpack.c.b16 %v7288, %v7287
      %v7318 = vpack.c.b16 %v7290, %v7289
      %v7319 = vpack.c.b16 %v7292, %v7291
      %v7320 = vpack.c.b16 %v7294, %v7293
      %v7321 = vpack.c.b16 %v7296, %v7295
      %v7322 = vpack.c.b16 %v7298, %v7297
      %v7323 = vpack.c.b16 %v7300, %v7299
      %v7324 = vpack.c.b16 %v7302, %v7301
      %v7325 = vpack.c.b16 %v7304, %v7303
      %v7326 = vpack.c.b16 %v7306, %v7305
      %v7327 = vpack.c.b16 %v7308, %v7307
      %v7328 = vpack.c.b16 %v7309, %v7309
      %v7330 = vshrl.u32 %v7310, 16
      %v7332 = vshll.u32 %v7310, 16
      %v7334 = vrot.slane %v7332, 1
      %v7335 = vor.u32 %v7330, %v7334
      %v7337 = vshll.u32 %v7311, 16
      %v7339 = vrot.slane %v7337, 1
      %v7340 = vsel %vm460, %v7335, %v7339
      %v7341 = vshrl.u32 %v7311, 16
      %v7343 = vor.u32 %v7341, %v7339
      %v7345 = vshll.u32 %v7312, 16
      %v7347 = vrot.slane %v7345, 1
      %v7348 = vsel %vm460, %v7343, %v7347
      %v7349 = vshrl.u32 %v7312, 16
      %v7351 = vor.u32 %v7349, %v7347
      %v7353 = vshll.u32 %v7313, 16
      %v7355 = vrot.slane %v7353, 1
      %v7356 = vsel %vm460, %v7351, %v7355
      %v7357 = vshrl.u32 %v7313, 16
      %v7359 = vor.u32 %v7357, %v7355
      %v7361 = vshll.u32 %v7314, 16
      %v7363 = vrot.slane %v7361, 1
      %v7364 = vsel %vm460, %v7359, %v7363
      %v7365 = vshrl.u32 %v7314, 16
      %v7367 = vor.u32 %v7365, %v7363
      %v7369 = vshll.u32 %v7315, 16
      %v7371 = vrot.slane %v7369, 1
      %v7372 = vsel %vm460, %v7367, %v7371
      %v7373 = vshrl.u32 %v7315, 16
      %v7375 = vor.u32 %v7373, %v7371
      %v7377 = vshll.u32 %v7316, 16
      %v7379 = vrot.slane %v7377, 1
      %v7380 = vsel %vm460, %v7375, %v7379
      %v7381 = vshrl.u32 %v7316, 16
      %v7383 = vor.u32 %v7381, %v7379
      %v7385 = vshll.u32 %v7317, 16
      %v7387 = vrot.slane %v7385, 1
      %v7388 = vsel %vm460, %v7383, %v7387
      %v7389 = vshrl.u32 %v7317, 16
      %v7391 = vor.u32 %v7389, %v7387
      %v7393 = vshll.u32 %v7318, 16
      %v7395 = vrot.slane %v7393, 1
      %v7396 = vsel %vm460, %v7391, %v7395
      %v7397 = vshrl.u32 %v7318, 16
      %v7399 = vor.u32 %v7397, %v7395
      %v7401 = vshll.u32 %v7319, 16
      %v7403 = vrot.slane %v7401, 1
      %v7404 = vsel %vm460, %v7399, %v7403
      %v7405 = vshrl.u32 %v7319, 16
      %v7407 = vor.u32 %v7405, %v7403
      %v7409 = vshll.u32 %v7320, 16
      %v7411 = vrot.slane %v7409, 1
      %v7412 = vsel %vm460, %v7407, %v7411
      %v7413 = vshrl.u32 %v7320, 16
      %v7415 = vor.u32 %v7413, %v7411
      %v7417 = vshll.u32 %v7321, 16
      %v7419 = vrot.slane %v7417, 1
      %v7420 = vsel %vm460, %v7415, %v7419
      %v7421 = vshrl.u32 %v7321, 16
      %v7423 = vor.u32 %v7421, %v7419
      %v7425 = vshll.u32 %v7322, 16
      %v7427 = vrot.slane %v7425, 1
      %v7428 = vsel %vm460, %v7423, %v7427
      %v7429 = vshrl.u32 %v7322, 16
      %v7431 = vor.u32 %v7429, %v7427
      %v7433 = vshll.u32 %v7323, 16
      %v7435 = vrot.slane %v7433, 1
      %v7436 = vsel %vm460, %v7431, %v7435
      %v7437 = vshrl.u32 %v7323, 16
      %v7439 = vor.u32 %v7437, %v7435
      %v7441 = vshll.u32 %v7324, 16
      %v7443 = vrot.slane %v7441, 1
      %v7444 = vsel %vm460, %v7439, %v7443
      %v7445 = vshrl.u32 %v7324, 16
      %v7447 = vor.u32 %v7445, %v7443
      %v7449 = vshll.u32 %v7325, 16
      %v7451 = vrot.slane %v7449, 1
      %v7452 = vsel %vm460, %v7447, %v7451
      %v7453 = vshrl.u32 %v7325, 16
      %v7455 = vor.u32 %v7453, %v7451
      %v7457 = vshll.u32 %v7326, 16
      %v7459 = vrot.slane %v7457, 1
      %v7460 = vsel %vm460, %v7455, %v7459
      %v7461 = vshrl.u32 %v7326, 16
      %v7463 = vor.u32 %v7461, %v7459
      %v7465 = vshll.u32 %v7327, 16
      %v7467 = vrot.slane %v7465, 1
      %v7468 = vsel %vm460, %v7463, %v7467
      %v7469 = vshrl.u32 %v7327, 16
      %v7471 = vor.u32 %v7469, %v7467
      %v7473 = vshll.u32 %v7328, 16
      %v7475 = vrot.slane %v7473, 1
      %v7476 = vsel %vm460, %v7471, %v7475
      %v7511 = vunpack.c.l.b16 %v7220
      %v7512 = vunpack.c.l.b16 %v7221
      %v7513 = vunpack.c.l.b16 %v7222
      %v7514 = vunpack.c.l.b16 %v7223
      %v7515 = vunpack.c.l.b16 %v7224
      %v7516 = vunpack.c.l.b16 %v7225
      %v7517 = vunpack.c.l.b16 %v7226
      %v7518 = vunpack.c.l.b16 %v7227
      %v7519 = vunpack.c.l.b16 %v7228
      %v7520 = vunpack.c.l.b16 %v7229
      %v7521 = vunpack.c.l.b16 %v7230
      %v7522 = vunpack.c.l.b16 %v7231
      %v7523 = vunpack.c.l.b16 %v7232
      %v7524 = vunpack.c.l.b16 %v7233
      %v7525 = vunpack.c.l.b16 %v7234
      %v7526 = vunpack.c.l.b16 %v7235
      %v7527 = vpack.c.b16 %v7512, %v7511
      %v7528 = vpack.c.b16 %v7514, %v7513
      %v7529 = vpack.c.b16 %v7516, %v7515
      %v7530 = vpack.c.b16 %v7518, %v7517
      %v7531 = vpack.c.b16 %v7520, %v7519
      %v7532 = vpack.c.b16 %v7522, %v7521
      %v7533 = vpack.c.b16 %v7524, %v7523
      %v7534 = vpack.c.b16 %v7526, %v7525
      %7543 = vmatprep.subr.bf16.mxu0 0
      %7544 = vmatpush1.bf16.msra.mxu0 %v7534
      %7545 = vmatprep.subr.bf16.mxu0 0
      %7546 = vmatpush1.bf16.msra.mxu0 %v7533
      %7547 = vmatprep.subr.bf16.mxu0 0
      %7548 = vmatpush1.bf16.msra.mxu0 %v7532
      %7549 = vmatprep.subr.bf16.mxu0 0
      %7550 = vmatpush1.bf16.msra.mxu0 %v7531
      %7551 = vmatprep.subr.bf16.mxu0 0
      %7552 = vmatpush1.bf16.msra.mxu0 %v7530
      %7553 = vmatprep.subr.bf16.mxu0 0
      %7554 = vmatpush1.bf16.msra.mxu0 %v7529
      %7555 = vmatprep.subr.bf16.mxu0 0
      %7556 = vmatpush1.bf16.msra.mxu0 %v7528
      %7557 = vmatprep.subr.bf16.mxu0 0
      %7558 = vmatpush1.bf16.msra.mxu0 %v7527
      %7559 = vmatprep.subr.bf16.mxu0 0
      %7560 = vmatpush2.bf16.msra.mxu0 0
      %7561 = vmatprep.subr.bf16.mxu0 0
      %7562 = vmatpush2.bf16.msra.mxu0 0
      %7563 = vmatprep.subr.bf16.mxu0 0
      %7564 = vmatpush2.bf16.msra.mxu0 0
      %7565 = vmatprep.subr.bf16.mxu0 0
      %7566 = vmatpush2.bf16.msra.mxu0 0
      %7567 = vmatprep.subr.bf16.mxu0 0
      %7568 = vmatpush2.bf16.msra.mxu0 0
      %7569 = vmatprep.subr.bf16.mxu0 0
      %7570 = vmatpush2.bf16.msra.mxu0 0
      %7571 = vmatprep.subr.bf16.mxu0 0
      %7572 = vmatpush2.bf16.msra.mxu0 0
      %7573 = vmatprep.subr.bf16.mxu0 0
      %7574 = vmatpush2.bf16.msra.mxu0 0
      %7575 = vmatprep.mubr.bf16.mxu0 0
      %7576 = vmatmul.mubr.bf16.gmra.mxu0 %v7340
      %v7577 = vpop.f32.mrf.mxu0
      %v7578 = vadd.f32 0.0, %v7577
      %v7579 = vpop.f32.mrf.mxu0
      %v7580 = vpop.f32.mrf.mxu0
      %v7581 = vadd.f32 0.0, %v7580
      %v7582 = vpop.f32.mrf.mxu0
      %7583 = vmatprep.mubr.bf16.mxu0 0
      %7584 = vmatmul.mubr.bf16.gmra.mxu0 %v7348
      %v7585 = vpop.f32.mrf.mxu0
      %v7586 = vadd.f32 0.0, %v7585
      %v7587 = vpop.f32.mrf.mxu0
      %v7588 = vpop.f32.mrf.mxu0
      %v7589 = vadd.f32 0.0, %v7588
      %v7590 = vpop.f32.mrf.mxu0
      %7591 = vmatprep.mubr.bf16.mxu0 0
      %7592 = vmatmul.mubr.bf16.gmra.mxu0 %v7356
      %v7593 = vpop.f32.mrf.mxu0
      %v7594 = vadd.f32 0.0, %v7593
      %v7595 = vpop.f32.mrf.mxu0
      %v7596 = vpop.f32.mrf.mxu0
      %v7597 = vadd.f32 0.0, %v7596
      %v7598 = vpop.f32.mrf.mxu0
      %7599 = vmatprep.mubr.bf16.mxu0 0
      %7600 = vmatmul.mubr.bf16.gmra.mxu0 %v7364
      %v7601 = vpop.f32.mrf.mxu0
      %v7602 = vadd.f32 0.0, %v7601
      %v7603 = vpop.f32.mrf.mxu0
      %v7604 = vpop.f32.mrf.mxu0
      %v7605 = vadd.f32 0.0, %v7604
      %v7606 = vpop.f32.mrf.mxu0
      %7607 = vmatprep.mubr.bf16.mxu0 0
      %7608 = vmatmul.mubr.bf16.gmra.mxu0 %v7372
      %v7609 = vpop.f32.mrf.mxu0
      %v7610 = vadd.f32 0.0, %v7609
      %v7611 = vpop.f32.mrf.mxu0
      %v7612 = vpop.f32.mrf.mxu0
      %v7613 = vadd.f32 0.0, %v7612
      %v7614 = vpop.f32.mrf.mxu0
      %7615 = vmatprep.mubr.bf16.mxu0 0
      %7616 = vmatmul.mubr.bf16.gmra.mxu0 %v7380
      %v7617 = vpop.f32.mrf.mxu0
      %v7618 = vadd.f32 0.0, %v7617
      %v7619 = vpop.f32.mrf.mxu0
      %v7620 = vpop.f32.mrf.mxu0
      %v7621 = vadd.f32 0.0, %v7620
      %v7622 = vpop.f32.mrf.mxu0
      %7623 = vmatprep.mubr.bf16.mxu0 0
      %7624 = vmatmul.mubr.bf16.gmra.mxu0 %v7388
      %v7625 = vpop.f32.mrf.mxu0
      %v7626 = vadd.f32 0.0, %v7625
      %v7627 = vpop.f32.mrf.mxu0
      %v7628 = vpop.f32.mrf.mxu0
      %v7629 = vadd.f32 0.0, %v7628
      %v7630 = vpop.f32.mrf.mxu0
      %7631 = vmatprep.mubr.bf16.mxu0 0
      %7632 = vmatmul.mubr.bf16.gmra.mxu0 %v7396
      %v7633 = vpop.f32.mrf.mxu0
      %v7634 = vadd.f32 0.0, %v7633
      %v7635 = vpop.f32.mrf.mxu0
      %v7636 = vpop.f32.mrf.mxu0
      %v7637 = vadd.f32 0.0, %v7636
      %v7638 = vpop.f32.mrf.mxu0
      %7639 = vmatprep.mubr.bf16.mxu0 0
      %7640 = vmatmul.mubr.bf16.gmra.mxu0 %v7404
      %v7641 = vpop.f32.mrf.mxu0
      %v7642 = vadd.f32 0.0, %v7641
      %v7643 = vpop.f32.mrf.mxu0
      %v7644 = vpop.f32.mrf.mxu0
      %v7645 = vadd.f32 0.0, %v7644
      %v7646 = vpop.f32.mrf.mxu0
      %7647 = vmatprep.mubr.bf16.mxu0 0
      %7648 = vmatmul.mubr.bf16.gmra.mxu0 %v7412
      %v7649 = vpop.f32.mrf.mxu0
      %v7650 = vadd.f32 0.0, %v7649
      %v7651 = vpop.f32.mrf.mxu0
      %v7652 = vpop.f32.mrf.mxu0
      %v7653 = vadd.f32 0.0, %v7652
      %v7654 = vpop.f32.mrf.mxu0
      %7655 = vmatprep.mubr.bf16.mxu0 0
      %7656 = vmatmul.mubr.bf16.gmra.mxu0 %v7420
      %v7657 = vpop.f32.mrf.mxu0
      %v7658 = vadd.f32 0.0, %v7657
      %v7659 = vpop.f32.mrf.mxu0
      %v7660 = vpop.f32.mrf.mxu0
      %v7661 = vadd.f32 0.0, %v7660
      %v7662 = vpop.f32.mrf.mxu0
      %7663 = vmatprep.mubr.bf16.mxu0 0
      %7664 = vmatmul.mubr.bf16.gmra.mxu0 %v7428
      %v7665 = vpop.f32.mrf.mxu0
      %v7666 = vadd.f32 0.0, %v7665
      %v7667 = vpop.f32.mrf.mxu0
      %v7668 = vpop.f32.mrf.mxu0
      %v7669 = vadd.f32 0.0, %v7668
      %v7670 = vpop.f32.mrf.mxu0
      %7671 = vmatprep.mubr.bf16.mxu0 0
      %7672 = vmatmul.mubr.bf16.gmra.mxu0 %v7436
      %v7673 = vpop.f32.mrf.mxu0
      %v7674 = vadd.f32 0.0, %v7673
      %v7675 = vpop.f32.mrf.mxu0
      %v7676 = vpop.f32.mrf.mxu0
      %v7677 = vadd.f32 0.0, %v7676
      %v7678 = vpop.f32.mrf.mxu0
      %7679 = vmatprep.mubr.bf16.mxu0 0
      %7680 = vmatmul.mubr.bf16.gmra.mxu0 %v7444
      %v7681 = vpop.f32.mrf.mxu0
      %v7682 = vadd.f32 0.0, %v7681
      %v7683 = vpop.f32.mrf.mxu0
      %v7684 = vpop.f32.mrf.mxu0
      %v7685 = vadd.f32 0.0, %v7684
      %v7686 = vpop.f32.mrf.mxu0
      %7687 = vmatprep.mubr.bf16.mxu0 0
      %7688 = vmatmul.mubr.bf16.gmra.mxu0 %v7452
      %v7689 = vpop.f32.mrf.mxu0
      %v7690 = vadd.f32 0.0, %v7689
      %v7691 = vpop.f32.mrf.mxu0
      %v7692 = vpop.f32.mrf.mxu0
      %v7693 = vadd.f32 0.0, %v7692
      %v7694 = vpop.f32.mrf.mxu0
      %7695 = vmatprep.mubr.bf16.mxu0 0
      %7696 = vmatmul.mubr.bf16.gmra.mxu0 %v7460
      %v7697 = vpop.f32.mrf.mxu0
      %v7698 = vadd.f32 0.0, %v7697
      %v7699 = vpop.f32.mrf.mxu0
      %v7700 = vpop.f32.mrf.mxu0
      %v7701 = vadd.f32 0.0, %v7700
      %v7702 = vpop.f32.mrf.mxu0
      %7703 = vmatprep.mubr.bf16.mxu0 0
      %7704 = vmatmul.mubr.bf16.gmra.mxu0 %v7468
      %v7705 = vpop.f32.mrf.mxu0
      %v7706 = vadd.f32 0.0, %v7705
      %v7707 = vpop.f32.mrf.mxu0
      %v7708 = vpop.f32.mrf.mxu0
      %v7709 = vadd.f32 0.0, %v7708
      %v7710 = vpop.f32.mrf.mxu0
      %7711 = vmatprep.mubr.bf16.mxu0 0
      %7712 = vmatmul.mubr.bf16.gmra.mxu0 %v7476
      %v7713 = vpop.f32.mrf.mxu0
      %v7714 = vadd.f32 0.0, %v7713
      %v7715 = vpop.f32.mrf.mxu0
      %v7716 = vpop.f32.mrf.mxu0
      %v7717 = vadd.f32 0.0, %v7716
      %v7718 = vpop.f32.mrf.mxu0
      %7719 = vdwg.mxu0
      %v7720 = vadd.f32 %v7146, %v7578
      %v7721 = vadd.f32 %v7147, %v7581
      %v7722 = vadd.f32 %v7148, %v7586
      %v7723 = vadd.f32 %v7149, %v7589
      %v7724 = vadd.f32 %v7150, %v7594
      %v7725 = vadd.f32 %v7151, %v7597
      %v7726 = vadd.f32 %v7152, %v7602
      %v7727 = vadd.f32 %v7153, %v7605
      %v7728 = vadd.f32 %v7154, %v7610
      %v7729 = vadd.f32 %v7155, %v7613
      %v7730 = vadd.f32 %v7156, %v7618
      %v7731 = vadd.f32 %v7157, %v7621
      %v7732 = vadd.f32 %v7158, %v7626
      %v7733 = vadd.f32 %v7159, %v7629
      %v7734 = vadd.f32 %v7160, %v7634
      %v7735 = vadd.f32 %v7161, %v7637
      %v7736 = vadd.f32 %v7162, %v7642
      %v7737 = vadd.f32 %v7163, %v7645
      %v7738 = vadd.f32 %v7164, %v7650
      %v7739 = vadd.f32 %v7165, %v7653
      %v7740 = vadd.f32 %v7166, %v7658
      %v7741 = vadd.f32 %v7167, %v7661
      %v7742 = vadd.f32 %v7168, %v7666
      %v7743 = vadd.f32 %v7169, %v7669
      %v7744 = vadd.f32 %v7170, %v7674
      %v7745 = vadd.f32 %v7171, %v7677
      %v7746 = vadd.f32 %v7172, %v7682
      %v7747 = vadd.f32 %v7173, %v7685
      %v7748 = vadd.f32 %v7174, %v7690
      %v7749 = vadd.f32 %v7175, %v7693
      %v7750 = vadd.f32 %v7176, %v7698
      %v7751 = vadd.f32 %v7177, %v7701
      %v7752 = vadd.f32 %v7178, %v7706
      %v7753 = vadd.f32 %v7179, %v7709
      %v7754 = vadd.f32 %v7180, %v7714
      %v7755 = vadd.f32 %v7181, %v7717
      %v7756 = vld [vmem:[#allocation2 + $0x18] sm:$0xe]
      %s7757 = scalar_lea.vmem %s4, 448
      %v7758 = vld [vmem:[%s7757] sm:$0xf]
      %v7759 = vld [vmem:[%s7757 + $0x4] sm:$0xf]
      %v7760 = vld [vmem:[%s7757 + $0x8] sm:$0xf]
      %v7761 = vld [vmem:[%s7757 + $0xc] sm:$0xf]
      %v7762 = vld [vmem:[%s7757 + $0x10] sm:$0xf]
      %v7763 = vld [vmem:[%s7757 + $0x14] sm:$0xf]
      %v7764 = vld [vmem:[%s7757 + $0x18] sm:$0xf]
      %v7765 = vld [vmem:[%s7757 + $0x1c] sm:$0xf]
      %v7766 = vld [vmem:[%s7757 + $0x20] sm:$0xf]
      %v7767 = vld [vmem:[%s7757 + $0x24] sm:$0xf]
      %v7768 = vld [vmem:[%s7757 + $0x28] sm:$0xf]
      %v7769 = vld [vmem:[%s7757 + $0x2c] sm:$0xf]
      %v7770 = vld [vmem:[%s7757 + $0x30] sm:$0xf]
      %v7771 = vld [vmem:[%s7757 + $0x34] sm:$0xf]
      %v7772 = vld [vmem:[%s7757 + $0x38] sm:$0xf]
      %v7773 = vld [vmem:[%s7757 + $0x3c] sm:$0xf]
      %v7775 = vunpack.c.l.b16 %v7756
      %v7776 = vpack.c.b16 %v7274, %v7775
      %v7777 = vrot.slane %v7776, 1
      %v7778 = vrot.slane %v7311, 1
      %v7779 = vsel %vm1116, %v7777, %v7778
      %v7780 = vrot.slane %v7312, 1
      %v7781 = vsel %vm1116, %v7778, %v7780
      %v7782 = vrot.slane %v7313, 1
      %v7783 = vsel %vm1116, %v7780, %v7782
      %v7784 = vrot.slane %v7314, 1
      %v7785 = vsel %vm1116, %v7782, %v7784
      %v7786 = vrot.slane %v7315, 1
      %v7787 = vsel %vm1116, %v7784, %v7786
      %v7788 = vrot.slane %v7316, 1
      %v7789 = vsel %vm1116, %v7786, %v7788
      %v7790 = vrot.slane %v7317, 1
      %v7791 = vsel %vm1116, %v7788, %v7790
      %v7792 = vrot.slane %v7318, 1
      %v7793 = vsel %vm1116, %v7790, %v7792
      %v7794 = vrot.slane %v7319, 1
      %v7795 = vsel %vm1116, %v7792, %v7794
      %v7796 = vrot.slane %v7320, 1
      %v7797 = vsel %vm1116, %v7794, %v7796
      %v7798 = vrot.slane %v7321, 1
      %v7799 = vsel %vm1116, %v7796, %v7798
      %v7800 = vrot.slane %v7322, 1
      %v7801 = vsel %vm1116, %v7798, %v7800
      %v7802 = vrot.slane %v7323, 1
      %v7803 = vsel %vm1116, %v7800, %v7802
      %v7804 = vrot.slane %v7324, 1
      %v7805 = vsel %vm1116, %v7802, %v7804
      %v7806 = vrot.slane %v7325, 1
      %v7807 = vsel %vm1116, %v7804, %v7806
      %v7808 = vrot.slane %v7326, 1
      %v7809 = vsel %vm1116, %v7806, %v7808
      %v7810 = vrot.slane %v7327, 1
      %v7811 = vsel %vm1116, %v7808, %v7810
      %v7812 = vrot.slane %v7328, 1
      %v7813 = vsel %vm1116, %v7810, %v7812
      %v7848 = vunpack.c.l.b16 %v7758
      %v7849 = vunpack.c.l.b16 %v7759
      %v7850 = vunpack.c.l.b16 %v7760
      %v7851 = vunpack.c.l.b16 %v7761
      %v7852 = vunpack.c.l.b16 %v7762
      %v7853 = vunpack.c.l.b16 %v7763
      %v7854 = vunpack.c.l.b16 %v7764
      %v7855 = vunpack.c.l.b16 %v7765
      %v7856 = vunpack.c.l.b16 %v7766
      %v7857 = vunpack.c.l.b16 %v7767
      %v7858 = vunpack.c.l.b16 %v7768
      %v7859 = vunpack.c.l.b16 %v7769
      %v7860 = vunpack.c.l.b16 %v7770
      %v7861 = vunpack.c.l.b16 %v7771
      %v7862 = vunpack.c.l.b16 %v7772
      %v7863 = vunpack.c.l.b16 %v7773
      %v7864 = vpack.c.b16 %v7849, %v7848
      %v7865 = vpack.c.b16 %v7851, %v7850
      %v7866 = vpack.c.b16 %v7853, %v7852
      %v7867 = vpack.c.b16 %v7855, %v7854
      %v7868 = vpack.c.b16 %v7857, %v7856
      %v7869 = vpack.c.b16 %v7859, %v7858
      %v7870 = vpack.c.b16 %v7861, %v7860
      %v7871 = vpack.c.b16 %v7863, %v7862
      %7880 = vmatprep.subr.bf16.mxu0 0
      %7881 = vmatpush1.bf16.msra.mxu0 %v7871
      %7882 = vmatprep.subr.bf16.mxu0 0
      %7883 = vmatpush1.bf16.msra.mxu0 %v7870
      %7884 = vmatprep.subr.bf16.mxu0 0
      %7885 = vmatpush1.bf16.msra.mxu0 %v7869
      %7886 = vmatprep.subr.bf16.mxu0 0
      %7887 = vmatpush1.bf16.msra.mxu0 %v7868
      %7888 = vmatprep.subr.bf16.mxu0 0
      %7889 = vmatpush1.bf16.msra.mxu0 %v7867
      %7890 = vmatprep.subr.bf16.mxu0 0
      %7891 = vmatpush1.bf16.msra.mxu0 %v7866
      %7892 = vmatprep.subr.bf16.mxu0 0
      %7893 = vmatpush1.bf16.msra.mxu0 %v7865
      %7894 = vmatprep.subr.bf16.mxu0 0
      %7895 = vmatpush1.bf16.msra.mxu0 %v7864
      %7896 = vmatprep.subr.bf16.mxu0 0
      %7897 = vmatpush2.bf16.msra.mxu0 0
      %7898 = vmatprep.subr.bf16.mxu0 0
      %7899 = vmatpush2.bf16.msra.mxu0 0
      %7900 = vmatprep.subr.bf16.mxu0 0
      %7901 = vmatpush2.bf16.msra.mxu0 0
      %7902 = vmatprep.subr.bf16.mxu0 0
      %7903 = vmatpush2.bf16.msra.mxu0 0
      %7904 = vmatprep.subr.bf16.mxu0 0
      %7905 = vmatpush2.bf16.msra.mxu0 0
      %7906 = vmatprep.subr.bf16.mxu0 0
      %7907 = vmatpush2.bf16.msra.mxu0 0
      %7908 = vmatprep.subr.bf16.mxu0 0
      %7909 = vmatpush2.bf16.msra.mxu0 0
      %7910 = vmatprep.subr.bf16.mxu0 0
      %7911 = vmatpush2.bf16.msra.mxu0 0
      %7912 = vmatprep.mubr.bf16.mxu0 0
      %7913 = vmatmul.mubr.bf16.gmra.mxu0 %v7779
      %v7914 = vpop.f32.mrf.mxu0
      %v7915 = vadd.f32 0.0, %v7914
      %v7916 = vpop.f32.mrf.mxu0
      %v7917 = vpop.f32.mrf.mxu0
      %v7918 = vadd.f32 0.0, %v7917
      %v7919 = vpop.f32.mrf.mxu0
      %7920 = vmatprep.mubr.bf16.mxu0 0
      %7921 = vmatmul.mubr.bf16.gmra.mxu0 %v7781
      %v7922 = vpop.f32.mrf.mxu0
      %v7923 = vadd.f32 0.0, %v7922
      %v7924 = vpop.f32.mrf.mxu0
      %v7925 = vpop.f32.mrf.mxu0
      %v7926 = vadd.f32 0.0, %v7925
      %v7927 = vpop.f32.mrf.mxu0
      %7928 = vmatprep.mubr.bf16.mxu0 0
      %7929 = vmatmul.mubr.bf16.gmra.mxu0 %v7783
      %v7930 = vpop.f32.mrf.mxu0
      %v7931 = vadd.f32 0.0, %v7930
      %v7932 = vpop.f32.mrf.mxu0
      %v7933 = vpop.f32.mrf.mxu0
      %v7934 = vadd.f32 0.0, %v7933
      %v7935 = vpop.f32.mrf.mxu0
      %7936 = vmatprep.mubr.bf16.mxu0 0
      %7937 = vmatmul.mubr.bf16.gmra.mxu0 %v7785
      %v7938 = vpop.f32.mrf.mxu0
      %v7939 = vadd.f32 0.0, %v7938
      %v7940 = vpop.f32.mrf.mxu0
      %v7941 = vpop.f32.mrf.mxu0
      %v7942 = vadd.f32 0.0, %v7941
      %v7943 = vpop.f32.mrf.mxu0
      %7944 = vmatprep.mubr.bf16.mxu0 0
      %7945 = vmatmul.mubr.bf16.gmra.mxu0 %v7787
      %v7946 = vpop.f32.mrf.mxu0
      %v7947 = vadd.f32 0.0, %v7946
      %v7948 = vpop.f32.mrf.mxu0
      %v7949 = vpop.f32.mrf.mxu0
      %v7950 = vadd.f32 0.0, %v7949
      %v7951 = vpop.f32.mrf.mxu0
      %7952 = vmatprep.mubr.bf16.mxu0 0
      %7953 = vmatmul.mubr.bf16.gmra.mxu0 %v7789
      %v7954 = vpop.f32.mrf.mxu0
      %v7955 = vadd.f32 0.0, %v7954
      %v7956 = vpop.f32.mrf.mxu0
      %v7957 = vpop.f32.mrf.mxu0
      %v7958 = vadd.f32 0.0, %v7957
      %v7959 = vpop.f32.mrf.mxu0
      %7960 = vmatprep.mubr.bf16.mxu0 0
      %7961 = vmatmul.mubr.bf16.gmra.mxu0 %v7791
      %v7962 = vpop.f32.mrf.mxu0
      %v7963 = vadd.f32 0.0, %v7962
      %v7964 = vpop.f32.mrf.mxu0
      %v7965 = vpop.f32.mrf.mxu0
      %v7966 = vadd.f32 0.0, %v7965
      %v7967 = vpop.f32.mrf.mxu0
      %7968 = vmatprep.mubr.bf16.mxu0 0
      %7969 = vmatmul.mubr.bf16.gmra.mxu0 %v7793
      %v7970 = vpop.f32.mrf.mxu0
      %v7971 = vadd.f32 0.0, %v7970
      %v7972 = vpop.f32.mrf.mxu0
      %v7973 = vpop.f32.mrf.mxu0
      %v7974 = vadd.f32 0.0, %v7973
      %v7975 = vpop.f32.mrf.mxu0
      %7976 = vmatprep.mubr.bf16.mxu0 0
      %7977 = vmatmul.mubr.bf16.gmra.mxu0 %v7795
      %v7978 = vpop.f32.mrf.mxu0
      %v7979 = vadd.f32 0.0, %v7978
      %v7980 = vpop.f32.mrf.mxu0
      %v7981 = vpop.f32.mrf.mxu0
      %v7982 = vadd.f32 0.0, %v7981
      %v7983 = vpop.f32.mrf.mxu0
      %7984 = vmatprep.mubr.bf16.mxu0 0
      %7985 = vmatmul.mubr.bf16.gmra.mxu0 %v7797
      %v7986 = vpop.f32.mrf.mxu0
      %v7987 = vadd.f32 0.0, %v7986
      %v7988 = vpop.f32.mrf.mxu0
      %v7989 = vpop.f32.mrf.mxu0
      %v7990 = vadd.f32 0.0, %v7989
      %v7991 = vpop.f32.mrf.mxu0
      %7992 = vmatprep.mubr.bf16.mxu0 0
      %7993 = vmatmul.mubr.bf16.gmra.mxu0 %v7799
      %v7994 = vpop.f32.mrf.mxu0
      %v7995 = vadd.f32 0.0, %v7994
      %v7996 = vpop.f32.mrf.mxu0
      %v7997 = vpop.f32.mrf.mxu0
      %v7998 = vadd.f32 0.0, %v7997
      %v7999 = vpop.f32.mrf.mxu0
      %8000 = vmatprep.mubr.bf16.mxu0 0
      %8001 = vmatmul.mubr.bf16.gmra.mxu0 %v7801
      %v8002 = vpop.f32.mrf.mxu0
      %v8003 = vadd.f32 0.0, %v8002
      %v8004 = vpop.f32.mrf.mxu0
      %v8005 = vpop.f32.mrf.mxu0
      %v8006 = vadd.f32 0.0, %v8005
      %v8007 = vpop.f32.mrf.mxu0
      %8008 = vmatprep.mubr.bf16.mxu0 0
      %8009 = vmatmul.mubr.bf16.gmra.mxu0 %v7803
      %v8010 = vpop.f32.mrf.mxu0
      %v8011 = vadd.f32 0.0, %v8010
      %v8012 = vpop.f32.mrf.mxu0
      %v8013 = vpop.f32.mrf.mxu0
      %v8014 = vadd.f32 0.0, %v8013
      %v8015 = vpop.f32.mrf.mxu0
      %8016 = vmatprep.mubr.bf16.mxu0 0
      %8017 = vmatmul.mubr.bf16.gmra.mxu0 %v7805
      %v8018 = vpop.f32.mrf.mxu0
      %v8019 = vadd.f32 0.0, %v8018
      %v8020 = vpop.f32.mrf.mxu0
      %v8021 = vpop.f32.mrf.mxu0
      %v8022 = vadd.f32 0.0, %v8021
      %v8023 = vpop.f32.mrf.mxu0
      %8024 = vmatprep.mubr.bf16.mxu0 0
      %8025 = vmatmul.mubr.bf16.gmra.mxu0 %v7807
      %v8026 = vpop.f32.mrf.mxu0
      %v8027 = vadd.f32 0.0, %v8026
      %v8028 = vpop.f32.mrf.mxu0
      %v8029 = vpop.f32.mrf.mxu0
      %v8030 = vadd.f32 0.0, %v8029
      %v8031 = vpop.f32.mrf.mxu0
      %8032 = vmatprep.mubr.bf16.mxu0 0
      %8033 = vmatmul.mubr.bf16.gmra.mxu0 %v7809
      %v8034 = vpop.f32.mrf.mxu0
      %v8035 = vadd.f32 0.0, %v8034
      %v8036 = vpop.f32.mrf.mxu0
      %v8037 = vpop.f32.mrf.mxu0
      %v8038 = vadd.f32 0.0, %v8037
      %v8039 = vpop.f32.mrf.mxu0
      %8040 = vmatprep.mubr.bf16.mxu0 0
      %8041 = vmatmul.mubr.bf16.gmra.mxu0 %v7811
      %v8042 = vpop.f32.mrf.mxu0
      %v8043 = vadd.f32 0.0, %v8042
      %v8044 = vpop.f32.mrf.mxu0
      %v8045 = vpop.f32.mrf.mxu0
      %v8046 = vadd.f32 0.0, %v8045
      %v8047 = vpop.f32.mrf.mxu0
      %8048 = vmatprep.mubr.bf16.mxu0 0
      %8049 = vmatmul.mubr.bf16.gmra.mxu0 %v7813
      %v8050 = vpop.f32.mrf.mxu0
      %v8051 = vadd.f32 0.0, %v8050
      %v8052 = vpop.f32.mrf.mxu0
      %v8053 = vpop.f32.mrf.mxu0
      %v8054 = vadd.f32 0.0, %v8053
      %v8055 = vpop.f32.mrf.mxu0
      %8056 = vdwg.mxu0
      %v8057 = vadd.f32 %v7720, %v7915
      %v8058 = vadd.f32 %v7721, %v7918
      %v8059 = vadd.f32 %v7722, %v7923
      %v8060 = vadd.f32 %v7723, %v7926
      %v8061 = vadd.f32 %v7724, %v7931
      %v8062 = vadd.f32 %v7725, %v7934
      %v8063 = vadd.f32 %v7726, %v7939
      %v8064 = vadd.f32 %v7727, %v7942
      %v8065 = vadd.f32 %v7728, %v7947
      %v8066 = vadd.f32 %v7729, %v7950
      %v8067 = vadd.f32 %v7730, %v7955
      %v8068 = vadd.f32 %v7731, %v7958
      %v8069 = vadd.f32 %v7732, %v7963
      %v8070 = vadd.f32 %v7733, %v7966
      %v8071 = vadd.f32 %v7734, %v7971
      %v8072 = vadd.f32 %v7735, %v7974
      %v8073 = vadd.f32 %v7736, %v7979
      %v8074 = vadd.f32 %v7737, %v7982
      %v8075 = vadd.f32 %v7738, %v7987
      %v8076 = vadd.f32 %v7739, %v7990
      %v8077 = vadd.f32 %v7740, %v7995
      %v8078 = vadd.f32 %v7741, %v7998
      %v8079 = vadd.f32 %v7742, %v8003
      %v8080 = vadd.f32 %v7743, %v8006
      %v8081 = vadd.f32 %v7744, %v8011
      %v8082 = vadd.f32 %v7745, %v8014
      %v8083 = vadd.f32 %v7746, %v8019
      %v8084 = vadd.f32 %v7747, %v8022
      %v8085 = vadd.f32 %v7748, %v8027
      %v8086 = vadd.f32 %v7749, %v8030
      %v8087 = vadd.f32 %v7750, %v8035
      %v8088 = vadd.f32 %v7751, %v8038
      %v8089 = vadd.f32 %v7752, %v8043
      %v8090 = vadd.f32 %v7753, %v8046
      %v8091 = vadd.f32 %v7754, %v8051
      %v8092 = vadd.f32 %v7755, %v8054
      %v8093 = vld [vmem:[#allocation2 + $0xa8] sm:$0x3]
      %s8094 = scalar_lea.vmem %s4, 512
      %v8095 = vld [vmem:[%s8094] sm:$0xf]
      %v8096 = vld [vmem:[%s8094 + $0x4] sm:$0xf]
      %v8097 = vld [vmem:[%s8094 + $0x8] sm:$0xf]
      %v8098 = vld [vmem:[%s8094 + $0xc] sm:$0xf]
      %v8099 = vld [vmem:[%s8094 + $0x10] sm:$0xf]
      %v8100 = vld [vmem:[%s8094 + $0x14] sm:$0xf]
      %v8101 = vld [vmem:[%s8094 + $0x18] sm:$0xf]
      %v8102 = vld [vmem:[%s8094 + $0x1c] sm:$0xf]
      %v8103 = vld [vmem:[%s8094 + $0x20] sm:$0xf]
      %v8104 = vld [vmem:[%s8094 + $0x24] sm:$0xf]
      %v8105 = vld [vmem:[%s8094 + $0x28] sm:$0xf]
      %v8106 = vld [vmem:[%s8094 + $0x2c] sm:$0xf]
      %v8107 = vld [vmem:[%s8094 + $0x30] sm:$0xf]
      %v8108 = vld [vmem:[%s8094 + $0x34] sm:$0xf]
      %v8109 = vld [vmem:[%s8094 + $0x38] sm:$0xf]
      %v8110 = vld [vmem:[%s8094 + $0x3c] sm:$0xf]
      %v8112 = vunpack.c.l.b16 %v8093
      %v8113 = vpack.c.b16 %v8112, %v8112
      %v8115 = vshrl.u32 %v7776, 16
      %v8117 = vrot.slane %v8115, 1
      %v8118 = vshll.u32 %v7776, 16
      %v8120 = vrot.slane %v8118, 2
      %v8121 = vor.u32 %v8117, %v8120
      %v8122 = vrot.slane %v7341, 1
      %v8123 = vrot.slane %v7337, 2
      %v8124 = vor.u32 %v8122, %v8123
      %v8125 = vsel %vm1917, %v8121, %v8124
      %v8126 = vrot.slane %v7349, 1
      %v8127 = vrot.slane %v7345, 2
      %v8128 = vor.u32 %v8126, %v8127
      %v8129 = vsel %vm1917, %v8124, %v8128
      %v8130 = vrot.slane %v7357, 1
      %v8131 = vrot.slane %v7353, 2
      %v8132 = vor.u32 %v8130, %v8131
      %v8133 = vsel %vm1917, %v8128, %v8132
      %v8134 = vrot.slane %v7365, 1
      %v8135 = vrot.slane %v7361, 2
      %v8136 = vor.u32 %v8134, %v8135
      %v8137 = vsel %vm1917, %v8132, %v8136
      %v8138 = vrot.slane %v7373, 1
      %v8139 = vrot.slane %v7369, 2
      %v8140 = vor.u32 %v8138, %v8139
      %v8141 = vsel %vm1917, %v8136, %v8140
      %v8142 = vrot.slane %v7381, 1
      %v8143 = vrot.slane %v7377, 2
      %v8144 = vor.u32 %v8142, %v8143
      %v8145 = vsel %vm1917, %v8140, %v8144
      %v8146 = vrot.slane %v7389, 1
      %v8147 = vrot.slane %v7385, 2
      %v8148 = vor.u32 %v8146, %v8147
      %v8149 = vsel %vm1917, %v8144, %v8148
      %v8150 = vrot.slane %v7397, 1
      %v8151 = vrot.slane %v7393, 2
      %v8152 = vor.u32 %v8150, %v8151
      %v8153 = vsel %vm1917, %v8148, %v8152
      %v8154 = vrot.slane %v7405, 1
      %v8155 = vrot.slane %v7401, 2
      %v8156 = vor.u32 %v8154, %v8155
      %v8157 = vsel %vm1917, %v8152, %v8156
      %v8158 = vrot.slane %v7413, 1
      %v8159 = vrot.slane %v7409, 2
      %v8160 = vor.u32 %v8158, %v8159
      %v8161 = vsel %vm1917, %v8156, %v8160
      %v8162 = vrot.slane %v7421, 1
      %v8163 = vrot.slane %v7417, 2
      %v8164 = vor.u32 %v8162, %v8163
      %v8165 = vsel %vm1917, %v8160, %v8164
      %v8166 = vrot.slane %v7429, 1
      %v8167 = vrot.slane %v7425, 2
      %v8168 = vor.u32 %v8166, %v8167
      %v8169 = vsel %vm1917, %v8164, %v8168
      %v8170 = vrot.slane %v7437, 1
      %v8171 = vrot.slane %v7433, 2
      %v8172 = vor.u32 %v8170, %v8171
      %v8173 = vsel %vm1917, %v8168, %v8172
      %v8174 = vrot.slane %v7445, 1
      %v8175 = vrot.slane %v7441, 2
      %v8176 = vor.u32 %v8174, %v8175
      %v8177 = vsel %vm1917, %v8172, %v8176
      %v8178 = vrot.slane %v7453, 1
      %v8179 = vrot.slane %v7449, 2
      %v8180 = vor.u32 %v8178, %v8179
      %v8181 = vsel %vm1917, %v8176, %v8180
      %v8182 = vrot.slane %v7461, 1
      %v8183 = vrot.slane %v7457, 2
      %v8184 = vor.u32 %v8182, %v8183
      %v8185 = vsel %vm1917, %v8180, %v8184
      %v8186 = vrot.slane %v7469, 1
      %v8187 = vrot.slane %v7465, 2
      %v8188 = vor.u32 %v8186, %v8187
      %v8189 = vsel %vm1917, %v8184, %v8188
      %v8191 = vshrl.u32 %v8113, 16
      %v8193 = vrot.slane %v8191, 1
      %v8194 = vshll.u32 %v8113, 16
      %v8196 = vrot.slane %v8194, 2
      %v8197 = vor.u32 %v8193, %v8196
      %v8198 = vsel %vm1917, %v8188, %v8197
      %v8233 = vunpack.c.l.b16 %v8095
      %v8234 = vunpack.c.l.b16 %v8096
      %v8235 = vunpack.c.l.b16 %v8097
      %v8236 = vunpack.c.l.b16 %v8098
      %v8237 = vunpack.c.l.b16 %v8099
      %v8238 = vunpack.c.l.b16 %v8100
      %v8239 = vunpack.c.l.b16 %v8101
      %v8240 = vunpack.c.l.b16 %v8102
      %v8241 = vunpack.c.l.b16 %v8103
      %v8242 = vunpack.c.l.b16 %v8104
      %v8243 = vunpack.c.l.b16 %v8105
      %v8244 = vunpack.c.l.b16 %v8106
      %v8245 = vunpack.c.l.b16 %v8107
      %v8246 = vunpack.c.l.b16 %v8108
      %v8247 = vunpack.c.l.b16 %v8109
      %v8248 = vunpack.c.l.b16 %v8110
      %v8249 = vpack.c.b16 %v8234, %v8233
      %v8250 = vpack.c.b16 %v8236, %v8235
      %v8251 = vpack.c.b16 %v8238, %v8237
      %v8252 = vpack.c.b16 %v8240, %v8239
      %v8253 = vpack.c.b16 %v8242, %v8241
      %v8254 = vpack.c.b16 %v8244, %v8243
      %v8255 = vpack.c.b16 %v8246, %v8245
      %v8256 = vpack.c.b16 %v8248, %v8247
      %8265 = vmatprep.subr.bf16.mxu0 0
      %8266 = vmatpush1.bf16.msra.mxu0 %v8256
      %8267 = vmatprep.subr.bf16.mxu0 0
      %8268 = vmatpush1.bf16.msra.mxu0 %v8255
      %8269 = vmatprep.subr.bf16.mxu0 0
      %8270 = vmatpush1.bf16.msra.mxu0 %v8254
      %8271 = vmatprep.subr.bf16.mxu0 0
      %8272 = vmatpush1.bf16.msra.mxu0 %v8253
      %8273 = vmatprep.subr.bf16.mxu0 0
      %8274 = vmatpush1.bf16.msra.mxu0 %v8252
      %8275 = vmatprep.subr.bf16.mxu0 0
      %8276 = vmatpush1.bf16.msra.mxu0 %v8251
      %8277 = vmatprep.subr.bf16.mxu0 0
      %8278 = vmatpush1.bf16.msra.mxu0 %v8250
      %8279 = vmatprep.subr.bf16.mxu0 0
      %8280 = vmatpush1.bf16.msra.mxu0 %v8249
      %8281 = vmatprep.subr.bf16.mxu0 0
      %8282 = vmatpush2.bf16.msra.mxu0 0
      %8283 = vmatprep.subr.bf16.mxu0 0
      %8284 = vmatpush2.bf16.msra.mxu0 0
      %8285 = vmatprep.subr.bf16.mxu0 0
      %8286 = vmatpush2.bf16.msra.mxu0 0
      %8287 = vmatprep.subr.bf16.mxu0 0
      %8288 = vmatpush2.bf16.msra.mxu0 0
      %8289 = vmatprep.subr.bf16.mxu0 0
      %8290 = vmatpush2.bf16.msra.mxu0 0
      %8291 = vmatprep.subr.bf16.mxu0 0
      %8292 = vmatpush2.bf16.msra.mxu0 0
      %8293 = vmatprep.subr.bf16.mxu0 0
      %8294 = vmatpush2.bf16.msra.mxu0 0
      %8295 = vmatprep.subr.bf16.mxu0 0
      %8296 = vmatpush2.bf16.msra.mxu0 0
      %8297 = vmatprep.mubr.bf16.mxu0 0
      %8298 = vmatmul.mubr.bf16.gmra.mxu0 %v8125
      %v8299 = vpop.f32.mrf.mxu0
      %v8300 = vadd.f32 0.0, %v8299
      %v8301 = vpop.f32.mrf.mxu0
      %v8302 = vpop.f32.mrf.mxu0
      %v8303 = vadd.f32 0.0, %v8302
      %v8304 = vpop.f32.mrf.mxu0
      %8305 = vmatprep.mubr.bf16.mxu0 0
      %8306 = vmatmul.mubr.bf16.gmra.mxu0 %v8129
      %v8307 = vpop.f32.mrf.mxu0
      %v8308 = vadd.f32 0.0, %v8307
      %v8309 = vpop.f32.mrf.mxu0
      %v8310 = vpop.f32.mrf.mxu0
      %v8311 = vadd.f32 0.0, %v8310
      %v8312 = vpop.f32.mrf.mxu0
      %8313 = vmatprep.mubr.bf16.mxu0 0
      %8314 = vmatmul.mubr.bf16.gmra.mxu0 %v8133
      %v8315 = vpop.f32.mrf.mxu0
      %v8316 = vadd.f32 0.0, %v8315
      %v8317 = vpop.f32.mrf.mxu0
      %v8318 = vpop.f32.mrf.mxu0
      %v8319 = vadd.f32 0.0, %v8318
      %v8320 = vpop.f32.mrf.mxu0
      %8321 = vmatprep.mubr.bf16.mxu0 0
      %8322 = vmatmul.mubr.bf16.gmra.mxu0 %v8137
      %v8323 = vpop.f32.mrf.mxu0
      %v8324 = vadd.f32 0.0, %v8323
      %v8325 = vpop.f32.mrf.mxu0
      %v8326 = vpop.f32.mrf.mxu0
      %v8327 = vadd.f32 0.0, %v8326
      %v8328 = vpop.f32.mrf.mxu0
      %8329 = vmatprep.mubr.bf16.mxu0 0
      %8330 = vmatmul.mubr.bf16.gmra.mxu0 %v8141
      %v8331 = vpop.f32.mrf.mxu0
      %v8332 = vadd.f32 0.0, %v8331
      %v8333 = vpop.f32.mrf.mxu0
      %v8334 = vpop.f32.mrf.mxu0
      %v8335 = vadd.f32 0.0, %v8334
      %v8336 = vpop.f32.mrf.mxu0
      %8337 = vmatprep.mubr.bf16.mxu0 0
      %8338 = vmatmul.mubr.bf16.gmra.mxu0 %v8145
      %v8339 = vpop.f32.mrf.mxu0
      %v8340 = vadd.f32 0.0, %v8339
      %v8341 = vpop.f32.mrf.mxu0
      %v8342 = vpop.f32.mrf.mxu0
      %v8343 = vadd.f32 0.0, %v8342
      %v8344 = vpop.f32.mrf.mxu0
      %8345 = vmatprep.mubr.bf16.mxu0 0
      %8346 = vmatmul.mubr.bf16.gmra.mxu0 %v8149
      %v8347 = vpop.f32.mrf.mxu0
      %v8348 = vadd.f32 0.0, %v8347
      %v8349 = vpop.f32.mrf.mxu0
      %v8350 = vpop.f32.mrf.mxu0
      %v8351 = vadd.f32 0.0, %v8350
      %v8352 = vpop.f32.mrf.mxu0
      %8353 = vmatprep.mubr.bf16.mxu0 0
      %8354 = vmatmul.mubr.bf16.gmra.mxu0 %v8153
      %v8355 = vpop.f32.mrf.mxu0
      %v8356 = vadd.f32 0.0, %v8355
      %v8357 = vpop.f32.mrf.mxu0
      %v8358 = vpop.f32.mrf.mxu0
      %v8359 = vadd.f32 0.0, %v8358
      %v8360 = vpop.f32.mrf.mxu0
      %8361 = vmatprep.mubr.bf16.mxu0 0
      %8362 = vmatmul.mubr.bf16.gmra.mxu0 %v8157
      %v8363 = vpop.f32.mrf.mxu0
      %v8364 = vadd.f32 0.0, %v8363
      %v8365 = vpop.f32.mrf.mxu0
      %v8366 = vpop.f32.mrf.mxu0
      %v8367 = vadd.f32 0.0, %v8366
      %v8368 = vpop.f32.mrf.mxu0
      %8369 = vmatprep.mubr.bf16.mxu0 0
      %8370 = vmatmul.mubr.bf16.gmra.mxu0 %v8161
      %v8371 = vpop.f32.mrf.mxu0
      %v8372 = vadd.f32 0.0, %v8371
      %v8373 = vpop.f32.mrf.mxu0
      %v8374 = vpop.f32.mrf.mxu0
      %v8375 = vadd.f32 0.0, %v8374
      %v8376 = vpop.f32.mrf.mxu0
      %8377 = vmatprep.mubr.bf16.mxu0 0
      %8378 = vmatmul.mubr.bf16.gmra.mxu0 %v8165
      %v8379 = vpop.f32.mrf.mxu0
      %v8380 = vadd.f32 0.0, %v8379
      %v8381 = vpop.f32.mrf.mxu0
      %v8382 = vpop.f32.mrf.mxu0
      %v8383 = vadd.f32 0.0, %v8382
      %v8384 = vpop.f32.mrf.mxu0
      %8385 = vmatprep.mubr.bf16.mxu0 0
      %8386 = vmatmul.mubr.bf16.gmra.mxu0 %v8169
      %v8387 = vpop.f32.mrf.mxu0
      %v8388 = vadd.f32 0.0, %v8387
      %v8389 = vpop.f32.mrf.mxu0
      %v8390 = vpop.f32.mrf.mxu0
      %v8391 = vadd.f32 0.0, %v8390
      %v8392 = vpop.f32.mrf.mxu0
      %8393 = vmatprep.mubr.bf16.mxu0 0
      %8394 = vmatmul.mubr.bf16.gmra.mxu0 %v8173
      %v8395 = vpop.f32.mrf.mxu0
      %v8396 = vadd.f32 0.0, %v8395
      %v8397 = vpop.f32.mrf.mxu0
      %v8398 = vpop.f32.mrf.mxu0
      %v8399 = vadd.f32 0.0, %v8398
      %v8400 = vpop.f32.mrf.mxu0
      %8401 = vmatprep.mubr.bf16.mxu0 0
      %8402 = vmatmul.mubr.bf16.gmra.mxu0 %v8177
      %v8403 = vpop.f32.mrf.mxu0
      %v8404 = vadd.f32 0.0, %v8403
      %v8405 = vpop.f32.mrf.mxu0
      %v8406 = vpop.f32.mrf.mxu0
      %v8407 = vadd.f32 0.0, %v8406
      %v8408 = vpop.f32.mrf.mxu0
      %8409 = vmatprep.mubr.bf16.mxu0 0
      %8410 = vmatmul.mubr.bf16.gmra.mxu0 %v8181
      %v8411 = vpop.f32.mrf.mxu0
      %v8412 = vadd.f32 0.0, %v8411
      %v8413 = vpop.f32.mrf.mxu0
      %v8414 = vpop.f32.mrf.mxu0
      %v8415 = vadd.f32 0.0, %v8414
      %v8416 = vpop.f32.mrf.mxu0
      %8417 = vmatprep.mubr.bf16.mxu0 0
      %8418 = vmatmul.mubr.bf16.gmra.mxu0 %v8185
      %v8419 = vpop.f32.mrf.mxu0
      %v8420 = vadd.f32 0.0, %v8419
      %v8421 = vpop.f32.mrf.mxu0
      %v8422 = vpop.f32.mrf.mxu0
      %v8423 = vadd.f32 0.0, %v8422
      %v8424 = vpop.f32.mrf.mxu0
      %8425 = vmatprep.mubr.bf16.mxu0 0
      %8426 = vmatmul.mubr.bf16.gmra.mxu0 %v8189
      %v8427 = vpop.f32.mrf.mxu0
      %v8428 = vadd.f32 0.0, %v8427
      %v8429 = vpop.f32.mrf.mxu0
      %v8430 = vpop.f32.mrf.mxu0
      %v8431 = vadd.f32 0.0, %v8430
      %v8432 = vpop.f32.mrf.mxu0
      %8433 = vmatprep.mubr.bf16.mxu0 0
      %8434 = vmatmul.mubr.bf16.gmra.mxu0 %v8198
      %v8435 = vpop.f32.mrf.mxu0
      %v8436 = vadd.f32 0.0, %v8435
      %v8437 = vpop.f32.mrf.mxu0
      %v8438 = vpop.f32.mrf.mxu0
      %v8439 = vadd.f32 0.0, %v8438
      %v8440 = vpop.f32.mrf.mxu0
      %8441 = vdwg.mxu0
      %v8442 = vadd.f32 %v8057, %v8300
      %v8443 = vadd.f32 %v8058, %v8303
      %v8444 = vadd.f32 %v8059, %v8308
      %v8445 = vadd.f32 %v8060, %v8311
      %v8446 = vadd.f32 %v8061, %v8316
      %v8447 = vadd.f32 %v8062, %v8319
      %v8448 = vadd.f32 %v8063, %v8324
      %v8449 = vadd.f32 %v8064, %v8327
      %v8450 = vadd.f32 %v8065, %v8332
      %v8451 = vadd.f32 %v8066, %v8335
      %v8452 = vadd.f32 %v8067, %v8340
      %v8453 = vadd.f32 %v8068, %v8343
      %v8454 = vadd.f32 %v8069, %v8348
      %v8455 = vadd.f32 %v8070, %v8351
      %v8456 = vadd.f32 %v8071, %v8356
      %v8457 = vadd.f32 %v8072, %v8359
      %v8458 = vadd.f32 %v8073, %v8364
      %v8459 = vadd.f32 %v8074, %v8367
      %v8460 = vadd.f32 %v8075, %v8372
      %v8461 = vadd.f32 %v8076, %v8375
      %v8462 = vadd.f32 %v8077, %v8380
      %v8463 = vadd.f32 %v8078, %v8383
      %v8464 = vadd.f32 %v8079, %v8388
      %v8465 = vadd.f32 %v8080, %v8391
      %v8466 = vadd.f32 %v8081, %v8396
      %v8467 = vadd.f32 %v8082, %v8399
      %v8468 = vadd.f32 %v8083, %v8404
      %v8469 = vadd.f32 %v8084, %v8407
      %v8470 = vadd.f32 %v8085, %v8412
      %v8471 = vadd.f32 %v8086, %v8415
      %v8472 = vadd.f32 %v8087, %v8420
      %v8473 = vadd.f32 %v8088, %v8423
      %v8474 = vadd.f32 %v8089, %v8428
      %v8475 = vadd.f32 %v8090, %v8431
      %v8476 = vadd.f32 %v8091, %v8436
      %v8477 = vadd.f32 %v8092, %v8439
      %v8478 = vld [vmem:[%s5] sm:$0x1]
      %v8480 = vlaneseq
      %v8481 = vshrl.u32 %v8480, 7
      %v8482 = vsub.s32 0, %v8481
      %v8483 = vrot.slane %v8478, %v8482
      %v8485 = vadd.f32 %v8442, %v8483
      %v8486 = vadd.f32 %v8443, %v8483
      %v8487 = vadd.f32 %v8444, %v8483
      %v8488 = vadd.f32 %v8445, %v8483
      %v8489 = vadd.f32 %v8446, %v8483
      %v8490 = vadd.f32 %v8447, %v8483
      %v8491 = vadd.f32 %v8448, %v8483
      %v8492 = vadd.f32 %v8449, %v8483
      %v8493 = vadd.f32 %v8450, %v8483
      %v8494 = vadd.f32 %v8451, %v8483
      %v8495 = vadd.f32 %v8452, %v8483
      %v8496 = vadd.f32 %v8453, %v8483
      %v8497 = vadd.f32 %v8454, %v8483
      %v8498 = vadd.f32 %v8455, %v8483
      %v8499 = vadd.f32 %v8456, %v8483
      %v8500 = vadd.f32 %v8457, %v8483
      %v8501 = vadd.f32 %v8458, %v8483
      %v8502 = vadd.f32 %v8459, %v8483
      %v8503 = vadd.f32 %v8460, %v8483
      %v8504 = vadd.f32 %v8461, %v8483
      %v8505 = vadd.f32 %v8462, %v8483
      %v8506 = vadd.f32 %v8463, %v8483
      %v8507 = vadd.f32 %v8464, %v8483
      %v8508 = vadd.f32 %v8465, %v8483
      %v8509 = vadd.f32 %v8466, %v8483
      %v8510 = vadd.f32 %v8467, %v8483
      %v8511 = vadd.f32 %v8468, %v8483
      %v8512 = vadd.f32 %v8469, %v8483
      %v8513 = vadd.f32 %v8470, %v8483
      %v8514 = vadd.f32 %v8471, %v8483
      %v8515 = vadd.f32 %v8472, %v8483
      %v8516 = vadd.f32 %v8473, %v8483
      %v8517 = vadd.f32 %v8474, %v8483
      %v8518 = vadd.f32 %v8475, %v8483
      %v8519 = vadd.f32 %v8476, %v8483
      %v8520 = vadd.f32 %v8477, %v8483
      %v8521 = vmax.f32 %v8485, 0.0
      %v8522 = vmax.f32 %v8486, 0.0
      %v8523 = vmax.f32 %v8487, 0.0
      %v8524 = vmax.f32 %v8488, 0.0
      %v8525 = vmax.f32 %v8489, 0.0
      %v8526 = vmax.f32 %v8490, 0.0
      %v8527 = vmax.f32 %v8491, 0.0
      %v8528 = vmax.f32 %v8492, 0.0
      %v8529 = vmax.f32 %v8493, 0.0
      %v8530 = vmax.f32 %v8494, 0.0
      %v8531 = vmax.f32 %v8495, 0.0
      %v8532 = vmax.f32 %v8496, 0.0
      %v8533 = vmax.f32 %v8497, 0.0
      %v8534 = vmax.f32 %v8498, 0.0
      %v8535 = vmax.f32 %v8499, 0.0
      %v8536 = vmax.f32 %v8500, 0.0
      %v8537 = vmax.f32 %v8501, 0.0
      %v8538 = vmax.f32 %v8502, 0.0
      %v8539 = vmax.f32 %v8503, 0.0
      %v8540 = vmax.f32 %v8504, 0.0
      %v8541 = vmax.f32 %v8505, 0.0
      %v8542 = vmax.f32 %v8506, 0.0
      %v8543 = vmax.f32 %v8507, 0.0
      %v8544 = vmax.f32 %v8508, 0.0
      %v8545 = vmax.f32 %v8509, 0.0
      %v8546 = vmax.f32 %v8510, 0.0
      %v8547 = vmax.f32 %v8511, 0.0
      %v8548 = vmax.f32 %v8512, 0.0
      %v8549 = vmax.f32 %v8513, 0.0
      %v8550 = vmax.f32 %v8514, 0.0
      %v8551 = vmax.f32 %v8515, 0.0
      %v8552 = vmax.f32 %v8516, 0.0
      %v8553 = vmax.f32 %v8517, 0.0
      %v8554 = vmax.f32 %v8518, 0.0
      %v8555 = vmax.f32 %v8519, 0.0
      %v8556 = vmax.f32 %v8520, 0.0
      %v8557 = vpack.c.bf16 %v8522, %v8521
      %v8558 = vpack.c.bf16 %v8524, %v8523
      %v8559 = vpack.c.bf16 %v8526, %v8525
      %v8560 = vpack.c.bf16 %v8528, %v8527
      %v8561 = vpack.c.bf16 %v8530, %v8529
      %v8562 = vpack.c.bf16 %v8532, %v8531
      %v8563 = vpack.c.bf16 %v8534, %v8533
      %v8564 = vpack.c.bf16 %v8536, %v8535
      %v8565 = vpack.c.bf16 %v8538, %v8537
      %v8566 = vpack.c.bf16 %v8540, %v8539
      %v8567 = vpack.c.bf16 %v8542, %v8541
      %v8568 = vpack.c.bf16 %v8544, %v8543
      %v8569 = vpack.c.bf16 %v8546, %v8545
      %v8570 = vpack.c.bf16 %v8548, %v8547
      %v8571 = vpack.c.bf16 %v8550, %v8549
      %v8572 = vpack.c.bf16 %v8552, %v8551
      %v8573 = vpack.c.bf16 %v8554, %v8553
      %v8574 = vpack.c.bf16 %v8556, %v8555
      %v8593 = vunpack.c.l.b16 %v8557
      %v8594 = vunpack.c.h.b16 %v8557
      %v8595 = vunpack.c.l.b16 %v8558
      %v8596 = vunpack.c.h.b16 %v8558
      %v8597 = vunpack.c.l.b16 %v8559
      %v8598 = vunpack.c.h.b16 %v8559
      %v8599 = vunpack.c.l.b16 %v8560
      %v8600 = vunpack.c.h.b16 %v8560
      %v8601 = vunpack.c.l.b16 %v8561
      %v8602 = vunpack.c.h.b16 %v8561
      %v8603 = vunpack.c.l.b16 %v8562
      %v8604 = vunpack.c.h.b16 %v8562
      %v8605 = vunpack.c.l.b16 %v8563
      %v8606 = vunpack.c.h.b16 %v8563
      %v8607 = vunpack.c.l.b16 %v8564
      %v8608 = vunpack.c.h.b16 %v8564
      %v8609 = vunpack.c.l.b16 %v8565
      %v8610 = vunpack.c.h.b16 %v8565
      %v8611 = vunpack.c.l.b16 %v8566
      %v8612 = vunpack.c.h.b16 %v8566
      %v8613 = vunpack.c.l.b16 %v8567
      %v8614 = vunpack.c.h.b16 %v8567
      %v8615 = vunpack.c.l.b16 %v8568
      %v8616 = vunpack.c.h.b16 %v8568
      %v8617 = vunpack.c.l.b16 %v8569
      %v8618 = vunpack.c.h.b16 %v8569
      %v8619 = vunpack.c.l.b16 %v8570
      %v8620 = vunpack.c.h.b16 %v8570
      %v8621 = vunpack.c.l.b16 %v8571
      %v8622 = vunpack.c.h.b16 %v8571
      %v8623 = vunpack.c.l.b16 %v8572
      %v8624 = vunpack.c.h.b16 %v8572
      %v8625 = vunpack.c.l.b16 %v8573
      %v8626 = vunpack.c.h.b16 %v8573
      %v8627 = vunpack.c.l.b16 %v8574
      %v8628 = vunpack.c.h.b16 %v8574
      %v8629 = vpack.c.b16 %v8593, %v8593
      %v8630 = vpack.c.b16 %v8594, %v8594
      %v8631 = vpack.c.b16 %v8595, %v8595
      %v8632 = vpack.c.b16 %v8596, %v8596
      %v8633 = vpack.c.b16 %v8597, %v8597
      %v8634 = vpack.c.b16 %v8598, %v8598
      %v8635 = vpack.c.b16 %v8599, %v8599
      %v8636 = vpack.c.b16 %v8600, %v8600
      %v8637 = vpack.c.b16 %v8601, %v8601
      %v8638 = vpack.c.b16 %v8602, %v8602
      %v8639 = vpack.c.b16 %v8603, %v8603
      %v8640 = vpack.c.b16 %v8604, %v8604
      %v8641 = vpack.c.b16 %v8605, %v8605
      %v8642 = vpack.c.b16 %v8606, %v8606
      %v8643 = vpack.c.b16 %v8607, %v8607
      %v8644 = vpack.c.b16 %v8608, %v8608
      %v8645 = vpack.c.b16 %v8609, %v8609
      %v8646 = vpack.c.b16 %v8610, %v8610
      %v8647 = vpack.c.b16 %v8611, %v8611
      %v8648 = vpack.c.b16 %v8612, %v8612
      %v8649 = vpack.c.b16 %v8613, %v8613
      %v8650 = vpack.c.b16 %v8614, %v8614
      %v8651 = vpack.c.b16 %v8615, %v8615
      %v8652 = vpack.c.b16 %v8616, %v8616
      %v8653 = vpack.c.b16 %v8617, %v8617
      %v8654 = vpack.c.b16 %v8618, %v8618
      %v8655 = vpack.c.b16 %v8619, %v8619
      %v8656 = vpack.c.b16 %v8620, %v8620
      %v8657 = vpack.c.b16 %v8621, %v8621
      %v8658 = vpack.c.b16 %v8622, %v8622
      %v8659 = vpack.c.b16 %v8623, %v8623
      %v8660 = vpack.c.b16 %v8624, %v8624
      %v8661 = vpack.c.b16 %v8625, %v8625
      %v8662 = vpack.c.b16 %v8626, %v8626
      %v8663 = vpack.c.b16 %v8627, %v8627
      %v8664 = vpack.c.b16 %v8628, %v8628
      %8701 = vst [vmem:[%s251] sm:$0xf] %v8629
      %8702 = vst [vmem:[%s251 + $0x4] sm:$0xf] %v8630
      %8703 = vst [vmem:[%s251 + $0x8] sm:$0xf] %v8631
      %8704 = vst [vmem:[%s251 + $0xc] sm:$0xf] %v8632
      %8705 = vst [vmem:[%s251 + $0x10] sm:$0xf] %v8633
      %8706 = vst [vmem:[%s251 + $0x14] sm:$0xf] %v8634
      %8707 = vst [vmem:[%s251 + $0x18] sm:$0xf] %v8635
      %8708 = vst [vmem:[%s251 + $0x1c] sm:$0xf] %v8636
      %8709 = vst [vmem:[%s251 + $0x20] sm:$0xf] %v8637
      %8710 = vst [vmem:[%s251 + $0x24] sm:$0xf] %v8638
      %8711 = vst [vmem:[%s251 + $0x28] sm:$0xf] %v8639
      %8712 = vst [vmem:[%s251 + $0x2c] sm:$0xf] %v8640
      %8713 = vst [vmem:[%s251 + $0x30] sm:$0xf] %v8641
      %8714 = vst [vmem:[%s251 + $0x34] sm:$0xf] %v8642
      %8715 = vst [vmem:[%s251 + $0x38] sm:$0xf] %v8643
      %8716 = vst [vmem:[%s251 + $0x3c] sm:$0xf] %v8644
      %8717 = vst [vmem:[%s251 + $0x40] sm:$0xf] %v8645
      %8718 = vst [vmem:[%s251 + $0x44] sm:$0xf] %v8646
      %8719 = vst [vmem:[%s251 + $0x48] sm:$0xf] %v8647
      %8720 = vst [vmem:[%s251 + $0x4c] sm:$0xf] %v8648
      %8721 = vst [vmem:[%s251 + $0x50] sm:$0xf] %v8649
      %8722 = vst [vmem:[%s251 + $0x54] sm:$0xf] %v8650
      %8723 = vst [vmem:[%s251 + $0x58] sm:$0xf] %v8651
      %8724 = vst [vmem:[%s251 + $0x5c] sm:$0xf] %v8652
      %8725 = vst [vmem:[%s251 + $0x60] sm:$0xf] %v8653
      %8726 = vst [vmem:[%s251 + $0x64] sm:$0xf] %v8654
      %8727 = vst [vmem:[%s251 + $0x68] sm:$0xf] %v8655
      %8728 = vst [vmem:[%s251 + $0x6c] sm:$0xf] %v8656
      %8729 = vst [vmem:[%s251 + $0x70] sm:$0xf] %v8657
      %8730 = vst [vmem:[%s251 + $0x74] sm:$0xf] %v8658
      %8731 = vst [vmem:[%s251 + $0x78] sm:$0xf] %v8659
      %8732 = vst [vmem:[%s251 + $0x7c] sm:$0xf] %v8660
      %8733 = vst [vmem:[%s251 + $0x80] sm:$0xf] %v8661
      %8734 = vst [vmem:[%s251 + $0x84] sm:$0xf] %v8662
      %8735 = vst [vmem:[%s251 + $0x88] sm:$0xf] %v8663
      %8736 = vst [vmem:[%s251 + $0x8c] sm:$0xf] %v8664
      %p8737 = scmp.lt.s32.totalorder %s17, 1
      %s8738 = scalar_select %p8737, %s17, 1
      %s8739 = smul.addr %s8738, 36
      %s8740 = smul.addr %s8739, 4
      %s8741 = scalar_lea.vmem %s6, %s8740
      // Predicated region
      $region45: #{simple_fuse_block_2d.1} parent=43 // pred_check
        %p8742 = pneg %p166
      $region46: #{simple_fuse_block_2d.1} parent=43 // pred_check_branch
        %8744 = sbr.rel (%p8742) target = $region48
      $region47: #{simple_fuse_block_2d.1} parent=43 // pred_region
        _
      $region48: #{simple_fuse_block_2d.1} parent=43 // pred_fallthru
        _
    $region44: #{simple_fuse_block_2d.1} parent=5 // pred_fallthru
      _
    %p8745 = scmp.le.s32.totalorder 2, %s12
    // Predicated region
    $region49: #{simple_fuse_block_2d.1} parent=5 // pred_check
      %p8746 = pneg %p8745
    $region50: #{simple_fuse_block_2d.1} parent=5 // pred_check_branch
      %8748 = sbr.rel (%p8746) target = $region52
    $region51: #{simple_fuse_block_2d.1} parent=5 // pred_region
      %s8749 = ssub.s32 %s12, 2
      // Predicated region
      $region53: #{simple_fuse_block_2d.1} parent=51 // pred_check
        %p8750 = pneg %p172
      $region54: #{simple_fuse_block_2d.1} parent=51 // pred_check_branch
        %8752 = sbr.rel (%p8750) target = $region56
      $region55: #{simple_fuse_block_2d.1} parent=51 // pred_region
        %p8753 = scmp.lt.s32.totalorder %s18, 1
        %s8754 = scalar_select %p8753, %s18, 1
        %s8755 = smul.addr %s8754, 36
        %s8756 = smul.addr %s8755, 4
        %s8757 = scalar_lea.vmem %s6, %s8756
      $region56: #{simple_fuse_block_2d.1} parent=51 // pred_fallthru
        _
    $region52: #{simple_fuse_block_2d.1} parent=5 // pred_fallthru
      _
  $region6: #{simple_fuse_block_2d.1} parent=0 // loop_footer
    %s16 = sadd.s32 1, %s12
  $region7: #{simple_fuse_block_2d.1} parent=0 // loop_footer_branch
    %11 = sbr.rel target = $region3
  $region8: #{simple_fuse_block_2d.1} parent=0 // loop_exit
    _

</llo_original>
